<compile_context>
chip_gen: v6e
topology: v6e:2x2x1
jax: 0.10.0
libtpu: 0.0.40
codegen_flags: <defaults>
</compile_context>

<pallas_src>
import jax
import jax.numpy as jnp
from jax.experimental import pallas as pl
from jax.experimental.pallas import tpu as pltpu

LEAKY_SLOPE = 0.01   # PyTorch nn.LeakyReLU default
H1, H2 = 1024, 512   # hidden sizes from the PyTorch module


def _leaky_relu(x):
    return jnp.where(x > 0, x, LEAKY_SLOPE * x)


def _bias_layout(n_actions):
    """128-lane-aligned offsets inside the packed bias slab."""
    a_pad = -(-n_actions // 128) * 128
    off_ba2 = 2 * H1
    off_bc2 = 2 * H1 + H2
    off_ba3 = 2 * H1 + 2 * H2
    off_bc3 = off_ba3 + a_pad
    total = off_bc3 + a_pad
    return off_ba2, off_bc2, off_ba3, off_bc3, total


def a2cq_kernel(x_ref, mask_ref, w1_ref, wa2_ref, wc2_ref, wa3_ref, wc3_ref,
                bias_ref, logits_ref, logprobs_ref, values_ref):
    A = mask_ref.shape[-1]
    off_ba2, off_bc2, off_ba3, off_bc3, _ = _bias_layout(A)

    # Activations in bf16 so the MXU runs native bf16 x bf16 (f32 acc).
    x = x_ref[...].astype(jnp.bfloat16)                        # (TB, S)

    # ---- fused layer 1: actor || critic share the same input x -----------
    b1 = bias_ref[:, 0:2 * H1]                                 # (1, 2048) f32
    h1 = jnp.dot(x, w1_ref[...], preferred_element_type=jnp.float32) + b1
    h1 = _leaky_relu(h1)                                       # (TB, 2048) f32
    h1a = h1[:, :H1].astype(jnp.bfloat16)                      # 128-aligned slice
    h1c = h1[:, H1:].astype(jnp.bfloat16)

    # ---- layer 2 (branches have different inputs; kept separate) ---------
    ba2 = bias_ref[:, off_ba2:off_ba2 + H2]
    bc2 = bias_ref[:, off_bc2:off_bc2 + H2]
    h2a = _leaky_relu(
        jnp.dot(h1a, wa2_ref[...], preferred_element_type=jnp.float32) + ba2
    ).astype(jnp.bfloat16)                                     # (TB, 512)
    h2c = _leaky_relu(
        jnp.dot(h1c, wc2_ref[...], preferred_element_type=jnp.float32) + bc2
    ).astype(jnp.bfloat16)                                     # (TB, 512)

    # ---- layer 3 heads (no block-diag zeros, no concat) ------------------
    ba3 = bias_ref[:, off_ba3:off_ba3 + A]
    bc3 = bias_ref[:, off_bc3:off_bc3 + A]
    policy = (jnp.dot(h2a, wa3_ref[...], preferred_element_type=jnp.float32)
              + ba3) * mask_ref[...]            # policy *= mask (module semantics)
    values = jnp.dot(h2c, wc3_ref[...], preferred_element_type=jnp.float32) + bc3

    # Categorical(logits=policy).logits == policy - logsumexp(policy)
    m = jnp.max(policy, axis=-1, keepdims=True)
    lse = m + jnp.log(jnp.sum(jnp.exp(policy - m), axis=-1, keepdims=True))

    logits_ref[...] = policy
    logprobs_ref[...] = policy - lse
    values_ref[...] = values


def pack_params(p):
    """One-time packing: bf16 weights, fused layer-1 weight, aligned bias slab."""
    bf16 = jnp.bfloat16
    A = p["wa3"].shape[1]
    off_ba2, off_bc2, off_ba3, off_bc3, total = _bias_layout(A)

    w1 = jnp.concatenate([p["wa1"], p["wc1"]], axis=1).astype(bf16)   # (S, 2048)
    wa2 = p["wa2"].astype(bf16)                                       # (1024, 512)
    wc2 = p["wc2"].astype(bf16)                                       # (1024, 512)
    wa3 = p["wa3"].astype(bf16)                                       # (512, A)
    wc3 = p["wc3"].astype(bf16)                                       # (512, A)

    bias = jnp.zeros((1, total), jnp.float32)
    bias = bias.at[:, 0:H1].set(p["ba1"])
    bias = bias.at[:, H1:2 * H1].set(p["bc1"])
    bias = bias.at[:, off_ba2:off_ba2 + H2].set(p["ba2"])
    bias = bias.at[:, off_bc2:off_bc2 + H2].set(p["bc2"])
    bias = bias.at[:, off_ba3:off_ba3 + A].set(p["ba3"])
    bias = bias.at[:, off_bc3:off_bc3 + A].set(p["bc3"])
    return {"w1": w1, "wa2": wa2, "wc2": wc2, "wa3": wa3, "wc3": wc3,
            "bias": bias}


def a2cq_forward(x, mask, packed, *, row_tile=128):
    B, S = x.shape
    A = mask.shape[1]

    # Pad batch to a multiple of the row tile (>=128 rows per MXU matmul).
    Bp = -(-B // row_tile) * row_tile
    if Bp != B:
        x = jnp.pad(x, ((0, Bp - B), (0, 0)))
        mask = jnp.pad(mask, ((0, Bp - B), (0, 0)))
    n_tiles = Bp // row_tile

    flops = 2 * Bp * (S * 2 * H1 + 2 * H1 * H2 + 2 * H2 * A)
    weight_bytes = 2 * sum(packed[k].size
                           for k in ("w1", "wa2", "wc2", "wa3", "wc3"))
    bytes_accessed = (weight_bytes                       # bf16 weights (fetched once)
                      + 4 * packed["bias"].size          # f32 bias slab
                      + 4 * (Bp * S + Bp * A + 3 * Bp * A))
    cost = pl.CostEstimate(flops=flops, transcendentals=Bp * (A + 1),
                           bytes_accessed=bytes_accessed)

    # Batch-tiled x / mask / outputs pipeline per grid step; weights & bias use
    # a constant index_map so they are DMA'd once and stay VMEM-resident.
    tiled_in = lambda cols: pl.BlockSpec((row_tile, cols), lambda t: (t, 0))
    resident = lambda arr: pl.BlockSpec(arr.shape, lambda t: (0, 0))

    in_specs = [
        tiled_in(S),                    # x
        tiled_in(A),                    # mask
        resident(packed["w1"]),
        resident(packed["wa2"]),
        resident(packed["wc2"]),
        resident(packed["wa3"]),
        resident(packed["wc3"]),
        resident(packed["bias"]),
    ]
    out_specs = (tiled_in(A), tiled_in(A), tiled_in(A))
    out_shape = (jax.ShapeDtypeStruct((Bp, A), jnp.float32),
                 jax.ShapeDtypeStruct((Bp, A), jnp.float32),
                 jax.ShapeDtypeStruct((Bp, A), jnp.float32))

    logits, logprobs, values = pl.pallas_call(
        a2cq_kernel,
        out_shape=out_shape,
        grid=(n_tiles,),
        in_specs=in_specs,
        out_specs=out_specs,
        compiler_params=pltpu.CompilerParams(
            dimension_semantics=("parallel",),
            vmem_limit_bytes=32 * 1024 * 1024),
        cost_estimate=cost,
    )(x, mask, packed["w1"], packed["wa2"], packed["wc2"],
      packed["wa3"], packed["wc3"], packed["bias"])

    return logits[:B], logprobs[:B], values[:B]


def init_params(key, state_size, n_actions):
    """Deterministic synthetic parameters (shapes match the PyTorch module)."""
    dims = [(state_size, H1), (H1, H2), (H2, n_actions)]
    params = {}
    keys = jax.random.split(key, 12)
    ki = 0
    for branch in ("a", "c"):
        for li, (din, dout) in enumerate(dims, start=1):
            scale = 1.0 / jnp.sqrt(jnp.float32(din))
            params[f"w{branch}{li}"] = (
                jax.random.uniform(keys[ki], (din, dout), jnp.float32, -1.0, 1.0)
                * scale)
            ki += 1
            params[f"b{branch}{li}"] = (
                jax.random.uniform(keys[ki], (1, dout), jnp.float32, -1.0, 1.0)
                * scale)
            ki += 1
    return params


def reference_forward(x, mask, p):
    """f32 reference using the same bf16-rounded weights the kernel stores."""
    def q(w):
        return w.astype(jnp.bfloat16).astype(jnp.float32)

    def mlp(w1, b1, w2, b2, w3, b3):
        h1 = _leaky_relu(x @ q(w1) + b1)
        h2 = _leaky_relu(h1 @ q(w2) + b2)
        return h2 @ q(w3) + b3

    policy = mlp(p["wa1"], p["ba1"], p["wa2"], p["ba2"], p["wa3"], p["ba3"]) * mask
    logprobs = policy - jax.scipy.special.logsumexp(policy, axis=-1, keepdims=True)
    values = mlp(p["wc1"], p["bc1"], p["wc2"], p["bc2"], p["wc3"], p["bc3"])
    return policy, logprobs, values


if __name__ == "__main__":
    # B=200 exercises both the batch padding (-> 256) and a 2-step grid in
    # which the weights are fetched once and reused on the second tile.
    B, STATE_SIZE, N_ACTIONS = 200, 32, 16
    key = jax.random.PRNGKey(0)
    kx, km, kp = jax.random.split(key, 3)

    x = jax.random.normal(kx, (B, STATE_SIZE), jnp.float32)
    mask = (jax.random.uniform(km, (B, N_ACTIONS)) > 0.3).astype(jnp.float32)
    params = init_params(kp, STATE_SIZE, N_ACTIONS)
    packed = pack_params(params)

    logits, logprobs, values = a2cq_forward(x, mask, packed, row_tile=128)
    jax.block_until_ready((logits, logprobs, values))

    ref_logits, ref_logprobs, ref_values = reference_forward(x, mask, params)
    # bf16 activations inside the kernel -> loosened tolerance vs f32 reference.
    assert jnp.allclose(logits, ref_logits, rtol=1e-2, atol=1e-2)
    assert jnp.allclose(logprobs, ref_logprobs, rtol=1e-2, atol=1e-2)
    assert jnp.allclose(values, ref_values, rtol=1e-2, atol=1e-2)

    print("KERNEL_OK")
</pallas_src>

<mosaic_0001>
module attributes {stable_mosaic.version = 11 : i64} {
  func.func @a2cq_kernel(%arg0: i32, %arg1: memref<128x32xf32, #tpu.memory_space<vmem>>, %arg2: memref<128x16xf32, #tpu.memory_space<vmem>>, %arg3: memref<32x2048xbf16, #tpu.memory_space<vmem>>, %arg4: memref<1024x512xbf16, #tpu.memory_space<vmem>>, %arg5: memref<1024x512xbf16, #tpu.memory_space<vmem>>, %arg6: memref<512x16xbf16, #tpu.memory_space<vmem>>, %arg7: memref<512x16xbf16, #tpu.memory_space<vmem>>, %arg8: memref<1x3328xf32, #tpu.memory_space<vmem>>, %arg9: memref<128x16xf32, #tpu.memory_space<vmem>>, %arg10: memref<128x16xf32, #tpu.memory_space<vmem>>, %arg11: memref<128x16xf32, #tpu.memory_space<vmem>>) attributes {dimension_semantics = [#tpu.dimension_semantics<parallel>], iteration_bounds = array<i64: 2>, scalar_prefetch = 0 : i64, scratch_operands = 0 : i64, tpu.core_type = #tpu.core_type<tc>, window_params = [{transform_indices = @transform_0, window_bounds = array<i64: 128, 32>}, {transform_indices = @transform_1, window_bounds = array<i64: 128, 16>}, {pipeline_mode = #tpu.pipeline_mode<synchronous>, transform_indices = @transform_2, window_bounds = array<i64: 32, 2048>}, {pipeline_mode = #tpu.pipeline_mode<synchronous>, transform_indices = @transform_3, window_bounds = array<i64: 1024, 512>}, {pipeline_mode = #tpu.pipeline_mode<synchronous>, transform_indices = @transform_4, window_bounds = array<i64: 1024, 512>}, {pipeline_mode = #tpu.pipeline_mode<synchronous>, transform_indices = @transform_5, window_bounds = array<i64: 512, 16>}, {pipeline_mode = #tpu.pipeline_mode<synchronous>, transform_indices = @transform_6, window_bounds = array<i64: 512, 16>}, {pipeline_mode = #tpu.pipeline_mode<synchronous>, transform_indices = @transform_7, window_bounds = array<i64: 1, 3328>}, {transform_indices = @transform_8, window_bounds = array<i64: 128, 16>}, {transform_indices = @transform_9, window_bounds = array<i64: 128, 16>}, {transform_indices = @transform_10, window_bounds = array<i64: 128, 16>}]} {
    %c0 = arith.constant 0 : index
    %c0_0 = arith.constant 0 : index
    %0 = vector.load %arg1[%c0, %c0_0] : memref<128x32xf32, #tpu.memory_space<vmem>>, vector<128x32xf32>
    %1 = arith.truncf %0 : vector<128x32xf32> to vector<128x32xbf16>
    %c0_1 = arith.constant 0 : index
    %c0_2 = arith.constant 0 : index
    %2 = vector.load %arg8[%c0_1, %c0_2] : memref<1x3328xf32, #tpu.memory_space<vmem>>, vector<1x2048xf32>
    %c0_3 = arith.constant 0 : index
    %c0_4 = arith.constant 0 : index
    %3 = vector.load %arg3[%c0_3, %c0_4] : memref<32x2048xbf16, #tpu.memory_space<vmem>>, vector<32x2048xbf16>
    %cst = arith.constant dense<0.000000e+00> : vector<128x2048xf32>
    %4 = tpu.matmul %1, %3, %cst {dimension_numbers = #tpu.dot_dimension_numbers<[1], [0], [0], [1], [0, 0, 1, 1], [], []>} : vector<128x32xbf16>, vector<32x2048xbf16>, vector<128x2048xf32> -> vector<128x2048xf32>
    %5 = vector.broadcast %2 : vector<1x2048xf32> to vector<128x2048xf32>
    %6 = arith.addf %4, %5 : vector<128x2048xf32>
    %cst_5 = arith.constant 0.000000e+00 : f32
    %7 = vector.broadcast %cst_5 : f32 to vector<128x2048xf32>
    %8 = arith.cmpf ogt, %6, %7 : vector<128x2048xf32>
    %cst_6 = arith.constant 0.00999999977 : f32
    %9 = vector.broadcast %cst_6 : f32 to vector<128x2048xf32>
    %10 = arith.mulf %9, %6 : vector<128x2048xf32>
    %11 = arith.select %8, %6, %10 : vector<128x2048xi1>, vector<128x2048xf32>
    %12 = vector.extract_strided_slice %11 {offsets = [0, 0], sizes = [128, 1024], strides = [1, 1]} : vector<128x2048xf32> to vector<128x1024xf32>
    %13 = arith.truncf %12 : vector<128x1024xf32> to vector<128x1024xbf16>
    %14 = vector.extract_strided_slice %11 {offsets = [0, 1024], sizes = [128, 1024], strides = [1, 1]} : vector<128x2048xf32> to vector<128x1024xf32>
    %15 = arith.truncf %14 : vector<128x1024xf32> to vector<128x1024xbf16>
    %c0_7 = arith.constant 0 : index
    %c2048 = arith.constant 2048 : index
    %16 = vector.load %arg8[%c0_7, %c2048] : memref<1x3328xf32, #tpu.memory_space<vmem>>, vector<1x512xf32>
    %c0_8 = arith.constant 0 : index
    %c2560 = arith.constant 2560 : index
    %17 = vector.load %arg8[%c0_8, %c2560] : memref<1x3328xf32, #tpu.memory_space<vmem>>, vector<1x512xf32>
    %c0_9 = arith.constant 0 : index
    %c0_10 = arith.constant 0 : index
    %18 = vector.load %arg4[%c0_9, %c0_10] : memref<1024x512xbf16, #tpu.memory_space<vmem>>, vector<1024x512xbf16>
    %cst_11 = arith.constant dense<0.000000e+00> : vector<128x512xf32>
    %19 = tpu.matmul %13, %18, %cst_11 {dimension_numbers = #tpu.dot_dimension_numbers<[1], [0], [0], [1], [0, 0, 1, 1], [], []>} : vector<128x1024xbf16>, vector<1024x512xbf16>, vector<128x512xf32> -> vector<128x512xf32>
    %20 = vector.broadcast %16 : vector<1x512xf32> to vector<128x512xf32>
    %21 = arith.addf %19, %20 : vector<128x512xf32>
    %cst_12 = arith.constant 0.000000e+00 : f32
    %22 = vector.broadcast %cst_12 : f32 to vector<128x512xf32>
    %23 = arith.cmpf ogt, %21, %22 : vector<128x512xf32>
    %cst_13 = arith.constant 0.00999999977 : f32
    %24 = vector.broadcast %cst_13 : f32 to vector<128x512xf32>
    %25 = arith.mulf %24, %21 : vector<128x512xf32>
    %26 = arith.select %23, %21, %25 : vector<128x512xi1>, vector<128x512xf32>
    %27 = arith.truncf %26 : vector<128x512xf32> to vector<128x512xbf16>
    %c0_14 = arith.constant 0 : index
    %c0_15 = arith.constant 0 : index
    %28 = vector.load %arg5[%c0_14, %c0_15] : memref<1024x512xbf16, #tpu.memory_space<vmem>>, vector<1024x512xbf16>
    %cst_16 = arith.constant dense<0.000000e+00> : vector<128x512xf32>
    %29 = tpu.matmul %15, %28, %cst_16 {dimension_numbers = #tpu.dot_dimension_numbers<[1], [0], [0], [1], [0, 0, 1, 1], [], []>} : vector<128x1024xbf16>, vector<1024x512xbf16>, vector<128x512xf32> -> vector<128x512xf32>
    %30 = vector.broadcast %17 : vector<1x512xf32> to vector<128x512xf32>
    %31 = arith.addf %29, %30 : vector<128x512xf32>
    %cst_17 = arith.constant 0.000000e+00 : f32
    %32 = vector.broadcast %cst_17 : f32 to vector<128x512xf32>
    %33 = arith.cmpf ogt, %31, %32 : vector<128x512xf32>
    %cst_18 = arith.constant 0.00999999977 : f32
    %34 = vector.broadcast %cst_18 : f32 to vector<128x512xf32>
    %35 = arith.mulf %34, %31 : vector<128x512xf32>
    %36 = arith.select %33, %31, %35 : vector<128x512xi1>, vector<128x512xf32>
    %37 = arith.truncf %36 : vector<128x512xf32> to vector<128x512xbf16>
    %c0_19 = arith.constant 0 : index
    %c3072 = arith.constant 3072 : index
    %38 = vector.load %arg8[%c0_19, %c3072] : memref<1x3328xf32, #tpu.memory_space<vmem>>, vector<1x16xf32>
    %c0_20 = arith.constant 0 : index
    %c3200 = arith.constant 3200 : index
    %39 = vector.load %arg8[%c0_20, %c3200] : memref<1x3328xf32, #tpu.memory_space<vmem>>, vector<1x16xf32>
    %c0_21 = arith.constant 0 : index
    %c0_22 = arith.constant 0 : index
    %40 = vector.load %arg6[%c0_21, %c0_22] : memref<512x16xbf16, #tpu.memory_space<vmem>>, vector<512x16xbf16>
    %cst_23 = arith.constant dense<0.000000e+00> : vector<128x16xf32>
    %41 = tpu.matmul %27, %40, %cst_23 {dimension_numbers = #tpu.dot_dimension_numbers<[1], [0], [0], [1], [0, 0, 1, 1], [], []>} : vector<128x512xbf16>, vector<512x16xbf16>, vector<128x16xf32> -> vector<128x16xf32>
    %42 = vector.broadcast %38 : vector<1x16xf32> to vector<128x16xf32>
    %43 = arith.addf %41, %42 : vector<128x16xf32>
    %c0_24 = arith.constant 0 : index
    %c0_25 = arith.constant 0 : index
    %44 = vector.load %arg2[%c0_24, %c0_25] : memref<128x16xf32, #tpu.memory_space<vmem>>, vector<128x16xf32>
    %45 = arith.mulf %43, %44 : vector<128x16xf32>
    %c0_26 = arith.constant 0 : index
    %c0_27 = arith.constant 0 : index
    %46 = vector.load %arg7[%c0_26, %c0_27] : memref<512x16xbf16, #tpu.memory_space<vmem>>, vector<512x16xbf16>
    %cst_28 = arith.constant dense<0.000000e+00> : vector<128x16xf32>
    %47 = tpu.matmul %37, %46, %cst_28 {dimension_numbers = #tpu.dot_dimension_numbers<[1], [0], [0], [1], [0, 0, 1, 1], [], []>} : vector<128x512xbf16>, vector<512x16xbf16>, vector<128x16xf32> -> vector<128x16xf32>
    %48 = vector.broadcast %39 : vector<1x16xf32> to vector<128x16xf32>
    %49 = arith.addf %47, %48 : vector<128x16xf32>
    %cst_29 = arith.constant dense<0xFF800000> : vector<128xf32>
    %50 = vector.multi_reduction <maximumf>, %45, %cst_29 [1] : vector<128x16xf32> to vector<128xf32>
    %51 = vector.shape_cast %50 : vector<128xf32> to vector<128x1xf32>
    %52 = vector.broadcast %51 : vector<128x1xf32> to vector<128x16xf32>
    %53 = arith.subf %45, %52 : vector<128x16xf32>
    %54 = math.exp %53 : vector<128x16xf32>
    %cst_30 = arith.constant dense<0.000000e+00> : vector<128xf32>
    %55 = vector.multi_reduction <add>, %54, %cst_30 [1] : vector<128x16xf32> to vector<128xf32>
    %56 = vector.shape_cast %55 : vector<128xf32> to vector<128x1xf32>
    %57 = math.log %56 : vector<128x1xf32>
    %58 = arith.addf %51, %57 : vector<128x1xf32>
    %c0_31 = arith.constant 0 : index
    %c0_32 = arith.constant 0 : index
    %59 = vector.load %arg9[%c0_31, %c0_32] : memref<128x16xf32, #tpu.memory_space<vmem>>, vector<128x16xf32>
    tpu.vector_store %arg9[%c0_31, %c0_32], %45 {strides = array<i32>} : memref<128x16xf32, #tpu.memory_space<vmem>>, vector<128x16xf32>,
    %60 = vector.broadcast %58 : vector<128x1xf32> to vector<128x16xf32>
    %61 = arith.subf %45, %60 : vector<128x16xf32>
    %c0_33 = arith.constant 0 : index
    %c0_34 = arith.constant 0 : index
    %62 = vector.load %arg10[%c0_33, %c0_34] : memref<128x16xf32, #tpu.memory_space<vmem>>, vector<128x16xf32>
    tpu.vector_store %arg10[%c0_33, %c0_34], %61 {strides = array<i32>} : memref<128x16xf32, #tpu.memory_space<vmem>>, vector<128x16xf32>,
    %c0_35 = arith.constant 0 : index
    %c0_36 = arith.constant 0 : index
    %63 = vector.load %arg11[%c0_35, %c0_36] : memref<128x16xf32, #tpu.memory_space<vmem>>, vector<128x16xf32>
    tpu.vector_store %arg11[%c0_35, %c0_36], %49 {strides = array<i32>} : memref<128x16xf32, #tpu.memory_space<vmem>>, vector<128x16xf32>,
    return
  }
  func.func @transform_0(%arg0: i32) -> (i32, i32) {
    %c0_i32 = arith.constant 0 : i32
    %c0_i32_0 = arith.constant 0 : i32
    return %arg0, %c0_i32 : i32, i32
  }
  func.func @transform_1(%arg0: i32) -> (i32, i32) {
    %c0_i32 = arith.constant 0 : i32
    %c0_i32_0 = arith.constant 0 : i32
    return %arg0, %c0_i32 : i32, i32
  }
  func.func @transform_2(%arg0: i32) -> (i32, i32) {
    %c0_i32 = arith.constant 0 : i32
    %c0_i32_0 = arith.constant 0 : i32
    %c0_i32_1 = arith.constant 0 : i32
    return %c0_i32, %c0_i32_0 : i32, i32
  }
  func.func @transform_3(%arg0: i32) -> (i32, i32) {
    %c0_i32 = arith.constant 0 : i32
    %c0_i32_0 = arith.constant 0 : i32
    %c0_i32_1 = arith.constant 0 : i32
    return %c0_i32, %c0_i32_0 : i32, i32
  }
  func.func @transform_4(%arg0: i32) -> (i32, i32) {
    %c0_i32 = arith.constant 0 : i32
    %c0_i32_0 = arith.constant 0 : i32
    %c0_i32_1 = arith.constant 0 : i32
    return %c0_i32, %c0_i32_0 : i32, i32
  }
  func.func @transform_5(%arg0: i32) -> (i32, i32) {
    %c0_i32 = arith.constant 0 : i32
    %c0_i32_0 = arith.constant 0 : i32
    %c0_i32_1 = arith.constant 0 : i32
    return %c0_i32, %c0_i32_0 : i32, i32
  }
  func.func @transform_6(%arg0: i32) -> (i32, i32) {
    %c0_i32 = arith.constant 0 : i32
    %c0_i32_0 = arith.constant 0 : i32
    %c0_i32_1 = arith.constant 0 : i32
    return %c0_i32, %c0_i32_0 : i32, i32
  }
  func.func @transform_7(%arg0: i32) -> (i32, i32) {
    %c0_i32 = arith.constant 0 : i32
    %c0_i32_0 = arith.constant 0 : i32
    %c0_i32_1 = arith.constant 0 : i32
    return %c0_i32, %c0_i32_0 : i32, i32
  }
  func.func @transform_8(%arg0: i32) -> (i32, i32) {
    %c0_i32 = arith.constant 0 : i32
    %c0_i32_0 = arith.constant 0 : i32
    return %arg0, %c0_i32 : i32, i32
  }
  func.func @transform_9(%arg0: i32) -> (i32, i32) {
    %c0_i32 = arith.constant 0 : i32
    %c0_i32_0 = arith.constant 0 : i32
    return %arg0, %c0_i32 : i32, i32
  }
  func.func @transform_10(%arg0: i32) -> (i32, i32) {
    %c0_i32 = arith.constant 0 : i32
    %c0_i32_0 = arith.constant 0 : i32
    return %arg0, %c0_i32 : i32, i32
  }
}

</mosaic_0001>

<llo_original>
// kernel: tpu_custom_call.1
$region0: #{tpu_custom_call.1}
  #allocation0 [shape = 'u32[]', space=smem, size = 0x4, offset = 0x4, fixed_abs, tag = 'smem constant byte address 0x4 - core index']
  #allocation1 [shape = 'u32[144,128]{1,0:T(1,128)}', space=vmem, size = 0x12000, scoped, tag = 'internal scratch']
  %s0 = inlined_call_operand.vmem [shape: f32[256,32], index: 0, kind: input, shape index: {}]
  %s1 = inlined_call_operand.vmem [shape: f32[256,16], index: 1, kind: input, shape index: {}]
  %s2 = inlined_call_operand.vmem [shape: bf16[32,2048], index: 2, kind: input, shape index: {}]
  %s3 = inlined_call_operand.hbm [shape: bf16[1024,512], index: 3, kind: input, shape index: {}]
  %s4 = inlined_call_operand.hbm [shape: bf16[1024,512], index: 4, kind: input, shape index: {}]
  %s5 = inlined_call_operand.vmem [shape: bf16[512,16], index: 5, kind: input, shape index: {}]
  %s6 = inlined_call_operand.vmem [shape: bf16[512,16], index: 6, kind: input, shape index: {}]
  %s7 = inlined_call_operand.vmem [shape: f32[1,3328], index: 7, kind: input, shape index: {}]
  %s8 = inlined_call_operand.vmem [shape: f32[256,16], index: 8, kind: output, shape index: {0}]
  %s9 = inlined_call_operand.vmem [shape: f32[256,16], index: 9, kind: output, shape index: {1}]
  %s10 = inlined_call_operand.vmem [shape: f32[256,16], index: 10, kind: output, shape index: {2}]
  %11 = xla_tuple %s8, %s9, %s10
  %s12 = sld [smem:[#allocation0]]
  $region89: #{tpu_custom_call.1} parent=0
    _
  %s14 = ssub.s32 1, %s12
  %s15 = scalar_select 0, %s14, %s12
  $region1: #{tpu_custom_call.1} parent=0
    #allocation2 [shape = 'u8[1048576]{0}', space=vmem, size = 0x100000, scoped, tag = 'input window, operand 3, single buffered']
    #allocation3 [shape = 's32[2]{0}', space=sflag, size = 0x8, scoped, tag = 'scoped memory for tpu_custom_call.1']
    #allocation4 [shape = 'u8[1048576]{0}', space=vmem, size = 0x100000, scoped, tag = 'input window, operand 4, single buffered']
    #allocation5 [shape = 's32[1]{0}', space=sflag, size = 0x4, scoped, tag = 'scoped memory for tpu_custom_call.1']
    %16 = vsyncpa [#allocation3], 0
    %17 = vsyncpa [#allocation5], 0
    loop: start=0, step=1, limit=4
    $region2: #{tpu_custom_call.1} parent=1 // loop_pre_header
      _
    $region3: #{tpu_custom_call.1} parent=1 // loop_header
      %s19 = sphi 0, %s23
      %p20 = scmp.ge.s32.totalorder %s19, 4
      %s29 = sphi 0, %s31
      %s32 = sphi 0, %s29
      %s33 = sphi 0, %s32
      %s49 = sphi 0, %s33
      %s55 = sphi 0, %s57
      %s58 = sphi 0, %s55
      %s59 = sphi 0, %s58
      %s75 = sphi 0, %s59
      %s79 = sphi 0, %s79
      %s81 = sphi 0, %s79
      %s82 = sphi 0, %s81
      %s96 = sphi 0, %s82
      %s100 = sphi 0, %s100
      %s102 = sphi 0, %s100
      %s103 = sphi 0, %s102
      %s117 = sphi 0, %s103
      %s121 = sphi 0, %s121
      %s123 = sphi 0, %s121
      %s124 = sphi 0, %s123
      %s138 = sphi 0, %s124
      %s142 = sphi 0, %s142
      %s144 = sphi 0, %s142
      %s145 = sphi 0, %s144
      %s159 = sphi 0, %s145
      %s163 = sphi 0, %s163
      %s165 = sphi 0, %s163
      %s166 = sphi 0, %s165
      %s180 = sphi 0, %s166
      %s184 = sphi 0, %s184
      %s186 = sphi 0, %s184
      %s187 = sphi 0, %s186
      %s201 = sphi 0, %s187
      %s207 = sphi 0, %s209
      %s210 = sphi 0, %s207
      %s211 = sphi 0, %s210
      %s227 = sphi 0, %s211
      %s233 = sphi 0, %s235
      %s236 = sphi 0, %s233
      %s237 = sphi 0, %s236
      %s253 = sphi 0, %s237
      %s259 = sphi 0, %s261
      %s262 = sphi 0, %s259
      %s263 = sphi 0, %s262
      %s279 = sphi 0, %s263
    $region4: #{tpu_custom_call.1} parent=1 // loop_header_branch
      %22 = sbr.rel (%p20) target = $region8
    $region5: #{tpu_custom_call.1} parent=1 // loop_body
      %s24 = ssub.s32 %s19, 1
      %s25 = ssub.s32 %s19, 2
      %s26 = sadd.s32 %s19, 1
      %s27 = ssub.s32 %s19, %s26
      %p28 = scmp.eq.s32.totalorder %s27, 0
      %s30 = sadd.s32 %s29, 1
      %s31 = scalar_select %p28, %s29, %s30
      %p34 = pneg %p28
      %p35 = scmp.eq.s32.totalorder %s19, 1
      %p36 = por %p34, %p35
      %p37 = scmp.ne.s32.totalorder %s29, %s32
      %p38 = scmp.eq.s32.totalorder %s19, 0
      %p39 = por %p37, %p38
      %p40 = scmp.ne.s32.totalorder %s29, %s32
      %p41 = scmp.eq.s32.totalorder %s24, 1
      %p42 = por %p40, %p41
      %p43 = scmp.ne.s32.totalorder %s32, %s33
      %p44 = scmp.eq.s32.totalorder %s24, 0
      %p45 = por %p43, %p44
      %p46 = scmp.ne.s32.totalorder %s32, %s33
      %p47 = scmp.eq.s32.totalorder %s25, 1
      %p48 = por %p46, %p47
      %p50 = scmp.ne.s32.totalorder %s33, %s49
      %p51 = scmp.eq.s32.totalorder %s25, 0
      %p52 = por %p50, %p51
      %s53 = ssub.s32 %s19, %s26
      %p54 = scmp.eq.s32.totalorder %s53, 0
      %s56 = sadd.s32 %s55, 1
      %s57 = scalar_select %p54, %s55, %s56
      %p60 = pneg %p54
      %p61 = scmp.eq.s32.totalorder %s19, 1
      %p62 = por %p60, %p61
      %p63 = scmp.ne.s32.totalorder %s55, %s58
      %p64 = scmp.eq.s32.totalorder %s19, 0
      %p65 = por %p63, %p64
      %p66 = scmp.ne.s32.totalorder %s55, %s58
      %p67 = scmp.eq.s32.totalorder %s24, 1
      %p68 = por %p66, %p67
      %p69 = scmp.ne.s32.totalorder %s58, %s59
      %p70 = scmp.eq.s32.totalorder %s24, 0
      %p71 = por %p69, %p70
      %p72 = scmp.ne.s32.totalorder %s58, %s59
      %p73 = scmp.eq.s32.totalorder %s25, 1
      %p74 = por %p72, %p73
      %p76 = scmp.ne.s32.totalorder %s59, %s75
      %p77 = scmp.eq.s32.totalorder %s25, 0
      %p78 = por %p76, %p77
      %s80 = sadd.s32 %s79, 1
      %p83 = scmp.eq.s32.totalorder %s19, 1
      %p84 = scmp.ne.s32.totalorder %s79, %s81
      %p85 = scmp.eq.s32.totalorder %s19, 0
      %p86 = por %p84, %p85
      %p87 = scmp.ne.s32.totalorder %s79, %s81
      %p88 = scmp.eq.s32.totalorder %s24, 1
      %p89 = por %p87, %p88
      %p90 = scmp.ne.s32.totalorder %s81, %s82
      %p91 = scmp.eq.s32.totalorder %s24, 0
      %p92 = por %p90, %p91
      %p93 = scmp.ne.s32.totalorder %s81, %s82
      %p94 = scmp.eq.s32.totalorder %s25, 1
      %p95 = por %p93, %p94
      %p97 = scmp.ne.s32.totalorder %s82, %s96
      %p98 = scmp.eq.s32.totalorder %s25, 0
      %p99 = por %p97, %p98
      %s101 = sadd.s32 %s100, 1
      %p104 = scmp.eq.s32.totalorder %s19, 1
      %p105 = scmp.ne.s32.totalorder %s100, %s102
      %p106 = scmp.eq.s32.totalorder %s19, 0
      %p107 = por %p105, %p106
      %p108 = scmp.ne.s32.totalorder %s100, %s102
      %p109 = scmp.eq.s32.totalorder %s24, 1
      %p110 = por %p108, %p109
      %p111 = scmp.ne.s32.totalorder %s102, %s103
      %p112 = scmp.eq.s32.totalorder %s24, 0
      %p113 = por %p111, %p112
      %p114 = scmp.ne.s32.totalorder %s102, %s103
      %p115 = scmp.eq.s32.totalorder %s25, 1
      %p116 = por %p114, %p115
      %p118 = scmp.ne.s32.totalorder %s103, %s117
      %p119 = scmp.eq.s32.totalorder %s25, 0
      %p120 = por %p118, %p119
      %s122 = sadd.s32 %s121, 1
      %p125 = scmp.eq.s32.totalorder %s19, 1
      %p126 = scmp.ne.s32.totalorder %s121, %s123
      %p127 = scmp.eq.s32.totalorder %s19, 0
      %p128 = por %p126, %p127
      %p129 = scmp.ne.s32.totalorder %s121, %s123
      %p130 = scmp.eq.s32.totalorder %s24, 1
      %p131 = por %p129, %p130
      %p132 = scmp.ne.s32.totalorder %s123, %s124
      %p133 = scmp.eq.s32.totalorder %s24, 0
      %p134 = por %p132, %p133
      %p135 = scmp.ne.s32.totalorder %s123, %s124
      %p136 = scmp.eq.s32.totalorder %s25, 1
      %p137 = por %p135, %p136
      %p139 = scmp.ne.s32.totalorder %s124, %s138
      %p140 = scmp.eq.s32.totalorder %s25, 0
      %p141 = por %p139, %p140
      %s143 = sadd.s32 %s142, 1
      %p146 = scmp.eq.s32.totalorder %s19, 1
      %p147 = scmp.ne.s32.totalorder %s142, %s144
      %p148 = scmp.eq.s32.totalorder %s19, 0
      %p149 = por %p147, %p148
      %p150 = scmp.ne.s32.totalorder %s142, %s144
      %p151 = scmp.eq.s32.totalorder %s24, 1
      %p152 = por %p150, %p151
      %p153 = scmp.ne.s32.totalorder %s144, %s145
      %p154 = scmp.eq.s32.totalorder %s24, 0
      %p155 = por %p153, %p154
      %p156 = scmp.ne.s32.totalorder %s144, %s145
      %p157 = scmp.eq.s32.totalorder %s25, 1
      %p158 = por %p156, %p157
      %p160 = scmp.ne.s32.totalorder %s145, %s159
      %p161 = scmp.eq.s32.totalorder %s25, 0
      %p162 = por %p160, %p161
      %s164 = sadd.s32 %s163, 1
      %p167 = scmp.eq.s32.totalorder %s19, 1
      %p168 = scmp.ne.s32.totalorder %s163, %s165
      %p169 = scmp.eq.s32.totalorder %s19, 0
      %p170 = por %p168, %p169
      %p171 = scmp.ne.s32.totalorder %s163, %s165
      %p172 = scmp.eq.s32.totalorder %s24, 1
      %p173 = por %p171, %p172
      %p174 = scmp.ne.s32.totalorder %s165, %s166
      %p175 = scmp.eq.s32.totalorder %s24, 0
      %p176 = por %p174, %p175
      %p177 = scmp.ne.s32.totalorder %s165, %s166
      %p178 = scmp.eq.s32.totalorder %s25, 1
      %p179 = por %p177, %p178
      %p181 = scmp.ne.s32.totalorder %s166, %s180
      %p182 = scmp.eq.s32.totalorder %s25, 0
      %p183 = por %p181, %p182
      %s185 = sadd.s32 %s184, 1
      %p188 = scmp.eq.s32.totalorder %s19, 1
      %p189 = scmp.ne.s32.totalorder %s184, %s186
      %p190 = scmp.eq.s32.totalorder %s19, 0
      %p191 = por %p189, %p190
      %p192 = scmp.ne.s32.totalorder %s184, %s186
      %p193 = scmp.eq.s32.totalorder %s24, 1
      %p194 = por %p192, %p193
      %p195 = scmp.ne.s32.totalorder %s186, %s187
      %p196 = scmp.eq.s32.totalorder %s24, 0
      %p197 = por %p195, %p196
      %p198 = scmp.ne.s32.totalorder %s186, %s187
      %p199 = scmp.eq.s32.totalorder %s25, 1
      %p200 = por %p198, %p199
      %p202 = scmp.ne.s32.totalorder %s187, %s201
      %p203 = scmp.eq.s32.totalorder %s25, 0
      %p204 = por %p202, %p203
      %s205 = ssub.s32 %s19, %s26
      %p206 = scmp.eq.s32.totalorder %s205, 0
      %s208 = sadd.s32 %s207, 1
      %s209 = scalar_select %p206, %s207, %s208
      %p212 = pneg %p206
      %p213 = scmp.eq.s32.totalorder %s19, 1
      %p214 = por %p212, %p213
      %p215 = scmp.ne.s32.totalorder %s207, %s210
      %p216 = scmp.eq.s32.totalorder %s19, 0
      %p217 = por %p215, %p216
      %p218 = scmp.ne.s32.totalorder %s207, %s210
      %p219 = scmp.eq.s32.totalorder %s24, 1
      %p220 = por %p218, %p219
      %p221 = scmp.ne.s32.totalorder %s210, %s211
      %p222 = scmp.eq.s32.totalorder %s24, 0
      %p223 = por %p221, %p222
      %p224 = scmp.ne.s32.totalorder %s210, %s211
      %p225 = scmp.eq.s32.totalorder %s25, 1
      %p226 = por %p224, %p225
      %p228 = scmp.ne.s32.totalorder %s211, %s227
      %p229 = scmp.eq.s32.totalorder %s25, 0
      %p230 = por %p228, %p229
      %s231 = ssub.s32 %s19, %s26
      %p232 = scmp.eq.s32.totalorder %s231, 0
      %s234 = sadd.s32 %s233, 1
      %s235 = scalar_select %p232, %s233, %s234
      %p238 = pneg %p232
      %p239 = scmp.eq.s32.totalorder %s19, 1
      %p240 = por %p238, %p239
      %p241 = scmp.ne.s32.totalorder %s233, %s236
      %p242 = scmp.eq.s32.totalorder %s19, 0
      %p243 = por %p241, %p242
      %p244 = scmp.ne.s32.totalorder %s233, %s236
      %p245 = scmp.eq.s32.totalorder %s24, 1
      %p246 = por %p244, %p245
      %p247 = scmp.ne.s32.totalorder %s236, %s237
      %p248 = scmp.eq.s32.totalorder %s24, 0
      %p249 = por %p247, %p248
      %p250 = scmp.ne.s32.totalorder %s236, %s237
      %p251 = scmp.eq.s32.totalorder %s25, 1
      %p252 = por %p250, %p251
      %p254 = scmp.ne.s32.totalorder %s237, %s253
      %p255 = scmp.eq.s32.totalorder %s25, 0
      %p256 = por %p254, %p255
      %s257 = ssub.s32 %s19, %s26
      %p258 = scmp.eq.s32.totalorder %s257, 0
      %s260 = sadd.s32 %s259, 1
      %s261 = scalar_select %p258, %s259, %s260
      %p264 = pneg %p258
      %p265 = scmp.eq.s32.totalorder %s19, 1
      %p266 = por %p264, %p265
      %p267 = scmp.ne.s32.totalorder %s259, %s262
      %p268 = scmp.eq.s32.totalorder %s19, 0
      %p269 = por %p267, %p268
      %p270 = scmp.ne.s32.totalorder %s259, %s262
      %p271 = scmp.eq.s32.totalorder %s24, 1
      %p272 = por %p270, %p271
      %p273 = scmp.ne.s32.totalorder %s262, %s263
      %p274 = scmp.eq.s32.totalorder %s24, 0
      %p275 = por %p273, %p274
      %p276 = scmp.ne.s32.totalorder %s262, %s263
      %p277 = scmp.eq.s32.totalorder %s25, 1
      %p278 = por %p276, %p277
      %p280 = scmp.ne.s32.totalorder %s263, %s279
      %p281 = scmp.eq.s32.totalorder %s25, 0
      %p282 = por %p280, %p281
      %p283 = scmp.le.s32.totalorder 1, %s19
      %p284 = scmp.lt.s32.totalorder %s19, 3
      %p285 = pnand %p283, %p284
      %p286 = pneg %p285
      // Predicated region
      $region9: #{tpu_custom_call.1} parent=5 // pred_check
        _
      $region10: #{tpu_custom_call.1} parent=5 // pred_check_branch
        %288 = sbr.rel (%p285) target = $region12
      $region11: #{tpu_custom_call.1} parent=5 // pred_region
        %s289 = ssub.s32 %s19, 1
        // Predicated region
        $region13: #{tpu_custom_call.1} parent=11 // pred_check
          %p290 = pneg %p92
        $region14: #{tpu_custom_call.1} parent=11 // pred_check_branch
          %292 = sbr.rel (%p290) target = $region16
        $region15: #{tpu_custom_call.1} parent=11 // pred_region
          _
        $region16: #{tpu_custom_call.1} parent=11 // pred_fallthru
          _
        // Predicated region
        $region17: #{tpu_custom_call.1} parent=11 // pred_check
          %p293 = pneg %p113
        $region18: #{tpu_custom_call.1} parent=11 // pred_check_branch
          %295 = sbr.rel (%p293) target = $region20
        $region19: #{tpu_custom_call.1} parent=11 // pred_region
          %s297 = ssub.s32 32768, 32768
          %298 = vsyncadd [#allocation3], %s297
          %s299 = sshll.u32 [#allocation2], 4
          %s300 = int_to_ptr.vmem [resolvable:$true] %s299
          %305 = dma.hbm_to_vmem [thread:$0]  %s3, 32768, %s300, [#allocation3], 256, 256, 16
        $region20: #{tpu_custom_call.1} parent=11 // pred_fallthru
          _
        // Predicated region
        $region21: #{tpu_custom_call.1} parent=11 // pred_check
          %p306 = pneg %p134
        $region22: #{tpu_custom_call.1} parent=11 // pred_check_branch
          %308 = sbr.rel (%p306) target = $region24
        $region23: #{tpu_custom_call.1} parent=11 // pred_region
          %s310 = ssub.s32 32768, 32768
          %311 = vsyncadd [#allocation5], %s310
          %s312 = sshll.u32 [#allocation4], 4
          %s313 = int_to_ptr.vmem [resolvable:$true] %s312
          %318 = dma.hbm_to_vmem [thread:$0]  %s4, 32768, %s313, [#allocation5], 256, 256, 16
        $region24: #{tpu_custom_call.1} parent=11 // pred_fallthru
          _
        // Predicated region
        $region25: #{tpu_custom_call.1} parent=11 // pred_check
          %p319 = pneg %p155
        $region26: #{tpu_custom_call.1} parent=11 // pred_check_branch
          %321 = sbr.rel (%p319) target = $region28
        $region27: #{tpu_custom_call.1} parent=11 // pred_region
          _
        $region28: #{tpu_custom_call.1} parent=11 // pred_fallthru
          _
        // Predicated region
        $region29: #{tpu_custom_call.1} parent=11 // pred_check
          %p322 = pneg %p176
        $region30: #{tpu_custom_call.1} parent=11 // pred_check_branch
          %324 = sbr.rel (%p322) target = $region32
        $region31: #{tpu_custom_call.1} parent=11 // pred_region
          _
        $region32: #{tpu_custom_call.1} parent=11 // pred_fallthru
          _
        // Predicated region
        $region33: #{tpu_custom_call.1} parent=11 // pred_check
          %p325 = pneg %p197
        $region34: #{tpu_custom_call.1} parent=11 // pred_check_branch
          %327 = sbr.rel (%p325) target = $region36
        $region35: #{tpu_custom_call.1} parent=11 // pred_region
          _
        $region36: #{tpu_custom_call.1} parent=11 // pred_fallthru
          _
      $region12: #{tpu_custom_call.1} parent=5 // pred_fallthru
        _
      %p328 = scmp.lt.s32.totalorder %s19, 2
      // Predicated region
      $region37: #{tpu_custom_call.1} parent=5 // pred_check
        %p329 = pneg %p328
      $region38: #{tpu_custom_call.1} parent=5 // pred_check_branch
        %331 = sbr.rel (%p329) target = $region40
      $region39: #{tpu_custom_call.1} parent=5 // pred_region
        // Predicated region
        $region41: #{tpu_custom_call.1} parent=39 // pred_check
          %p332 = pneg %p39
        $region42: #{tpu_custom_call.1} parent=39 // pred_check_branch
          %334 = sbr.rel (%p332) target = $region44
        $region43: #{tpu_custom_call.1} parent=39 // pred_region
          %s335 = smul.u32 16, %s19
          %p336 = scmp.lt.s32.totalorder %s335, 31
          %s337 = scalar_select %p336, %s335, 31
          %s338 = smul.addr %s337, 8
          %s339 = scalar_lea.vmem %s0, %s338
          %s340 = smul.u32 16, %s19
        $region44: #{tpu_custom_call.1} parent=39 // pred_fallthru
          _
        // Predicated region
        $region45: #{tpu_custom_call.1} parent=39 // pred_check
          %p341 = pneg %p65
        $region46: #{tpu_custom_call.1} parent=39 // pred_check_branch
          %343 = sbr.rel (%p341) target = $region48
        $region47: #{tpu_custom_call.1} parent=39 // pred_region
          %s344 = smul.u32 16, %s19
          %p345 = scmp.lt.s32.totalorder %s344, 31
          %s346 = scalar_select %p345, %s344, 31
          %s347 = smul.addr %s346, 8
          %s348 = scalar_lea.vmem %s1, %s347
          %s349 = smul.u32 16, %s19
        $region48: #{tpu_custom_call.1} parent=39 // pred_fallthru
          _
      $region40: #{tpu_custom_call.1} parent=5 // pred_fallthru
        _
      %p350 = scmp.le.s32.totalorder 1, %s19
      %p351 = scmp.lt.s32.totalorder %s19, 3
      %p352 = pnand %p350, %p351
      %p353 = pneg %p352
      // Predicated region
      $region49: #{tpu_custom_call.1} parent=5 // pred_check
        _
      $region50: #{tpu_custom_call.1} parent=5 // pred_check_branch
        %355 = sbr.rel (%p352) target = $region52
      $region51: #{tpu_custom_call.1} parent=5 // pred_region
        %s356 = ssub.s32 %s19, 1
        // Predicated region
        $region53: #{tpu_custom_call.1} parent=51 // pred_check
          %p357 = pneg %p113
        $region54: #{tpu_custom_call.1} parent=51 // pred_check_branch
          %359 = sbr.rel (%p357) target = $region56
        $region55: #{tpu_custom_call.1} parent=51 // pred_region
          %360 = dma.done [#allocation3], 32768
        $region56: #{tpu_custom_call.1} parent=51 // pred_fallthru
          _
        // Predicated region
        $region57: #{tpu_custom_call.1} parent=51 // pred_check
          %p361 = pneg %p134
        $region58: #{tpu_custom_call.1} parent=51 // pred_check_branch
          %363 = sbr.rel (%p361) target = $region60
        $region59: #{tpu_custom_call.1} parent=51 // pred_region
          %364 = dma.done [#allocation5], 32768
        $region60: #{tpu_custom_call.1} parent=51 // pred_fallthru
          _
        %s365 = smul.u32 16, %s24
        %p366 = scmp.lt.s32.totalorder %s365, 31
        %s367 = scalar_select %p366, %s365, 31
        %s368 = smul.addr %s367, 8
        %s369 = scalar_lea.vmem %s0, %s368
        %p370 = pneg %p45
        %p371 = pneg %p42
        %s372 = smul.u32 16, %s24
        %p373 = scmp.lt.s32.totalorder %s372, 31
        %s374 = scalar_select %p373, %s372, 31
        %s375 = smul.addr %s374, 8
        %s376 = scalar_lea.vmem %s1, %s375
        %p377 = pneg %p71
        %p378 = pneg %p68
        %p379 = pneg %p92
        %p380 = pneg %p89
        %p381 = pneg %p113
        %p382 = pneg %p110
        %p383 = pneg %p134
        %p384 = pneg %p131
        %p385 = pneg %p155
        %p386 = pneg %p152
        %p387 = pneg %p176
        %p388 = pneg %p173
        %p389 = pneg %p197
        %p390 = pneg %p194
        %p391 = pneg %p223
        %p392 = pneg %p220
        %s393 = smul.u32 16, %s24
        %p394 = scmp.lt.s32.totalorder %s393, 31
        %s395 = scalar_select %p394, %s393, 31
        %s396 = smul.addr %s395, 8
        %s397 = scalar_lea.vmem %s8, %s396
        %p398 = pneg %p249
        %p399 = pneg %p246
        %s400 = smul.u32 16, %s24
        %p401 = scmp.lt.s32.totalorder %s400, 31
        %s402 = scalar_select %p401, %s400, 31
        %s403 = smul.addr %s402, 8
        %s404 = scalar_lea.vmem %s9, %s403
        %p405 = pneg %p275
        %p406 = pneg %p272
        %s407 = smul.u32 16, %s24
        %p408 = scmp.lt.s32.totalorder %s407, 31
        %s409 = scalar_select %p408, %s407, 31
        %s410 = smul.addr %s409, 8
        %s411 = scalar_lea.vmem %s10, %s410
        %s412 = smul.u32 16, %s24
        %p413 = scmp.lt.s32.totalorder %s412, 31
        %s414 = scalar_select %p413, %s412, 31
        %s415 = smul.addr %s414, 8
        %s416 = scalar_lea.vmem %s0, %s415
        %s417 = smul.u32 16, %s24
        %s418 = smul.u32 16, %s24
        %p419 = scmp.lt.s32.totalorder %s418, 31
        %s420 = scalar_select %p419, %s418, 31
        %s421 = smul.addr %s420, 8
        %s422 = scalar_lea.vmem %s1, %s421
        %s423 = smul.u32 16, %s24
        %s424 = smul.u32 16, %s24
        %p425 = scmp.lt.s32.totalorder %s424, 31
        %s426 = scalar_select %p425, %s424, 31
        %s427 = smul.addr %s426, 8
        %s428 = scalar_lea.vmem %s8, %s427
        %s429 = smul.u32 16, %s24
        %s430 = smul.u32 16, %s24
        %p431 = scmp.lt.s32.totalorder %s430, 31
        %s432 = scalar_select %p431, %s430, 31
        %s433 = smul.addr %s432, 8
        %s434 = scalar_lea.vmem %s9, %s433
        %s435 = smul.u32 16, %s24
        %s436 = smul.u32 16, %s24
        %p437 = scmp.lt.s32.totalorder %s436, 31
        %s438 = scalar_select %p437, %s436, 31
        %s439 = smul.addr %s438, 8
        %s440 = scalar_lea.vmem %s10, %s439
        %s441 = smul.u32 16, %s24
        %v443 = vld [vmem:[%s416] sm:$0xff]
        %v444 = vld [vmem:[%s416 + $0x8] sm:$0xff]
        %v445 = vld [vmem:[%s416 + $0x10] sm:$0xff]
        %v446 = vld [vmem:[%s416 + $0x18] sm:$0xff]
        %v447 = vld [vmem:[%s416 + $0x20] sm:$0xff]
        %v448 = vld [vmem:[%s416 + $0x28] sm:$0xff]
        %v449 = vld [vmem:[%s416 + $0x30] sm:$0xff]
        %v450 = vld [vmem:[%s416 + $0x38] sm:$0xff]
        %v451 = vld [vmem:[%s416 + $0x40] sm:$0xff]
        %v452 = vld [vmem:[%s416 + $0x48] sm:$0xff]
        %v453 = vld [vmem:[%s416 + $0x50] sm:$0xff]
        %v454 = vld [vmem:[%s416 + $0x58] sm:$0xff]
        %v455 = vld [vmem:[%s416 + $0x60] sm:$0xff]
        %v456 = vld [vmem:[%s416 + $0x68] sm:$0xff]
        %v457 = vld [vmem:[%s416 + $0x70] sm:$0xff]
        %v458 = vld [vmem:[%s416 + $0x78] sm:$0xff]
        %v459 = vpack.c.bf16 %v444, %v443
        %v460 = vpack.c.bf16 %v446, %v445
        %v461 = vpack.c.bf16 %v448, %v447
        %v462 = vpack.c.bf16 %v450, %v449
        %v463 = vpack.c.bf16 %v452, %v451
        %v464 = vpack.c.bf16 %v454, %v453
        %v465 = vpack.c.bf16 %v456, %v455
        %v466 = vpack.c.bf16 %v458, %v457
        %v467 = vld [vmem:[%s7] sm:$0xff]
        %v468 = vld [vmem:[%s7 + $0x8] sm:$0xff]
        %v469 = vld [vmem:[%s2] sm:$0xff]
        %v470 = vld [vmem:[%s2 + $0x8] sm:$0xff]
        %v471 = vld [vmem:[%s2 + $0x10] sm:$0xff]
        %v472 = vld [vmem:[%s2 + $0x18] sm:$0xff]
        %v473 = vld [vmem:[%s2 + $0x20] sm:$0xff]
        %v474 = vld [vmem:[%s2 + $0x28] sm:$0xff]
        %v475 = vld [vmem:[%s2 + $0x30] sm:$0xff]
        %v476 = vld [vmem:[%s2 + $0x38] sm:$0xff]
        %v477 = vld [vmem:[%s2 + $0x40] sm:$0xff]
        %v478 = vld [vmem:[%s2 + $0x48] sm:$0xff]
        %v479 = vld [vmem:[%s2 + $0x50] sm:$0xff]
        %v480 = vld [vmem:[%s2 + $0x58] sm:$0xff]
        %v481 = vld [vmem:[%s2 + $0x60] sm:$0xff]
        %v482 = vld [vmem:[%s2 + $0x68] sm:$0xff]
        %v483 = vld [vmem:[%s2 + $0x70] sm:$0xff]
        %v484 = vld [vmem:[%s2 + $0x78] sm:$0xff]
        %v485 = vld [vmem:[%s2 + $0x80] sm:$0xff]
        %v486 = vld [vmem:[%s2 + $0x88] sm:$0xff]
        %v487 = vld [vmem:[%s2 + $0x90] sm:$0xff]
        %v488 = vld [vmem:[%s2 + $0x98] sm:$0xff]
        %v489 = vld [vmem:[%s2 + $0xa0] sm:$0xff]
        %v490 = vld [vmem:[%s2 + $0xa8] sm:$0xff]
        %v491 = vld [vmem:[%s2 + $0xb0] sm:$0xff]
        %v492 = vld [vmem:[%s2 + $0xb8] sm:$0xff]
        %v493 = vld [vmem:[%s2 + $0xc0] sm:$0xff]
        %v494 = vld [vmem:[%s2 + $0xc8] sm:$0xff]
        %v495 = vld [vmem:[%s2 + $0xd0] sm:$0xff]
        %v496 = vld [vmem:[%s2 + $0xd8] sm:$0xff]
        %v497 = vld [vmem:[%s2 + $0xe0] sm:$0xff]
        %v498 = vld [vmem:[%s2 + $0xe8] sm:$0xff]
        %v499 = vld [vmem:[%s2 + $0xf0] sm:$0xff]
        %v500 = vld [vmem:[%s2 + $0xf8] sm:$0xff]
        %v503 = vlaneseq
        %v504 = vshrl.u32 %v503, 7
        %v505 = vsub.s32 0, %v504
        %v506 = vrot.slane %v467, %v505
        %v507 = vlaneseq
        %v508 = vshrl.u32 %v507, 7
        %v509 = vsub.s32 1, %v508
        %v510 = vrot.slane %v467, %v509
        %v511 = vlaneseq
        %v512 = vshrl.u32 %v511, 7
        %v513 = vsub.s32 2, %v512
        %v514 = vrot.slane %v467, %v513
        %v515 = vlaneseq
        %v516 = vshrl.u32 %v515, 7
        %v517 = vsub.s32 3, %v516
        %v518 = vrot.slane %v467, %v517
        %v519 = vlaneseq
        %v520 = vshrl.u32 %v519, 7
        %v521 = vsub.s32 4, %v520
        %v522 = vrot.slane %v467, %v521
        %v523 = vlaneseq
        %v524 = vshrl.u32 %v523, 7
        %v525 = vsub.s32 5, %v524
        %v526 = vrot.slane %v467, %v525
        %v527 = vlaneseq
        %v528 = vshrl.u32 %v527, 7
        %v529 = vsub.s32 6, %v528
        %v530 = vrot.slane %v467, %v529
        %v531 = vlaneseq
        %v532 = vshrl.u32 %v531, 7
        %v533 = vsub.s32 7, %v532
        %v534 = vrot.slane %v467, %v533
        %v535 = vlaneseq
        %v536 = vshrl.u32 %v535, 7
        %v537 = vsub.s32 0, %v536
        %v538 = vrot.slane %v468, %v537
        %v539 = vlaneseq
        %v540 = vshrl.u32 %v539, 7
        %v541 = vsub.s32 1, %v540
        %v542 = vrot.slane %v468, %v541
        %v543 = vlaneseq
        %v544 = vshrl.u32 %v543, 7
        %v545 = vsub.s32 2, %v544
        %v546 = vrot.slane %v468, %v545
        %v547 = vlaneseq
        %v548 = vshrl.u32 %v547, 7
        %v549 = vsub.s32 3, %v548
        %v550 = vrot.slane %v468, %v549
        %v551 = vlaneseq
        %v552 = vshrl.u32 %v551, 7
        %v553 = vsub.s32 4, %v552
        %v554 = vrot.slane %v468, %v553
        %v555 = vlaneseq
        %v556 = vshrl.u32 %v555, 7
        %v557 = vsub.s32 5, %v556
        %v558 = vrot.slane %v468, %v557
        %v559 = vlaneseq
        %v560 = vshrl.u32 %v559, 7
        %v561 = vsub.s32 6, %v560
        %v562 = vrot.slane %v468, %v561
        %v563 = vlaneseq
        %v564 = vshrl.u32 %v563, 7
        %v565 = vsub.s32 7, %v564
        %v566 = vrot.slane %v468, %v565
        %v615 = vunpack.c.l.b16 %v469
        %v616 = vunpack.c.h.b16 %v469
        %v617 = vunpack.c.l.b16 %v470
        %v618 = vunpack.c.h.b16 %v470
        %v619 = vunpack.c.l.b16 %v471
        %v620 = vunpack.c.h.b16 %v471
        %v621 = vunpack.c.l.b16 %v472
        %v622 = vunpack.c.h.b16 %v472
        %v623 = vunpack.c.l.b16 %v473
        %v624 = vunpack.c.h.b16 %v473
        %v625 = vunpack.c.l.b16 %v474
        %v626 = vunpack.c.h.b16 %v474
        %v627 = vunpack.c.l.b16 %v475
        %v628 = vunpack.c.h.b16 %v475
        %v629 = vunpack.c.l.b16 %v476
        %v630 = vunpack.c.h.b16 %v476
        %v631 = vunpack.c.l.b16 %v477
        %v632 = vunpack.c.h.b16 %v477
        %v633 = vunpack.c.l.b16 %v478
        %v634 = vunpack.c.h.b16 %v478
        %v635 = vunpack.c.l.b16 %v479
        %v636 = vunpack.c.h.b16 %v479
        %v637 = vunpack.c.l.b16 %v480
        %v638 = vunpack.c.h.b16 %v480
        %v639 = vunpack.c.l.b16 %v481
        %v640 = vunpack.c.h.b16 %v481
        %v641 = vunpack.c.l.b16 %v482
        %v642 = vunpack.c.h.b16 %v482
        %v643 = vunpack.c.l.b16 %v483
        %v644 = vunpack.c.h.b16 %v483
        %v645 = vunpack.c.l.b16 %v484
        %v646 = vunpack.c.h.b16 %v484
        %v647 = vunpack.c.l.b16 %v485
        %v648 = vunpack.c.h.b16 %v485
        %v649 = vunpack.c.l.b16 %v486
        %v650 = vunpack.c.h.b16 %v486
        %v651 = vunpack.c.l.b16 %v487
        %v652 = vunpack.c.h.b16 %v487
        %v653 = vunpack.c.l.b16 %v488
        %v654 = vunpack.c.h.b16 %v488
        %v655 = vunpack.c.l.b16 %v489
        %v656 = vunpack.c.h.b16 %v489
        %v657 = vunpack.c.l.b16 %v490
        %v658 = vunpack.c.h.b16 %v490
        %v659 = vunpack.c.l.b16 %v491
        %v660 = vunpack.c.h.b16 %v491
        %v661 = vunpack.c.l.b16 %v492
        %v662 = vunpack.c.h.b16 %v492
        %v663 = vunpack.c.l.b16 %v493
        %v664 = vunpack.c.h.b16 %v493
        %v665 = vunpack.c.l.b16 %v494
        %v666 = vunpack.c.h.b16 %v494
        %v667 = vunpack.c.l.b16 %v495
        %v668 = vunpack.c.h.b16 %v495
        %v669 = vunpack.c.l.b16 %v496
        %v670 = vunpack.c.h.b16 %v496
        %v671 = vunpack.c.l.b16 %v497
        %v672 = vunpack.c.h.b16 %v497
        %v673 = vunpack.c.l.b16 %v498
        %v674 = vunpack.c.h.b16 %v498
        %v675 = vunpack.c.l.b16 %v499
        %v676 = vunpack.c.h.b16 %v499
        %v677 = vunpack.c.l.b16 %v500
        %v678 = vunpack.c.h.b16 %v500
        %v679 = vpack.c.b16 %v631, %v615
        %v680 = vpack.c.b16 %v632, %v616
        %v681 = vpack.c.b16 %v633, %v617
        %v682 = vpack.c.b16 %v634, %v618
        %v683 = vpack.c.b16 %v635, %v619
        %v684 = vpack.c.b16 %v636, %v620
        %v685 = vpack.c.b16 %v637, %v621
        %v686 = vpack.c.b16 %v638, %v622
        %v687 = vpack.c.b16 %v639, %v623
        %v688 = vpack.c.b16 %v640, %v624
        %v689 = vpack.c.b16 %v641, %v625
        %v690 = vpack.c.b16 %v642, %v626
        %v691 = vpack.c.b16 %v643, %v627
        %v692 = vpack.c.b16 %v644, %v628
        %v693 = vpack.c.b16 %v645, %v629
        %v694 = vpack.c.b16 %v646, %v630
        %v695 = vpack.c.b16 %v663, %v647
        %v696 = vpack.c.b16 %v664, %v648
        %v697 = vpack.c.b16 %v665, %v649
        %v698 = vpack.c.b16 %v666, %v650
        %v699 = vpack.c.b16 %v667, %v651
        %v700 = vpack.c.b16 %v668, %v652
        %v701 = vpack.c.b16 %v669, %v653
        %v702 = vpack.c.b16 %v670, %v654
        %v703 = vpack.c.b16 %v671, %v655
        %v704 = vpack.c.b16 %v672, %v656
        %v705 = vpack.c.b16 %v673, %v657
        %v706 = vpack.c.b16 %v674, %v658
        %v707 = vpack.c.b16 %v675, %v659
        %v708 = vpack.c.b16 %v676, %v660
        %v709 = vpack.c.b16 %v677, %v661
        %v710 = vpack.c.b16 %v678, %v662
        %vm743 = vcmask 261120
        %v745 = vsel %vm743, %v459, 0
        %v748 = vsel %vm743, %v460, 0
        %v751 = vsel %vm743, %v461, 0
        %v754 = vsel %vm743, %v462, 0
        %v757 = vsel %vm743, %v463, 0
        %v760 = vsel %vm743, %v464, 0
        %v763 = vsel %vm743, %v465, 0
        %v766 = vsel %vm743, %v466, 0
        %768 = vmatprep.subr.bf16.mxu0 0
        %769 = vmatpush1.bf16.msra.mxu0 0
        %770 = vmatprep.subr.bf16.mxu0 0
        %771 = vmatpush1.bf16.msra.mxu0 0
        %772 = vmatprep.subr.bf16.mxu0 0
        %773 = vmatpush1.bf16.msra.mxu0 0
        %774 = vmatprep.subr.bf16.mxu0 0
        %775 = vmatpush1.bf16.msra.mxu0 0
        %776 = vmatprep.subr.bf16.mxu0 0
        %777 = vmatpush1.bf16.msra.mxu0 0
        %778 = vmatprep.subr.bf16.mxu0 0
        %779 = vmatpush1.bf16.msra.mxu0 0
        %780 = vmatprep.subr.bf16.mxu0 %v696
        %781 = vmatpush1.bf16.msra.mxu0 %v695
        %782 = vmatprep.subr.bf16.mxu0 %v680
        %783 = vmatpush1.bf16.msra.mxu0 %v679
        %784 = vmatprep.subr.bf16.mxu0 0
        %785 = vmatpush2.bf16.msra.mxu0 0
        %786 = vmatprep.subr.bf16.mxu0 0
        %787 = vmatpush2.bf16.msra.mxu0 0
        %788 = vmatprep.subr.bf16.mxu0 0
        %789 = vmatpush2.bf16.msra.mxu0 0
        %790 = vmatprep.subr.bf16.mxu0 0
        %791 = vmatpush2.bf16.msra.mxu0 0
        %792 = vmatprep.subr.bf16.mxu0 0
        %793 = vmatpush2.bf16.msra.mxu0 0
        %794 = vmatprep.subr.bf16.mxu0 0
        %795 = vmatpush2.bf16.msra.mxu0 0
        %796 = vmatprep.subr.bf16.mxu0 0
        %797 = vmatpush2.bf16.msra.mxu0 0
        %798 = vmatprep.subr.bf16.mxu0 0
        %799 = vmatpush2.bf16.msra.mxu0 0
        %800 = vmatprep.mubr.bf16.mxu0 0
        %801 = vmatmul.mubr.bf16.gmra.mxu0 %v745
        %v802 = vpop.f32.mrf.mxu0
        %v803 = vadd.f32 %v506, %v802
        %v804 = vpop.f32.mrf.mxu0
        %v805 = vadd.f32 %v510, %v804
        %v806 = vpop.f32.mrf.mxu0
        %v807 = vadd.f32 %v506, %v806
        %v808 = vpop.f32.mrf.mxu0
        %v809 = vadd.f32 %v510, %v808
        %810 = vmatprep.mubr.bf16.mxu0 0
        %811 = vmatmul.mubr.bf16.gmra.mxu0 %v748
        %v812 = vpop.f32.mrf.mxu0
        %v813 = vadd.f32 %v506, %v812
        %v814 = vpop.f32.mrf.mxu0
        %v815 = vadd.f32 %v510, %v814
        %v816 = vpop.f32.mrf.mxu0
        %v817 = vadd.f32 %v506, %v816
        %v818 = vpop.f32.mrf.mxu0
        %v819 = vadd.f32 %v510, %v818
        %820 = vmatprep.mubr.bf16.mxu0 0
        %821 = vmatmul.mubr.bf16.gmra.mxu0 %v751
        %v822 = vpop.f32.mrf.mxu0
        %v823 = vadd.f32 %v506, %v822
        %v824 = vpop.f32.mrf.mxu0
        %v825 = vadd.f32 %v510, %v824
        %v826 = vpop.f32.mrf.mxu0
        %v827 = vadd.f32 %v506, %v826
        %v828 = vpop.f32.mrf.mxu0
        %v829 = vadd.f32 %v510, %v828
        %830 = vmatprep.mubr.bf16.mxu0 0
        %831 = vmatmul.mubr.bf16.gmra.mxu0 %v754
        %v832 = vpop.f32.mrf.mxu0
        %v833 = vadd.f32 %v506, %v832
        %v834 = vpop.f32.mrf.mxu0
        %v835 = vadd.f32 %v510, %v834
        %v836 = vpop.f32.mrf.mxu0
        %v837 = vadd.f32 %v506, %v836
        %v838 = vpop.f32.mrf.mxu0
        %v839 = vadd.f32 %v510, %v838
        %840 = vmatprep.mubr.bf16.mxu0 0
        %841 = vmatmul.mubr.bf16.gmra.mxu0 %v757
        %v842 = vpop.f32.mrf.mxu0
        %v843 = vadd.f32 %v506, %v842
        %v844 = vpop.f32.mrf.mxu0
        %v845 = vadd.f32 %v510, %v844
        %v846 = vpop.f32.mrf.mxu0
        %v847 = vadd.f32 %v506, %v846
        %v848 = vpop.f32.mrf.mxu0
        %v849 = vadd.f32 %v510, %v848
        %850 = vmatprep.mubr.bf16.mxu0 0
        %851 = vmatmul.mubr.bf16.gmra.mxu0 %v760
        %v852 = vpop.f32.mrf.mxu0
        %v853 = vadd.f32 %v506, %v852
        %v854 = vpop.f32.mrf.mxu0
        %v855 = vadd.f32 %v510, %v854
        %v856 = vpop.f32.mrf.mxu0
        %v857 = vadd.f32 %v506, %v856
        %v858 = vpop.f32.mrf.mxu0
        %v859 = vadd.f32 %v510, %v858
        %860 = vmatprep.mubr.bf16.mxu0 0
        %861 = vmatmul.mubr.bf16.gmra.mxu0 %v763
        %v862 = vpop.f32.mrf.mxu0
        %v863 = vadd.f32 %v506, %v862
        %v864 = vpop.f32.mrf.mxu0
        %v865 = vadd.f32 %v510, %v864
        %v866 = vpop.f32.mrf.mxu0
        %v867 = vadd.f32 %v506, %v866
        %v868 = vpop.f32.mrf.mxu0
        %v869 = vadd.f32 %v510, %v868
        %870 = vmatprep.mubr.bf16.mxu0 0
        %871 = vmatmul.mubr.bf16.gmra.mxu0 %v766
        %v872 = vpop.f32.mrf.mxu0
        %v873 = vadd.f32 %v506, %v872
        %v874 = vpop.f32.mrf.mxu0
        %v875 = vadd.f32 %v510, %v874
        %v876 = vpop.f32.mrf.mxu0
        %v877 = vadd.f32 %v506, %v876
        %v878 = vpop.f32.mrf.mxu0
        %v879 = vadd.f32 %v510, %v878
        %880 = vdwg.mxu0
        %881 = vmatprep.subr.bf16.mxu0 0
        %882 = vmatpush1.bf16.msra.mxu0 0
        %883 = vmatprep.subr.bf16.mxu0 0
        %884 = vmatpush1.bf16.msra.mxu0 0
        %885 = vmatprep.subr.bf16.mxu0 0
        %886 = vmatpush1.bf16.msra.mxu0 0
        %887 = vmatprep.subr.bf16.mxu0 0
        %888 = vmatpush1.bf16.msra.mxu0 0
        %889 = vmatprep.subr.bf16.mxu0 0
        %890 = vmatpush1.bf16.msra.mxu0 0
        %891 = vmatprep.subr.bf16.mxu0 0
        %892 = vmatpush1.bf16.msra.mxu0 0
        %893 = vmatprep.subr.bf16.mxu0 %v698
        %894 = vmatpush1.bf16.msra.mxu0 %v697
        %895 = vmatprep.subr.bf16.mxu0 %v682
        %896 = vmatpush1.bf16.msra.mxu0 %v681
        %897 = vmatprep.subr.bf16.mxu0 0
        %898 = vmatpush2.bf16.msra.mxu0 0
        %899 = vmatprep.subr.bf16.mxu0 0
        %900 = vmatpush2.bf16.msra.mxu0 0
        %901 = vmatprep.subr.bf16.mxu0 0
        %902 = vmatpush2.bf16.msra.mxu0 0
        %903 = vmatprep.subr.bf16.mxu0 0
        %904 = vmatpush2.bf16.msra.mxu0 0
        %905 = vmatprep.subr.bf16.mxu0 0
        %906 = vmatpush2.bf16.msra.mxu0 0
        %907 = vmatprep.subr.bf16.mxu0 0
        %908 = vmatpush2.bf16.msra.mxu0 0
        %909 = vmatprep.subr.bf16.mxu0 0
        %910 = vmatpush2.bf16.msra.mxu0 0
        %911 = vmatprep.subr.bf16.mxu0 0
        %912 = vmatpush2.bf16.msra.mxu0 0
        %913 = vmatprep.mubr.bf16.mxu0 0
        %914 = vmatmul.mubr.bf16.gmra.mxu0 %v745
        %v915 = vpop.f32.mrf.mxu0
        %v916 = vadd.f32 %v514, %v915
        %v917 = vpop.f32.mrf.mxu0
        %v918 = vadd.f32 %v518, %v917
        %v919 = vpop.f32.mrf.mxu0
        %v920 = vadd.f32 %v514, %v919
        %v921 = vpop.f32.mrf.mxu0
        %v922 = vadd.f32 %v518, %v921
        %923 = vmatprep.mubr.bf16.mxu0 0
        %924 = vmatmul.mubr.bf16.gmra.mxu0 %v748
        %v925 = vpop.f32.mrf.mxu0
        %v926 = vadd.f32 %v514, %v925
        %v927 = vpop.f32.mrf.mxu0
        %v928 = vadd.f32 %v518, %v927
        %v929 = vpop.f32.mrf.mxu0
        %v930 = vadd.f32 %v514, %v929
        %v931 = vpop.f32.mrf.mxu0
        %v932 = vadd.f32 %v518, %v931
        %933 = vmatprep.mubr.bf16.mxu0 0
        %934 = vmatmul.mubr.bf16.gmra.mxu0 %v751
        %v935 = vpop.f32.mrf.mxu0
        %v936 = vadd.f32 %v514, %v935
        %v937 = vpop.f32.mrf.mxu0
        %v938 = vadd.f32 %v518, %v937
        %v939 = vpop.f32.mrf.mxu0
        %v940 = vadd.f32 %v514, %v939
        %v941 = vpop.f32.mrf.mxu0
        %v942 = vadd.f32 %v518, %v941
        %943 = vmatprep.mubr.bf16.mxu0 0
        %944 = vmatmul.mubr.bf16.gmra.mxu0 %v754
        %v945 = vpop.f32.mrf.mxu0
        %v946 = vadd.f32 %v514, %v945
        %v947 = vpop.f32.mrf.mxu0
        %v948 = vadd.f32 %v518, %v947
        %v949 = vpop.f32.mrf.mxu0
        %v950 = vadd.f32 %v514, %v949
        %v951 = vpop.f32.mrf.mxu0
        %v952 = vadd.f32 %v518, %v951
        %953 = vmatprep.mubr.bf16.mxu0 0
        %954 = vmatmul.mubr.bf16.gmra.mxu0 %v757
        %v955 = vpop.f32.mrf.mxu0
        %v956 = vadd.f32 %v514, %v955
        %v957 = vpop.f32.mrf.mxu0
        %v958 = vadd.f32 %v518, %v957
        %v959 = vpop.f32.mrf.mxu0
        %v960 = vadd.f32 %v514, %v959
        %v961 = vpop.f32.mrf.mxu0
        %v962 = vadd.f32 %v518, %v961
        %963 = vmatprep.mubr.bf16.mxu0 0
        %964 = vmatmul.mubr.bf16.gmra.mxu0 %v760
        %v965 = vpop.f32.mrf.mxu0
        %v966 = vadd.f32 %v514, %v965
        %v967 = vpop.f32.mrf.mxu0
        %v968 = vadd.f32 %v518, %v967
        %v969 = vpop.f32.mrf.mxu0
        %v970 = vadd.f32 %v514, %v969
        %v971 = vpop.f32.mrf.mxu0
        %v972 = vadd.f32 %v518, %v971
        %973 = vmatprep.mubr.bf16.mxu0 0
        %974 = vmatmul.mubr.bf16.gmra.mxu0 %v763
        %v975 = vpop.f32.mrf.mxu0
        %v976 = vadd.f32 %v514, %v975
        %v977 = vpop.f32.mrf.mxu0
        %v978 = vadd.f32 %v518, %v977
        %v979 = vpop.f32.mrf.mxu0
        %v980 = vadd.f32 %v514, %v979
        %v981 = vpop.f32.mrf.mxu0
        %v982 = vadd.f32 %v518, %v981
        %983 = vmatprep.mubr.bf16.mxu0 0
        %984 = vmatmul.mubr.bf16.gmra.mxu0 %v766
        %v985 = vpop.f32.mrf.mxu0
        %v986 = vadd.f32 %v514, %v985
        %v987 = vpop.f32.mrf.mxu0
        %v988 = vadd.f32 %v518, %v987
        %v989 = vpop.f32.mrf.mxu0
        %v990 = vadd.f32 %v514, %v989
        %v991 = vpop.f32.mrf.mxu0
        %v992 = vadd.f32 %v518, %v991
        %993 = vdwg.mxu0
        %994 = vmatprep.subr.bf16.mxu0 0
        %995 = vmatpush1.bf16.msra.mxu0 0
        %996 = vmatprep.subr.bf16.mxu0 0
        %997 = vmatpush1.bf16.msra.mxu0 0
        %998 = vmatprep.subr.bf16.mxu0 0
        %999 = vmatpush1.bf16.msra.mxu0 0
        %1000 = vmatprep.subr.bf16.mxu0 0
        %1001 = vmatpush1.bf16.msra.mxu0 0
        %1002 = vmatprep.subr.bf16.mxu0 0
        %1003 = vmatpush1.bf16.msra.mxu0 0
        %1004 = vmatprep.subr.bf16.mxu0 0
        %1005 = vmatpush1.bf16.msra.mxu0 0
        %1006 = vmatprep.subr.bf16.mxu0 %v700
        %1007 = vmatpush1.bf16.msra.mxu0 %v699
        %1008 = vmatprep.subr.bf16.mxu0 %v684
        %1009 = vmatpush1.bf16.msra.mxu0 %v683
        %1010 = vmatprep.subr.bf16.mxu0 0
        %1011 = vmatpush2.bf16.msra.mxu0 0
        %1012 = vmatprep.subr.bf16.mxu0 0
        %1013 = vmatpush2.bf16.msra.mxu0 0
        %1014 = vmatprep.subr.bf16.mxu0 0
        %1015 = vmatpush2.bf16.msra.mxu0 0
        %1016 = vmatprep.subr.bf16.mxu0 0
        %1017 = vmatpush2.bf16.msra.mxu0 0
        %1018 = vmatprep.subr.bf16.mxu0 0
        %1019 = vmatpush2.bf16.msra.mxu0 0
        %1020 = vmatprep.subr.bf16.mxu0 0
        %1021 = vmatpush2.bf16.msra.mxu0 0
        %1022 = vmatprep.subr.bf16.mxu0 0
        %1023 = vmatpush2.bf16.msra.mxu0 0
        %1024 = vmatprep.subr.bf16.mxu0 0
        %1025 = vmatpush2.bf16.msra.mxu0 0
        %1026 = vmatprep.mubr.bf16.mxu0 0
        %1027 = vmatmul.mubr.bf16.gmra.mxu0 %v745
        %v1028 = vpop.f32.mrf.mxu0
        %v1029 = vadd.f32 %v522, %v1028
        %v1030 = vpop.f32.mrf.mxu0
        %v1031 = vadd.f32 %v526, %v1030
        %v1032 = vpop.f32.mrf.mxu0
        %v1033 = vadd.f32 %v522, %v1032
        %v1034 = vpop.f32.mrf.mxu0
        %v1035 = vadd.f32 %v526, %v1034
        %1036 = vmatprep.mubr.bf16.mxu0 0
        %1037 = vmatmul.mubr.bf16.gmra.mxu0 %v748
        %v1038 = vpop.f32.mrf.mxu0
        %v1039 = vadd.f32 %v522, %v1038
        %v1040 = vpop.f32.mrf.mxu0
        %v1041 = vadd.f32 %v526, %v1040
        %v1042 = vpop.f32.mrf.mxu0
        %v1043 = vadd.f32 %v522, %v1042
        %v1044 = vpop.f32.mrf.mxu0
        %v1045 = vadd.f32 %v526, %v1044
        %1046 = vmatprep.mubr.bf16.mxu0 0
        %1047 = vmatmul.mubr.bf16.gmra.mxu0 %v751
        %v1048 = vpop.f32.mrf.mxu0
        %v1049 = vadd.f32 %v522, %v1048
        %v1050 = vpop.f32.mrf.mxu0
        %v1051 = vadd.f32 %v526, %v1050
        %v1052 = vpop.f32.mrf.mxu0
        %v1053 = vadd.f32 %v522, %v1052
        %v1054 = vpop.f32.mrf.mxu0
        %v1055 = vadd.f32 %v526, %v1054
        %1056 = vmatprep.mubr.bf16.mxu0 0
        %1057 = vmatmul.mubr.bf16.gmra.mxu0 %v754
        %v1058 = vpop.f32.mrf.mxu0
        %v1059 = vadd.f32 %v522, %v1058
        %v1060 = vpop.f32.mrf.mxu0
        %v1061 = vadd.f32 %v526, %v1060
        %v1062 = vpop.f32.mrf.mxu0
        %v1063 = vadd.f32 %v522, %v1062
        %v1064 = vpop.f32.mrf.mxu0
        %v1065 = vadd.f32 %v526, %v1064
        %1066 = vmatprep.mubr.bf16.mxu0 0
        %1067 = vmatmul.mubr.bf16.gmra.mxu0 %v757
        %v1068 = vpop.f32.mrf.mxu0
        %v1069 = vadd.f32 %v522, %v1068
        %v1070 = vpop.f32.mrf.mxu0
        %v1071 = vadd.f32 %v526, %v1070
        %v1072 = vpop.f32.mrf.mxu0
        %v1073 = vadd.f32 %v522, %v1072
        %v1074 = vpop.f32.mrf.mxu0
        %v1075 = vadd.f32 %v526, %v1074
        %1076 = vmatprep.mubr.bf16.mxu0 0
        %1077 = vmatmul.mubr.bf16.gmra.mxu0 %v760
        %v1078 = vpop.f32.mrf.mxu0
        %v1079 = vadd.f32 %v522, %v1078
        %v1080 = vpop.f32.mrf.mxu0
        %v1081 = vadd.f32 %v526, %v1080
        %v1082 = vpop.f32.mrf.mxu0
        %v1083 = vadd.f32 %v522, %v1082
        %v1084 = vpop.f32.mrf.mxu0
        %v1085 = vadd.f32 %v526, %v1084
        %1086 = vmatprep.mubr.bf16.mxu0 0
        %1087 = vmatmul.mubr.bf16.gmra.mxu0 %v763
        %v1088 = vpop.f32.mrf.mxu0
        %v1089 = vadd.f32 %v522, %v1088
        %v1090 = vpop.f32.mrf.mxu0
        %v1091 = vadd.f32 %v526, %v1090
        %v1092 = vpop.f32.mrf.mxu0
        %v1093 = vadd.f32 %v522, %v1092
        %v1094 = vpop.f32.mrf.mxu0
        %v1095 = vadd.f32 %v526, %v1094
        %1096 = vmatprep.mubr.bf16.mxu0 0
        %1097 = vmatmul.mubr.bf16.gmra.mxu0 %v766
        %v1098 = vpop.f32.mrf.mxu0
        %v1099 = vadd.f32 %v522, %v1098
        %v1100 = vpop.f32.mrf.mxu0
        %v1101 = vadd.f32 %v526, %v1100
        %v1102 = vpop.f32.mrf.mxu0
        %v1103 = vadd.f32 %v522, %v1102
        %v1104 = vpop.f32.mrf.mxu0
        %v1105 = vadd.f32 %v526, %v1104
        %1106 = vdwg.mxu0
        %1107 = vmatprep.subr.bf16.mxu0 0
        %1108 = vmatpush1.bf16.msra.mxu0 0
        %1109 = vmatprep.subr.bf16.mxu0 0
        %1110 = vmatpush1.bf16.msra.mxu0 0
        %1111 = vmatprep.subr.bf16.mxu0 0
        %1112 = vmatpush1.bf16.msra.mxu0 0
        %1113 = vmatprep.subr.bf16.mxu0 0
        %1114 = vmatpush1.bf16.msra.mxu0 0
        %1115 = vmatprep.subr.bf16.mxu0 0
        %1116 = vmatpush1.bf16.msra.mxu0 0
        %1117 = vmatprep.subr.bf16.mxu0 0
        %1118 = vmatpush1.bf16.msra.mxu0 0
        %1119 = vmatprep.subr.bf16.mxu0 %v702
        %1120 = vmatpush1.bf16.msra.mxu0 %v701
        %1121 = vmatprep.subr.bf16.mxu0 %v686
        %1122 = vmatpush1.bf16.msra.mxu0 %v685
        %1123 = vmatprep.subr.bf16.mxu0 0
        %1124 = vmatpush2.bf16.msra.mxu0 0
        %1125 = vmatprep.subr.bf16.mxu0 0
        %1126 = vmatpush2.bf16.msra.mxu0 0
        %1127 = vmatprep.subr.bf16.mxu0 0
        %1128 = vmatpush2.bf16.msra.mxu0 0
        %1129 = vmatprep.subr.bf16.mxu0 0
        %1130 = vmatpush2.bf16.msra.mxu0 0
        %1131 = vmatprep.subr.bf16.mxu0 0
        %1132 = vmatpush2.bf16.msra.mxu0 0
        %1133 = vmatprep.subr.bf16.mxu0 0
        %1134 = vmatpush2.bf16.msra.mxu0 0
        %1135 = vmatprep.subr.bf16.mxu0 0
        %1136 = vmatpush2.bf16.msra.mxu0 0
        %1137 = vmatprep.subr.bf16.mxu0 0
        %1138 = vmatpush2.bf16.msra.mxu0 0
        %1139 = vmatprep.mubr.bf16.mxu0 0
        %1140 = vmatmul.mubr.bf16.gmra.mxu0 %v745
        %v1141 = vpop.f32.mrf.mxu0
        %v1142 = vadd.f32 %v530, %v1141
        %v1143 = vpop.f32.mrf.mxu0
        %v1144 = vadd.f32 %v534, %v1143
        %v1145 = vpop.f32.mrf.mxu0
        %v1146 = vadd.f32 %v530, %v1145
        %v1147 = vpop.f32.mrf.mxu0
        %v1148 = vadd.f32 %v534, %v1147
        %1149 = vmatprep.mubr.bf16.mxu0 0
        %1150 = vmatmul.mubr.bf16.gmra.mxu0 %v748
        %v1151 = vpop.f32.mrf.mxu0
        %v1152 = vadd.f32 %v530, %v1151
        %v1153 = vpop.f32.mrf.mxu0
        %v1154 = vadd.f32 %v534, %v1153
        %v1155 = vpop.f32.mrf.mxu0
        %v1156 = vadd.f32 %v530, %v1155
        %v1157 = vpop.f32.mrf.mxu0
        %v1158 = vadd.f32 %v534, %v1157
        %1159 = vmatprep.mubr.bf16.mxu0 0
        %1160 = vmatmul.mubr.bf16.gmra.mxu0 %v751
        %v1161 = vpop.f32.mrf.mxu0
        %v1162 = vadd.f32 %v530, %v1161
        %v1163 = vpop.f32.mrf.mxu0
        %v1164 = vadd.f32 %v534, %v1163
        %v1165 = vpop.f32.mrf.mxu0
        %v1166 = vadd.f32 %v530, %v1165
        %v1167 = vpop.f32.mrf.mxu0
        %v1168 = vadd.f32 %v534, %v1167
        %1169 = vmatprep.mubr.bf16.mxu0 0
        %1170 = vmatmul.mubr.bf16.gmra.mxu0 %v754
        %v1171 = vpop.f32.mrf.mxu0
        %v1172 = vadd.f32 %v530, %v1171
        %v1173 = vpop.f32.mrf.mxu0
        %v1174 = vadd.f32 %v534, %v1173
        %v1175 = vpop.f32.mrf.mxu0
        %v1176 = vadd.f32 %v530, %v1175
        %v1177 = vpop.f32.mrf.mxu0
        %v1178 = vadd.f32 %v534, %v1177
        %1179 = vmatprep.mubr.bf16.mxu0 0
        %1180 = vmatmul.mubr.bf16.gmra.mxu0 %v757
        %v1181 = vpop.f32.mrf.mxu0
        %v1182 = vadd.f32 %v530, %v1181
        %v1183 = vpop.f32.mrf.mxu0
        %v1184 = vadd.f32 %v534, %v1183
        %v1185 = vpop.f32.mrf.mxu0
        %v1186 = vadd.f32 %v530, %v1185
        %v1187 = vpop.f32.mrf.mxu0
        %v1188 = vadd.f32 %v534, %v1187
        %1189 = vmatprep.mubr.bf16.mxu0 0
        %1190 = vmatmul.mubr.bf16.gmra.mxu0 %v760
        %v1191 = vpop.f32.mrf.mxu0
        %v1192 = vadd.f32 %v530, %v1191
        %v1193 = vpop.f32.mrf.mxu0
        %v1194 = vadd.f32 %v534, %v1193
        %v1195 = vpop.f32.mrf.mxu0
        %v1196 = vadd.f32 %v530, %v1195
        %v1197 = vpop.f32.mrf.mxu0
        %v1198 = vadd.f32 %v534, %v1197
        %1199 = vmatprep.mubr.bf16.mxu0 0
        %1200 = vmatmul.mubr.bf16.gmra.mxu0 %v763
        %v1201 = vpop.f32.mrf.mxu0
        %v1202 = vadd.f32 %v530, %v1201
        %v1203 = vpop.f32.mrf.mxu0
        %v1204 = vadd.f32 %v534, %v1203
        %v1205 = vpop.f32.mrf.mxu0
        %v1206 = vadd.f32 %v530, %v1205
        %v1207 = vpop.f32.mrf.mxu0
        %v1208 = vadd.f32 %v534, %v1207
        %1209 = vmatprep.mubr.bf16.mxu0 0
        %1210 = vmatmul.mubr.bf16.gmra.mxu0 %v766
        %v1211 = vpop.f32.mrf.mxu0
        %v1212 = vadd.f32 %v530, %v1211
        %v1213 = vpop.f32.mrf.mxu0
        %v1214 = vadd.f32 %v534, %v1213
        %v1215 = vpop.f32.mrf.mxu0
        %v1216 = vadd.f32 %v530, %v1215
        %v1217 = vpop.f32.mrf.mxu0
        %v1218 = vadd.f32 %v534, %v1217
        %1219 = vdwg.mxu0
        %1220 = vmatprep.subr.bf16.mxu0 0
        %1221 = vmatpush1.bf16.msra.mxu0 0
        %1222 = vmatprep.subr.bf16.mxu0 0
        %1223 = vmatpush1.bf16.msra.mxu0 0
        %1224 = vmatprep.subr.bf16.mxu0 0
        %1225 = vmatpush1.bf16.msra.mxu0 0
        %1226 = vmatprep.subr.bf16.mxu0 0
        %1227 = vmatpush1.bf16.msra.mxu0 0
        %1228 = vmatprep.subr.bf16.mxu0 0
        %1229 = vmatpush1.bf16.msra.mxu0 0
        %1230 = vmatprep.subr.bf16.mxu0 0
        %1231 = vmatpush1.bf16.msra.mxu0 0
        %1232 = vmatprep.subr.bf16.mxu0 %v704
        %1233 = vmatpush1.bf16.msra.mxu0 %v703
        %1234 = vmatprep.subr.bf16.mxu0 %v688
        %1235 = vmatpush1.bf16.msra.mxu0 %v687
        %1236 = vmatprep.subr.bf16.mxu0 0
        %1237 = vmatpush2.bf16.msra.mxu0 0
        %1238 = vmatprep.subr.bf16.mxu0 0
        %1239 = vmatpush2.bf16.msra.mxu0 0
        %1240 = vmatprep.subr.bf16.mxu0 0
        %1241 = vmatpush2.bf16.msra.mxu0 0
        %1242 = vmatprep.subr.bf16.mxu0 0
        %1243 = vmatpush2.bf16.msra.mxu0 0
        %1244 = vmatprep.subr.bf16.mxu0 0
        %1245 = vmatpush2.bf16.msra.mxu0 0
        %1246 = vmatprep.subr.bf16.mxu0 0
        %1247 = vmatpush2.bf16.msra.mxu0 0
        %1248 = vmatprep.subr.bf16.mxu0 0
        %1249 = vmatpush2.bf16.msra.mxu0 0
        %1250 = vmatprep.subr.bf16.mxu0 0
        %1251 = vmatpush2.bf16.msra.mxu0 0
        %1252 = vmatprep.mubr.bf16.mxu0 0
        %1253 = vmatmul.mubr.bf16.gmra.mxu0 %v745
        %v1254 = vpop.f32.mrf.mxu0
        %v1255 = vadd.f32 %v538, %v1254
        %v1256 = vpop.f32.mrf.mxu0
        %v1257 = vadd.f32 %v542, %v1256
        %v1258 = vpop.f32.mrf.mxu0
        %v1259 = vadd.f32 %v538, %v1258
        %v1260 = vpop.f32.mrf.mxu0
        %v1261 = vadd.f32 %v542, %v1260
        %1262 = vmatprep.mubr.bf16.mxu0 0
        %1263 = vmatmul.mubr.bf16.gmra.mxu0 %v748
        %v1264 = vpop.f32.mrf.mxu0
        %v1265 = vadd.f32 %v538, %v1264
        %v1266 = vpop.f32.mrf.mxu0
        %v1267 = vadd.f32 %v542, %v1266
        %v1268 = vpop.f32.mrf.mxu0
        %v1269 = vadd.f32 %v538, %v1268
        %v1270 = vpop.f32.mrf.mxu0
        %v1271 = vadd.f32 %v542, %v1270
        %1272 = vmatprep.mubr.bf16.mxu0 0
        %1273 = vmatmul.mubr.bf16.gmra.mxu0 %v751
        %v1274 = vpop.f32.mrf.mxu0
        %v1275 = vadd.f32 %v538, %v1274
        %v1276 = vpop.f32.mrf.mxu0
        %v1277 = vadd.f32 %v542, %v1276
        %v1278 = vpop.f32.mrf.mxu0
        %v1279 = vadd.f32 %v538, %v1278
        %v1280 = vpop.f32.mrf.mxu0
        %v1281 = vadd.f32 %v542, %v1280
        %1282 = vmatprep.mubr.bf16.mxu0 0
        %1283 = vmatmul.mubr.bf16.gmra.mxu0 %v754
        %v1284 = vpop.f32.mrf.mxu0
        %v1285 = vadd.f32 %v538, %v1284
        %v1286 = vpop.f32.mrf.mxu0
        %v1287 = vadd.f32 %v542, %v1286
        %v1288 = vpop.f32.mrf.mxu0
        %v1289 = vadd.f32 %v538, %v1288
        %v1290 = vpop.f32.mrf.mxu0
        %v1291 = vadd.f32 %v542, %v1290
        %1292 = vmatprep.mubr.bf16.mxu0 0
        %1293 = vmatmul.mubr.bf16.gmra.mxu0 %v757
        %v1294 = vpop.f32.mrf.mxu0
        %v1295 = vadd.f32 %v538, %v1294
        %v1296 = vpop.f32.mrf.mxu0
        %v1297 = vadd.f32 %v542, %v1296
        %v1298 = vpop.f32.mrf.mxu0
        %v1299 = vadd.f32 %v538, %v1298
        %v1300 = vpop.f32.mrf.mxu0
        %v1301 = vadd.f32 %v542, %v1300
        %1302 = vmatprep.mubr.bf16.mxu0 0
        %1303 = vmatmul.mubr.bf16.gmra.mxu0 %v760
        %v1304 = vpop.f32.mrf.mxu0
        %v1305 = vadd.f32 %v538, %v1304
        %v1306 = vpop.f32.mrf.mxu0
        %v1307 = vadd.f32 %v542, %v1306
        %v1308 = vpop.f32.mrf.mxu0
        %v1309 = vadd.f32 %v538, %v1308
        %v1310 = vpop.f32.mrf.mxu0
        %v1311 = vadd.f32 %v542, %v1310
        %1312 = vmatprep.mubr.bf16.mxu0 0
        %1313 = vmatmul.mubr.bf16.gmra.mxu0 %v763
        %v1314 = vpop.f32.mrf.mxu0
        %v1315 = vadd.f32 %v538, %v1314
        %v1316 = vpop.f32.mrf.mxu0
        %v1317 = vadd.f32 %v542, %v1316
        %v1318 = vpop.f32.mrf.mxu0
        %v1319 = vadd.f32 %v538, %v1318
        %v1320 = vpop.f32.mrf.mxu0
        %v1321 = vadd.f32 %v542, %v1320
        %1322 = vmatprep.mubr.bf16.mxu0 0
        %1323 = vmatmul.mubr.bf16.gmra.mxu0 %v766
        %v1324 = vpop.f32.mrf.mxu0
        %v1325 = vadd.f32 %v538, %v1324
        %v1326 = vpop.f32.mrf.mxu0
        %v1327 = vadd.f32 %v542, %v1326
        %v1328 = vpop.f32.mrf.mxu0
        %v1329 = vadd.f32 %v538, %v1328
        %v1330 = vpop.f32.mrf.mxu0
        %v1331 = vadd.f32 %v542, %v1330
        %1332 = vdwg.mxu0
        %1333 = vmatprep.subr.bf16.mxu0 0
        %1334 = vmatpush1.bf16.msra.mxu0 0
        %1335 = vmatprep.subr.bf16.mxu0 0
        %1336 = vmatpush1.bf16.msra.mxu0 0
        %1337 = vmatprep.subr.bf16.mxu0 0
        %1338 = vmatpush1.bf16.msra.mxu0 0
        %1339 = vmatprep.subr.bf16.mxu0 0
        %1340 = vmatpush1.bf16.msra.mxu0 0
        %1341 = vmatprep.subr.bf16.mxu0 0
        %1342 = vmatpush1.bf16.msra.mxu0 0
        %1343 = vmatprep.subr.bf16.mxu0 0
        %1344 = vmatpush1.bf16.msra.mxu0 0
        %1345 = vmatprep.subr.bf16.mxu0 %v706
        %1346 = vmatpush1.bf16.msra.mxu0 %v705
        %1347 = vmatprep.subr.bf16.mxu0 %v690
        %1348 = vmatpush1.bf16.msra.mxu0 %v689
        %1349 = vmatprep.subr.bf16.mxu0 0
        %1350 = vmatpush2.bf16.msra.mxu0 0
        %1351 = vmatprep.subr.bf16.mxu0 0
        %1352 = vmatpush2.bf16.msra.mxu0 0
        %1353 = vmatprep.subr.bf16.mxu0 0
        %1354 = vmatpush2.bf16.msra.mxu0 0
        %1355 = vmatprep.subr.bf16.mxu0 0
        %1356 = vmatpush2.bf16.msra.mxu0 0
        %1357 = vmatprep.subr.bf16.mxu0 0
        %1358 = vmatpush2.bf16.msra.mxu0 0
        %1359 = vmatprep.subr.bf16.mxu0 0
        %1360 = vmatpush2.bf16.msra.mxu0 0
        %1361 = vmatprep.subr.bf16.mxu0 0
        %1362 = vmatpush2.bf16.msra.mxu0 0
        %1363 = vmatprep.subr.bf16.mxu0 0
        %1364 = vmatpush2.bf16.msra.mxu0 0
        %1365 = vmatprep.mubr.bf16.mxu0 0
        %1366 = vmatmul.mubr.bf16.gmra.mxu0 %v745
        %v1367 = vpop.f32.mrf.mxu0
        %v1368 = vadd.f32 %v546, %v1367
        %v1369 = vpop.f32.mrf.mxu0
        %v1370 = vadd.f32 %v550, %v1369
        %v1371 = vpop.f32.mrf.mxu0
        %v1372 = vadd.f32 %v546, %v1371
        %v1373 = vpop.f32.mrf.mxu0
        %v1374 = vadd.f32 %v550, %v1373
        %1375 = vmatprep.mubr.bf16.mxu0 0
        %1376 = vmatmul.mubr.bf16.gmra.mxu0 %v748
        %v1377 = vpop.f32.mrf.mxu0
        %v1378 = vadd.f32 %v546, %v1377
        %v1379 = vpop.f32.mrf.mxu0
        %v1380 = vadd.f32 %v550, %v1379
        %v1381 = vpop.f32.mrf.mxu0
        %v1382 = vadd.f32 %v546, %v1381
        %v1383 = vpop.f32.mrf.mxu0
        %v1384 = vadd.f32 %v550, %v1383
        %1385 = vmatprep.mubr.bf16.mxu0 0
        %1386 = vmatmul.mubr.bf16.gmra.mxu0 %v751
        %v1387 = vpop.f32.mrf.mxu0
        %v1388 = vadd.f32 %v546, %v1387
        %v1389 = vpop.f32.mrf.mxu0
        %v1390 = vadd.f32 %v550, %v1389
        %v1391 = vpop.f32.mrf.mxu0
        %v1392 = vadd.f32 %v546, %v1391
        %v1393 = vpop.f32.mrf.mxu0
        %v1394 = vadd.f32 %v550, %v1393
        %1395 = vmatprep.mubr.bf16.mxu0 0
        %1396 = vmatmul.mubr.bf16.gmra.mxu0 %v754
        %v1397 = vpop.f32.mrf.mxu0
        %v1398 = vadd.f32 %v546, %v1397
        %v1399 = vpop.f32.mrf.mxu0
        %v1400 = vadd.f32 %v550, %v1399
        %v1401 = vpop.f32.mrf.mxu0
        %v1402 = vadd.f32 %v546, %v1401
        %v1403 = vpop.f32.mrf.mxu0
        %v1404 = vadd.f32 %v550, %v1403
        %1405 = vmatprep.mubr.bf16.mxu0 0
        %1406 = vmatmul.mubr.bf16.gmra.mxu0 %v757
        %v1407 = vpop.f32.mrf.mxu0
        %v1408 = vadd.f32 %v546, %v1407
        %v1409 = vpop.f32.mrf.mxu0
        %v1410 = vadd.f32 %v550, %v1409
        %v1411 = vpop.f32.mrf.mxu0
        %v1412 = vadd.f32 %v546, %v1411
        %v1413 = vpop.f32.mrf.mxu0
        %v1414 = vadd.f32 %v550, %v1413
        %1415 = vmatprep.mubr.bf16.mxu0 0
        %1416 = vmatmul.mubr.bf16.gmra.mxu0 %v760
        %v1417 = vpop.f32.mrf.mxu0
        %v1418 = vadd.f32 %v546, %v1417
        %v1419 = vpop.f32.mrf.mxu0
        %v1420 = vadd.f32 %v550, %v1419
        %v1421 = vpop.f32.mrf.mxu0
        %v1422 = vadd.f32 %v546, %v1421
        %v1423 = vpop.f32.mrf.mxu0
        %v1424 = vadd.f32 %v550, %v1423
        %1425 = vmatprep.mubr.bf16.mxu0 0
        %1426 = vmatmul.mubr.bf16.gmra.mxu0 %v763
        %v1427 = vpop.f32.mrf.mxu0
        %v1428 = vadd.f32 %v546, %v1427
        %v1429 = vpop.f32.mrf.mxu0
        %v1430 = vadd.f32 %v550, %v1429
        %v1431 = vpop.f32.mrf.mxu0
        %v1432 = vadd.f32 %v546, %v1431
        %v1433 = vpop.f32.mrf.mxu0
        %v1434 = vadd.f32 %v550, %v1433
        %1435 = vmatprep.mubr.bf16.mxu0 0
        %1436 = vmatmul.mubr.bf16.gmra.mxu0 %v766
        %v1437 = vpop.f32.mrf.mxu0
        %v1438 = vadd.f32 %v546, %v1437
        %v1439 = vpop.f32.mrf.mxu0
        %v1440 = vadd.f32 %v550, %v1439
        %v1441 = vpop.f32.mrf.mxu0
        %v1442 = vadd.f32 %v546, %v1441
        %v1443 = vpop.f32.mrf.mxu0
        %v1444 = vadd.f32 %v550, %v1443
        %1445 = vdwg.mxu0
        %1446 = vmatprep.subr.bf16.mxu0 0
        %1447 = vmatpush1.bf16.msra.mxu0 0
        %1448 = vmatprep.subr.bf16.mxu0 0
        %1449 = vmatpush1.bf16.msra.mxu0 0
        %1450 = vmatprep.subr.bf16.mxu0 0
        %1451 = vmatpush1.bf16.msra.mxu0 0
        %1452 = vmatprep.subr.bf16.mxu0 0
        %1453 = vmatpush1.bf16.msra.mxu0 0
        %1454 = vmatprep.subr.bf16.mxu0 0
        %1455 = vmatpush1.bf16.msra.mxu0 0
        %1456 = vmatprep.subr.bf16.mxu0 0
        %1457 = vmatpush1.bf16.msra.mxu0 0
        %1458 = vmatprep.subr.bf16.mxu0 %v708
        %1459 = vmatpush1.bf16.msra.mxu0 %v707
        %1460 = vmatprep.subr.bf16.mxu0 %v692
        %1461 = vmatpush1.bf16.msra.mxu0 %v691
        %1462 = vmatprep.subr.bf16.mxu0 0
        %1463 = vmatpush2.bf16.msra.mxu0 0
        %1464 = vmatprep.subr.bf16.mxu0 0
        %1465 = vmatpush2.bf16.msra.mxu0 0
        %1466 = vmatprep.subr.bf16.mxu0 0
        %1467 = vmatpush2.bf16.msra.mxu0 0
        %1468 = vmatprep.subr.bf16.mxu0 0
        %1469 = vmatpush2.bf16.msra.mxu0 0
        %1470 = vmatprep.subr.bf16.mxu0 0
        %1471 = vmatpush2.bf16.msra.mxu0 0
        %1472 = vmatprep.subr.bf16.mxu0 0
        %1473 = vmatpush2.bf16.msra.mxu0 0
        %1474 = vmatprep.subr.bf16.mxu0 0
        %1475 = vmatpush2.bf16.msra.mxu0 0
        %1476 = vmatprep.subr.bf16.mxu0 0
        %1477 = vmatpush2.bf16.msra.mxu0 0
        %1478 = vmatprep.mubr.bf16.mxu0 0
        %1479 = vmatmul.mubr.bf16.gmra.mxu0 %v745
        %v1480 = vpop.f32.mrf.mxu0
        %v1481 = vadd.f32 %v554, %v1480
        %v1482 = vpop.f32.mrf.mxu0
        %v1483 = vadd.f32 %v558, %v1482
        %v1484 = vpop.f32.mrf.mxu0
        %v1485 = vadd.f32 %v554, %v1484
        %v1486 = vpop.f32.mrf.mxu0
        %v1487 = vadd.f32 %v558, %v1486
        %1488 = vmatprep.mubr.bf16.mxu0 0
        %1489 = vmatmul.mubr.bf16.gmra.mxu0 %v748
        %v1490 = vpop.f32.mrf.mxu0
        %v1491 = vadd.f32 %v554, %v1490
        %v1492 = vpop.f32.mrf.mxu0
        %v1493 = vadd.f32 %v558, %v1492
        %v1494 = vpop.f32.mrf.mxu0
        %v1495 = vadd.f32 %v554, %v1494
        %v1496 = vpop.f32.mrf.mxu0
        %v1497 = vadd.f32 %v558, %v1496
        %1498 = vmatprep.mubr.bf16.mxu0 0
        %1499 = vmatmul.mubr.bf16.gmra.mxu0 %v751
        %v1500 = vpop.f32.mrf.mxu0
        %v1501 = vadd.f32 %v554, %v1500
        %v1502 = vpop.f32.mrf.mxu0
        %v1503 = vadd.f32 %v558, %v1502
        %v1504 = vpop.f32.mrf.mxu0
        %v1505 = vadd.f32 %v554, %v1504
        %v1506 = vpop.f32.mrf.mxu0
        %v1507 = vadd.f32 %v558, %v1506
        %1508 = vmatprep.mubr.bf16.mxu0 0
        %1509 = vmatmul.mubr.bf16.gmra.mxu0 %v754
        %v1510 = vpop.f32.mrf.mxu0
        %v1511 = vadd.f32 %v554, %v1510
        %v1512 = vpop.f32.mrf.mxu0
        %v1513 = vadd.f32 %v558, %v1512
        %v1514 = vpop.f32.mrf.mxu0
        %v1515 = vadd.f32 %v554, %v1514
        %v1516 = vpop.f32.mrf.mxu0
        %v1517 = vadd.f32 %v558, %v1516
        %1518 = vmatprep.mubr.bf16.mxu0 0
        %1519 = vmatmul.mubr.bf16.gmra.mxu0 %v757
        %v1520 = vpop.f32.mrf.mxu0
        %v1521 = vadd.f32 %v554, %v1520
        %v1522 = vpop.f32.mrf.mxu0
        %v1523 = vadd.f32 %v558, %v1522
        %v1524 = vpop.f32.mrf.mxu0
        %v1525 = vadd.f32 %v554, %v1524
        %v1526 = vpop.f32.mrf.mxu0
        %v1527 = vadd.f32 %v558, %v1526
        %1528 = vmatprep.mubr.bf16.mxu0 0
        %1529 = vmatmul.mubr.bf16.gmra.mxu0 %v760
        %v1530 = vpop.f32.mrf.mxu0
        %v1531 = vadd.f32 %v554, %v1530
        %v1532 = vpop.f32.mrf.mxu0
        %v1533 = vadd.f32 %v558, %v1532
        %v1534 = vpop.f32.mrf.mxu0
        %v1535 = vadd.f32 %v554, %v1534
        %v1536 = vpop.f32.mrf.mxu0
        %v1537 = vadd.f32 %v558, %v1536
        %1538 = vmatprep.mubr.bf16.mxu0 0
        %1539 = vmatmul.mubr.bf16.gmra.mxu0 %v763
        %v1540 = vpop.f32.mrf.mxu0
        %v1541 = vadd.f32 %v554, %v1540
        %v1542 = vpop.f32.mrf.mxu0
        %v1543 = vadd.f32 %v558, %v1542
        %v1544 = vpop.f32.mrf.mxu0
        %v1545 = vadd.f32 %v554, %v1544
        %v1546 = vpop.f32.mrf.mxu0
        %v1547 = vadd.f32 %v558, %v1546
        %1548 = vmatprep.mubr.bf16.mxu0 0
        %1549 = vmatmul.mubr.bf16.gmra.mxu0 %v766
        %v1550 = vpop.f32.mrf.mxu0
        %v1551 = vadd.f32 %v554, %v1550
        %v1552 = vpop.f32.mrf.mxu0
        %v1553 = vadd.f32 %v558, %v1552
        %v1554 = vpop.f32.mrf.mxu0
        %v1555 = vadd.f32 %v554, %v1554
        %v1556 = vpop.f32.mrf.mxu0
        %v1557 = vadd.f32 %v558, %v1556
        %1558 = vdwg.mxu0
        %1559 = vmatprep.subr.bf16.mxu0 0
        %1560 = vmatpush1.bf16.msra.mxu0 0
        %1561 = vmatprep.subr.bf16.mxu0 0
        %1562 = vmatpush1.bf16.msra.mxu0 0
        %1563 = vmatprep.subr.bf16.mxu0 0
        %1564 = vmatpush1.bf16.msra.mxu0 0
        %1565 = vmatprep.subr.bf16.mxu0 0
        %1566 = vmatpush1.bf16.msra.mxu0 0
        %1567 = vmatprep.subr.bf16.mxu0 0
        %1568 = vmatpush1.bf16.msra.mxu0 0
        %1569 = vmatprep.subr.bf16.mxu0 0
        %1570 = vmatpush1.bf16.msra.mxu0 0
        %1571 = vmatprep.subr.bf16.mxu0 %v710
        %1572 = vmatpush1.bf16.msra.mxu0 %v709
        %1573 = vmatprep.subr.bf16.mxu0 %v694
        %1574 = vmatpush1.bf16.msra.mxu0 %v693
        %1575 = vmatprep.subr.bf16.mxu0 0
        %1576 = vmatpush2.bf16.msra.mxu0 0
        %1577 = vmatprep.subr.bf16.mxu0 0
        %1578 = vmatpush2.bf16.msra.mxu0 0
        %1579 = vmatprep.subr.bf16.mxu0 0
        %1580 = vmatpush2.bf16.msra.mxu0 0
        %1581 = vmatprep.subr.bf16.mxu0 0
        %1582 = vmatpush2.bf16.msra.mxu0 0
        %1583 = vmatprep.subr.bf16.mxu0 0
        %1584 = vmatpush2.bf16.msra.mxu0 0
        %1585 = vmatprep.subr.bf16.mxu0 0
        %1586 = vmatpush2.bf16.msra.mxu0 0
        %1587 = vmatprep.subr.bf16.mxu0 0
        %1588 = vmatpush2.bf16.msra.mxu0 0
        %1589 = vmatprep.subr.bf16.mxu0 0
        %1590 = vmatpush2.bf16.msra.mxu0 0
        %1591 = vmatprep.mubr.bf16.mxu0 0
        %1592 = vmatmul.mubr.bf16.gmra.mxu0 %v745
        %v1593 = vpop.f32.mrf.mxu0
        %v1594 = vadd.f32 %v562, %v1593
        %v1595 = vpop.f32.mrf.mxu0
        %v1596 = vadd.f32 %v566, %v1595
        %v1597 = vpop.f32.mrf.mxu0
        %v1598 = vadd.f32 %v562, %v1597
        %v1599 = vpop.f32.mrf.mxu0
        %v1600 = vadd.f32 %v566, %v1599
        %1601 = vmatprep.mubr.bf16.mxu0 0
        %1602 = vmatmul.mubr.bf16.gmra.mxu0 %v748
        %v1603 = vpop.f32.mrf.mxu0
        %v1604 = vadd.f32 %v562, %v1603
        %v1605 = vpop.f32.mrf.mxu0
        %v1606 = vadd.f32 %v566, %v1605
        %v1607 = vpop.f32.mrf.mxu0
        %v1608 = vadd.f32 %v562, %v1607
        %v1609 = vpop.f32.mrf.mxu0
        %v1610 = vadd.f32 %v566, %v1609
        %1611 = vmatprep.mubr.bf16.mxu0 0
        %1612 = vmatmul.mubr.bf16.gmra.mxu0 %v751
        %v1613 = vpop.f32.mrf.mxu0
        %v1614 = vadd.f32 %v562, %v1613
        %v1615 = vpop.f32.mrf.mxu0
        %v1616 = vadd.f32 %v566, %v1615
        %v1617 = vpop.f32.mrf.mxu0
        %v1618 = vadd.f32 %v562, %v1617
        %v1619 = vpop.f32.mrf.mxu0
        %v1620 = vadd.f32 %v566, %v1619
        %1621 = vmatprep.mubr.bf16.mxu0 0
        %1622 = vmatmul.mubr.bf16.gmra.mxu0 %v754
        %v1623 = vpop.f32.mrf.mxu0
        %v1624 = vadd.f32 %v562, %v1623
        %v1625 = vpop.f32.mrf.mxu0
        %v1626 = vadd.f32 %v566, %v1625
        %v1627 = vpop.f32.mrf.mxu0
        %v1628 = vadd.f32 %v562, %v1627
        %v1629 = vpop.f32.mrf.mxu0
        %v1630 = vadd.f32 %v566, %v1629
        %1631 = vmatprep.mubr.bf16.mxu0 0
        %1632 = vmatmul.mubr.bf16.gmra.mxu0 %v757
        %v1633 = vpop.f32.mrf.mxu0
        %v1634 = vadd.f32 %v562, %v1633
        %v1635 = vpop.f32.mrf.mxu0
        %v1636 = vadd.f32 %v566, %v1635
        %v1637 = vpop.f32.mrf.mxu0
        %v1638 = vadd.f32 %v562, %v1637
        %v1639 = vpop.f32.mrf.mxu0
        %v1640 = vadd.f32 %v566, %v1639
        %1641 = vmatprep.mubr.bf16.mxu0 0
        %1642 = vmatmul.mubr.bf16.gmra.mxu0 %v760
        %v1643 = vpop.f32.mrf.mxu0
        %v1644 = vadd.f32 %v562, %v1643
        %v1645 = vpop.f32.mrf.mxu0
        %v1646 = vadd.f32 %v566, %v1645
        %v1647 = vpop.f32.mrf.mxu0
        %v1648 = vadd.f32 %v562, %v1647
        %v1649 = vpop.f32.mrf.mxu0
        %v1650 = vadd.f32 %v566, %v1649
        %1651 = vmatprep.mubr.bf16.mxu0 0
        %1652 = vmatmul.mubr.bf16.gmra.mxu0 %v763
        %v1653 = vpop.f32.mrf.mxu0
        %v1654 = vadd.f32 %v562, %v1653
        %v1655 = vpop.f32.mrf.mxu0
        %v1656 = vadd.f32 %v566, %v1655
        %v1657 = vpop.f32.mrf.mxu0
        %v1658 = vadd.f32 %v562, %v1657
        %v1659 = vpop.f32.mrf.mxu0
        %v1660 = vadd.f32 %v566, %v1659
        %1661 = vmatprep.mubr.bf16.mxu0 0
        %1662 = vmatmul.mubr.bf16.gmra.mxu0 %v766
        %v1663 = vpop.f32.mrf.mxu0
        %v1664 = vadd.f32 %v562, %v1663
        %v1665 = vpop.f32.mrf.mxu0
        %v1666 = vadd.f32 %v566, %v1665
        %v1667 = vpop.f32.mrf.mxu0
        %v1668 = vadd.f32 %v562, %v1667
        %v1669 = vpop.f32.mrf.mxu0
        %v1670 = vadd.f32 %v566, %v1669
        %1671 = vdwg.mxu0
        %vm1672 = vcmp.gt.f32.partialorder %v803, 0.0
        %vm1673 = vcmp.gt.f32.partialorder %v805, 0.0
        %vm1674 = vcmp.gt.f32.partialorder %v916, 0.0
        %vm1675 = vcmp.gt.f32.partialorder %v918, 0.0
        %vm1676 = vcmp.gt.f32.partialorder %v1029, 0.0
        %vm1677 = vcmp.gt.f32.partialorder %v1031, 0.0
        %vm1678 = vcmp.gt.f32.partialorder %v1142, 0.0
        %vm1679 = vcmp.gt.f32.partialorder %v1144, 0.0
        %vm1680 = vcmp.gt.f32.partialorder %v1255, 0.0
        %vm1681 = vcmp.gt.f32.partialorder %v1257, 0.0
        %vm1682 = vcmp.gt.f32.partialorder %v1368, 0.0
        %vm1683 = vcmp.gt.f32.partialorder %v1370, 0.0
        %vm1684 = vcmp.gt.f32.partialorder %v1481, 0.0
        %vm1685 = vcmp.gt.f32.partialorder %v1483, 0.0
        %vm1686 = vcmp.gt.f32.partialorder %v1594, 0.0
        %vm1687 = vcmp.gt.f32.partialorder %v1596, 0.0
        %vm1688 = vcmp.gt.f32.partialorder %v807, 0.0
        %vm1689 = vcmp.gt.f32.partialorder %v809, 0.0
        %vm1690 = vcmp.gt.f32.partialorder %v920, 0.0
        %vm1691 = vcmp.gt.f32.partialorder %v922, 0.0
        %vm1692 = vcmp.gt.f32.partialorder %v1033, 0.0
        %vm1693 = vcmp.gt.f32.partialorder %v1035, 0.0
        %vm1694 = vcmp.gt.f32.partialorder %v1146, 0.0
        %vm1695 = vcmp.gt.f32.partialorder %v1148, 0.0
        %vm1696 = vcmp.gt.f32.partialorder %v1259, 0.0
        %vm1697 = vcmp.gt.f32.partialorder %v1261, 0.0
        %vm1698 = vcmp.gt.f32.partialorder %v1372, 0.0
        %vm1699 = vcmp.gt.f32.partialorder %v1374, 0.0
        %vm1700 = vcmp.gt.f32.partialorder %v1485, 0.0
        %vm1701 = vcmp.gt.f32.partialorder %v1487, 0.0
        %vm1702 = vcmp.gt.f32.partialorder %v1598, 0.0
        %vm1703 = vcmp.gt.f32.partialorder %v1600, 0.0
        %vm1704 = vcmp.gt.f32.partialorder %v813, 0.0
        %vm1705 = vcmp.gt.f32.partialorder %v815, 0.0
        %vm1706 = vcmp.gt.f32.partialorder %v926, 0.0
        %vm1707 = vcmp.gt.f32.partialorder %v928, 0.0
        %vm1708 = vcmp.gt.f32.partialorder %v1039, 0.0
        %vm1709 = vcmp.gt.f32.partialorder %v1041, 0.0
        %vm1710 = vcmp.gt.f32.partialorder %v1152, 0.0
        %vm1711 = vcmp.gt.f32.partialorder %v1154, 0.0
        %vm1712 = vcmp.gt.f32.partialorder %v1265, 0.0
        %vm1713 = vcmp.gt.f32.partialorder %v1267, 0.0
        %vm1714 = vcmp.gt.f32.partialorder %v1378, 0.0
        %vm1715 = vcmp.gt.f32.partialorder %v1380, 0.0
        %vm1716 = vcmp.gt.f32.partialorder %v1491, 0.0
        %vm1717 = vcmp.gt.f32.partialorder %v1493, 0.0
        %vm1718 = vcmp.gt.f32.partialorder %v1604, 0.0
        %vm1719 = vcmp.gt.f32.partialorder %v1606, 0.0
        %vm1720 = vcmp.gt.f32.partialorder %v817, 0.0
        %vm1721 = vcmp.gt.f32.partialorder %v819, 0.0
        %vm1722 = vcmp.gt.f32.partialorder %v930, 0.0
        %vm1723 = vcmp.gt.f32.partialorder %v932, 0.0
        %vm1724 = vcmp.gt.f32.partialorder %v1043, 0.0
        %vm1725 = vcmp.gt.f32.partialorder %v1045, 0.0
        %vm1726 = vcmp.gt.f32.partialorder %v1156, 0.0
        %vm1727 = vcmp.gt.f32.partialorder %v1158, 0.0
        %vm1728 = vcmp.gt.f32.partialorder %v1269, 0.0
        %vm1729 = vcmp.gt.f32.partialorder %v1271, 0.0
        %vm1730 = vcmp.gt.f32.partialorder %v1382, 0.0
        %vm1731 = vcmp.gt.f32.partialorder %v1384, 0.0
        %vm1732 = vcmp.gt.f32.partialorder %v1495, 0.0
        %vm1733 = vcmp.gt.f32.partialorder %v1497, 0.0
        %vm1734 = vcmp.gt.f32.partialorder %v1608, 0.0
        %vm1735 = vcmp.gt.f32.partialorder %v1610, 0.0
        %vm1736 = vcmp.gt.f32.partialorder %v823, 0.0
        %vm1737 = vcmp.gt.f32.partialorder %v825, 0.0
        %vm1738 = vcmp.gt.f32.partialorder %v936, 0.0
        %vm1739 = vcmp.gt.f32.partialorder %v938, 0.0
        %vm1740 = vcmp.gt.f32.partialorder %v1049, 0.0
        %vm1741 = vcmp.gt.f32.partialorder %v1051, 0.0
        %vm1742 = vcmp.gt.f32.partialorder %v1162, 0.0
        %vm1743 = vcmp.gt.f32.partialorder %v1164, 0.0
        %vm1744 = vcmp.gt.f32.partialorder %v1275, 0.0
        %vm1745 = vcmp.gt.f32.partialorder %v1277, 0.0
        %vm1746 = vcmp.gt.f32.partialorder %v1388, 0.0
        %vm1747 = vcmp.gt.f32.partialorder %v1390, 0.0
        %vm1748 = vcmp.gt.f32.partialorder %v1501, 0.0
        %vm1749 = vcmp.gt.f32.partialorder %v1503, 0.0
        %vm1750 = vcmp.gt.f32.partialorder %v1614, 0.0
        %vm1751 = vcmp.gt.f32.partialorder %v1616, 0.0
        %vm1752 = vcmp.gt.f32.partialorder %v827, 0.0
        %vm1753 = vcmp.gt.f32.partialorder %v829, 0.0
        %vm1754 = vcmp.gt.f32.partialorder %v940, 0.0
        %vm1755 = vcmp.gt.f32.partialorder %v942, 0.0
        %vm1756 = vcmp.gt.f32.partialorder %v1053, 0.0
        %vm1757 = vcmp.gt.f32.partialorder %v1055, 0.0
        %vm1758 = vcmp.gt.f32.partialorder %v1166, 0.0
        %vm1759 = vcmp.gt.f32.partialorder %v1168, 0.0
        %vm1760 = vcmp.gt.f32.partialorder %v1279, 0.0
        %vm1761 = vcmp.gt.f32.partialorder %v1281, 0.0
        %vm1762 = vcmp.gt.f32.partialorder %v1392, 0.0
        %vm1763 = vcmp.gt.f32.partialorder %v1394, 0.0
        %vm1764 = vcmp.gt.f32.partialorder %v1505, 0.0
        %vm1765 = vcmp.gt.f32.partialorder %v1507, 0.0
        %vm1766 = vcmp.gt.f32.partialorder %v1618, 0.0
        %vm1767 = vcmp.gt.f32.partialorder %v1620, 0.0
        %vm1768 = vcmp.gt.f32.partialorder %v833, 0.0
        %vm1769 = vcmp.gt.f32.partialorder %v835, 0.0
        %vm1770 = vcmp.gt.f32.partialorder %v946, 0.0
        %vm1771 = vcmp.gt.f32.partialorder %v948, 0.0
        %vm1772 = vcmp.gt.f32.partialorder %v1059, 0.0
        %vm1773 = vcmp.gt.f32.partialorder %v1061, 0.0
        %vm1774 = vcmp.gt.f32.partialorder %v1172, 0.0
        %vm1775 = vcmp.gt.f32.partialorder %v1174, 0.0
        %vm1776 = vcmp.gt.f32.partialorder %v1285, 0.0
        %vm1777 = vcmp.gt.f32.partialorder %v1287, 0.0
        %vm1778 = vcmp.gt.f32.partialorder %v1398, 0.0
        %vm1779 = vcmp.gt.f32.partialorder %v1400, 0.0
        %vm1780 = vcmp.gt.f32.partialorder %v1511, 0.0
        %vm1781 = vcmp.gt.f32.partialorder %v1513, 0.0
        %vm1782 = vcmp.gt.f32.partialorder %v1624, 0.0
        %vm1783 = vcmp.gt.f32.partialorder %v1626, 0.0
        %vm1784 = vcmp.gt.f32.partialorder %v837, 0.0
        %vm1785 = vcmp.gt.f32.partialorder %v839, 0.0
        %vm1786 = vcmp.gt.f32.partialorder %v950, 0.0
        %vm1787 = vcmp.gt.f32.partialorder %v952, 0.0
        %vm1788 = vcmp.gt.f32.partialorder %v1063, 0.0
        %vm1789 = vcmp.gt.f32.partialorder %v1065, 0.0
        %vm1790 = vcmp.gt.f32.partialorder %v1176, 0.0
        %vm1791 = vcmp.gt.f32.partialorder %v1178, 0.0
        %vm1792 = vcmp.gt.f32.partialorder %v1289, 0.0
        %vm1793 = vcmp.gt.f32.partialorder %v1291, 0.0
        %vm1794 = vcmp.gt.f32.partialorder %v1402, 0.0
        %vm1795 = vcmp.gt.f32.partialorder %v1404, 0.0
        %vm1796 = vcmp.gt.f32.partialorder %v1515, 0.0
        %vm1797 = vcmp.gt.f32.partialorder %v1517, 0.0
        %vm1798 = vcmp.gt.f32.partialorder %v1628, 0.0
        %vm1799 = vcmp.gt.f32.partialorder %v1630, 0.0
        %vm1800 = vcmp.gt.f32.partialorder %v843, 0.0
        %vm1801 = vcmp.gt.f32.partialorder %v845, 0.0
        %vm1802 = vcmp.gt.f32.partialorder %v956, 0.0
        %vm1803 = vcmp.gt.f32.partialorder %v958, 0.0
        %vm1804 = vcmp.gt.f32.partialorder %v1069, 0.0
        %vm1805 = vcmp.gt.f32.partialorder %v1071, 0.0
        %vm1806 = vcmp.gt.f32.partialorder %v1182, 0.0
        %vm1807 = vcmp.gt.f32.partialorder %v1184, 0.0
        %vm1808 = vcmp.gt.f32.partialorder %v1295, 0.0
        %vm1809 = vcmp.gt.f32.partialorder %v1297, 0.0
        %vm1810 = vcmp.gt.f32.partialorder %v1408, 0.0
        %vm1811 = vcmp.gt.f32.partialorder %v1410, 0.0
        %vm1812 = vcmp.gt.f32.partialorder %v1521, 0.0
        %vm1813 = vcmp.gt.f32.partialorder %v1523, 0.0
        %vm1814 = vcmp.gt.f32.partialorder %v1634, 0.0
        %vm1815 = vcmp.gt.f32.partialorder %v1636, 0.0
        %vm1816 = vcmp.gt.f32.partialorder %v847, 0.0
        %vm1817 = vcmp.gt.f32.partialorder %v849, 0.0
        %vm1818 = vcmp.gt.f32.partialorder %v960, 0.0
        %vm1819 = vcmp.gt.f32.partialorder %v962, 0.0
        %vm1820 = vcmp.gt.f32.partialorder %v1073, 0.0
        %vm1821 = vcmp.gt.f32.partialorder %v1075, 0.0
        %vm1822 = vcmp.gt.f32.partialorder %v1186, 0.0
        %vm1823 = vcmp.gt.f32.partialorder %v1188, 0.0
        %vm1824 = vcmp.gt.f32.partialorder %v1299, 0.0
        %vm1825 = vcmp.gt.f32.partialorder %v1301, 0.0
        %vm1826 = vcmp.gt.f32.partialorder %v1412, 0.0
        %vm1827 = vcmp.gt.f32.partialorder %v1414, 0.0
        %vm1828 = vcmp.gt.f32.partialorder %v1525, 0.0
        %vm1829 = vcmp.gt.f32.partialorder %v1527, 0.0
        %vm1830 = vcmp.gt.f32.partialorder %v1638, 0.0
        %vm1831 = vcmp.gt.f32.partialorder %v1640, 0.0
        %vm1832 = vcmp.gt.f32.partialorder %v853, 0.0
        %vm1833 = vcmp.gt.f32.partialorder %v855, 0.0
        %vm1834 = vcmp.gt.f32.partialorder %v966, 0.0
        %vm1835 = vcmp.gt.f32.partialorder %v968, 0.0
        %vm1836 = vcmp.gt.f32.partialorder %v1079, 0.0
        %vm1837 = vcmp.gt.f32.partialorder %v1081, 0.0
        %vm1838 = vcmp.gt.f32.partialorder %v1192, 0.0
        %vm1839 = vcmp.gt.f32.partialorder %v1194, 0.0
        %vm1840 = vcmp.gt.f32.partialorder %v1305, 0.0
        %vm1841 = vcmp.gt.f32.partialorder %v1307, 0.0
        %vm1842 = vcmp.gt.f32.partialorder %v1418, 0.0
        %vm1843 = vcmp.gt.f32.partialorder %v1420, 0.0
        %vm1844 = vcmp.gt.f32.partialorder %v1531, 0.0
        %vm1845 = vcmp.gt.f32.partialorder %v1533, 0.0
        %vm1846 = vcmp.gt.f32.partialorder %v1644, 0.0
        %vm1847 = vcmp.gt.f32.partialorder %v1646, 0.0
        %vm1848 = vcmp.gt.f32.partialorder %v857, 0.0
        %vm1849 = vcmp.gt.f32.partialorder %v859, 0.0
        %vm1850 = vcmp.gt.f32.partialorder %v970, 0.0
        %vm1851 = vcmp.gt.f32.partialorder %v972, 0.0
        %vm1852 = vcmp.gt.f32.partialorder %v1083, 0.0
        %vm1853 = vcmp.gt.f32.partialorder %v1085, 0.0
        %vm1854 = vcmp.gt.f32.partialorder %v1196, 0.0
        %vm1855 = vcmp.gt.f32.partialorder %v1198, 0.0
        %vm1856 = vcmp.gt.f32.partialorder %v1309, 0.0
        %vm1857 = vcmp.gt.f32.partialorder %v1311, 0.0
        %vm1858 = vcmp.gt.f32.partialorder %v1422, 0.0
        %vm1859 = vcmp.gt.f32.partialorder %v1424, 0.0
        %vm1860 = vcmp.gt.f32.partialorder %v1535, 0.0
        %vm1861 = vcmp.gt.f32.partialorder %v1537, 0.0
        %vm1862 = vcmp.gt.f32.partialorder %v1648, 0.0
        %vm1863 = vcmp.gt.f32.partialorder %v1650, 0.0
        %vm1864 = vcmp.gt.f32.partialorder %v863, 0.0
        %vm1865 = vcmp.gt.f32.partialorder %v865, 0.0
        %vm1866 = vcmp.gt.f32.partialorder %v976, 0.0
        %vm1867 = vcmp.gt.f32.partialorder %v978, 0.0
        %vm1868 = vcmp.gt.f32.partialorder %v1089, 0.0
        %vm1869 = vcmp.gt.f32.partialorder %v1091, 0.0
        %vm1870 = vcmp.gt.f32.partialorder %v1202, 0.0
        %vm1871 = vcmp.gt.f32.partialorder %v1204, 0.0
        %vm1872 = vcmp.gt.f32.partialorder %v1315, 0.0
        %vm1873 = vcmp.gt.f32.partialorder %v1317, 0.0
        %vm1874 = vcmp.gt.f32.partialorder %v1428, 0.0
        %vm1875 = vcmp.gt.f32.partialorder %v1430, 0.0
        %vm1876 = vcmp.gt.f32.partialorder %v1541, 0.0
        %vm1877 = vcmp.gt.f32.partialorder %v1543, 0.0
        %vm1878 = vcmp.gt.f32.partialorder %v1654, 0.0
        %vm1879 = vcmp.gt.f32.partialorder %v1656, 0.0
        %vm1880 = vcmp.gt.f32.partialorder %v867, 0.0
        %vm1881 = vcmp.gt.f32.partialorder %v869, 0.0
        %vm1882 = vcmp.gt.f32.partialorder %v980, 0.0
        %vm1883 = vcmp.gt.f32.partialorder %v982, 0.0
        %vm1884 = vcmp.gt.f32.partialorder %v1093, 0.0
        %vm1885 = vcmp.gt.f32.partialorder %v1095, 0.0
        %vm1886 = vcmp.gt.f32.partialorder %v1206, 0.0
        %vm1887 = vcmp.gt.f32.partialorder %v1208, 0.0
        %vm1888 = vcmp.gt.f32.partialorder %v1319, 0.0
        %vm1889 = vcmp.gt.f32.partialorder %v1321, 0.0
        %vm1890 = vcmp.gt.f32.partialorder %v1432, 0.0
        %vm1891 = vcmp.gt.f32.partialorder %v1434, 0.0
        %vm1892 = vcmp.gt.f32.partialorder %v1545, 0.0
        %vm1893 = vcmp.gt.f32.partialorder %v1547, 0.0
        %vm1894 = vcmp.gt.f32.partialorder %v1658, 0.0
        %vm1895 = vcmp.gt.f32.partialorder %v1660, 0.0
        %vm1896 = vcmp.gt.f32.partialorder %v873, 0.0
        %vm1897 = vcmp.gt.f32.partialorder %v875, 0.0
        %vm1898 = vcmp.gt.f32.partialorder %v986, 0.0
        %vm1899 = vcmp.gt.f32.partialorder %v988, 0.0
        %vm1900 = vcmp.gt.f32.partialorder %v1099, 0.0
        %vm1901 = vcmp.gt.f32.partialorder %v1101, 0.0
        %vm1902 = vcmp.gt.f32.partialorder %v1212, 0.0
        %vm1903 = vcmp.gt.f32.partialorder %v1214, 0.0
        %vm1904 = vcmp.gt.f32.partialorder %v1325, 0.0
        %vm1905 = vcmp.gt.f32.partialorder %v1327, 0.0
        %vm1906 = vcmp.gt.f32.partialorder %v1438, 0.0
        %vm1907 = vcmp.gt.f32.partialorder %v1440, 0.0
        %vm1908 = vcmp.gt.f32.partialorder %v1551, 0.0
        %vm1909 = vcmp.gt.f32.partialorder %v1553, 0.0
        %vm1910 = vcmp.gt.f32.partialorder %v1664, 0.0
        %vm1911 = vcmp.gt.f32.partialorder %v1666, 0.0
        %vm1912 = vcmp.gt.f32.partialorder %v877, 0.0
        %vm1913 = vcmp.gt.f32.partialorder %v879, 0.0
        %vm1914 = vcmp.gt.f32.partialorder %v990, 0.0
        %vm1915 = vcmp.gt.f32.partialorder %v992, 0.0
        %vm1916 = vcmp.gt.f32.partialorder %v1103, 0.0
        %vm1917 = vcmp.gt.f32.partialorder %v1105, 0.0
        %vm1918 = vcmp.gt.f32.partialorder %v1216, 0.0
        %vm1919 = vcmp.gt.f32.partialorder %v1218, 0.0
        %vm1920 = vcmp.gt.f32.partialorder %v1329, 0.0
        %vm1921 = vcmp.gt.f32.partialorder %v1331, 0.0
        %vm1922 = vcmp.gt.f32.partialorder %v1442, 0.0
        %vm1923 = vcmp.gt.f32.partialorder %v1444, 0.0
        %vm1924 = vcmp.gt.f32.partialorder %v1555, 0.0
        %vm1925 = vcmp.gt.f32.partialorder %v1557, 0.0
        %vm1926 = vcmp.gt.f32.partialorder %v1668, 0.0
        %vm1927 = vcmp.gt.f32.partialorder %v1670, 0.0
        %v1928 = vmul.f32 %v803, 0.01
        %v1929 = vmul.f32 %v805, 0.01
        %v1930 = vmul.f32 %v916, 0.01
        %v1931 = vmul.f32 %v918, 0.01
        %v1932 = vmul.f32 %v1029, 0.01
        %v1933 = vmul.f32 %v1031, 0.01
        %v1934 = vmul.f32 %v1142, 0.01
        %v1935 = vmul.f32 %v1144, 0.01
        %v1936 = vmul.f32 %v1255, 0.01
        %v1937 = vmul.f32 %v1257, 0.01
        %v1938 = vmul.f32 %v1368, 0.01
        %v1939 = vmul.f32 %v1370, 0.01
        %v1940 = vmul.f32 %v1481, 0.01
        %v1941 = vmul.f32 %v1483, 0.01
        %v1942 = vmul.f32 %v1594, 0.01
        %v1943 = vmul.f32 %v1596, 0.01
        %v1944 = vmul.f32 %v807, 0.01
        %v1945 = vmul.f32 %v809, 0.01
        %v1946 = vmul.f32 %v920, 0.01
        %v1947 = vmul.f32 %v922, 0.01
        %v1948 = vmul.f32 %v1033, 0.01
        %v1949 = vmul.f32 %v1035, 0.01
        %v1950 = vmul.f32 %v1146, 0.01
        %v1951 = vmul.f32 %v1148, 0.01
        %v1952 = vmul.f32 %v1259, 0.01
        %v1953 = vmul.f32 %v1261, 0.01
        %v1954 = vmul.f32 %v1372, 0.01
        %v1955 = vmul.f32 %v1374, 0.01
        %v1956 = vmul.f32 %v1485, 0.01
        %v1957 = vmul.f32 %v1487, 0.01
        %v1958 = vmul.f32 %v1598, 0.01
        %v1959 = vmul.f32 %v1600, 0.01
        %v1960 = vmul.f32 %v813, 0.01
        %v1961 = vmul.f32 %v815, 0.01
        %v1962 = vmul.f32 %v926, 0.01
        %v1963 = vmul.f32 %v928, 0.01
        %v1964 = vmul.f32 %v1039, 0.01
        %v1965 = vmul.f32 %v1041, 0.01
        %v1966 = vmul.f32 %v1152, 0.01
        %v1967 = vmul.f32 %v1154, 0.01
        %v1968 = vmul.f32 %v1265, 0.01
        %v1969 = vmul.f32 %v1267, 0.01
        %v1970 = vmul.f32 %v1378, 0.01
        %v1971 = vmul.f32 %v1380, 0.01
        %v1972 = vmul.f32 %v1491, 0.01
        %v1973 = vmul.f32 %v1493, 0.01
        %v1974 = vmul.f32 %v1604, 0.01
        %v1975 = vmul.f32 %v1606, 0.01
        %v1976 = vmul.f32 %v817, 0.01
        %v1977 = vmul.f32 %v819, 0.01
        %v1978 = vmul.f32 %v930, 0.01
        %v1979 = vmul.f32 %v932, 0.01
        %v1980 = vmul.f32 %v1043, 0.01
        %v1981 = vmul.f32 %v1045, 0.01
        %v1982 = vmul.f32 %v1156, 0.01
        %v1983 = vmul.f32 %v1158, 0.01
        %v1984 = vmul.f32 %v1269, 0.01
        %v1985 = vmul.f32 %v1271, 0.01
        %v1986 = vmul.f32 %v1382, 0.01
        %v1987 = vmul.f32 %v1384, 0.01
        %v1988 = vmul.f32 %v1495, 0.01
        %v1989 = vmul.f32 %v1497, 0.01
        %v1990 = vmul.f32 %v1608, 0.01
        %v1991 = vmul.f32 %v1610, 0.01
        %v1992 = vmul.f32 %v823, 0.01
        %v1993 = vmul.f32 %v825, 0.01
        %v1994 = vmul.f32 %v936, 0.01
        %v1995 = vmul.f32 %v938, 0.01
        %v1996 = vmul.f32 %v1049, 0.01
        %v1997 = vmul.f32 %v1051, 0.01
        %v1998 = vmul.f32 %v1162, 0.01
        %v1999 = vmul.f32 %v1164, 0.01
        %v2000 = vmul.f32 %v1275, 0.01
        %v2001 = vmul.f32 %v1277, 0.01
        %v2002 = vmul.f32 %v1388, 0.01
        %v2003 = vmul.f32 %v1390, 0.01
        %v2004 = vmul.f32 %v1501, 0.01
        %v2005 = vmul.f32 %v1503, 0.01
        %v2006 = vmul.f32 %v1614, 0.01
        %v2007 = vmul.f32 %v1616, 0.01
        %v2008 = vmul.f32 %v827, 0.01
        %v2009 = vmul.f32 %v829, 0.01
        %v2010 = vmul.f32 %v940, 0.01
        %v2011 = vmul.f32 %v942, 0.01
        %v2012 = vmul.f32 %v1053, 0.01
        %v2013 = vmul.f32 %v1055, 0.01
        %v2014 = vmul.f32 %v1166, 0.01
        %v2015 = vmul.f32 %v1168, 0.01
        %v2016 = vmul.f32 %v1279, 0.01
        %v2017 = vmul.f32 %v1281, 0.01
        %v2018 = vmul.f32 %v1392, 0.01
        %v2019 = vmul.f32 %v1394, 0.01
        %v2020 = vmul.f32 %v1505, 0.01
        %v2021 = vmul.f32 %v1507, 0.01
        %v2022 = vmul.f32 %v1618, 0.01
        %v2023 = vmul.f32 %v1620, 0.01
        %v2024 = vmul.f32 %v833, 0.01
        %v2025 = vmul.f32 %v835, 0.01
        %v2026 = vmul.f32 %v946, 0.01
        %v2027 = vmul.f32 %v948, 0.01
        %v2028 = vmul.f32 %v1059, 0.01
        %v2029 = vmul.f32 %v1061, 0.01
        %v2030 = vmul.f32 %v1172, 0.01
        %v2031 = vmul.f32 %v1174, 0.01
        %v2032 = vmul.f32 %v1285, 0.01
        %v2033 = vmul.f32 %v1287, 0.01
        %v2034 = vmul.f32 %v1398, 0.01
        %v2035 = vmul.f32 %v1400, 0.01
        %v2036 = vmul.f32 %v1511, 0.01
        %v2037 = vmul.f32 %v1513, 0.01
        %v2038 = vmul.f32 %v1624, 0.01
        %v2039 = vmul.f32 %v1626, 0.01
        %v2040 = vmul.f32 %v837, 0.01
        %v2041 = vmul.f32 %v839, 0.01
        %v2042 = vmul.f32 %v950, 0.01
        %v2043 = vmul.f32 %v952, 0.01
        %v2044 = vmul.f32 %v1063, 0.01
        %v2045 = vmul.f32 %v1065, 0.01
        %v2046 = vmul.f32 %v1176, 0.01
        %v2047 = vmul.f32 %v1178, 0.01
        %v2048 = vmul.f32 %v1289, 0.01
        %v2049 = vmul.f32 %v1291, 0.01
        %v2050 = vmul.f32 %v1402, 0.01
        %v2051 = vmul.f32 %v1404, 0.01
        %v2052 = vmul.f32 %v1515, 0.01
        %v2053 = vmul.f32 %v1517, 0.01
        %v2054 = vmul.f32 %v1628, 0.01
        %v2055 = vmul.f32 %v1630, 0.01
        %v2056 = vmul.f32 %v843, 0.01
        %v2057 = vmul.f32 %v845, 0.01
        %v2058 = vmul.f32 %v956, 0.01
        %v2059 = vmul.f32 %v958, 0.01
        %v2060 = vmul.f32 %v1069, 0.01
        %v2061 = vmul.f32 %v1071, 0.01
        %v2062 = vmul.f32 %v1182, 0.01
        %v2063 = vmul.f32 %v1184, 0.01
        %v2064 = vmul.f32 %v1295, 0.01
        %v2065 = vmul.f32 %v1297, 0.01
        %v2066 = vmul.f32 %v1408, 0.01
        %v2067 = vmul.f32 %v1410, 0.01
        %v2068 = vmul.f32 %v1521, 0.01
        %v2069 = vmul.f32 %v1523, 0.01
        %v2070 = vmul.f32 %v1634, 0.01
        %v2071 = vmul.f32 %v1636, 0.01
        %v2072 = vmul.f32 %v847, 0.01
        %v2073 = vmul.f32 %v849, 0.01
        %v2074 = vmul.f32 %v960, 0.01
        %v2075 = vmul.f32 %v962, 0.01
        %v2076 = vmul.f32 %v1073, 0.01
        %v2077 = vmul.f32 %v1075, 0.01
        %v2078 = vmul.f32 %v1186, 0.01
        %v2079 = vmul.f32 %v1188, 0.01
        %v2080 = vmul.f32 %v1299, 0.01
        %v2081 = vmul.f32 %v1301, 0.01
        %v2082 = vmul.f32 %v1412, 0.01
        %v2083 = vmul.f32 %v1414, 0.01
        %v2084 = vmul.f32 %v1525, 0.01
        %v2085 = vmul.f32 %v1527, 0.01
        %v2086 = vmul.f32 %v1638, 0.01
        %v2087 = vmul.f32 %v1640, 0.01
        %v2088 = vmul.f32 %v853, 0.01
        %v2089 = vmul.f32 %v855, 0.01
        %v2090 = vmul.f32 %v966, 0.01
        %v2091 = vmul.f32 %v968, 0.01
        %v2092 = vmul.f32 %v1079, 0.01
        %v2093 = vmul.f32 %v1081, 0.01
        %v2094 = vmul.f32 %v1192, 0.01
        %v2095 = vmul.f32 %v1194, 0.01
        %v2096 = vmul.f32 %v1305, 0.01
        %v2097 = vmul.f32 %v1307, 0.01
        %v2098 = vmul.f32 %v1418, 0.01
        %v2099 = vmul.f32 %v1420, 0.01
        %v2100 = vmul.f32 %v1531, 0.01
        %v2101 = vmul.f32 %v1533, 0.01
        %v2102 = vmul.f32 %v1644, 0.01
        %v2103 = vmul.f32 %v1646, 0.01
        %v2104 = vmul.f32 %v857, 0.01
        %v2105 = vmul.f32 %v859, 0.01
        %v2106 = vmul.f32 %v970, 0.01
        %v2107 = vmul.f32 %v972, 0.01
        %v2108 = vmul.f32 %v1083, 0.01
        %v2109 = vmul.f32 %v1085, 0.01
        %v2110 = vmul.f32 %v1196, 0.01
        %v2111 = vmul.f32 %v1198, 0.01
        %v2112 = vmul.f32 %v1309, 0.01
        %v2113 = vmul.f32 %v1311, 0.01
        %v2114 = vmul.f32 %v1422, 0.01
        %v2115 = vmul.f32 %v1424, 0.01
        %v2116 = vmul.f32 %v1535, 0.01
        %v2117 = vmul.f32 %v1537, 0.01
        %v2118 = vmul.f32 %v1648, 0.01
        %v2119 = vmul.f32 %v1650, 0.01
        %v2120 = vmul.f32 %v863, 0.01
        %v2121 = vmul.f32 %v865, 0.01
        %v2122 = vmul.f32 %v976, 0.01
        %v2123 = vmul.f32 %v978, 0.01
        %v2124 = vmul.f32 %v1089, 0.01
        %v2125 = vmul.f32 %v1091, 0.01
        %v2126 = vmul.f32 %v1202, 0.01
        %v2127 = vmul.f32 %v1204, 0.01
        %v2128 = vmul.f32 %v1315, 0.01
        %v2129 = vmul.f32 %v1317, 0.01
        %v2130 = vmul.f32 %v1428, 0.01
        %v2131 = vmul.f32 %v1430, 0.01
        %v2132 = vmul.f32 %v1541, 0.01
        %v2133 = vmul.f32 %v1543, 0.01
        %v2134 = vmul.f32 %v1654, 0.01
        %v2135 = vmul.f32 %v1656, 0.01
        %v2136 = vmul.f32 %v867, 0.01
        %v2137 = vmul.f32 %v869, 0.01
        %v2138 = vmul.f32 %v980, 0.01
        %v2139 = vmul.f32 %v982, 0.01
        %v2140 = vmul.f32 %v1093, 0.01
        %v2141 = vmul.f32 %v1095, 0.01
        %v2142 = vmul.f32 %v1206, 0.01
        %v2143 = vmul.f32 %v1208, 0.01
        %v2144 = vmul.f32 %v1319, 0.01
        %v2145 = vmul.f32 %v1321, 0.01
        %v2146 = vmul.f32 %v1432, 0.01
        %v2147 = vmul.f32 %v1434, 0.01
        %v2148 = vmul.f32 %v1545, 0.01
        %v2149 = vmul.f32 %v1547, 0.01
        %v2150 = vmul.f32 %v1658, 0.01
        %v2151 = vmul.f32 %v1660, 0.01
        %v2152 = vmul.f32 %v873, 0.01
        %v2153 = vmul.f32 %v875, 0.01
        %v2154 = vmul.f32 %v986, 0.01
        %v2155 = vmul.f32 %v988, 0.01
        %v2156 = vmul.f32 %v1099, 0.01
        %v2157 = vmul.f32 %v1101, 0.01
        %v2158 = vmul.f32 %v1212, 0.01
        %v2159 = vmul.f32 %v1214, 0.01
        %v2160 = vmul.f32 %v1325, 0.01
        %v2161 = vmul.f32 %v1327, 0.01
        %v2162 = vmul.f32 %v1438, 0.01
        %v2163 = vmul.f32 %v1440, 0.01
        %v2164 = vmul.f32 %v1551, 0.01
        %v2165 = vmul.f32 %v1553, 0.01
        %v2166 = vmul.f32 %v1664, 0.01
        %v2167 = vmul.f32 %v1666, 0.01
        %v2168 = vmul.f32 %v877, 0.01
        %v2169 = vmul.f32 %v879, 0.01
        %v2170 = vmul.f32 %v990, 0.01
        %v2171 = vmul.f32 %v992, 0.01
        %v2172 = vmul.f32 %v1103, 0.01
        %v2173 = vmul.f32 %v1105, 0.01
        %v2174 = vmul.f32 %v1216, 0.01
        %v2175 = vmul.f32 %v1218, 0.01
        %v2176 = vmul.f32 %v1329, 0.01
        %v2177 = vmul.f32 %v1331, 0.01
        %v2178 = vmul.f32 %v1442, 0.01
        %v2179 = vmul.f32 %v1444, 0.01
        %v2180 = vmul.f32 %v1555, 0.01
        %v2181 = vmul.f32 %v1557, 0.01
        %v2182 = vmul.f32 %v1668, 0.01
        %v2183 = vmul.f32 %v1670, 0.01
        %v2184 = vsel %vm1672, %v803, %v1928
        %v2185 = vsel %vm1673, %v805, %v1929
        %v2186 = vsel %vm1674, %v916, %v1930
        %v2187 = vsel %vm1675, %v918, %v1931
        %v2188 = vsel %vm1676, %v1029, %v1932
        %v2189 = vsel %vm1677, %v1031, %v1933
        %v2190 = vsel %vm1678, %v1142, %v1934
        %v2191 = vsel %vm1679, %v1144, %v1935
        %v2192 = vsel %vm1680, %v1255, %v1936
        %v2193 = vsel %vm1681, %v1257, %v1937
        %v2194 = vsel %vm1682, %v1368, %v1938
        %v2195 = vsel %vm1683, %v1370, %v1939
        %v2196 = vsel %vm1684, %v1481, %v1940
        %v2197 = vsel %vm1685, %v1483, %v1941
        %v2198 = vsel %vm1686, %v1594, %v1942
        %v2199 = vsel %vm1687, %v1596, %v1943
        %v2200 = vsel %vm1688, %v807, %v1944
        %v2201 = vsel %vm1689, %v809, %v1945
        %v2202 = vsel %vm1690, %v920, %v1946
        %v2203 = vsel %vm1691, %v922, %v1947
        %v2204 = vsel %vm1692, %v1033, %v1948
        %v2205 = vsel %vm1693, %v1035, %v1949
        %v2206 = vsel %vm1694, %v1146, %v1950
        %v2207 = vsel %vm1695, %v1148, %v1951
        %v2208 = vsel %vm1696, %v1259, %v1952
        %v2209 = vsel %vm1697, %v1261, %v1953
        %v2210 = vsel %vm1698, %v1372, %v1954
        %v2211 = vsel %vm1699, %v1374, %v1955
        %v2212 = vsel %vm1700, %v1485, %v1956
        %v2213 = vsel %vm1701, %v1487, %v1957
        %v2214 = vsel %vm1702, %v1598, %v1958
        %v2215 = vsel %vm1703, %v1600, %v1959
        %v2216 = vsel %vm1704, %v813, %v1960
        %v2217 = vsel %vm1705, %v815, %v1961
        %v2218 = vsel %vm1706, %v926, %v1962
        %v2219 = vsel %vm1707, %v928, %v1963
        %v2220 = vsel %vm1708, %v1039, %v1964
        %v2221 = vsel %vm1709, %v1041, %v1965
        %v2222 = vsel %vm1710, %v1152, %v1966
        %v2223 = vsel %vm1711, %v1154, %v1967
        %v2224 = vsel %vm1712, %v1265, %v1968
        %v2225 = vsel %vm1713, %v1267, %v1969
        %v2226 = vsel %vm1714, %v1378, %v1970
        %v2227 = vsel %vm1715, %v1380, %v1971
        %v2228 = vsel %vm1716, %v1491, %v1972
        %v2229 = vsel %vm1717, %v1493, %v1973
        %v2230 = vsel %vm1718, %v1604, %v1974
        %v2231 = vsel %vm1719, %v1606, %v1975
        %v2232 = vsel %vm1720, %v817, %v1976
        %v2233 = vsel %vm1721, %v819, %v1977
        %v2234 = vsel %vm1722, %v930, %v1978
        %v2235 = vsel %vm1723, %v932, %v1979
        %v2236 = vsel %vm1724, %v1043, %v1980
        %v2237 = vsel %vm1725, %v1045, %v1981
        %v2238 = vsel %vm1726, %v1156, %v1982
        %v2239 = vsel %vm1727, %v1158, %v1983
        %v2240 = vsel %vm1728, %v1269, %v1984
        %v2241 = vsel %vm1729, %v1271, %v1985
        %v2242 = vsel %vm1730, %v1382, %v1986
        %v2243 = vsel %vm1731, %v1384, %v1987
        %v2244 = vsel %vm1732, %v1495, %v1988
        %v2245 = vsel %vm1733, %v1497, %v1989
        %v2246 = vsel %vm1734, %v1608, %v1990
        %v2247 = vsel %vm1735, %v1610, %v1991
        %v2248 = vsel %vm1736, %v823, %v1992
        %v2249 = vsel %vm1737, %v825, %v1993
        %v2250 = vsel %vm1738, %v936, %v1994
        %v2251 = vsel %vm1739, %v938, %v1995
        %v2252 = vsel %vm1740, %v1049, %v1996
        %v2253 = vsel %vm1741, %v1051, %v1997
        %v2254 = vsel %vm1742, %v1162, %v1998
        %v2255 = vsel %vm1743, %v1164, %v1999
        %v2256 = vsel %vm1744, %v1275, %v2000
        %v2257 = vsel %vm1745, %v1277, %v2001
        %v2258 = vsel %vm1746, %v1388, %v2002
        %v2259 = vsel %vm1747, %v1390, %v2003
        %v2260 = vsel %vm1748, %v1501, %v2004
        %v2261 = vsel %vm1749, %v1503, %v2005
        %v2262 = vsel %vm1750, %v1614, %v2006
        %v2263 = vsel %vm1751, %v1616, %v2007
        %v2264 = vsel %vm1752, %v827, %v2008
        %v2265 = vsel %vm1753, %v829, %v2009
        %v2266 = vsel %vm1754, %v940, %v2010
        %v2267 = vsel %vm1755, %v942, %v2011
        %v2268 = vsel %vm1756, %v1053, %v2012
        %v2269 = vsel %vm1757, %v1055, %v2013
        %v2270 = vsel %vm1758, %v1166, %v2014
        %v2271 = vsel %vm1759, %v1168, %v2015
        %v2272 = vsel %vm1760, %v1279, %v2016
        %v2273 = vsel %vm1761, %v1281, %v2017
        %v2274 = vsel %vm1762, %v1392, %v2018
        %v2275 = vsel %vm1763, %v1394, %v2019
        %v2276 = vsel %vm1764, %v1505, %v2020
        %v2277 = vsel %vm1765, %v1507, %v2021
        %v2278 = vsel %vm1766, %v1618, %v2022
        %v2279 = vsel %vm1767, %v1620, %v2023
        %v2280 = vsel %vm1768, %v833, %v2024
        %v2281 = vsel %vm1769, %v835, %v2025
        %v2282 = vsel %vm1770, %v946, %v2026
        %v2283 = vsel %vm1771, %v948, %v2027
        %v2284 = vsel %vm1772, %v1059, %v2028
        %v2285 = vsel %vm1773, %v1061, %v2029
        %v2286 = vsel %vm1774, %v1172, %v2030
        %v2287 = vsel %vm1775, %v1174, %v2031
        %v2288 = vsel %vm1776, %v1285, %v2032
        %v2289 = vsel %vm1777, %v1287, %v2033
        %v2290 = vsel %vm1778, %v1398, %v2034
        %v2291 = vsel %vm1779, %v1400, %v2035
        %v2292 = vsel %vm1780, %v1511, %v2036
        %v2293 = vsel %vm1781, %v1513, %v2037
        %v2294 = vsel %vm1782, %v1624, %v2038
        %v2295 = vsel %vm1783, %v1626, %v2039
        %v2296 = vsel %vm1784, %v837, %v2040
        %v2297 = vsel %vm1785, %v839, %v2041
        %v2298 = vsel %vm1786, %v950, %v2042
        %v2299 = vsel %vm1787, %v952, %v2043
        %v2300 = vsel %vm1788, %v1063, %v2044
        %v2301 = vsel %vm1789, %v1065, %v2045
        %v2302 = vsel %vm1790, %v1176, %v2046
        %v2303 = vsel %vm1791, %v1178, %v2047
        %v2304 = vsel %vm1792, %v1289, %v2048
        %v2305 = vsel %vm1793, %v1291, %v2049
        %v2306 = vsel %vm1794, %v1402, %v2050
        %v2307 = vsel %vm1795, %v1404, %v2051
        %v2308 = vsel %vm1796, %v1515, %v2052
        %v2309 = vsel %vm1797, %v1517, %v2053
        %v2310 = vsel %vm1798, %v1628, %v2054
        %v2311 = vsel %vm1799, %v1630, %v2055
        %v2312 = vsel %vm1800, %v843, %v2056
        %v2313 = vsel %vm1801, %v845, %v2057
        %v2314 = vsel %vm1802, %v956, %v2058
        %v2315 = vsel %vm1803, %v958, %v2059
        %v2316 = vsel %vm1804, %v1069, %v2060
        %v2317 = vsel %vm1805, %v1071, %v2061
        %v2318 = vsel %vm1806, %v1182, %v2062
        %v2319 = vsel %vm1807, %v1184, %v2063
        %v2320 = vsel %vm1808, %v1295, %v2064
        %v2321 = vsel %vm1809, %v1297, %v2065
        %v2322 = vsel %vm1810, %v1408, %v2066
        %v2323 = vsel %vm1811, %v1410, %v2067
        %v2324 = vsel %vm1812, %v1521, %v2068
        %v2325 = vsel %vm1813, %v1523, %v2069
        %v2326 = vsel %vm1814, %v1634, %v2070
        %v2327 = vsel %vm1815, %v1636, %v2071
        %v2328 = vsel %vm1816, %v847, %v2072
        %v2329 = vsel %vm1817, %v849, %v2073
        %v2330 = vsel %vm1818, %v960, %v2074
        %v2331 = vsel %vm1819, %v962, %v2075
        %v2332 = vsel %vm1820, %v1073, %v2076
        %v2333 = vsel %vm1821, %v1075, %v2077
        %v2334 = vsel %vm1822, %v1186, %v2078
        %v2335 = vsel %vm1823, %v1188, %v2079
        %v2336 = vsel %vm1824, %v1299, %v2080
        %v2337 = vsel %vm1825, %v1301, %v2081
        %v2338 = vsel %vm1826, %v1412, %v2082
        %v2339 = vsel %vm1827, %v1414, %v2083
        %v2340 = vsel %vm1828, %v1525, %v2084
        %v2341 = vsel %vm1829, %v1527, %v2085
        %v2342 = vsel %vm1830, %v1638, %v2086
        %v2343 = vsel %vm1831, %v1640, %v2087
        %v2344 = vsel %vm1832, %v853, %v2088
        %v2345 = vsel %vm1833, %v855, %v2089
        %v2346 = vsel %vm1834, %v966, %v2090
        %v2347 = vsel %vm1835, %v968, %v2091
        %v2348 = vsel %vm1836, %v1079, %v2092
        %v2349 = vsel %vm1837, %v1081, %v2093
        %v2350 = vsel %vm1838, %v1192, %v2094
        %v2351 = vsel %vm1839, %v1194, %v2095
        %v2352 = vsel %vm1840, %v1305, %v2096
        %v2353 = vsel %vm1841, %v1307, %v2097
        %v2354 = vsel %vm1842, %v1418, %v2098
        %v2355 = vsel %vm1843, %v1420, %v2099
        %v2356 = vsel %vm1844, %v1531, %v2100
        %v2357 = vsel %vm1845, %v1533, %v2101
        %v2358 = vsel %vm1846, %v1644, %v2102
        %v2359 = vsel %vm1847, %v1646, %v2103
        %v2360 = vsel %vm1848, %v857, %v2104
        %v2361 = vsel %vm1849, %v859, %v2105
        %v2362 = vsel %vm1850, %v970, %v2106
        %v2363 = vsel %vm1851, %v972, %v2107
        %v2364 = vsel %vm1852, %v1083, %v2108
        %v2365 = vsel %vm1853, %v1085, %v2109
        %v2366 = vsel %vm1854, %v1196, %v2110
        %v2367 = vsel %vm1855, %v1198, %v2111
        %v2368 = vsel %vm1856, %v1309, %v2112
        %v2369 = vsel %vm1857, %v1311, %v2113
        %v2370 = vsel %vm1858, %v1422, %v2114
        %v2371 = vsel %vm1859, %v1424, %v2115
        %v2372 = vsel %vm1860, %v1535, %v2116
        %v2373 = vsel %vm1861, %v1537, %v2117
        %v2374 = vsel %vm1862, %v1648, %v2118
        %v2375 = vsel %vm1863, %v1650, %v2119
        %v2376 = vsel %vm1864, %v863, %v2120
        %v2377 = vsel %vm1865, %v865, %v2121
        %v2378 = vsel %vm1866, %v976, %v2122
        %v2379 = vsel %vm1867, %v978, %v2123
        %v2380 = vsel %vm1868, %v1089, %v2124
        %v2381 = vsel %vm1869, %v1091, %v2125
        %v2382 = vsel %vm1870, %v1202, %v2126
        %v2383 = vsel %vm1871, %v1204, %v2127
        %v2384 = vsel %vm1872, %v1315, %v2128
        %v2385 = vsel %vm1873, %v1317, %v2129
        %v2386 = vsel %vm1874, %v1428, %v2130
        %v2387 = vsel %vm1875, %v1430, %v2131
        %v2388 = vsel %vm1876, %v1541, %v2132
        %v2389 = vsel %vm1877, %v1543, %v2133
        %v2390 = vsel %vm1878, %v1654, %v2134
        %v2391 = vsel %vm1879, %v1656, %v2135
        %v2392 = vsel %vm1880, %v867, %v2136
        %v2393 = vsel %vm1881, %v869, %v2137
        %v2394 = vsel %vm1882, %v980, %v2138
        %v2395 = vsel %vm1883, %v982, %v2139
        %v2396 = vsel %vm1884, %v1093, %v2140
        %v2397 = vsel %vm1885, %v1095, %v2141
        %v2398 = vsel %vm1886, %v1206, %v2142
        %v2399 = vsel %vm1887, %v1208, %v2143
        %v2400 = vsel %vm1888, %v1319, %v2144
        %v2401 = vsel %vm1889, %v1321, %v2145
        %v2402 = vsel %vm1890, %v1432, %v2146
        %v2403 = vsel %vm1891, %v1434, %v2147
        %v2404 = vsel %vm1892, %v1545, %v2148
        %v2405 = vsel %vm1893, %v1547, %v2149
        %v2406 = vsel %vm1894, %v1658, %v2150
        %v2407 = vsel %vm1895, %v1660, %v2151
        %v2408 = vsel %vm1896, %v873, %v2152
        %v2409 = vsel %vm1897, %v875, %v2153
        %v2410 = vsel %vm1898, %v986, %v2154
        %v2411 = vsel %vm1899, %v988, %v2155
        %v2412 = vsel %vm1900, %v1099, %v2156
        %v2413 = vsel %vm1901, %v1101, %v2157
        %v2414 = vsel %vm1902, %v1212, %v2158
        %v2415 = vsel %vm1903, %v1214, %v2159
        %v2416 = vsel %vm1904, %v1325, %v2160
        %v2417 = vsel %vm1905, %v1327, %v2161
        %v2418 = vsel %vm1906, %v1438, %v2162
        %v2419 = vsel %vm1907, %v1440, %v2163
        %v2420 = vsel %vm1908, %v1551, %v2164
        %v2421 = vsel %vm1909, %v1553, %v2165
        %v2422 = vsel %vm1910, %v1664, %v2166
        %v2423 = vsel %vm1911, %v1666, %v2167
        %v2424 = vsel %vm1912, %v877, %v2168
        %v2425 = vsel %vm1913, %v879, %v2169
        %v2426 = vsel %vm1914, %v990, %v2170
        %v2427 = vsel %vm1915, %v992, %v2171
        %v2428 = vsel %vm1916, %v1103, %v2172
        %v2429 = vsel %vm1917, %v1105, %v2173
        %v2430 = vsel %vm1918, %v1216, %v2174
        %v2431 = vsel %vm1919, %v1218, %v2175
        %v2432 = vsel %vm1920, %v1329, %v2176
        %v2433 = vsel %vm1921, %v1331, %v2177
        %v2434 = vsel %vm1922, %v1442, %v2178
        %v2435 = vsel %vm1923, %v1444, %v2179
        %v2436 = vsel %vm1924, %v1555, %v2180
        %v2437 = vsel %vm1925, %v1557, %v2181
        %v2438 = vsel %vm1926, %v1668, %v2182
        %v2439 = vsel %vm1927, %v1670, %v2183
        %v2440 = vpack.c.bf16 %v2200, %v2184
        %v2441 = vpack.c.bf16 %v2201, %v2185
        %v2442 = vpack.c.bf16 %v2202, %v2186
        %v2443 = vpack.c.bf16 %v2203, %v2187
        %v2444 = vpack.c.bf16 %v2204, %v2188
        %v2445 = vpack.c.bf16 %v2205, %v2189
        %v2446 = vpack.c.bf16 %v2206, %v2190
        %v2447 = vpack.c.bf16 %v2207, %v2191
        %v2448 = vpack.c.bf16 %v2232, %v2216
        %v2449 = vpack.c.bf16 %v2233, %v2217
        %v2450 = vpack.c.bf16 %v2234, %v2218
        %v2451 = vpack.c.bf16 %v2235, %v2219
        %v2452 = vpack.c.bf16 %v2236, %v2220
        %v2453 = vpack.c.bf16 %v2237, %v2221
        %v2454 = vpack.c.bf16 %v2238, %v2222
        %v2455 = vpack.c.bf16 %v2239, %v2223
        %v2456 = vpack.c.bf16 %v2264, %v2248
        %v2457 = vpack.c.bf16 %v2265, %v2249
        %v2458 = vpack.c.bf16 %v2266, %v2250
        %v2459 = vpack.c.bf16 %v2267, %v2251
        %v2460 = vpack.c.bf16 %v2268, %v2252
        %v2461 = vpack.c.bf16 %v2269, %v2253
        %v2462 = vpack.c.bf16 %v2270, %v2254
        %v2463 = vpack.c.bf16 %v2271, %v2255
        %v2464 = vpack.c.bf16 %v2296, %v2280
        %v2465 = vpack.c.bf16 %v2297, %v2281
        %v2466 = vpack.c.bf16 %v2298, %v2282
        %v2467 = vpack.c.bf16 %v2299, %v2283
        %v2468 = vpack.c.bf16 %v2300, %v2284
        %v2469 = vpack.c.bf16 %v2301, %v2285
        %v2470 = vpack.c.bf16 %v2302, %v2286
        %v2471 = vpack.c.bf16 %v2303, %v2287
        %v2472 = vpack.c.bf16 %v2328, %v2312
        %v2473 = vpack.c.bf16 %v2329, %v2313
        %v2474 = vpack.c.bf16 %v2330, %v2314
        %v2475 = vpack.c.bf16 %v2331, %v2315
        %v2476 = vpack.c.bf16 %v2332, %v2316
        %v2477 = vpack.c.bf16 %v2333, %v2317
        %v2478 = vpack.c.bf16 %v2334, %v2318
        %v2479 = vpack.c.bf16 %v2335, %v2319
        %v2480 = vpack.c.bf16 %v2360, %v2344
        %v2481 = vpack.c.bf16 %v2361, %v2345
        %v2482 = vpack.c.bf16 %v2362, %v2346
        %v2483 = vpack.c.bf16 %v2363, %v2347
        %v2484 = vpack.c.bf16 %v2364, %v2348
        %v2485 = vpack.c.bf16 %v2365, %v2349
        %v2486 = vpack.c.bf16 %v2366, %v2350
        %v2487 = vpack.c.bf16 %v2367, %v2351
        %v2488 = vpack.c.bf16 %v2392, %v2376
        %v2489 = vpack.c.bf16 %v2393, %v2377
        %v2490 = vpack.c.bf16 %v2394, %v2378
        %v2491 = vpack.c.bf16 %v2395, %v2379
        %v2492 = vpack.c.bf16 %v2396, %v2380
        %v2493 = vpack.c.bf16 %v2397, %v2381
        %v2494 = vpack.c.bf16 %v2398, %v2382
        %v2495 = vpack.c.bf16 %v2399, %v2383
        %v2496 = vpack.c.bf16 %v2424, %v2408
        %v2497 = vpack.c.bf16 %v2425, %v2409
        %v2498 = vpack.c.bf16 %v2426, %v2410
        %v2499 = vpack.c.bf16 %v2427, %v2411
        %v2500 = vpack.c.bf16 %v2428, %v2412
        %v2501 = vpack.c.bf16 %v2429, %v2413
        %v2502 = vpack.c.bf16 %v2430, %v2414
        %v2503 = vpack.c.bf16 %v2431, %v2415
        %v2504 = vpack.c.bf16 %v2208, %v2192
        %v2505 = vpack.c.bf16 %v2209, %v2193
        %v2506 = vpack.c.bf16 %v2210, %v2194
        %v2507 = vpack.c.bf16 %v2211, %v2195
        %v2508 = vpack.c.bf16 %v2212, %v2196
        %v2509 = vpack.c.bf16 %v2213, %v2197
        %v2510 = vpack.c.bf16 %v2214, %v2198
        %v2511 = vpack.c.bf16 %v2215, %v2199
        %v2512 = vpack.c.bf16 %v2240, %v2224
        %v2513 = vpack.c.bf16 %v2241, %v2225
        %v2514 = vpack.c.bf16 %v2242, %v2226
        %v2515 = vpack.c.bf16 %v2243, %v2227
        %v2516 = vpack.c.bf16 %v2244, %v2228
        %v2517 = vpack.c.bf16 %v2245, %v2229
        %v2518 = vpack.c.bf16 %v2246, %v2230
        %v2519 = vpack.c.bf16 %v2247, %v2231
        %v2520 = vpack.c.bf16 %v2272, %v2256
        %v2521 = vpack.c.bf16 %v2273, %v2257
        %v2522 = vpack.c.bf16 %v2274, %v2258
        %v2523 = vpack.c.bf16 %v2275, %v2259
        %v2524 = vpack.c.bf16 %v2276, %v2260
        %v2525 = vpack.c.bf16 %v2277, %v2261
        %v2526 = vpack.c.bf16 %v2278, %v2262
        %v2527 = vpack.c.bf16 %v2279, %v2263
        %v2528 = vpack.c.bf16 %v2304, %v2288
        %v2529 = vpack.c.bf16 %v2305, %v2289
        %v2530 = vpack.c.bf16 %v2306, %v2290
        %v2531 = vpack.c.bf16 %v2307, %v2291
        %v2532 = vpack.c.bf16 %v2308, %v2292
        %v2533 = vpack.c.bf16 %v2309, %v2293
        %v2534 = vpack.c.bf16 %v2310, %v2294
        %v2535 = vpack.c.bf16 %v2311, %v2295
        %v2536 = vpack.c.bf16 %v2336, %v2320
        %v2537 = vpack.c.bf16 %v2337, %v2321
        %v2538 = vpack.c.bf16 %v2338, %v2322
        %v2539 = vpack.c.bf16 %v2339, %v2323
        %v2540 = vpack.c.bf16 %v2340, %v2324
        %v2541 = vpack.c.bf16 %v2341, %v2325
        %v2542 = vpack.c.bf16 %v2342, %v2326
        %v2543 = vpack.c.bf16 %v2343, %v2327
        %v2544 = vpack.c.bf16 %v2368, %v2352
        %v2545 = vpack.c.bf16 %v2369, %v2353
        %v2546 = vpack.c.bf16 %v2370, %v2354
        %v2547 = vpack.c.bf16 %v2371, %v2355
        %v2548 = vpack.c.bf16 %v2372, %v2356
        %v2549 = vpack.c.bf16 %v2373, %v2357
        %v2550 = vpack.c.bf16 %v2374, %v2358
        %v2551 = vpack.c.bf16 %v2375, %v2359
        %v2552 = vpack.c.bf16 %v2400, %v2384
        %v2553 = vpack.c.bf16 %v2401, %v2385
        %v2554 = vpack.c.bf16 %v2402, %v2386
        %v2555 = vpack.c.bf16 %v2403, %v2387
        %v2556 = vpack.c.bf16 %v2404, %v2388
        %v2557 = vpack.c.bf16 %v2405, %v2389
        %v2558 = vpack.c.bf16 %v2406, %v2390
        %v2559 = vpack.c.bf16 %v2407, %v2391
        %v2560 = vpack.c.bf16 %v2432, %v2416
        %v2561 = vpack.c.bf16 %v2433, %v2417
        %v2562 = vpack.c.bf16 %v2434, %v2418
        %v2563 = vpack.c.bf16 %v2435, %v2419
        %v2564 = vpack.c.bf16 %v2436, %v2420
        %v2565 = vpack.c.bf16 %v2437, %v2421
        %v2566 = vpack.c.bf16 %v2438, %v2422
        %v2567 = vpack.c.bf16 %v2439, %v2423
        %v2568 = vld [vmem:[%s7 + $0x10] sm:$0xf]
        %v2569 = vld [vmem:[%s7 + $0x14] sm:$0xf]
        %v2570 = vld [vmem:[#allocation2] sm:$0xff]
        %v2571 = vld [vmem:[#allocation2 + $0x8] sm:$0xff]
        %v2572 = vld [vmem:[#allocation2 + $0x10] sm:$0xff]
        %v2573 = vld [vmem:[#allocation2 + $0x18] sm:$0xff]
        %v2574 = vld [vmem:[#allocation2 + $0x20] sm:$0xff]
        %v2575 = vld [vmem:[#allocation2 + $0x28] sm:$0xff]
        %v2576 = vld [vmem:[#allocation2 + $0x30] sm:$0xff]
        %v2577 = vld [vmem:[#allocation2 + $0x38] sm:$0xff]
        %v2578 = vld [vmem:[#allocation2 + $0x40] sm:$0xff]
        %v2579 = vld [vmem:[#allocation2 + $0x48] sm:$0xff]
        %v2580 = vld [vmem:[#allocation2 + $0x50] sm:$0xff]
        %v2581 = vld [vmem:[#allocation2 + $0x58] sm:$0xff]
        %v2582 = vld [vmem:[#allocation2 + $0x60] sm:$0xff]
        %v2583 = vld [vmem:[#allocation2 + $0x68] sm:$0xff]
        %v2584 = vld [vmem:[#allocation2 + $0x70] sm:$0xff]
        %v2585 = vld [vmem:[#allocation2 + $0x78] sm:$0xff]
        %v2586 = vld [vmem:[#allocation2 + $0x80] sm:$0xff]
        %v2587 = vld [vmem:[#allocation2 + $0x88] sm:$0xff]
        %v2588 = vld [vmem:[#allocation2 + $0x90] sm:$0xff]
        %v2589 = vld [vmem:[#allocation2 + $0x98] sm:$0xff]
        %v2590 = vld [vmem:[#allocation2 + $0xa0] sm:$0xff]
        %v2591 = vld [vmem:[#allocation2 + $0xa8] sm:$0xff]
        %v2592 = vld [vmem:[#allocation2 + $0xb0] sm:$0xff]
        %v2593 = vld [vmem:[#allocation2 + $0xb8] sm:$0xff]
        %v2594 = vld [vmem:[#allocation2 + $0xc0] sm:$0xff]
        %v2595 = vld [vmem:[#allocation2 + $0xc8] sm:$0xff]
        %v2596 = vld [vmem:[#allocation2 + $0xd0] sm:$0xff]
        %v2597 = vld [vmem:[#allocation2 + $0xd8] sm:$0xff]
        %v2598 = vld [vmem:[#allocation2 + $0xe0] sm:$0xff]
        %v2599 = vld [vmem:[#allocation2 + $0xe8] sm:$0xff]
        %v2600 = vld [vmem:[#allocation2 + $0xf0] sm:$0xff]
        %v2601 = vld [vmem:[#allocation2 + $0xf8] sm:$0xff]
        %v2602 = vld [vmem:[#allocation2 + $0x100] sm:$0xff]
        %v2603 = vld [vmem:[#allocation2 + $0x108] sm:$0xff]
        %v2604 = vld [vmem:[#allocation2 + $0x110] sm:$0xff]
        %v2605 = vld [vmem:[#allocation2 + $0x118] sm:$0xff]
        %v2606 = vld [vmem:[#allocation2 + $0x120] sm:$0xff]
        %v2607 = vld [vmem:[#allocation2 + $0x128] sm:$0xff]
        %v2608 = vld [vmem:[#allocation2 + $0x130] sm:$0xff]
        %v2609 = vld [vmem:[#allocation2 + $0x138] sm:$0xff]
        %v2610 = vld [vmem:[#allocation2 + $0x140] sm:$0xff]
        %v2611 = vld [vmem:[#allocation2 + $0x148] sm:$0xff]
        %v2612 = vld [vmem:[#allocation2 + $0x150] sm:$0xff]
        %v2613 = vld [vmem:[#allocation2 + $0x158] sm:$0xff]
        %v2614 = vld [vmem:[#allocation2 + $0x160] sm:$0xff]
        %v2615 = vld [vmem:[#allocation2 + $0x168] sm:$0xff]
        %v2616 = vld [vmem:[#allocation2 + $0x170] sm:$0xff]
        %v2617 = vld [vmem:[#allocation2 + $0x178] sm:$0xff]
        %v2618 = vld [vmem:[#allocation2 + $0x180] sm:$0xff]
        %v2619 = vld [vmem:[#allocation2 + $0x188] sm:$0xff]
        %v2620 = vld [vmem:[#allocation2 + $0x190] sm:$0xff]
        %v2621 = vld [vmem:[#allocation2 + $0x198] sm:$0xff]
        %v2622 = vld [vmem:[#allocation2 + $0x1a0] sm:$0xff]
        %v2623 = vld [vmem:[#allocation2 + $0x1a8] sm:$0xff]
        %v2624 = vld [vmem:[#allocation2 + $0x1b0] sm:$0xff]
        %v2625 = vld [vmem:[#allocation2 + $0x1b8] sm:$0xff]
        %v2626 = vld [vmem:[#allocation2 + $0x1c0] sm:$0xff]
        %v2627 = vld [vmem:[#allocation2 + $0x1c8] sm:$0xff]
        %v2628 = vld [vmem:[#allocation2 + $0x1d0] sm:$0xff]
        %v2629 = vld [vmem:[#allocation2 + $0x1d8] sm:$0xff]
        %v2630 = vld [vmem:[#allocation2 + $0x1e0] sm:$0xff]
        %v2631 = vld [vmem:[#allocation2 + $0x1e8] sm:$0xff]
        %v2632 = vld [vmem:[#allocation2 + $0x1f0] sm:$0xff]
        %v2633 = vld [vmem:[#allocation2 + $0x1f8] sm:$0xff]
        %v2634 = vld [vmem:[#allocation2 + $0x200] sm:$0xff]
        %v2635 = vld [vmem:[#allocation2 + $0x208] sm:$0xff]
        %v2636 = vld [vmem:[#allocation2 + $0x210] sm:$0xff]
        %v2637 = vld [vmem:[#allocation2 + $0x218] sm:$0xff]
        %v2638 = vld [vmem:[#allocation2 + $0x220] sm:$0xff]
        %v2639 = vld [vmem:[#allocation2 + $0x228] sm:$0xff]
        %v2640 = vld [vmem:[#allocation2 + $0x230] sm:$0xff]
        %v2641 = vld [vmem:[#allocation2 + $0x238] sm:$0xff]
        %v2642 = vld [vmem:[#allocation2 + $0x240] sm:$0xff]
        %v2643 = vld [vmem:[#allocation2 + $0x248] sm:$0xff]
        %v2644 = vld [vmem:[#allocation2 + $0x250] sm:$0xff]
        %v2645 = vld [vmem:[#allocation2 + $0x258] sm:$0xff]
        %v2646 = vld [vmem:[#allocation2 + $0x260] sm:$0xff]
        %v2647 = vld [vmem:[#allocation2 + $0x268] sm:$0xff]
        %v2648 = vld [vmem:[#allocation2 + $0x270] sm:$0xff]
        %v2649 = vld [vmem:[#allocation2 + $0x278] sm:$0xff]
        %v2650 = vld [vmem:[#allocation2 + $0x280] sm:$0xff]
        %v2651 = vld [vmem:[#allocation2 + $0x288] sm:$0xff]
        %v2652 = vld [vmem:[#allocation2 + $0x290] sm:$0xff]
        %v2653 = vld [vmem:[#allocation2 + $0x298] sm:$0xff]
        %v2654 = vld [vmem:[#allocation2 + $0x2a0] sm:$0xff]
        %v2655 = vld [vmem:[#allocation2 + $0x2a8] sm:$0xff]
        %v2656 = vld [vmem:[#allocation2 + $0x2b0] sm:$0xff]
        %v2657 = vld [vmem:[#allocation2 + $0x2b8] sm:$0xff]
        %v2658 = vld [vmem:[#allocation2 + $0x2c0] sm:$0xff]
        %v2659 = vld [vmem:[#allocation2 + $0x2c8] sm:$0xff]
        %v2660 = vld [vmem:[#allocation2 + $0x2d0] sm:$0xff]
        %v2661 = vld [vmem:[#allocation2 + $0x2d8] sm:$0xff]
        %v2662 = vld [vmem:[#allocation2 + $0x2e0] sm:$0xff]
        %v2663 = vld [vmem:[#allocation2 + $0x2e8] sm:$0xff]
        %v2664 = vld [vmem:[#allocation2 + $0x2f0] sm:$0xff]
        %v2665 = vld [vmem:[#allocation2 + $0x2f8] sm:$0xff]
        %v2666 = vld [vmem:[#allocation2 + $0x300] sm:$0xff]
        %v2667 = vld [vmem:[#allocation2 + $0x308] sm:$0xff]
        %v2668 = vld [vmem:[#allocation2 + $0x310] sm:$0xff]
        %v2669 = vld [vmem:[#allocation2 + $0x318] sm:$0xff]
        %v2670 = vld [vmem:[#allocation2 + $0x320] sm:$0xff]
        %v2671 = vld [vmem:[#allocation2 + $0x328] sm:$0xff]
        %v2672 = vld [vmem:[#allocation2 + $0x330] sm:$0xff]
        %v2673 = vld [vmem:[#allocation2 + $0x338] sm:$0xff]
        %v2674 = vld [vmem:[#allocation2 + $0x340] sm:$0xff]
        %v2675 = vld [vmem:[#allocation2 + $0x348] sm:$0xff]
        %v2676 = vld [vmem:[#allocation2 + $0x350] sm:$0xff]
        %v2677 = vld [vmem:[#allocation2 + $0x358] sm:$0xff]
        %v2678 = vld [vmem:[#allocation2 + $0x360] sm:$0xff]
        %v2679 = vld [vmem:[#allocation2 + $0x368] sm:$0xff]
        %v2680 = vld [vmem:[#allocation2 + $0x370] sm:$0xff]
        %v2681 = vld [vmem:[#allocation2 + $0x378] sm:$0xff]
        %v2682 = vld [vmem:[#allocation2 + $0x380] sm:$0xff]
        %v2683 = vld [vmem:[#allocation2 + $0x388] sm:$0xff]
        %v2684 = vld [vmem:[#allocation2 + $0x390] sm:$0xff]
        %v2685 = vld [vmem:[#allocation2 + $0x398] sm:$0xff]
        %v2686 = vld [vmem:[#allocation2 + $0x3a0] sm:$0xff]
        %v2687 = vld [vmem:[#allocation2 + $0x3a8] sm:$0xff]
        %v2688 = vld [vmem:[#allocation2 + $0x3b0] sm:$0xff]
        %v2689 = vld [vmem:[#allocation2 + $0x3b8] sm:$0xff]
        %v2690 = vld [vmem:[#allocation2 + $0x3c0] sm:$0xff]
        %v2691 = vld [vmem:[#allocation2 + $0x3c8] sm:$0xff]
        %v2692 = vld [vmem:[#allocation2 + $0x3d0] sm:$0xff]
        %v2693 = vld [vmem:[#allocation2 + $0x3d8] sm:$0xff]
        %v2694 = vld [vmem:[#allocation2 + $0x3e0] sm:$0xff]
        %v2695 = vld [vmem:[#allocation2 + $0x3e8] sm:$0xff]
        %v2696 = vld [vmem:[#allocation2 + $0x3f0] sm:$0xff]
        %v2697 = vld [vmem:[#allocation2 + $0x3f8] sm:$0xff]
        %v2698 = vld [vmem:[#allocation2 + $0x400] sm:$0xff]
        %v2699 = vld [vmem:[#allocation2 + $0x408] sm:$0xff]
        %v2700 = vld [vmem:[#allocation2 + $0x410] sm:$0xff]
        %v2701 = vld [vmem:[#allocation2 + $0x418] sm:$0xff]
        %v2702 = vld [vmem:[#allocation2 + $0x420] sm:$0xff]
        %v2703 = vld [vmem:[#allocation2 + $0x428] sm:$0xff]
        %v2704 = vld [vmem:[#allocation2 + $0x430] sm:$0xff]
        %v2705 = vld [vmem:[#allocation2 + $0x438] sm:$0xff]
        %v2706 = vld [vmem:[#allocation2 + $0x440] sm:$0xff]
        %v2707 = vld [vmem:[#allocation2 + $0x448] sm:$0xff]
        %v2708 = vld [vmem:[#allocation2 + $0x450] sm:$0xff]
        %v2709 = vld [vmem:[#allocation2 + $0x458] sm:$0xff]
        %v2710 = vld [vmem:[#allocation2 + $0x460] sm:$0xff]
        %v2711 = vld [vmem:[#allocation2 + $0x468] sm:$0xff]
        %v2712 = vld [vmem:[#allocation2 + $0x470] sm:$0xff]
        %v2713 = vld [vmem:[#allocation2 + $0x478] sm:$0xff]
        %v2714 = vld [vmem:[#allocation2 + $0x480] sm:$0xff]
        %v2715 = vld [vmem:[#allocation2 + $0x488] sm:$0xff]
        %v2716 = vld [vmem:[#allocation2 + $0x490] sm:$0xff]
        %v2717 = vld [vmem:[#allocation2 + $0x498] sm:$0xff]
        %v2718 = vld [vmem:[#allocation2 + $0x4a0] sm:$0xff]
        %v2719 = vld [vmem:[#allocation2 + $0x4a8] sm:$0xff]
        %v2720 = vld [vmem:[#allocation2 + $0x4b0] sm:$0xff]
        %v2721 = vld [vmem:[#allocation2 + $0x4b8] sm:$0xff]
        %v2722 = vld [vmem:[#allocation2 + $0x4c0] sm:$0xff]
        %v2723 = vld [vmem:[#allocation2 + $0x4c8] sm:$0xff]
        %v2724 = vld [vmem:[#allocation2 + $0x4d0] sm:$0xff]
        %v2725 = vld [vmem:[#allocation2 + $0x4d8] sm:$0xff]
        %v2726 = vld [vmem:[#allocation2 + $0x4e0] sm:$0xff]
        %v2727 = vld [vmem:[#allocation2 + $0x4e8] sm:$0xff]
        %v2728 = vld [vmem:[#allocation2 + $0x4f0] sm:$0xff]
        %v2729 = vld [vmem:[#allocation2 + $0x4f8] sm:$0xff]
        %v2730 = vld [vmem:[#allocation2 + $0x500] sm:$0xff]
        %v2731 = vld [vmem:[#allocation2 + $0x508] sm:$0xff]
        %v2732 = vld [vmem:[#allocation2 + $0x510] sm:$0xff]
        %v2733 = vld [vmem:[#allocation2 + $0x518] sm:$0xff]
        %v2734 = vld [vmem:[#allocation2 + $0x520] sm:$0xff]
        %v2735 = vld [vmem:[#allocation2 + $0x528] sm:$0xff]
        %v2736 = vld [vmem:[#allocation2 + $0x530] sm:$0xff]
        %v2737 = vld [vmem:[#allocation2 + $0x538] sm:$0xff]
        %v2738 = vld [vmem:[#allocation2 + $0x540] sm:$0xff]
        %v2739 = vld [vmem:[#allocation2 + $0x548] sm:$0xff]
        %v2740 = vld [vmem:[#allocation2 + $0x550] sm:$0xff]
        %v2741 = vld [vmem:[#allocation2 + $0x558] sm:$0xff]
        %v2742 = vld [vmem:[#allocation2 + $0x560] sm:$0xff]
        %v2743 = vld [vmem:[#allocation2 + $0x568] sm:$0xff]
        %v2744 = vld [vmem:[#allocation2 + $0x570] sm:$0xff]
        %v2745 = vld [vmem:[#allocation2 + $0x578] sm:$0xff]
        %v2746 = vld [vmem:[#allocation2 + $0x580] sm:$0xff]
        %v2747 = vld [vmem:[#allocation2 + $0x588] sm:$0xff]
        %v2748 = vld [vmem:[#allocation2 + $0x590] sm:$0xff]
        %v2749 = vld [vmem:[#allocation2 + $0x598] sm:$0xff]
        %v2750 = vld [vmem:[#allocation2 + $0x5a0] sm:$0xff]
        %v2751 = vld [vmem:[#allocation2 + $0x5a8] sm:$0xff]
        %v2752 = vld [vmem:[#allocation2 + $0x5b0] sm:$0xff]
        %v2753 = vld [vmem:[#allocation2 + $0x5b8] sm:$0xff]
        %v2754 = vld [vmem:[#allocation2 + $0x5c0] sm:$0xff]
        %v2755 = vld [vmem:[#allocation2 + $0x5c8] sm:$0xff]
        %v2756 = vld [vmem:[#allocation2 + $0x5d0] sm:$0xff]
        %v2757 = vld [vmem:[#allocation2 + $0x5d8] sm:$0xff]
        %v2758 = vld [vmem:[#allocation2 + $0x5e0] sm:$0xff]
        %v2759 = vld [vmem:[#allocation2 + $0x5e8] sm:$0xff]
        %v2760 = vld [vmem:[#allocation2 + $0x5f0] sm:$0xff]
        %v2761 = vld [vmem:[#allocation2 + $0x5f8] sm:$0xff]
        %v2762 = vld [vmem:[#allocation2 + $0x600] sm:$0xff]
        %v2763 = vld [vmem:[#allocation2 + $0x608] sm:$0xff]
        %v2764 = vld [vmem:[#allocation2 + $0x610] sm:$0xff]
        %v2765 = vld [vmem:[#allocation2 + $0x618] sm:$0xff]
        %v2766 = vld [vmem:[#allocation2 + $0x620] sm:$0xff]
        %v2767 = vld [vmem:[#allocation2 + $0x628] sm:$0xff]
        %v2768 = vld [vmem:[#allocation2 + $0x630] sm:$0xff]
        %v2769 = vld [vmem:[#allocation2 + $0x638] sm:$0xff]
        %v2770 = vld [vmem:[#allocation2 + $0x640] sm:$0xff]
        %v2771 = vld [vmem:[#allocation2 + $0x648] sm:$0xff]
        %v2772 = vld [vmem:[#allocation2 + $0x650] sm:$0xff]
        %v2773 = vld [vmem:[#allocation2 + $0x658] sm:$0xff]
        %v2774 = vld [vmem:[#allocation2 + $0x660] sm:$0xff]
        %v2775 = vld [vmem:[#allocation2 + $0x668] sm:$0xff]
        %v2776 = vld [vmem:[#allocation2 + $0x670] sm:$0xff]
        %v2777 = vld [vmem:[#allocation2 + $0x678] sm:$0xff]
        %v2778 = vld [vmem:[#allocation2 + $0x680] sm:$0xff]
        %v2779 = vld [vmem:[#allocation2 + $0x688] sm:$0xff]
        %v2780 = vld [vmem:[#allocation2 + $0x690] sm:$0xff]
        %v2781 = vld [vmem:[#allocation2 + $0x698] sm:$0xff]
        %v2782 = vld [vmem:[#allocation2 + $0x6a0] sm:$0xff]
        %v2783 = vld [vmem:[#allocation2 + $0x6a8] sm:$0xff]
        %v2784 = vld [vmem:[#allocation2 + $0x6b0] sm:$0xff]
        %v2785 = vld [vmem:[#allocation2 + $0x6b8] sm:$0xff]
        %v2786 = vld [vmem:[#allocation2 + $0x6c0] sm:$0xff]
        %v2787 = vld [vmem:[#allocation2 + $0x6c8] sm:$0xff]
        %v2788 = vld [vmem:[#allocation2 + $0x6d0] sm:$0xff]
        %v2789 = vld [vmem:[#allocation2 + $0x6d8] sm:$0xff]
        %v2790 = vld [vmem:[#allocation2 + $0x6e0] sm:$0xff]
        %v2791 = vld [vmem:[#allocation2 + $0x6e8] sm:$0xff]
        %v2792 = vld [vmem:[#allocation2 + $0x6f0] sm:$0xff]
        %v2793 = vld [vmem:[#allocation2 + $0x6f8] sm:$0xff]
        %v2794 = vld [vmem:[#allocation2 + $0x700] sm:$0xff]
        %v2795 = vld [vmem:[#allocation2 + $0x708] sm:$0xff]
        %v2796 = vld [vmem:[#allocation2 + $0x710] sm:$0xff]
        %v2797 = vld [vmem:[#allocation2 + $0x718] sm:$0xff]
        %v2798 = vld [vmem:[#allocation2 + $0x720] sm:$0xff]
        %v2799 = vld [vmem:[#allocation2 + $0x728] sm:$0xff]
        %v2800 = vld [vmem:[#allocation2 + $0x730] sm:$0xff]
        %v2801 = vld [vmem:[#allocation2 + $0x738] sm:$0xff]
        %v2802 = vld [vmem:[#allocation2 + $0x740] sm:$0xff]
        %v2803 = vld [vmem:[#allocation2 + $0x748] sm:$0xff]
        %v2804 = vld [vmem:[#allocation2 + $0x750] sm:$0xff]
        %v2805 = vld [vmem:[#allocation2 + $0x758] sm:$0xff]
        %v2806 = vld [vmem:[#allocation2 + $0x760] sm:$0xff]
        %v2807 = vld [vmem:[#allocation2 + $0x768] sm:$0xff]
        %v2808 = vld [vmem:[#allocation2 + $0x770] sm:$0xff]
        %v2809 = vld [vmem:[#allocation2 + $0x778] sm:$0xff]
        %v2810 = vld [vmem:[#allocation2 + $0x780] sm:$0xff]
        %v2811 = vld [vmem:[#allocation2 + $0x788] sm:$0xff]
        %v2812 = vld [vmem:[#allocation2 + $0x790] sm:$0xff]
        %v2813 = vld [vmem:[#allocation2 + $0x798] sm:$0xff]
        %v2814 = vld [vmem:[#allocation2 + $0x7a0] sm:$0xff]
        %v2815 = vld [vmem:[#allocation2 + $0x7a8] sm:$0xff]
        %v2816 = vld [vmem:[#allocation2 + $0x7b0] sm:$0xff]
        %v2817 = vld [vmem:[#allocation2 + $0x7b8] sm:$0xff]
        %v2818 = vld [vmem:[#allocation2 + $0x7c0] sm:$0xff]
        %v2819 = vld [vmem:[#allocation2 + $0x7c8] sm:$0xff]
        %v2820 = vld [vmem:[#allocation2 + $0x7d0] sm:$0xff]
        %v2821 = vld [vmem:[#allocation2 + $0x7d8] sm:$0xff]
        %v2822 = vld [vmem:[#allocation2 + $0x7e0] sm:$0xff]
        %v2823 = vld [vmem:[#allocation2 + $0x7e8] sm:$0xff]
        %v2824 = vld [vmem:[#allocation2 + $0x7f0] sm:$0xff]
        %v2825 = vld [vmem:[#allocation2 + $0x7f8] sm:$0xff]
        %v2827 = vlaneseq
        %v2828 = vshrl.u32 %v2827, 7
        %v2829 = vsub.s32 0, %v2828
        %v2830 = vrot.slane %v2568, %v2829
        %v2831 = vlaneseq
        %v2832 = vshrl.u32 %v2831, 7
        %v2833 = vsub.s32 1, %v2832
        %v2834 = vrot.slane %v2568, %v2833
        %v2835 = vlaneseq
        %v2836 = vshrl.u32 %v2835, 7
        %v2837 = vsub.s32 2, %v2836
        %v2838 = vrot.slane %v2568, %v2837
        %v2839 = vlaneseq
        %v2840 = vshrl.u32 %v2839, 7
        %v2841 = vsub.s32 3, %v2840
        %v2842 = vrot.slane %v2568, %v2841
        %v3103 = vunpack.c.l.b16 %v2570
        %v3104 = vunpack.c.h.b16 %v2570
        %v3105 = vunpack.c.l.b16 %v2571
        %v3106 = vunpack.c.h.b16 %v2571
        %v3107 = vunpack.c.l.b16 %v2572
        %v3108 = vunpack.c.h.b16 %v2572
        %v3109 = vunpack.c.l.b16 %v2573
        %v3110 = vunpack.c.h.b16 %v2573
        %v3111 = vunpack.c.l.b16 %v2574
        %v3112 = vunpack.c.h.b16 %v2574
        %v3113 = vunpack.c.l.b16 %v2575
        %v3114 = vunpack.c.h.b16 %v2575
        %v3115 = vunpack.c.l.b16 %v2576
        %v3116 = vunpack.c.h.b16 %v2576
        %v3117 = vunpack.c.l.b16 %v2577
        %v3118 = vunpack.c.h.b16 %v2577
        %v3119 = vunpack.c.l.b16 %v2578
        %v3120 = vunpack.c.h.b16 %v2578
        %v3121 = vunpack.c.l.b16 %v2579
        %v3122 = vunpack.c.h.b16 %v2579
        %v3123 = vunpack.c.l.b16 %v2580
        %v3124 = vunpack.c.h.b16 %v2580
        %v3125 = vunpack.c.l.b16 %v2581
        %v3126 = vunpack.c.h.b16 %v2581
        %v3127 = vunpack.c.l.b16 %v2582
        %v3128 = vunpack.c.h.b16 %v2582
        %v3129 = vunpack.c.l.b16 %v2583
        %v3130 = vunpack.c.h.b16 %v2583
        %v3131 = vunpack.c.l.b16 %v2584
        %v3132 = vunpack.c.h.b16 %v2584
        %v3133 = vunpack.c.l.b16 %v2585
        %v3134 = vunpack.c.h.b16 %v2585
        %v3135 = vunpack.c.l.b16 %v2586
        %v3136 = vunpack.c.h.b16 %v2586
        %v3137 = vunpack.c.l.b16 %v2587
        %v3138 = vunpack.c.h.b16 %v2587
        %v3139 = vunpack.c.l.b16 %v2588
        %v3140 = vunpack.c.h.b16 %v2588
        %v3141 = vunpack.c.l.b16 %v2589
        %v3142 = vunpack.c.h.b16 %v2589
        %v3143 = vunpack.c.l.b16 %v2590
        %v3144 = vunpack.c.h.b16 %v2590
        %v3145 = vunpack.c.l.b16 %v2591
        %v3146 = vunpack.c.h.b16 %v2591
        %v3147 = vunpack.c.l.b16 %v2592
        %v3148 = vunpack.c.h.b16 %v2592
        %v3149 = vunpack.c.l.b16 %v2593
        %v3150 = vunpack.c.h.b16 %v2593
        %v3151 = vunpack.c.l.b16 %v2594
        %v3152 = vunpack.c.h.b16 %v2594
        %v3153 = vunpack.c.l.b16 %v2595
        %v3154 = vunpack.c.h.b16 %v2595
        %v3155 = vunpack.c.l.b16 %v2596
        %v3156 = vunpack.c.h.b16 %v2596
        %v3157 = vunpack.c.l.b16 %v2597
        %v3158 = vunpack.c.h.b16 %v2597
        %v3159 = vunpack.c.l.b16 %v2598
        %v3160 = vunpack.c.h.b16 %v2598
        %v3161 = vunpack.c.l.b16 %v2599
        %v3162 = vunpack.c.h.b16 %v2599
        %v3163 = vunpack.c.l.b16 %v2600
        %v3164 = vunpack.c.h.b16 %v2600
        %v3165 = vunpack.c.l.b16 %v2601
        %v3166 = vunpack.c.h.b16 %v2601
        %v3167 = vunpack.c.l.b16 %v2602
        %v3168 = vunpack.c.h.b16 %v2602
        %v3169 = vunpack.c.l.b16 %v2603
        %v3170 = vunpack.c.h.b16 %v2603
        %v3171 = vunpack.c.l.b16 %v2604
        %v3172 = vunpack.c.h.b16 %v2604
        %v3173 = vunpack.c.l.b16 %v2605
        %v3174 = vunpack.c.h.b16 %v2605
        %v3175 = vunpack.c.l.b16 %v2606
        %v3176 = vunpack.c.h.b16 %v2606
        %v3177 = vunpack.c.l.b16 %v2607
        %v3178 = vunpack.c.h.b16 %v2607
        %v3179 = vunpack.c.l.b16 %v2608
        %v3180 = vunpack.c.h.b16 %v2608
        %v3181 = vunpack.c.l.b16 %v2609
        %v3182 = vunpack.c.h.b16 %v2609
        %v3183 = vunpack.c.l.b16 %v2610
        %v3184 = vunpack.c.h.b16 %v2610
        %v3185 = vunpack.c.l.b16 %v2611
        %v3186 = vunpack.c.h.b16 %v2611
        %v3187 = vunpack.c.l.b16 %v2612
        %v3188 = vunpack.c.h.b16 %v2612
        %v3189 = vunpack.c.l.b16 %v2613
        %v3190 = vunpack.c.h.b16 %v2613
        %v3191 = vunpack.c.l.b16 %v2614
        %v3192 = vunpack.c.h.b16 %v2614
        %v3193 = vunpack.c.l.b16 %v2615
        %v3194 = vunpack.c.h.b16 %v2615
        %v3195 = vunpack.c.l.b16 %v2616
        %v3196 = vunpack.c.h.b16 %v2616
        %v3197 = vunpack.c.l.b16 %v2617
        %v3198 = vunpack.c.h.b16 %v2617
        %v3199 = vunpack.c.l.b16 %v2618
        %v3200 = vunpack.c.h.b16 %v2618
        %v3201 = vunpack.c.l.b16 %v2619
        %v3202 = vunpack.c.h.b16 %v2619
        %v3203 = vunpack.c.l.b16 %v2620
        %v3204 = vunpack.c.h.b16 %v2620
        %v3205 = vunpack.c.l.b16 %v2621
        %v3206 = vunpack.c.h.b16 %v2621
        %v3207 = vunpack.c.l.b16 %v2622
        %v3208 = vunpack.c.h.b16 %v2622
        %v3209 = vunpack.c.l.b16 %v2623
        %v3210 = vunpack.c.h.b16 %v2623
        %v3211 = vunpack.c.l.b16 %v2624
        %v3212 = vunpack.c.h.b16 %v2624
        %v3213 = vunpack.c.l.b16 %v2625
        %v3214 = vunpack.c.h.b16 %v2625
        %v3215 = vunpack.c.l.b16 %v2626
        %v3216 = vunpack.c.h.b16 %v2626
        %v3217 = vunpack.c.l.b16 %v2627
        %v3218 = vunpack.c.h.b16 %v2627
        %v3219 = vunpack.c.l.b16 %v2628
        %v3220 = vunpack.c.h.b16 %v2628
        %v3221 = vunpack.c.l.b16 %v2629
        %v3222 = vunpack.c.h.b16 %v2629
        %v3223 = vunpack.c.l.b16 %v2630
        %v3224 = vunpack.c.h.b16 %v2630
        %v3225 = vunpack.c.l.b16 %v2631
        %v3226 = vunpack.c.h.b16 %v2631
        %v3227 = vunpack.c.l.b16 %v2632
        %v3228 = vunpack.c.h.b16 %v2632
        %v3229 = vunpack.c.l.b16 %v2633
        %v3230 = vunpack.c.h.b16 %v2633
        %v3231 = vunpack.c.l.b16 %v2634
        %v3232 = vunpack.c.h.b16 %v2634
        %v3233 = vunpack.c.l.b16 %v2635
        %v3234 = vunpack.c.h.b16 %v2635
        %v3235 = vunpack.c.l.b16 %v2636
        %v3236 = vunpack.c.h.b16 %v2636
        %v3237 = vunpack.c.l.b16 %v2637
        %v3238 = vunpack.c.h.b16 %v2637
        %v3239 = vunpack.c.l.b16 %v2638
        %v3240 = vunpack.c.h.b16 %v2638
        %v3241 = vunpack.c.l.b16 %v2639
        %v3242 = vunpack.c.h.b16 %v2639
        %v3243 = vunpack.c.l.b16 %v2640
        %v3244 = vunpack.c.h.b16 %v2640
        %v3245 = vunpack.c.l.b16 %v2641
        %v3246 = vunpack.c.h.b16 %v2641
        %v3247 = vunpack.c.l.b16 %v2642
        %v3248 = vunpack.c.h.b16 %v2642
        %v3249 = vunpack.c.l.b16 %v2643
        %v3250 = vunpack.c.h.b16 %v2643
        %v3251 = vunpack.c.l.b16 %v2644
        %v3252 = vunpack.c.h.b16 %v2644
        %v3253 = vunpack.c.l.b16 %v2645
        %v3254 = vunpack.c.h.b16 %v2645
        %v3255 = vunpack.c.l.b16 %v2646
        %v3256 = vunpack.c.h.b16 %v2646
        %v3257 = vunpack.c.l.b16 %v2647
        %v3258 = vunpack.c.h.b16 %v2647
        %v3259 = vunpack.c.l.b16 %v2648
        %v3260 = vunpack.c.h.b16 %v2648
        %v3261 = vunpack.c.l.b16 %v2649
        %v3262 = vunpack.c.h.b16 %v2649
        %v3263 = vunpack.c.l.b16 %v2650
        %v3264 = vunpack.c.h.b16 %v2650
        %v3265 = vunpack.c.l.b16 %v2651
        %v3266 = vunpack.c.h.b16 %v2651
        %v3267 = vunpack.c.l.b16 %v2652
        %v3268 = vunpack.c.h.b16 %v2652
        %v3269 = vunpack.c.l.b16 %v2653
        %v3270 = vunpack.c.h.b16 %v2653
        %v3271 = vunpack.c.l.b16 %v2654
        %v3272 = vunpack.c.h.b16 %v2654
        %v3273 = vunpack.c.l.b16 %v2655
        %v3274 = vunpack.c.h.b16 %v2655
        %v3275 = vunpack.c.l.b16 %v2656
        %v3276 = vunpack.c.h.b16 %v2656
        %v3277 = vunpack.c.l.b16 %v2657
        %v3278 = vunpack.c.h.b16 %v2657
        %v3279 = vunpack.c.l.b16 %v2658
        %v3280 = vunpack.c.h.b16 %v2658
        %v3281 = vunpack.c.l.b16 %v2659
        %v3282 = vunpack.c.h.b16 %v2659
        %v3283 = vunpack.c.l.b16 %v2660
        %v3284 = vunpack.c.h.b16 %v2660
        %v3285 = vunpack.c.l.b16 %v2661
        %v3286 = vunpack.c.h.b16 %v2661
        %v3287 = vunpack.c.l.b16 %v2662
        %v3288 = vunpack.c.h.b16 %v2662
        %v3289 = vunpack.c.l.b16 %v2663
        %v3290 = vunpack.c.h.b16 %v2663
        %v3291 = vunpack.c.l.b16 %v2664
        %v3292 = vunpack.c.h.b16 %v2664
        %v3293 = vunpack.c.l.b16 %v2665
        %v3294 = vunpack.c.h.b16 %v2665
        %v3295 = vunpack.c.l.b16 %v2666
        %v3296 = vunpack.c.h.b16 %v2666
        %v3297 = vunpack.c.l.b16 %v2667
        %v3298 = vunpack.c.h.b16 %v2667
        %v3299 = vunpack.c.l.b16 %v2668
        %v3300 = vunpack.c.h.b16 %v2668
        %v3301 = vunpack.c.l.b16 %v2669
        %v3302 = vunpack.c.h.b16 %v2669
        %v3303 = vunpack.c.l.b16 %v2670
        %v3304 = vunpack.c.h.b16 %v2670
        %v3305 = vunpack.c.l.b16 %v2671
        %v3306 = vunpack.c.h.b16 %v2671
        %v3307 = vunpack.c.l.b16 %v2672
        %v3308 = vunpack.c.h.b16 %v2672
        %v3309 = vunpack.c.l.b16 %v2673
        %v3310 = vunpack.c.h.b16 %v2673
        %v3311 = vunpack.c.l.b16 %v2674
        %v3312 = vunpack.c.h.b16 %v2674
        %v3313 = vunpack.c.l.b16 %v2675
        %v3314 = vunpack.c.h.b16 %v2675
        %v3315 = vunpack.c.l.b16 %v2676
        %v3316 = vunpack.c.h.b16 %v2676
        %v3317 = vunpack.c.l.b16 %v2677
        %v3318 = vunpack.c.h.b16 %v2677
        %v3319 = vunpack.c.l.b16 %v2678
        %v3320 = vunpack.c.h.b16 %v2678
        %v3321 = vunpack.c.l.b16 %v2679
        %v3322 = vunpack.c.h.b16 %v2679
        %v3323 = vunpack.c.l.b16 %v2680
        %v3324 = vunpack.c.h.b16 %v2680
        %v3325 = vunpack.c.l.b16 %v2681
        %v3326 = vunpack.c.h.b16 %v2681
        %v3327 = vunpack.c.l.b16 %v2682
        %v3328 = vunpack.c.h.b16 %v2682
        %v3329 = vunpack.c.l.b16 %v2683
        %v3330 = vunpack.c.h.b16 %v2683
        %v3331 = vunpack.c.l.b16 %v2684
        %v3332 = vunpack.c.h.b16 %v2684
        %v3333 = vunpack.c.l.b16 %v2685
        %v3334 = vunpack.c.h.b16 %v2685
        %v3335 = vunpack.c.l.b16 %v2686
        %v3336 = vunpack.c.h.b16 %v2686
        %v3337 = vunpack.c.l.b16 %v2687
        %v3338 = vunpack.c.h.b16 %v2687
        %v3339 = vunpack.c.l.b16 %v2688
        %v3340 = vunpack.c.h.b16 %v2688
        %v3341 = vunpack.c.l.b16 %v2689
        %v3342 = vunpack.c.h.b16 %v2689
        %v3343 = vunpack.c.l.b16 %v2690
        %v3344 = vunpack.c.h.b16 %v2690
        %v3345 = vunpack.c.l.b16 %v2691
        %v3346 = vunpack.c.h.b16 %v2691
        %v3347 = vunpack.c.l.b16 %v2692
        %v3348 = vunpack.c.h.b16 %v2692
        %v3349 = vunpack.c.l.b16 %v2693
        %v3350 = vunpack.c.h.b16 %v2693
        %v3351 = vunpack.c.l.b16 %v2694
        %v3352 = vunpack.c.h.b16 %v2694
        %v3353 = vunpack.c.l.b16 %v2695
        %v3354 = vunpack.c.h.b16 %v2695
        %v3355 = vunpack.c.l.b16 %v2696
        %v3356 = vunpack.c.h.b16 %v2696
        %v3357 = vunpack.c.l.b16 %v2697
        %v3358 = vunpack.c.h.b16 %v2697
        %v3359 = vunpack.c.l.b16 %v2698
        %v3360 = vunpack.c.h.b16 %v2698
        %v3361 = vunpack.c.l.b16 %v2699
        %v3362 = vunpack.c.h.b16 %v2699
        %v3363 = vunpack.c.l.b16 %v2700
        %v3364 = vunpack.c.h.b16 %v2700
        %v3365 = vunpack.c.l.b16 %v2701
        %v3366 = vunpack.c.h.b16 %v2701
        %v3367 = vunpack.c.l.b16 %v2702
        %v3368 = vunpack.c.h.b16 %v2702
        %v3369 = vunpack.c.l.b16 %v2703
        %v3370 = vunpack.c.h.b16 %v2703
        %v3371 = vunpack.c.l.b16 %v2704
        %v3372 = vunpack.c.h.b16 %v2704
        %v3373 = vunpack.c.l.b16 %v2705
        %v3374 = vunpack.c.h.b16 %v2705
        %v3375 = vunpack.c.l.b16 %v2706
        %v3376 = vunpack.c.h.b16 %v2706
        %v3377 = vunpack.c.l.b16 %v2707
        %v3378 = vunpack.c.h.b16 %v2707
        %v3379 = vunpack.c.l.b16 %v2708
        %v3380 = vunpack.c.h.b16 %v2708
        %v3381 = vunpack.c.l.b16 %v2709
        %v3382 = vunpack.c.h.b16 %v2709
        %v3383 = vunpack.c.l.b16 %v2710
        %v3384 = vunpack.c.h.b16 %v2710
        %v3385 = vunpack.c.l.b16 %v2711
        %v3386 = vunpack.c.h.b16 %v2711
        %v3387 = vunpack.c.l.b16 %v2712
        %v3388 = vunpack.c.h.b16 %v2712
        %v3389 = vunpack.c.l.b16 %v2713
        %v3390 = vunpack.c.h.b16 %v2713
        %v3391 = vunpack.c.l.b16 %v2714
        %v3392 = vunpack.c.h.b16 %v2714
        %v3393 = vunpack.c.l.b16 %v2715
        %v3394 = vunpack.c.h.b16 %v2715
        %v3395 = vunpack.c.l.b16 %v2716
        %v3396 = vunpack.c.h.b16 %v2716
        %v3397 = vunpack.c.l.b16 %v2717
        %v3398 = vunpack.c.h.b16 %v2717
        %v3399 = vunpack.c.l.b16 %v2718
        %v3400 = vunpack.c.h.b16 %v2718
        %v3401 = vunpack.c.l.b16 %v2719
        %v3402 = vunpack.c.h.b16 %v2719
        %v3403 = vunpack.c.l.b16 %v2720
        %v3404 = vunpack.c.h.b16 %v2720
        %v3405 = vunpack.c.l.b16 %v2721
        %v3406 = vunpack.c.h.b16 %v2721
        %v3407 = vunpack.c.l.b16 %v2722
        %v3408 = vunpack.c.h.b16 %v2722
        %v3409 = vunpack.c.l.b16 %v2723
        %v3410 = vunpack.c.h.b16 %v2723
        %v3411 = vunpack.c.l.b16 %v2724
        %v3412 = vunpack.c.h.b16 %v2724
        %v3413 = vunpack.c.l.b16 %v2725
        %v3414 = vunpack.c.h.b16 %v2725
        %v3415 = vunpack.c.l.b16 %v2726
        %v3416 = vunpack.c.h.b16 %v2726
        %v3417 = vunpack.c.l.b16 %v2727
        %v3418 = vunpack.c.h.b16 %v2727
        %v3419 = vunpack.c.l.b16 %v2728
        %v3420 = vunpack.c.h.b16 %v2728
        %v3421 = vunpack.c.l.b16 %v2729
        %v3422 = vunpack.c.h.b16 %v2729
        %v3423 = vunpack.c.l.b16 %v2730
        %v3424 = vunpack.c.h.b16 %v2730
        %v3425 = vunpack.c.l.b16 %v2731
        %v3426 = vunpack.c.h.b16 %v2731
        %v3427 = vunpack.c.l.b16 %v2732
        %v3428 = vunpack.c.h.b16 %v2732
        %v3429 = vunpack.c.l.b16 %v2733
        %v3430 = vunpack.c.h.b16 %v2733
        %v3431 = vunpack.c.l.b16 %v2734
        %v3432 = vunpack.c.h.b16 %v2734
        %v3433 = vunpack.c.l.b16 %v2735
        %v3434 = vunpack.c.h.b16 %v2735
        %v3435 = vunpack.c.l.b16 %v2736
        %v3436 = vunpack.c.h.b16 %v2736
        %v3437 = vunpack.c.l.b16 %v2737
        %v3438 = vunpack.c.h.b16 %v2737
        %v3439 = vunpack.c.l.b16 %v2738
        %v3440 = vunpack.c.h.b16 %v2738
        %v3441 = vunpack.c.l.b16 %v2739
        %v3442 = vunpack.c.h.b16 %v2739
        %v3443 = vunpack.c.l.b16 %v2740
        %v3444 = vunpack.c.h.b16 %v2740
        %v3445 = vunpack.c.l.b16 %v2741
        %v3446 = vunpack.c.h.b16 %v2741
        %v3447 = vunpack.c.l.b16 %v2742
        %v3448 = vunpack.c.h.b16 %v2742
        %v3449 = vunpack.c.l.b16 %v2743
        %v3450 = vunpack.c.h.b16 %v2743
        %v3451 = vunpack.c.l.b16 %v2744
        %v3452 = vunpack.c.h.b16 %v2744
        %v3453 = vunpack.c.l.b16 %v2745
        %v3454 = vunpack.c.h.b16 %v2745
        %v3455 = vunpack.c.l.b16 %v2746
        %v3456 = vunpack.c.h.b16 %v2746
        %v3457 = vunpack.c.l.b16 %v2747
        %v3458 = vunpack.c.h.b16 %v2747
        %v3459 = vunpack.c.l.b16 %v2748
        %v3460 = vunpack.c.h.b16 %v2748
        %v3461 = vunpack.c.l.b16 %v2749
        %v3462 = vunpack.c.h.b16 %v2749
        %v3463 = vunpack.c.l.b16 %v2750
        %v3464 = vunpack.c.h.b16 %v2750
        %v3465 = vunpack.c.l.b16 %v2751
        %v3466 = vunpack.c.h.b16 %v2751
        %v3467 = vunpack.c.l.b16 %v2752
        %v3468 = vunpack.c.h.b16 %v2752
        %v3469 = vunpack.c.l.b16 %v2753
        %v3470 = vunpack.c.h.b16 %v2753
        %v3471 = vunpack.c.l.b16 %v2754
        %v3472 = vunpack.c.h.b16 %v2754
        %v3473 = vunpack.c.l.b16 %v2755
        %v3474 = vunpack.c.h.b16 %v2755
        %v3475 = vunpack.c.l.b16 %v2756
        %v3476 = vunpack.c.h.b16 %v2756
        %v3477 = vunpack.c.l.b16 %v2757
        %v3478 = vunpack.c.h.b16 %v2757
        %v3479 = vunpack.c.l.b16 %v2758
        %v3480 = vunpack.c.h.b16 %v2758
        %v3481 = vunpack.c.l.b16 %v2759
        %v3482 = vunpack.c.h.b16 %v2759
        %v3483 = vunpack.c.l.b16 %v2760
        %v3484 = vunpack.c.h.b16 %v2760
        %v3485 = vunpack.c.l.b16 %v2761
        %v3486 = vunpack.c.h.b16 %v2761
        %v3487 = vunpack.c.l.b16 %v2762
        %v3488 = vunpack.c.h.b16 %v2762
        %v3489 = vunpack.c.l.b16 %v2763
        %v3490 = vunpack.c.h.b16 %v2763
        %v3491 = vunpack.c.l.b16 %v2764
        %v3492 = vunpack.c.h.b16 %v2764
        %v3493 = vunpack.c.l.b16 %v2765
        %v3494 = vunpack.c.h.b16 %v2765
        %v3495 = vunpack.c.l.b16 %v2766
        %v3496 = vunpack.c.h.b16 %v2766
        %v3497 = vunpack.c.l.b16 %v2767
        %v3498 = vunpack.c.h.b16 %v2767
        %v3499 = vunpack.c.l.b16 %v2768
        %v3500 = vunpack.c.h.b16 %v2768
        %v3501 = vunpack.c.l.b16 %v2769
        %v3502 = vunpack.c.h.b16 %v2769
        %v3503 = vunpack.c.l.b16 %v2770
        %v3504 = vunpack.c.h.b16 %v2770
        %v3505 = vunpack.c.l.b16 %v2771
        %v3506 = vunpack.c.h.b16 %v2771
        %v3507 = vunpack.c.l.b16 %v2772
        %v3508 = vunpack.c.h.b16 %v2772
        %v3509 = vunpack.c.l.b16 %v2773
        %v3510 = vunpack.c.h.b16 %v2773
        %v3511 = vunpack.c.l.b16 %v2774
        %v3512 = vunpack.c.h.b16 %v2774
        %v3513 = vunpack.c.l.b16 %v2775
        %v3514 = vunpack.c.h.b16 %v2775
        %v3515 = vunpack.c.l.b16 %v2776
        %v3516 = vunpack.c.h.b16 %v2776
        %v3517 = vunpack.c.l.b16 %v2777
        %v3518 = vunpack.c.h.b16 %v2777
        %v3519 = vunpack.c.l.b16 %v2778
        %v3520 = vunpack.c.h.b16 %v2778
        %v3521 = vunpack.c.l.b16 %v2779
        %v3522 = vunpack.c.h.b16 %v2779
        %v3523 = vunpack.c.l.b16 %v2780
        %v3524 = vunpack.c.h.b16 %v2780
        %v3525 = vunpack.c.l.b16 %v2781
        %v3526 = vunpack.c.h.b16 %v2781
        %v3527 = vunpack.c.l.b16 %v2782
        %v3528 = vunpack.c.h.b16 %v2782
        %v3529 = vunpack.c.l.b16 %v2783
        %v3530 = vunpack.c.h.b16 %v2783
        %v3531 = vunpack.c.l.b16 %v2784
        %v3532 = vunpack.c.h.b16 %v2784
        %v3533 = vunpack.c.l.b16 %v2785
        %v3534 = vunpack.c.h.b16 %v2785
        %v3535 = vunpack.c.l.b16 %v2786
        %v3536 = vunpack.c.h.b16 %v2786
        %v3537 = vunpack.c.l.b16 %v2787
        %v3538 = vunpack.c.h.b16 %v2787
        %v3539 = vunpack.c.l.b16 %v2788
        %v3540 = vunpack.c.h.b16 %v2788
        %v3541 = vunpack.c.l.b16 %v2789
        %v3542 = vunpack.c.h.b16 %v2789
        %v3543 = vunpack.c.l.b16 %v2790
        %v3544 = vunpack.c.h.b16 %v2790
        %v3545 = vunpack.c.l.b16 %v2791
        %v3546 = vunpack.c.h.b16 %v2791
        %v3547 = vunpack.c.l.b16 %v2792
        %v3548 = vunpack.c.h.b16 %v2792
        %v3549 = vunpack.c.l.b16 %v2793
        %v3550 = vunpack.c.h.b16 %v2793
        %v3551 = vunpack.c.l.b16 %v2794
        %v3552 = vunpack.c.h.b16 %v2794
        %v3553 = vunpack.c.l.b16 %v2795
        %v3554 = vunpack.c.h.b16 %v2795
        %v3555 = vunpack.c.l.b16 %v2796
        %v3556 = vunpack.c.h.b16 %v2796
        %v3557 = vunpack.c.l.b16 %v2797
        %v3558 = vunpack.c.h.b16 %v2797
        %v3559 = vunpack.c.l.b16 %v2798
        %v3560 = vunpack.c.h.b16 %v2798
        %v3561 = vunpack.c.l.b16 %v2799
        %v3562 = vunpack.c.h.b16 %v2799
        %v3563 = vunpack.c.l.b16 %v2800
        %v3564 = vunpack.c.h.b16 %v2800
        %v3565 = vunpack.c.l.b16 %v2801
        %v3566 = vunpack.c.h.b16 %v2801
        %v3567 = vunpack.c.l.b16 %v2802
        %v3568 = vunpack.c.h.b16 %v2802
        %v3569 = vunpack.c.l.b16 %v2803
        %v3570 = vunpack.c.h.b16 %v2803
        %v3571 = vunpack.c.l.b16 %v2804
        %v3572 = vunpack.c.h.b16 %v2804
        %v3573 = vunpack.c.l.b16 %v2805
        %v3574 = vunpack.c.h.b16 %v2805
        %v3575 = vunpack.c.l.b16 %v2806
        %v3576 = vunpack.c.h.b16 %v2806
        %v3577 = vunpack.c.l.b16 %v2807
        %v3578 = vunpack.c.h.b16 %v2807
        %v3579 = vunpack.c.l.b16 %v2808
        %v3580 = vunpack.c.h.b16 %v2808
        %v3581 = vunpack.c.l.b16 %v2809
        %v3582 = vunpack.c.h.b16 %v2809
        %v3583 = vunpack.c.l.b16 %v2810
        %v3584 = vunpack.c.h.b16 %v2810
        %v3585 = vunpack.c.l.b16 %v2811
        %v3586 = vunpack.c.h.b16 %v2811
        %v3587 = vunpack.c.l.b16 %v2812
        %v3588 = vunpack.c.h.b16 %v2812
        %v3589 = vunpack.c.l.b16 %v2813
        %v3590 = vunpack.c.h.b16 %v2813
        %v3591 = vunpack.c.l.b16 %v2814
        %v3592 = vunpack.c.h.b16 %v2814
        %v3593 = vunpack.c.l.b16 %v2815
        %v3594 = vunpack.c.h.b16 %v2815
        %v3595 = vunpack.c.l.b16 %v2816
        %v3596 = vunpack.c.h.b16 %v2816
        %v3597 = vunpack.c.l.b16 %v2817
        %v3598 = vunpack.c.h.b16 %v2817
        %v3599 = vunpack.c.l.b16 %v2818
        %v3600 = vunpack.c.h.b16 %v2818
        %v3601 = vunpack.c.l.b16 %v2819
        %v3602 = vunpack.c.h.b16 %v2819
        %v3603 = vunpack.c.l.b16 %v2820
        %v3604 = vunpack.c.h.b16 %v2820
        %v3605 = vunpack.c.l.b16 %v2821
        %v3606 = vunpack.c.h.b16 %v2821
        %v3607 = vunpack.c.l.b16 %v2822
        %v3608 = vunpack.c.h.b16 %v2822
        %v3609 = vunpack.c.l.b16 %v2823
        %v3610 = vunpack.c.h.b16 %v2823
        %v3611 = vunpack.c.l.b16 %v2824
        %v3612 = vunpack.c.h.b16 %v2824
        %v3613 = vunpack.c.l.b16 %v2825
        %v3614 = vunpack.c.h.b16 %v2825
        %v3615 = vpack.c.b16 %v3107, %v3103
        %v3616 = vpack.c.b16 %v3108, %v3104
        %v3617 = vpack.c.b16 %v3109, %v3105
        %v3618 = vpack.c.b16 %v3110, %v3106
        %v3619 = vpack.c.b16 %v3115, %v3111
        %v3620 = vpack.c.b16 %v3116, %v3112
        %v3621 = vpack.c.b16 %v3117, %v3113
        %v3622 = vpack.c.b16 %v3118, %v3114
        %v3623 = vpack.c.b16 %v3123, %v3119
        %v3624 = vpack.c.b16 %v3124, %v3120
        %v3625 = vpack.c.b16 %v3125, %v3121
        %v3626 = vpack.c.b16 %v3126, %v3122
        %v3627 = vpack.c.b16 %v3131, %v3127
        %v3628 = vpack.c.b16 %v3132, %v3128
        %v3629 = vpack.c.b16 %v3133, %v3129
        %v3630 = vpack.c.b16 %v3134, %v3130
        %v3631 = vpack.c.b16 %v3139, %v3135
        %v3632 = vpack.c.b16 %v3140, %v3136
        %v3633 = vpack.c.b16 %v3141, %v3137
        %v3634 = vpack.c.b16 %v3142, %v3138
        %v3635 = vpack.c.b16 %v3147, %v3143
        %v3636 = vpack.c.b16 %v3148, %v3144
        %v3637 = vpack.c.b16 %v3149, %v3145
        %v3638 = vpack.c.b16 %v3150, %v3146
        %v3639 = vpack.c.b16 %v3155, %v3151
        %v3640 = vpack.c.b16 %v3156, %v3152
        %v3641 = vpack.c.b16 %v3157, %v3153
        %v3642 = vpack.c.b16 %v3158, %v3154
        %v3643 = vpack.c.b16 %v3163, %v3159
        %v3644 = vpack.c.b16 %v3164, %v3160
        %v3645 = vpack.c.b16 %v3165, %v3161
        %v3646 = vpack.c.b16 %v3166, %v3162
        %v3647 = vpack.c.b16 %v3171, %v3167
        %v3648 = vpack.c.b16 %v3172, %v3168
        %v3649 = vpack.c.b16 %v3173, %v3169
        %v3650 = vpack.c.b16 %v3174, %v3170
        %v3651 = vpack.c.b16 %v3179, %v3175
        %v3652 = vpack.c.b16 %v3180, %v3176
        %v3653 = vpack.c.b16 %v3181, %v3177
        %v3654 = vpack.c.b16 %v3182, %v3178
        %v3655 = vpack.c.b16 %v3187, %v3183
        %v3656 = vpack.c.b16 %v3188, %v3184
        %v3657 = vpack.c.b16 %v3189, %v3185
        %v3658 = vpack.c.b16 %v3190, %v3186
        %v3659 = vpack.c.b16 %v3195, %v3191
        %v3660 = vpack.c.b16 %v3196, %v3192
        %v3661 = vpack.c.b16 %v3197, %v3193
        %v3662 = vpack.c.b16 %v3198, %v3194
        %v3663 = vpack.c.b16 %v3203, %v3199
        %v3664 = vpack.c.b16 %v3204, %v3200
        %v3665 = vpack.c.b16 %v3205, %v3201
        %v3666 = vpack.c.b16 %v3206, %v3202
        %v3667 = vpack.c.b16 %v3211, %v3207
        %v3668 = vpack.c.b16 %v3212, %v3208
        %v3669 = vpack.c.b16 %v3213, %v3209
        %v3670 = vpack.c.b16 %v3214, %v3210
        %v3671 = vpack.c.b16 %v3219, %v3215
        %v3672 = vpack.c.b16 %v3220, %v3216
        %v3673 = vpack.c.b16 %v3221, %v3217
        %v3674 = vpack.c.b16 %v3222, %v3218
        %v3675 = vpack.c.b16 %v3227, %v3223
        %v3676 = vpack.c.b16 %v3228, %v3224
        %v3677 = vpack.c.b16 %v3229, %v3225
        %v3678 = vpack.c.b16 %v3230, %v3226
        %v3679 = vpack.c.b16 %v3235, %v3231
        %v3680 = vpack.c.b16 %v3236, %v3232
        %v3681 = vpack.c.b16 %v3237, %v3233
        %v3682 = vpack.c.b16 %v3238, %v3234
        %v3683 = vpack.c.b16 %v3243, %v3239
        %v3684 = vpack.c.b16 %v3244, %v3240
        %v3685 = vpack.c.b16 %v3245, %v3241
        %v3686 = vpack.c.b16 %v3246, %v3242
        %v3687 = vpack.c.b16 %v3251, %v3247
        %v3688 = vpack.c.b16 %v3252, %v3248
        %v3689 = vpack.c.b16 %v3253, %v3249
        %v3690 = vpack.c.b16 %v3254, %v3250
        %v3691 = vpack.c.b16 %v3259, %v3255
        %v3692 = vpack.c.b16 %v3260, %v3256
        %v3693 = vpack.c.b16 %v3261, %v3257
        %v3694 = vpack.c.b16 %v3262, %v3258
        %v3695 = vpack.c.b16 %v3267, %v3263
        %v3696 = vpack.c.b16 %v3268, %v3264
        %v3697 = vpack.c.b16 %v3269, %v3265
        %v3698 = vpack.c.b16 %v3270, %v3266
        %v3699 = vpack.c.b16 %v3275, %v3271
        %v3700 = vpack.c.b16 %v3276, %v3272
        %v3701 = vpack.c.b16 %v3277, %v3273
        %v3702 = vpack.c.b16 %v3278, %v3274
        %v3703 = vpack.c.b16 %v3283, %v3279
        %v3704 = vpack.c.b16 %v3284, %v3280
        %v3705 = vpack.c.b16 %v3285, %v3281
        %v3706 = vpack.c.b16 %v3286, %v3282
        %v3707 = vpack.c.b16 %v3291, %v3287
        %v3708 = vpack.c.b16 %v3292, %v3288
        %v3709 = vpack.c.b16 %v3293, %v3289
        %v3710 = vpack.c.b16 %v3294, %v3290
        %v3711 = vpack.c.b16 %v3299, %v3295
        %v3712 = vpack.c.b16 %v3300, %v3296
        %v3713 = vpack.c.b16 %v3301, %v3297
        %v3714 = vpack.c.b16 %v3302, %v3298
        %v3715 = vpack.c.b16 %v3307, %v3303
        %v3716 = vpack.c.b16 %v3308, %v3304
        %v3717 = vpack.c.b16 %v3309, %v3305
        %v3718 = vpack.c.b16 %v3310, %v3306
        %v3719 = vpack.c.b16 %v3315, %v3311
        %v3720 = vpack.c.b16 %v3316, %v3312
        %v3721 = vpack.c.b16 %v3317, %v3313
        %v3722 = vpack.c.b16 %v3318, %v3314
        %v3723 = vpack.c.b16 %v3323, %v3319
        %v3724 = vpack.c.b16 %v3324, %v3320
        %v3725 = vpack.c.b16 %v3325, %v3321
        %v3726 = vpack.c.b16 %v3326, %v3322
        %v3727 = vpack.c.b16 %v3331, %v3327
        %v3728 = vpack.c.b16 %v3332, %v3328
        %v3729 = vpack.c.b16 %v3333, %v3329
        %v3730 = vpack.c.b16 %v3334, %v3330
        %v3731 = vpack.c.b16 %v3339, %v3335
        %v3732 = vpack.c.b16 %v3340, %v3336
        %v3733 = vpack.c.b16 %v3341, %v3337
        %v3734 = vpack.c.b16 %v3342, %v3338
        %v3735 = vpack.c.b16 %v3347, %v3343
        %v3736 = vpack.c.b16 %v3348, %v3344
        %v3737 = vpack.c.b16 %v3349, %v3345
        %v3738 = vpack.c.b16 %v3350, %v3346
        %v3739 = vpack.c.b16 %v3355, %v3351
        %v3740 = vpack.c.b16 %v3356, %v3352
        %v3741 = vpack.c.b16 %v3357, %v3353
        %v3742 = vpack.c.b16 %v3358, %v3354
        %v3743 = vpack.c.b16 %v3363, %v3359
        %v3744 = vpack.c.b16 %v3364, %v3360
        %v3745 = vpack.c.b16 %v3365, %v3361
        %v3746 = vpack.c.b16 %v3366, %v3362
        %v3747 = vpack.c.b16 %v3371, %v3367
        %v3748 = vpack.c.b16 %v3372, %v3368
        %v3749 = vpack.c.b16 %v3373, %v3369
        %v3750 = vpack.c.b16 %v3374, %v3370
        %v3751 = vpack.c.b16 %v3379, %v3375
        %v3752 = vpack.c.b16 %v3380, %v3376
        %v3753 = vpack.c.b16 %v3381, %v3377
        %v3754 = vpack.c.b16 %v3382, %v3378
        %v3755 = vpack.c.b16 %v3387, %v3383
        %v3756 = vpack.c.b16 %v3388, %v3384
        %v3757 = vpack.c.b16 %v3389, %v3385
        %v3758 = vpack.c.b16 %v3390, %v3386
        %v3759 = vpack.c.b16 %v3395, %v3391
        %v3760 = vpack.c.b16 %v3396, %v3392
        %v3761 = vpack.c.b16 %v3397, %v3393
        %v3762 = vpack.c.b16 %v3398, %v3394
        %v3763 = vpack.c.b16 %v3403, %v3399
        %v3764 = vpack.c.b16 %v3404, %v3400
        %v3765 = vpack.c.b16 %v3405, %v3401
        %v3766 = vpack.c.b16 %v3406, %v3402
        %v3767 = vpack.c.b16 %v3411, %v3407
        %v3768 = vpack.c.b16 %v3412, %v3408
        %v3769 = vpack.c.b16 %v3413, %v3409
        %v3770 = vpack.c.b16 %v3414, %v3410
        %v3771 = vpack.c.b16 %v3419, %v3415
        %v3772 = vpack.c.b16 %v3420, %v3416
        %v3773 = vpack.c.b16 %v3421, %v3417
        %v3774 = vpack.c.b16 %v3422, %v3418
        %v3775 = vpack.c.b16 %v3427, %v3423
        %v3776 = vpack.c.b16 %v3428, %v3424
        %v3777 = vpack.c.b16 %v3429, %v3425
        %v3778 = vpack.c.b16 %v3430, %v3426
        %v3779 = vpack.c.b16 %v3435, %v3431
        %v3780 = vpack.c.b16 %v3436, %v3432
        %v3781 = vpack.c.b16 %v3437, %v3433
        %v3782 = vpack.c.b16 %v3438, %v3434
        %v3783 = vpack.c.b16 %v3443, %v3439
        %v3784 = vpack.c.b16 %v3444, %v3440
        %v3785 = vpack.c.b16 %v3445, %v3441
        %v3786 = vpack.c.b16 %v3446, %v3442
        %v3787 = vpack.c.b16 %v3451, %v3447
        %v3788 = vpack.c.b16 %v3452, %v3448
        %v3789 = vpack.c.b16 %v3453, %v3449
        %v3790 = vpack.c.b16 %v3454, %v3450
        %v3791 = vpack.c.b16 %v3459, %v3455
        %v3792 = vpack.c.b16 %v3460, %v3456
        %v3793 = vpack.c.b16 %v3461, %v3457
        %v3794 = vpack.c.b16 %v3462, %v3458
        %v3795 = vpack.c.b16 %v3467, %v3463
        %v3796 = vpack.c.b16 %v3468, %v3464
        %v3797 = vpack.c.b16 %v3469, %v3465
        %v3798 = vpack.c.b16 %v3470, %v3466
        %v3799 = vpack.c.b16 %v3475, %v3471
        %v3800 = vpack.c.b16 %v3476, %v3472
        %v3801 = vpack.c.b16 %v3477, %v3473
        %v3802 = vpack.c.b16 %v3478, %v3474
        %v3803 = vpack.c.b16 %v3483, %v3479
        %v3804 = vpack.c.b16 %v3484, %v3480
        %v3805 = vpack.c.b16 %v3485, %v3481
        %v3806 = vpack.c.b16 %v3486, %v3482
        %v3807 = vpack.c.b16 %v3491, %v3487
        %v3808 = vpack.c.b16 %v3492, %v3488
        %v3809 = vpack.c.b16 %v3493, %v3489
        %v3810 = vpack.c.b16 %v3494, %v3490
        %v3811 = vpack.c.b16 %v3499, %v3495
        %v3812 = vpack.c.b16 %v3500, %v3496
        %v3813 = vpack.c.b16 %v3501, %v3497
        %v3814 = vpack.c.b16 %v3502, %v3498
        %v3815 = vpack.c.b16 %v3507, %v3503
        %v3816 = vpack.c.b16 %v3508, %v3504
        %v3817 = vpack.c.b16 %v3509, %v3505
        %v3818 = vpack.c.b16 %v3510, %v3506
        %v3819 = vpack.c.b16 %v3515, %v3511
        %v3820 = vpack.c.b16 %v3516, %v3512
        %v3821 = vpack.c.b16 %v3517, %v3513
        %v3822 = vpack.c.b16 %v3518, %v3514
        %v3823 = vpack.c.b16 %v3523, %v3519
        %v3824 = vpack.c.b16 %v3524, %v3520
        %v3825 = vpack.c.b16 %v3525, %v3521
        %v3826 = vpack.c.b16 %v3526, %v3522
        %v3827 = vpack.c.b16 %v3531, %v3527
        %v3828 = vpack.c.b16 %v3532, %v3528
        %v3829 = vpack.c.b16 %v3533, %v3529
        %v3830 = vpack.c.b16 %v3534, %v3530
        %v3831 = vpack.c.b16 %v3539, %v3535
        %v3832 = vpack.c.b16 %v3540, %v3536
        %v3833 = vpack.c.b16 %v3541, %v3537
        %v3834 = vpack.c.b16 %v3542, %v3538
        %v3835 = vpack.c.b16 %v3547, %v3543
        %v3836 = vpack.c.b16 %v3548, %v3544
        %v3837 = vpack.c.b16 %v3549, %v3545
        %v3838 = vpack.c.b16 %v3550, %v3546
        %v3839 = vpack.c.b16 %v3555, %v3551
        %v3840 = vpack.c.b16 %v3556, %v3552
        %v3841 = vpack.c.b16 %v3557, %v3553
        %v3842 = vpack.c.b16 %v3558, %v3554
        %v3843 = vpack.c.b16 %v3563, %v3559
        %v3844 = vpack.c.b16 %v3564, %v3560
        %v3845 = vpack.c.b16 %v3565, %v3561
        %v3846 = vpack.c.b16 %v3566, %v3562
        %v3847 = vpack.c.b16 %v3571, %v3567
        %v3848 = vpack.c.b16 %v3572, %v3568
        %v3849 = vpack.c.b16 %v3573, %v3569
        %v3850 = vpack.c.b16 %v3574, %v3570
        %v3851 = vpack.c.b16 %v3579, %v3575
        %v3852 = vpack.c.b16 %v3580, %v3576
        %v3853 = vpack.c.b16 %v3581, %v3577
        %v3854 = vpack.c.b16 %v3582, %v3578
        %v3855 = vpack.c.b16 %v3587, %v3583
        %v3856 = vpack.c.b16 %v3588, %v3584
        %v3857 = vpack.c.b16 %v3589, %v3585
        %v3858 = vpack.c.b16 %v3590, %v3586
        %v3859 = vpack.c.b16 %v3595, %v3591
        %v3860 = vpack.c.b16 %v3596, %v3592
        %v3861 = vpack.c.b16 %v3597, %v3593
        %v3862 = vpack.c.b16 %v3598, %v3594
        %v3863 = vpack.c.b16 %v3603, %v3599
        %v3864 = vpack.c.b16 %v3604, %v3600
        %v3865 = vpack.c.b16 %v3605, %v3601
        %v3866 = vpack.c.b16 %v3606, %v3602
        %v3867 = vpack.c.b16 %v3611, %v3607
        %v3868 = vpack.c.b16 %v3612, %v3608
        %v3869 = vpack.c.b16 %v3613, %v3609
        %v3870 = vpack.c.b16 %v3614, %v3610
        %4127 = vmatprep.subr.bf16.mxu0 %v3644
        %4128 = vmatpush1.bf16.msra.mxu0 %v3643
        %4129 = vmatprep.subr.bf16.mxu0 %v3640
        %4130 = vmatpush1.bf16.msra.mxu0 %v3639
        %4131 = vmatprep.subr.bf16.mxu0 %v3636
        %4132 = vmatpush1.bf16.msra.mxu0 %v3635
        %4133 = vmatprep.subr.bf16.mxu0 %v3632
        %4134 = vmatpush1.bf16.msra.mxu0 %v3631
        %4135 = vmatprep.subr.bf16.mxu0 %v3628
        %4136 = vmatpush1.bf16.msra.mxu0 %v3627
        %4137 = vmatprep.subr.bf16.mxu0 %v3624
        %4138 = vmatpush1.bf16.msra.mxu0 %v3623
        %4139 = vmatprep.subr.bf16.mxu0 %v3620
        %4140 = vmatpush1.bf16.msra.mxu0 %v3619
        %4141 = vmatprep.subr.bf16.mxu0 %v3616
        %4142 = vmatpush1.bf16.msra.mxu0 %v3615
        %4143 = vmatprep.subr.bf16.mxu0 %v3676
        %4144 = vmatpush2.bf16.msra.mxu0 %v3675
        %4145 = vmatprep.subr.bf16.mxu0 %v3672
        %4146 = vmatpush2.bf16.msra.mxu0 %v3671
        %4147 = vmatprep.subr.bf16.mxu0 %v3668
        %4148 = vmatpush2.bf16.msra.mxu0 %v3667
        %4149 = vmatprep.subr.bf16.mxu0 %v3664
        %4150 = vmatpush2.bf16.msra.mxu0 %v3663
        %4151 = vmatprep.subr.bf16.mxu0 %v3660
        %4152 = vmatpush2.bf16.msra.mxu0 %v3659
        %4153 = vmatprep.subr.bf16.mxu0 %v3656
        %4154 = vmatpush2.bf16.msra.mxu0 %v3655
        %4155 = vmatprep.subr.bf16.mxu0 %v3652
        %4156 = vmatpush2.bf16.msra.mxu0 %v3651
        %4157 = vmatprep.subr.bf16.mxu0 %v3648
        %4158 = vmatpush2.bf16.msra.mxu0 %v3647
        %4159 = vmatprep.mubr.bf16.mxu0 %v2441
        %4160 = vmatmul.mubr.bf16.gmra.mxu0 %v2440
        %v4161 = vpop.f32.mrf.mxu0
        %v4162 = vadd.f32 %v2830, %v4161
        %v4163 = vpop.f32.mrf.mxu0
        %v4164 = vadd.f32 %v2834, %v4163
        %v4165 = vpop.f32.mrf.mxu0
        %v4166 = vadd.f32 %v2830, %v4165
        %v4167 = vpop.f32.mrf.mxu0
        %v4168 = vadd.f32 %v2834, %v4167
        %4169 = vmatprep.mubr.bf16.mxu0 %v2449
        %4170 = vmatmul.mubr.bf16.gmra.mxu0 %v2448
        %v4171 = vpop.f32.mrf.mxu0
        %v4172 = vadd.f32 %v2830, %v4171
        %v4173 = vpop.f32.mrf.mxu0
        %v4174 = vadd.f32 %v2834, %v4173
        %v4175 = vpop.f32.mrf.mxu0
        %v4176 = vadd.f32 %v2830, %v4175
        %v4177 = vpop.f32.mrf.mxu0
        %v4178 = vadd.f32 %v2834, %v4177
        %4179 = vmatprep.mubr.bf16.mxu0 %v2457
        %4180 = vmatmul.mubr.bf16.gmra.mxu0 %v2456
        %v4181 = vpop.f32.mrf.mxu0
        %v4182 = vadd.f32 %v2830, %v4181
        %v4183 = vpop.f32.mrf.mxu0
        %v4184 = vadd.f32 %v2834, %v4183
        %v4185 = vpop.f32.mrf.mxu0
        %v4186 = vadd.f32 %v2830, %v4185
        %v4187 = vpop.f32.mrf.mxu0
        %v4188 = vadd.f32 %v2834, %v4187
        %4189 = vmatprep.mubr.bf16.mxu0 %v2465
        %4190 = vmatmul.mubr.bf16.gmra.mxu0 %v2464
        %v4191 = vpop.f32.mrf.mxu0
        %v4192 = vadd.f32 %v2830, %v4191
        %v4193 = vpop.f32.mrf.mxu0
        %v4194 = vadd.f32 %v2834, %v4193
        %v4195 = vpop.f32.mrf.mxu0
        %v4196 = vadd.f32 %v2830, %v4195
        %v4197 = vpop.f32.mrf.mxu0
        %v4198 = vadd.f32 %v2834, %v4197
        %4199 = vmatprep.mubr.bf16.mxu0 %v2473
        %4200 = vmatmul.mubr.bf16.gmra.mxu0 %v2472
        %v4201 = vpop.f32.mrf.mxu0
        %v4202 = vadd.f32 %v2830, %v4201
        %v4203 = vpop.f32.mrf.mxu0
        %v4204 = vadd.f32 %v2834, %v4203
        %v4205 = vpop.f32.mrf.mxu0
        %v4206 = vadd.f32 %v2830, %v4205
        %v4207 = vpop.f32.mrf.mxu0
        %v4208 = vadd.f32 %v2834, %v4207
        %4209 = vmatprep.mubr.bf16.mxu0 %v2481
        %4210 = vmatmul.mubr.bf16.gmra.mxu0 %v2480
        %v4211 = vpop.f32.mrf.mxu0
        %v4212 = vadd.f32 %v2830, %v4211
        %v4213 = vpop.f32.mrf.mxu0
        %v4214 = vadd.f32 %v2834, %v4213
        %v4215 = vpop.f32.mrf.mxu0
        %v4216 = vadd.f32 %v2830, %v4215
        %v4217 = vpop.f32.mrf.mxu0
        %v4218 = vadd.f32 %v2834, %v4217
        %4219 = vmatprep.mubr.bf16.mxu0 %v2489
        %4220 = vmatmul.mubr.bf16.gmra.mxu0 %v2488
        %v4221 = vpop.f32.mrf.mxu0
        %v4222 = vadd.f32 %v2830, %v4221
        %v4223 = vpop.f32.mrf.mxu0
        %v4224 = vadd.f32 %v2834, %v4223
        %v4225 = vpop.f32.mrf.mxu0
        %v4226 = vadd.f32 %v2830, %v4225
        %v4227 = vpop.f32.mrf.mxu0
        %v4228 = vadd.f32 %v2834, %v4227
        %4229 = vmatprep.mubr.bf16.mxu0 %v2497
        %4230 = vmatmul.mubr.bf16.gmra.mxu0 %v2496
        %v4231 = vpop.f32.mrf.mxu0
        %v4232 = vadd.f32 %v2830, %v4231
        %v4233 = vpop.f32.mrf.mxu0
        %v4234 = vadd.f32 %v2834, %v4233
        %v4235 = vpop.f32.mrf.mxu0
        %v4236 = vadd.f32 %v2830, %v4235
        %v4237 = vpop.f32.mrf.mxu0
        %v4238 = vadd.f32 %v2834, %v4237
        %4239 = vdwg.mxu0
        %4240 = vmatprep.subr.bf16.mxu0 %v3708
        %4241 = vmatpush1.bf16.msra.mxu0 %v3707
        %4242 = vmatprep.subr.bf16.mxu0 %v3704
        %4243 = vmatpush1.bf16.msra.mxu0 %v3703
        %4244 = vmatprep.subr.bf16.mxu0 %v3700
        %4245 = vmatpush1.bf16.msra.mxu0 %v3699
        %4246 = vmatprep.subr.bf16.mxu0 %v3696
        %4247 = vmatpush1.bf16.msra.mxu0 %v3695
        %4248 = vmatprep.subr.bf16.mxu0 %v3692
        %4249 = vmatpush1.bf16.msra.mxu0 %v3691
        %4250 = vmatprep.subr.bf16.mxu0 %v3688
        %4251 = vmatpush1.bf16.msra.mxu0 %v3687
        %4252 = vmatprep.subr.bf16.mxu0 %v3684
        %4253 = vmatpush1.bf16.msra.mxu0 %v3683
        %4254 = vmatprep.subr.bf16.mxu0 %v3680
        %4255 = vmatpush1.bf16.msra.mxu0 %v3679
        %4256 = vmatprep.subr.bf16.mxu0 %v3740
        %4257 = vmatpush2.bf16.msra.mxu0 %v3739
        %4258 = vmatprep.subr.bf16.mxu0 %v3736
        %4259 = vmatpush2.bf16.msra.mxu0 %v3735
        %4260 = vmatprep.subr.bf16.mxu0 %v3732
        %4261 = vmatpush2.bf16.msra.mxu0 %v3731
        %4262 = vmatprep.subr.bf16.mxu0 %v3728
        %4263 = vmatpush2.bf16.msra.mxu0 %v3727
        %4264 = vmatprep.subr.bf16.mxu0 %v3724
        %4265 = vmatpush2.bf16.msra.mxu0 %v3723
        %4266 = vmatprep.subr.bf16.mxu0 %v3720
        %4267 = vmatpush2.bf16.msra.mxu0 %v3719
        %4268 = vmatprep.subr.bf16.mxu0 %v3716
        %4269 = vmatpush2.bf16.msra.mxu0 %v3715
        %4270 = vmatprep.subr.bf16.mxu0 %v3712
        %4271 = vmatpush2.bf16.msra.mxu0 %v3711
        %4272 = vmatprep.mubr.bf16.mxu0 %v2443
        %4273 = vmatmul.mubr.bf16.gmra.mxu0 %v2442
        %v4274 = vpop.f32.mrf.mxu0
        %v4275 = vadd.f32 %v4162, %v4274
        %v4276 = vpop.f32.mrf.mxu0
        %v4277 = vadd.f32 %v4164, %v4276
        %v4278 = vpop.f32.mrf.mxu0
        %v4279 = vadd.f32 %v4166, %v4278
        %v4280 = vpop.f32.mrf.mxu0
        %v4281 = vadd.f32 %v4168, %v4280
        %4282 = vmatprep.mubr.bf16.mxu0 %v2451
        %4283 = vmatmul.mubr.bf16.gmra.mxu0 %v2450
        %v4284 = vpop.f32.mrf.mxu0
        %v4285 = vadd.f32 %v4172, %v4284
        %v4286 = vpop.f32.mrf.mxu0
        %v4287 = vadd.f32 %v4174, %v4286
        %v4288 = vpop.f32.mrf.mxu0
        %v4289 = vadd.f32 %v4176, %v4288
        %v4290 = vpop.f32.mrf.mxu0
        %v4291 = vadd.f32 %v4178, %v4290
        %4292 = vmatprep.mubr.bf16.mxu0 %v2459
        %4293 = vmatmul.mubr.bf16.gmra.mxu0 %v2458
        %v4294 = vpop.f32.mrf.mxu0
        %v4295 = vadd.f32 %v4182, %v4294
        %v4296 = vpop.f32.mrf.mxu0
        %v4297 = vadd.f32 %v4184, %v4296
        %v4298 = vpop.f32.mrf.mxu0
        %v4299 = vadd.f32 %v4186, %v4298
        %v4300 = vpop.f32.mrf.mxu0
        %v4301 = vadd.f32 %v4188, %v4300
        %4302 = vmatprep.mubr.bf16.mxu0 %v2467
        %4303 = vmatmul.mubr.bf16.gmra.mxu0 %v2466
        %v4304 = vpop.f32.mrf.mxu0
        %v4305 = vadd.f32 %v4192, %v4304
        %v4306 = vpop.f32.mrf.mxu0
        %v4307 = vadd.f32 %v4194, %v4306
        %v4308 = vpop.f32.mrf.mxu0
        %v4309 = vadd.f32 %v4196, %v4308
        %v4310 = vpop.f32.mrf.mxu0
        %v4311 = vadd.f32 %v4198, %v4310
        %4312 = vmatprep.mubr.bf16.mxu0 %v2475
        %4313 = vmatmul.mubr.bf16.gmra.mxu0 %v2474
        %v4314 = vpop.f32.mrf.mxu0
        %v4315 = vadd.f32 %v4202, %v4314
        %v4316 = vpop.f32.mrf.mxu0
        %v4317 = vadd.f32 %v4204, %v4316
        %v4318 = vpop.f32.mrf.mxu0
        %v4319 = vadd.f32 %v4206, %v4318
        %v4320 = vpop.f32.mrf.mxu0
        %v4321 = vadd.f32 %v4208, %v4320
        %4322 = vmatprep.mubr.bf16.mxu0 %v2483
        %4323 = vmatmul.mubr.bf16.gmra.mxu0 %v2482
        %v4324 = vpop.f32.mrf.mxu0
        %v4325 = vadd.f32 %v4212, %v4324
        %v4326 = vpop.f32.mrf.mxu0
        %v4327 = vadd.f32 %v4214, %v4326
        %v4328 = vpop.f32.mrf.mxu0
        %v4329 = vadd.f32 %v4216, %v4328
        %v4330 = vpop.f32.mrf.mxu0
        %v4331 = vadd.f32 %v4218, %v4330
        %4332 = vmatprep.mubr.bf16.mxu0 %v2491
        %4333 = vmatmul.mubr.bf16.gmra.mxu0 %v2490
        %v4334 = vpop.f32.mrf.mxu0
        %v4335 = vadd.f32 %v4222, %v4334
        %v4336 = vpop.f32.mrf.mxu0
        %v4337 = vadd.f32 %v4224, %v4336
        %v4338 = vpop.f32.mrf.mxu0
        %v4339 = vadd.f32 %v4226, %v4338
        %v4340 = vpop.f32.mrf.mxu0
        %v4341 = vadd.f32 %v4228, %v4340
        %4342 = vmatprep.mubr.bf16.mxu0 %v2499
        %4343 = vmatmul.mubr.bf16.gmra.mxu0 %v2498
        %v4344 = vpop.f32.mrf.mxu0
        %v4345 = vadd.f32 %v4232, %v4344
        %v4346 = vpop.f32.mrf.mxu0
        %v4347 = vadd.f32 %v4234, %v4346
        %v4348 = vpop.f32.mrf.mxu0
        %v4349 = vadd.f32 %v4236, %v4348
        %v4350 = vpop.f32.mrf.mxu0
        %v4351 = vadd.f32 %v4238, %v4350
        %4352 = vdwg.mxu0
        %4353 = vmatprep.subr.bf16.mxu0 %v3772
        %4354 = vmatpush1.bf16.msra.mxu0 %v3771
        %4355 = vmatprep.subr.bf16.mxu0 %v3768
        %4356 = vmatpush1.bf16.msra.mxu0 %v3767
        %4357 = vmatprep.subr.bf16.mxu0 %v3764
        %4358 = vmatpush1.bf16.msra.mxu0 %v3763
        %4359 = vmatprep.subr.bf16.mxu0 %v3760
        %4360 = vmatpush1.bf16.msra.mxu0 %v3759
        %4361 = vmatprep.subr.bf16.mxu0 %v3756
        %4362 = vmatpush1.bf16.msra.mxu0 %v3755
        %4363 = vmatprep.subr.bf16.mxu0 %v3752
        %4364 = vmatpush1.bf16.msra.mxu0 %v3751
        %4365 = vmatprep.subr.bf16.mxu0 %v3748
        %4366 = vmatpush1.bf16.msra.mxu0 %v3747
        %4367 = vmatprep.subr.bf16.mxu0 %v3744
        %4368 = vmatpush1.bf16.msra.mxu0 %v3743
        %4369 = vmatprep.subr.bf16.mxu0 %v3804
        %4370 = vmatpush2.bf16.msra.mxu0 %v3803
        %4371 = vmatprep.subr.bf16.mxu0 %v3800
        %4372 = vmatpush2.bf16.msra.mxu0 %v3799
        %4373 = vmatprep.subr.bf16.mxu0 %v3796
        %4374 = vmatpush2.bf16.msra.mxu0 %v3795
        %4375 = vmatprep.subr.bf16.mxu0 %v3792
        %4376 = vmatpush2.bf16.msra.mxu0 %v3791
        %4377 = vmatprep.subr.bf16.mxu0 %v3788
        %4378 = vmatpush2.bf16.msra.mxu0 %v3787
        %4379 = vmatprep.subr.bf16.mxu0 %v3784
        %4380 = vmatpush2.bf16.msra.mxu0 %v3783
        %4381 = vmatprep.subr.bf16.mxu0 %v3780
        %4382 = vmatpush2.bf16.msra.mxu0 %v3779
        %4383 = vmatprep.subr.bf16.mxu0 %v3776
        %4384 = vmatpush2.bf16.msra.mxu0 %v3775
        %4385 = vmatprep.mubr.bf16.mxu0 %v2445
        %4386 = vmatmul.mubr.bf16.gmra.mxu0 %v2444
        %v4387 = vpop.f32.mrf.mxu0
        %v4388 = vadd.f32 %v4275, %v4387
        %v4389 = vpop.f32.mrf.mxu0
        %v4390 = vadd.f32 %v4277, %v4389
        %v4391 = vpop.f32.mrf.mxu0
        %v4392 = vadd.f32 %v4279, %v4391
        %v4393 = vpop.f32.mrf.mxu0
        %v4394 = vadd.f32 %v4281, %v4393
        %4395 = vmatprep.mubr.bf16.mxu0 %v2453
        %4396 = vmatmul.mubr.bf16.gmra.mxu0 %v2452
        %v4397 = vpop.f32.mrf.mxu0
        %v4398 = vadd.f32 %v4285, %v4397
        %v4399 = vpop.f32.mrf.mxu0
        %v4400 = vadd.f32 %v4287, %v4399
        %v4401 = vpop.f32.mrf.mxu0
        %v4402 = vadd.f32 %v4289, %v4401
        %v4403 = vpop.f32.mrf.mxu0
        %v4404 = vadd.f32 %v4291, %v4403
        %4405 = vmatprep.mubr.bf16.mxu0 %v2461
        %4406 = vmatmul.mubr.bf16.gmra.mxu0 %v2460
        %v4407 = vpop.f32.mrf.mxu0
        %v4408 = vadd.f32 %v4295, %v4407
        %v4409 = vpop.f32.mrf.mxu0
        %v4410 = vadd.f32 %v4297, %v4409
        %v4411 = vpop.f32.mrf.mxu0
        %v4412 = vadd.f32 %v4299, %v4411
        %v4413 = vpop.f32.mrf.mxu0
        %v4414 = vadd.f32 %v4301, %v4413
        %4415 = vmatprep.mubr.bf16.mxu0 %v2469
        %4416 = vmatmul.mubr.bf16.gmra.mxu0 %v2468
        %v4417 = vpop.f32.mrf.mxu0
        %v4418 = vadd.f32 %v4305, %v4417
        %v4419 = vpop.f32.mrf.mxu0
        %v4420 = vadd.f32 %v4307, %v4419
        %v4421 = vpop.f32.mrf.mxu0
        %v4422 = vadd.f32 %v4309, %v4421
        %v4423 = vpop.f32.mrf.mxu0
        %v4424 = vadd.f32 %v4311, %v4423
        %4425 = vmatprep.mubr.bf16.mxu0 %v2477
        %4426 = vmatmul.mubr.bf16.gmra.mxu0 %v2476
        %v4427 = vpop.f32.mrf.mxu0
        %v4428 = vadd.f32 %v4315, %v4427
        %v4429 = vpop.f32.mrf.mxu0
        %v4430 = vadd.f32 %v4317, %v4429
        %v4431 = vpop.f32.mrf.mxu0
        %v4432 = vadd.f32 %v4319, %v4431
        %v4433 = vpop.f32.mrf.mxu0
        %v4434 = vadd.f32 %v4321, %v4433
        %4435 = vmatprep.mubr.bf16.mxu0 %v2485
        %4436 = vmatmul.mubr.bf16.gmra.mxu0 %v2484
        %v4437 = vpop.f32.mrf.mxu0
        %v4438 = vadd.f32 %v4325, %v4437
        %v4439 = vpop.f32.mrf.mxu0
        %v4440 = vadd.f32 %v4327, %v4439
        %v4441 = vpop.f32.mrf.mxu0
        %v4442 = vadd.f32 %v4329, %v4441
        %v4443 = vpop.f32.mrf.mxu0
        %v4444 = vadd.f32 %v4331, %v4443
        %4445 = vmatprep.mubr.bf16.mxu0 %v2493
        %4446 = vmatmul.mubr.bf16.gmra.mxu0 %v2492
        %v4447 = vpop.f32.mrf.mxu0
        %v4448 = vadd.f32 %v4335, %v4447
        %v4449 = vpop.f32.mrf.mxu0
        %v4450 = vadd.f32 %v4337, %v4449
        %v4451 = vpop.f32.mrf.mxu0
        %v4452 = vadd.f32 %v4339, %v4451
        %v4453 = vpop.f32.mrf.mxu0
        %v4454 = vadd.f32 %v4341, %v4453
        %4455 = vmatprep.mubr.bf16.mxu0 %v2501
        %4456 = vmatmul.mubr.bf16.gmra.mxu0 %v2500
        %v4457 = vpop.f32.mrf.mxu0
        %v4458 = vadd.f32 %v4345, %v4457
        %v4459 = vpop.f32.mrf.mxu0
        %v4460 = vadd.f32 %v4347, %v4459
        %v4461 = vpop.f32.mrf.mxu0
        %v4462 = vadd.f32 %v4349, %v4461
        %v4463 = vpop.f32.mrf.mxu0
        %v4464 = vadd.f32 %v4351, %v4463
        %4465 = vdwg.mxu0
        %4466 = vmatprep.subr.bf16.mxu0 %v3836
        %4467 = vmatpush1.bf16.msra.mxu0 %v3835
        %4468 = vmatprep.subr.bf16.mxu0 %v3832
        %4469 = vmatpush1.bf16.msra.mxu0 %v3831
        %4470 = vmatprep.subr.bf16.mxu0 %v3828
        %4471 = vmatpush1.bf16.msra.mxu0 %v3827
        %4472 = vmatprep.subr.bf16.mxu0 %v3824
        %4473 = vmatpush1.bf16.msra.mxu0 %v3823
        %4474 = vmatprep.subr.bf16.mxu0 %v3820
        %4475 = vmatpush1.bf16.msra.mxu0 %v3819
        %4476 = vmatprep.subr.bf16.mxu0 %v3816
        %4477 = vmatpush1.bf16.msra.mxu0 %v3815
        %4478 = vmatprep.subr.bf16.mxu0 %v3812
        %4479 = vmatpush1.bf16.msra.mxu0 %v3811
        %4480 = vmatprep.subr.bf16.mxu0 %v3808
        %4481 = vmatpush1.bf16.msra.mxu0 %v3807
        %4482 = vmatprep.subr.bf16.mxu0 %v3868
        %4483 = vmatpush2.bf16.msra.mxu0 %v3867
        %4484 = vmatprep.subr.bf16.mxu0 %v3864
        %4485 = vmatpush2.bf16.msra.mxu0 %v3863
        %4486 = vmatprep.subr.bf16.mxu0 %v3860
        %4487 = vmatpush2.bf16.msra.mxu0 %v3859
        %4488 = vmatprep.subr.bf16.mxu0 %v3856
        %4489 = vmatpush2.bf16.msra.mxu0 %v3855
        %4490 = vmatprep.subr.bf16.mxu0 %v3852
        %4491 = vmatpush2.bf16.msra.mxu0 %v3851
        %4492 = vmatprep.subr.bf16.mxu0 %v3848
        %4493 = vmatpush2.bf16.msra.mxu0 %v3847
        %4494 = vmatprep.subr.bf16.mxu0 %v3844
        %4495 = vmatpush2.bf16.msra.mxu0 %v3843
        %4496 = vmatprep.subr.bf16.mxu0 %v3840
        %4497 = vmatpush2.bf16.msra.mxu0 %v3839
        %4498 = vmatprep.mubr.bf16.mxu0 %v2447
        %4499 = vmatmul.mubr.bf16.gmra.mxu0 %v2446
        %v4500 = vpop.f32.mrf.mxu0
        %v4501 = vadd.f32 %v4388, %v4500
        %v4502 = vpop.f32.mrf.mxu0
        %v4503 = vadd.f32 %v4390, %v4502
        %v4504 = vpop.f32.mrf.mxu0
        %v4505 = vadd.f32 %v4392, %v4504
        %v4506 = vpop.f32.mrf.mxu0
        %v4507 = vadd.f32 %v4394, %v4506
        %4508 = vmatprep.mubr.bf16.mxu0 %v2455
        %4509 = vmatmul.mubr.bf16.gmra.mxu0 %v2454
        %v4510 = vpop.f32.mrf.mxu0
        %v4511 = vadd.f32 %v4398, %v4510
        %v4512 = vpop.f32.mrf.mxu0
        %v4513 = vadd.f32 %v4400, %v4512
        %v4514 = vpop.f32.mrf.mxu0
        %v4515 = vadd.f32 %v4402, %v4514
        %v4516 = vpop.f32.mrf.mxu0
        %v4517 = vadd.f32 %v4404, %v4516
        %4518 = vmatprep.mubr.bf16.mxu0 %v2463
        %4519 = vmatmul.mubr.bf16.gmra.mxu0 %v2462
        %v4520 = vpop.f32.mrf.mxu0
        %v4521 = vadd.f32 %v4408, %v4520
        %v4522 = vpop.f32.mrf.mxu0
        %v4523 = vadd.f32 %v4410, %v4522
        %v4524 = vpop.f32.mrf.mxu0
        %v4525 = vadd.f32 %v4412, %v4524
        %v4526 = vpop.f32.mrf.mxu0
        %v4527 = vadd.f32 %v4414, %v4526
        %4528 = vmatprep.mubr.bf16.mxu0 %v2471
        %4529 = vmatmul.mubr.bf16.gmra.mxu0 %v2470
        %v4530 = vpop.f32.mrf.mxu0
        %v4531 = vadd.f32 %v4418, %v4530
        %v4532 = vpop.f32.mrf.mxu0
        %v4533 = vadd.f32 %v4420, %v4532
        %v4534 = vpop.f32.mrf.mxu0
        %v4535 = vadd.f32 %v4422, %v4534
        %v4536 = vpop.f32.mrf.mxu0
        %v4537 = vadd.f32 %v4424, %v4536
        %4538 = vmatprep.mubr.bf16.mxu0 %v2479
        %4539 = vmatmul.mubr.bf16.gmra.mxu0 %v2478
        %v4540 = vpop.f32.mrf.mxu0
        %v4541 = vadd.f32 %v4428, %v4540
        %v4542 = vpop.f32.mrf.mxu0
        %v4543 = vadd.f32 %v4430, %v4542
        %v4544 = vpop.f32.mrf.mxu0
        %v4545 = vadd.f32 %v4432, %v4544
        %v4546 = vpop.f32.mrf.mxu0
        %v4547 = vadd.f32 %v4434, %v4546
        %4548 = vmatprep.mubr.bf16.mxu0 %v2487
        %4549 = vmatmul.mubr.bf16.gmra.mxu0 %v2486
        %v4550 = vpop.f32.mrf.mxu0
        %v4551 = vadd.f32 %v4438, %v4550
        %v4552 = vpop.f32.mrf.mxu0
        %v4553 = vadd.f32 %v4440, %v4552
        %v4554 = vpop.f32.mrf.mxu0
        %v4555 = vadd.f32 %v4442, %v4554
        %v4556 = vpop.f32.mrf.mxu0
        %v4557 = vadd.f32 %v4444, %v4556
        %4558 = vmatprep.mubr.bf16.mxu0 %v2495
        %4559 = vmatmul.mubr.bf16.gmra.mxu0 %v2494
        %v4560 = vpop.f32.mrf.mxu0
        %v4561 = vadd.f32 %v4448, %v4560
        %v4562 = vpop.f32.mrf.mxu0
        %v4563 = vadd.f32 %v4450, %v4562
        %v4564 = vpop.f32.mrf.mxu0
        %v4565 = vadd.f32 %v4452, %v4564
        %v4566 = vpop.f32.mrf.mxu0
        %v4567 = vadd.f32 %v4454, %v4566
        %4568 = vmatprep.mubr.bf16.mxu0 %v2503
        %4569 = vmatmul.mubr.bf16.gmra.mxu0 %v2502
        %v4570 = vpop.f32.mrf.mxu0
        %v4571 = vadd.f32 %v4458, %v4570
        %v4572 = vpop.f32.mrf.mxu0
        %v4573 = vadd.f32 %v4460, %v4572
        %v4574 = vpop.f32.mrf.mxu0
        %v4575 = vadd.f32 %v4462, %v4574
        %v4576 = vpop.f32.mrf.mxu0
        %v4577 = vadd.f32 %v4464, %v4576
        %4578 = vdwg.mxu0
        %4579 = vmatprep.subr.bf16.mxu0 %v3646
        %4580 = vmatpush1.bf16.msra.mxu0 %v3645
        %4581 = vmatprep.subr.bf16.mxu0 %v3642
        %4582 = vmatpush1.bf16.msra.mxu0 %v3641
        %4583 = vmatprep.subr.bf16.mxu0 %v3638
        %4584 = vmatpush1.bf16.msra.mxu0 %v3637
        %4585 = vmatprep.subr.bf16.mxu0 %v3634
        %4586 = vmatpush1.bf16.msra.mxu0 %v3633
        %4587 = vmatprep.subr.bf16.mxu0 %v3630
        %4588 = vmatpush1.bf16.msra.mxu0 %v3629
        %4589 = vmatprep.subr.bf16.mxu0 %v3626
        %4590 = vmatpush1.bf16.msra.mxu0 %v3625
        %4591 = vmatprep.subr.bf16.mxu0 %v3622
        %4592 = vmatpush1.bf16.msra.mxu0 %v3621
        %4593 = vmatprep.subr.bf16.mxu0 %v3618
        %4594 = vmatpush1.bf16.msra.mxu0 %v3617
        %4595 = vmatprep.subr.bf16.mxu0 %v3678
        %4596 = vmatpush2.bf16.msra.mxu0 %v3677
        %4597 = vmatprep.subr.bf16.mxu0 %v3674
        %4598 = vmatpush2.bf16.msra.mxu0 %v3673
        %4599 = vmatprep.subr.bf16.mxu0 %v3670
        %4600 = vmatpush2.bf16.msra.mxu0 %v3669
        %4601 = vmatprep.subr.bf16.mxu0 %v3666
        %4602 = vmatpush2.bf16.msra.mxu0 %v3665
        %4603 = vmatprep.subr.bf16.mxu0 %v3662
        %4604 = vmatpush2.bf16.msra.mxu0 %v3661
        %4605 = vmatprep.subr.bf16.mxu0 %v3658
        %4606 = vmatpush2.bf16.msra.mxu0 %v3657
        %4607 = vmatprep.subr.bf16.mxu0 %v3654
        %4608 = vmatpush2.bf16.msra.mxu0 %v3653
        %4609 = vmatprep.subr.bf16.mxu0 %v3650
        %4610 = vmatpush2.bf16.msra.mxu0 %v3649
        %4611 = vmatprep.mubr.bf16.mxu0 %v2441
        %4612 = vmatmul.mubr.bf16.gmra.mxu0 %v2440
        %v4613 = vpop.f32.mrf.mxu0
        %v4614 = vadd.f32 %v2838, %v4613
        %v4615 = vpop.f32.mrf.mxu0
        %v4616 = vadd.f32 %v2842, %v4615
        %v4617 = vpop.f32.mrf.mxu0
        %v4618 = vadd.f32 %v2838, %v4617
        %v4619 = vpop.f32.mrf.mxu0
        %v4620 = vadd.f32 %v2842, %v4619
        %4621 = vmatprep.mubr.bf16.mxu0 %v2449
        %4622 = vmatmul.mubr.bf16.gmra.mxu0 %v2448
        %v4623 = vpop.f32.mrf.mxu0
        %v4624 = vadd.f32 %v2838, %v4623
        %v4625 = vpop.f32.mrf.mxu0
        %v4626 = vadd.f32 %v2842, %v4625
        %v4627 = vpop.f32.mrf.mxu0
        %v4628 = vadd.f32 %v2838, %v4627
        %v4629 = vpop.f32.mrf.mxu0
        %v4630 = vadd.f32 %v2842, %v4629
        %4631 = vmatprep.mubr.bf16.mxu0 %v2457
        %4632 = vmatmul.mubr.bf16.gmra.mxu0 %v2456
        %v4633 = vpop.f32.mrf.mxu0
        %v4634 = vadd.f32 %v2838, %v4633
        %v4635 = vpop.f32.mrf.mxu0
        %v4636 = vadd.f32 %v2842, %v4635
        %v4637 = vpop.f32.mrf.mxu0
        %v4638 = vadd.f32 %v2838, %v4637
        %v4639 = vpop.f32.mrf.mxu0
        %v4640 = vadd.f32 %v2842, %v4639
        %4641 = vmatprep.mubr.bf16.mxu0 %v2465
        %4642 = vmatmul.mubr.bf16.gmra.mxu0 %v2464
        %v4643 = vpop.f32.mrf.mxu0
        %v4644 = vadd.f32 %v2838, %v4643
        %v4645 = vpop.f32.mrf.mxu0
        %v4646 = vadd.f32 %v2842, %v4645
        %v4647 = vpop.f32.mrf.mxu0
        %v4648 = vadd.f32 %v2838, %v4647
        %v4649 = vpop.f32.mrf.mxu0
        %v4650 = vadd.f32 %v2842, %v4649
        %4651 = vmatprep.mubr.bf16.mxu0 %v2473
        %4652 = vmatmul.mubr.bf16.gmra.mxu0 %v2472
        %v4653 = vpop.f32.mrf.mxu0
        %v4654 = vadd.f32 %v2838, %v4653
        %v4655 = vpop.f32.mrf.mxu0
        %v4656 = vadd.f32 %v2842, %v4655
        %v4657 = vpop.f32.mrf.mxu0
        %v4658 = vadd.f32 %v2838, %v4657
        %v4659 = vpop.f32.mrf.mxu0
        %v4660 = vadd.f32 %v2842, %v4659
        %4661 = vmatprep.mubr.bf16.mxu0 %v2481
        %4662 = vmatmul.mubr.bf16.gmra.mxu0 %v2480
        %v4663 = vpop.f32.mrf.mxu0
        %v4664 = vadd.f32 %v2838, %v4663
        %v4665 = vpop.f32.mrf.mxu0
        %v4666 = vadd.f32 %v2842, %v4665
        %v4667 = vpop.f32.mrf.mxu0
        %v4668 = vadd.f32 %v2838, %v4667
        %v4669 = vpop.f32.mrf.mxu0
        %v4670 = vadd.f32 %v2842, %v4669
        %4671 = vmatprep.mubr.bf16.mxu0 %v2489
        %4672 = vmatmul.mubr.bf16.gmra.mxu0 %v2488
        %v4673 = vpop.f32.mrf.mxu0
        %v4674 = vadd.f32 %v2838, %v4673
        %v4675 = vpop.f32.mrf.mxu0
        %v4676 = vadd.f32 %v2842, %v4675
        %v4677 = vpop.f32.mrf.mxu0
        %v4678 = vadd.f32 %v2838, %v4677
        %v4679 = vpop.f32.mrf.mxu0
        %v4680 = vadd.f32 %v2842, %v4679
        %4681 = vmatprep.mubr.bf16.mxu0 %v2497
        %4682 = vmatmul.mubr.bf16.gmra.mxu0 %v2496
        %v4683 = vpop.f32.mrf.mxu0
        %v4684 = vadd.f32 %v2838, %v4683
        %v4685 = vpop.f32.mrf.mxu0
        %v4686 = vadd.f32 %v2842, %v4685
        %v4687 = vpop.f32.mrf.mxu0
        %v4688 = vadd.f32 %v2838, %v4687
        %v4689 = vpop.f32.mrf.mxu0
        %v4690 = vadd.f32 %v2842, %v4689
        %4691 = vdwg.mxu0
        %4692 = vmatprep.subr.bf16.mxu0 %v3710
        %4693 = vmatpush1.bf16.msra.mxu0 %v3709
        %4694 = vmatprep.subr.bf16.mxu0 %v3706
        %4695 = vmatpush1.bf16.msra.mxu0 %v3705
        %4696 = vmatprep.subr.bf16.mxu0 %v3702
        %4697 = vmatpush1.bf16.msra.mxu0 %v3701
        %4698 = vmatprep.subr.bf16.mxu0 %v3698
        %4699 = vmatpush1.bf16.msra.mxu0 %v3697
        %4700 = vmatprep.subr.bf16.mxu0 %v3694
        %4701 = vmatpush1.bf16.msra.mxu0 %v3693
        %4702 = vmatprep.subr.bf16.mxu0 %v3690
        %4703 = vmatpush1.bf16.msra.mxu0 %v3689
        %4704 = vmatprep.subr.bf16.mxu0 %v3686
        %4705 = vmatpush1.bf16.msra.mxu0 %v3685
        %4706 = vmatprep.subr.bf16.mxu0 %v3682
        %4707 = vmatpush1.bf16.msra.mxu0 %v3681
        %4708 = vmatprep.subr.bf16.mxu0 %v3742
        %4709 = vmatpush2.bf16.msra.mxu0 %v3741
        %4710 = vmatprep.subr.bf16.mxu0 %v3738
        %4711 = vmatpush2.bf16.msra.mxu0 %v3737
        %4712 = vmatprep.subr.bf16.mxu0 %v3734
        %4713 = vmatpush2.bf16.msra.mxu0 %v3733
        %4714 = vmatprep.subr.bf16.mxu0 %v3730
        %4715 = vmatpush2.bf16.msra.mxu0 %v3729
        %4716 = vmatprep.subr.bf16.mxu0 %v3726
        %4717 = vmatpush2.bf16.msra.mxu0 %v3725
        %4718 = vmatprep.subr.bf16.mxu0 %v3722
        %4719 = vmatpush2.bf16.msra.mxu0 %v3721
        %4720 = vmatprep.subr.bf16.mxu0 %v3718
        %4721 = vmatpush2.bf16.msra.mxu0 %v3717
        %4722 = vmatprep.subr.bf16.mxu0 %v3714
        %4723 = vmatpush2.bf16.msra.mxu0 %v3713
        %4724 = vmatprep.mubr.bf16.mxu0 %v2443
        %4725 = vmatmul.mubr.bf16.gmra.mxu0 %v2442
        %v4726 = vpop.f32.mrf.mxu0
        %v4727 = vadd.f32 %v4614, %v4726
        %v4728 = vpop.f32.mrf.mxu0
        %v4729 = vadd.f32 %v4616, %v4728
        %v4730 = vpop.f32.mrf.mxu0
        %v4731 = vadd.f32 %v4618, %v4730
        %v4732 = vpop.f32.mrf.mxu0
        %v4733 = vadd.f32 %v4620, %v4732
        %4734 = vmatprep.mubr.bf16.mxu0 %v2451
        %4735 = vmatmul.mubr.bf16.gmra.mxu0 %v2450
        %v4736 = vpop.f32.mrf.mxu0
        %v4737 = vadd.f32 %v4624, %v4736
        %v4738 = vpop.f32.mrf.mxu0
        %v4739 = vadd.f32 %v4626, %v4738
        %v4740 = vpop.f32.mrf.mxu0
        %v4741 = vadd.f32 %v4628, %v4740
        %v4742 = vpop.f32.mrf.mxu0
        %v4743 = vadd.f32 %v4630, %v4742
        %4744 = vmatprep.mubr.bf16.mxu0 %v2459
        %4745 = vmatmul.mubr.bf16.gmra.mxu0 %v2458
        %v4746 = vpop.f32.mrf.mxu0
        %v4747 = vadd.f32 %v4634, %v4746
        %v4748 = vpop.f32.mrf.mxu0
        %v4749 = vadd.f32 %v4636, %v4748
        %v4750 = vpop.f32.mrf.mxu0
        %v4751 = vadd.f32 %v4638, %v4750
        %v4752 = vpop.f32.mrf.mxu0
        %v4753 = vadd.f32 %v4640, %v4752
        %4754 = vmatprep.mubr.bf16.mxu0 %v2467
        %4755 = vmatmul.mubr.bf16.gmra.mxu0 %v2466
        %v4756 = vpop.f32.mrf.mxu0
        %v4757 = vadd.f32 %v4644, %v4756
        %v4758 = vpop.f32.mrf.mxu0
        %v4759 = vadd.f32 %v4646, %v4758
        %v4760 = vpop.f32.mrf.mxu0
        %v4761 = vadd.f32 %v4648, %v4760
        %v4762 = vpop.f32.mrf.mxu0
        %v4763 = vadd.f32 %v4650, %v4762
        %4764 = vmatprep.mubr.bf16.mxu0 %v2475
        %4765 = vmatmul.mubr.bf16.gmra.mxu0 %v2474
        %v4766 = vpop.f32.mrf.mxu0
        %v4767 = vadd.f32 %v4654, %v4766
        %v4768 = vpop.f32.mrf.mxu0
        %v4769 = vadd.f32 %v4656, %v4768
        %v4770 = vpop.f32.mrf.mxu0
        %v4771 = vadd.f32 %v4658, %v4770
        %v4772 = vpop.f32.mrf.mxu0
        %v4773 = vadd.f32 %v4660, %v4772
        %4774 = vmatprep.mubr.bf16.mxu0 %v2483
        %4775 = vmatmul.mubr.bf16.gmra.mxu0 %v2482
        %v4776 = vpop.f32.mrf.mxu0
        %v4777 = vadd.f32 %v4664, %v4776
        %v4778 = vpop.f32.mrf.mxu0
        %v4779 = vadd.f32 %v4666, %v4778
        %v4780 = vpop.f32.mrf.mxu0
        %v4781 = vadd.f32 %v4668, %v4780
        %v4782 = vpop.f32.mrf.mxu0
        %v4783 = vadd.f32 %v4670, %v4782
        %4784 = vmatprep.mubr.bf16.mxu0 %v2491
        %4785 = vmatmul.mubr.bf16.gmra.mxu0 %v2490
        %v4786 = vpop.f32.mrf.mxu0
        %v4787 = vadd.f32 %v4674, %v4786
        %v4788 = vpop.f32.mrf.mxu0
        %v4789 = vadd.f32 %v4676, %v4788
        %v4790 = vpop.f32.mrf.mxu0
        %v4791 = vadd.f32 %v4678, %v4790
        %v4792 = vpop.f32.mrf.mxu0
        %v4793 = vadd.f32 %v4680, %v4792
        %4794 = vmatprep.mubr.bf16.mxu0 %v2499
        %4795 = vmatmul.mubr.bf16.gmra.mxu0 %v2498
        %v4796 = vpop.f32.mrf.mxu0
        %v4797 = vadd.f32 %v4684, %v4796
        %v4798 = vpop.f32.mrf.mxu0
        %v4799 = vadd.f32 %v4686, %v4798
        %v4800 = vpop.f32.mrf.mxu0
        %v4801 = vadd.f32 %v4688, %v4800
        %v4802 = vpop.f32.mrf.mxu0
        %v4803 = vadd.f32 %v4690, %v4802
        %4804 = vdwg.mxu0
        %4805 = vmatprep.subr.bf16.mxu0 %v3774
        %4806 = vmatpush1.bf16.msra.mxu0 %v3773
        %4807 = vmatprep.subr.bf16.mxu0 %v3770
        %4808 = vmatpush1.bf16.msra.mxu0 %v3769
        %4809 = vmatprep.subr.bf16.mxu0 %v3766
        %4810 = vmatpush1.bf16.msra.mxu0 %v3765
        %4811 = vmatprep.subr.bf16.mxu0 %v3762
        %4812 = vmatpush1.bf16.msra.mxu0 %v3761
        %4813 = vmatprep.subr.bf16.mxu0 %v3758
        %4814 = vmatpush1.bf16.msra.mxu0 %v3757
        %4815 = vmatprep.subr.bf16.mxu0 %v3754
        %4816 = vmatpush1.bf16.msra.mxu0 %v3753
        %4817 = vmatprep.subr.bf16.mxu0 %v3750
        %4818 = vmatpush1.bf16.msra.mxu0 %v3749
        %4819 = vmatprep.subr.bf16.mxu0 %v3746
        %4820 = vmatpush1.bf16.msra.mxu0 %v3745
        %4821 = vmatprep.subr.bf16.mxu0 %v3806
        %4822 = vmatpush2.bf16.msra.mxu0 %v3805
        %4823 = vmatprep.subr.bf16.mxu0 %v3802
        %4824 = vmatpush2.bf16.msra.mxu0 %v3801
        %4825 = vmatprep.subr.bf16.mxu0 %v3798
        %4826 = vmatpush2.bf16.msra.mxu0 %v3797
        %4827 = vmatprep.subr.bf16.mxu0 %v3794
        %4828 = vmatpush2.bf16.msra.mxu0 %v3793
        %4829 = vmatprep.subr.bf16.mxu0 %v3790
        %4830 = vmatpush2.bf16.msra.mxu0 %v3789
        %4831 = vmatprep.subr.bf16.mxu0 %v3786
        %4832 = vmatpush2.bf16.msra.mxu0 %v3785
        %4833 = vmatprep.subr.bf16.mxu0 %v3782
        %4834 = vmatpush2.bf16.msra.mxu0 %v3781
        %4835 = vmatprep.subr.bf16.mxu0 %v3778
        %4836 = vmatpush2.bf16.msra.mxu0 %v3777
        %4837 = vmatprep.mubr.bf16.mxu0 %v2445
        %4838 = vmatmul.mubr.bf16.gmra.mxu0 %v2444
        %v4839 = vpop.f32.mrf.mxu0
        %v4840 = vadd.f32 %v4727, %v4839
        %v4841 = vpop.f32.mrf.mxu0
        %v4842 = vadd.f32 %v4729, %v4841
        %v4843 = vpop.f32.mrf.mxu0
        %v4844 = vadd.f32 %v4731, %v4843
        %v4845 = vpop.f32.mrf.mxu0
        %v4846 = vadd.f32 %v4733, %v4845
        %4847 = vmatprep.mubr.bf16.mxu0 %v2453
        %4848 = vmatmul.mubr.bf16.gmra.mxu0 %v2452
        %v4849 = vpop.f32.mrf.mxu0
        %v4850 = vadd.f32 %v4737, %v4849
        %v4851 = vpop.f32.mrf.mxu0
        %v4852 = vadd.f32 %v4739, %v4851
        %v4853 = vpop.f32.mrf.mxu0
        %v4854 = vadd.f32 %v4741, %v4853
        %v4855 = vpop.f32.mrf.mxu0
        %v4856 = vadd.f32 %v4743, %v4855
        %4857 = vmatprep.mubr.bf16.mxu0 %v2461
        %4858 = vmatmul.mubr.bf16.gmra.mxu0 %v2460
        %v4859 = vpop.f32.mrf.mxu0
        %v4860 = vadd.f32 %v4747, %v4859
        %v4861 = vpop.f32.mrf.mxu0
        %v4862 = vadd.f32 %v4749, %v4861
        %v4863 = vpop.f32.mrf.mxu0
        %v4864 = vadd.f32 %v4751, %v4863
        %v4865 = vpop.f32.mrf.mxu0
        %v4866 = vadd.f32 %v4753, %v4865
        %4867 = vmatprep.mubr.bf16.mxu0 %v2469
        %4868 = vmatmul.mubr.bf16.gmra.mxu0 %v2468
        %v4869 = vpop.f32.mrf.mxu0
        %v4870 = vadd.f32 %v4757, %v4869
        %v4871 = vpop.f32.mrf.mxu0
        %v4872 = vadd.f32 %v4759, %v4871
        %v4873 = vpop.f32.mrf.mxu0
        %v4874 = vadd.f32 %v4761, %v4873
        %v4875 = vpop.f32.mrf.mxu0
        %v4876 = vadd.f32 %v4763, %v4875
        %4877 = vmatprep.mubr.bf16.mxu0 %v2477
        %4878 = vmatmul.mubr.bf16.gmra.mxu0 %v2476
        %v4879 = vpop.f32.mrf.mxu0
        %v4880 = vadd.f32 %v4767, %v4879
        %v4881 = vpop.f32.mrf.mxu0
        %v4882 = vadd.f32 %v4769, %v4881
        %v4883 = vpop.f32.mrf.mxu0
        %v4884 = vadd.f32 %v4771, %v4883
        %v4885 = vpop.f32.mrf.mxu0
        %v4886 = vadd.f32 %v4773, %v4885
        %4887 = vmatprep.mubr.bf16.mxu0 %v2485
        %4888 = vmatmul.mubr.bf16.gmra.mxu0 %v2484
        %v4889 = vpop.f32.mrf.mxu0
        %v4890 = vadd.f32 %v4777, %v4889
        %v4891 = vpop.f32.mrf.mxu0
        %v4892 = vadd.f32 %v4779, %v4891
        %v4893 = vpop.f32.mrf.mxu0
        %v4894 = vadd.f32 %v4781, %v4893
        %v4895 = vpop.f32.mrf.mxu0
        %v4896 = vadd.f32 %v4783, %v4895
        %4897 = vmatprep.mubr.bf16.mxu0 %v2493
        %4898 = vmatmul.mubr.bf16.gmra.mxu0 %v2492
        %v4899 = vpop.f32.mrf.mxu0
        %v4900 = vadd.f32 %v4787, %v4899
        %v4901 = vpop.f32.mrf.mxu0
        %v4902 = vadd.f32 %v4789, %v4901
        %v4903 = vpop.f32.mrf.mxu0
        %v4904 = vadd.f32 %v4791, %v4903
        %v4905 = vpop.f32.mrf.mxu0
        %v4906 = vadd.f32 %v4793, %v4905
        %4907 = vmatprep.mubr.bf16.mxu0 %v2501
        %4908 = vmatmul.mubr.bf16.gmra.mxu0 %v2500
        %v4909 = vpop.f32.mrf.mxu0
        %v4910 = vadd.f32 %v4797, %v4909
        %v4911 = vpop.f32.mrf.mxu0
        %v4912 = vadd.f32 %v4799, %v4911
        %v4913 = vpop.f32.mrf.mxu0
        %v4914 = vadd.f32 %v4801, %v4913
        %v4915 = vpop.f32.mrf.mxu0
        %v4916 = vadd.f32 %v4803, %v4915
        %4917 = vdwg.mxu0
        %4918 = vmatprep.subr.bf16.mxu0 %v3838
        %4919 = vmatpush1.bf16.msra.mxu0 %v3837
        %4920 = vmatprep.subr.bf16.mxu0 %v3834
        %4921 = vmatpush1.bf16.msra.mxu0 %v3833
        %4922 = vmatprep.subr.bf16.mxu0 %v3830
        %4923 = vmatpush1.bf16.msra.mxu0 %v3829
        %4924 = vmatprep.subr.bf16.mxu0 %v3826
        %4925 = vmatpush1.bf16.msra.mxu0 %v3825
        %4926 = vmatprep.subr.bf16.mxu0 %v3822
        %4927 = vmatpush1.bf16.msra.mxu0 %v3821
        %4928 = vmatprep.subr.bf16.mxu0 %v3818
        %4929 = vmatpush1.bf16.msra.mxu0 %v3817
        %4930 = vmatprep.subr.bf16.mxu0 %v3814
        %4931 = vmatpush1.bf16.msra.mxu0 %v3813
        %4932 = vmatprep.subr.bf16.mxu0 %v3810
        %4933 = vmatpush1.bf16.msra.mxu0 %v3809
        %4934 = vmatprep.subr.bf16.mxu0 %v3870
        %4935 = vmatpush2.bf16.msra.mxu0 %v3869
        %4936 = vmatprep.subr.bf16.mxu0 %v3866
        %4937 = vmatpush2.bf16.msra.mxu0 %v3865
        %4938 = vmatprep.subr.bf16.mxu0 %v3862
        %4939 = vmatpush2.bf16.msra.mxu0 %v3861
        %4940 = vmatprep.subr.bf16.mxu0 %v3858
        %4941 = vmatpush2.bf16.msra.mxu0 %v3857
        %4942 = vmatprep.subr.bf16.mxu0 %v3854
        %4943 = vmatpush2.bf16.msra.mxu0 %v3853
        %4944 = vmatprep.subr.bf16.mxu0 %v3850
        %4945 = vmatpush2.bf16.msra.mxu0 %v3849
        %4946 = vmatprep.subr.bf16.mxu0 %v3846
        %4947 = vmatpush2.bf16.msra.mxu0 %v3845
        %4948 = vmatprep.subr.bf16.mxu0 %v3842
        %4949 = vmatpush2.bf16.msra.mxu0 %v3841
        %4950 = vmatprep.mubr.bf16.mxu0 %v2447
        %4951 = vmatmul.mubr.bf16.gmra.mxu0 %v2446
        %v4952 = vpop.f32.mrf.mxu0
        %v4953 = vadd.f32 %v4840, %v4952
        %v4954 = vpop.f32.mrf.mxu0
        %v4955 = vadd.f32 %v4842, %v4954
        %v4956 = vpop.f32.mrf.mxu0
        %v4957 = vadd.f32 %v4844, %v4956
        %v4958 = vpop.f32.mrf.mxu0
        %v4959 = vadd.f32 %v4846, %v4958
        %4960 = vmatprep.mubr.bf16.mxu0 %v2455
        %4961 = vmatmul.mubr.bf16.gmra.mxu0 %v2454
        %v4962 = vpop.f32.mrf.mxu0
        %v4963 = vadd.f32 %v4850, %v4962
        %v4964 = vpop.f32.mrf.mxu0
        %v4965 = vadd.f32 %v4852, %v4964
        %v4966 = vpop.f32.mrf.mxu0
        %v4967 = vadd.f32 %v4854, %v4966
        %v4968 = vpop.f32.mrf.mxu0
        %v4969 = vadd.f32 %v4856, %v4968
        %4970 = vmatprep.mubr.bf16.mxu0 %v2463
        %4971 = vmatmul.mubr.bf16.gmra.mxu0 %v2462
        %v4972 = vpop.f32.mrf.mxu0
        %v4973 = vadd.f32 %v4860, %v4972
        %v4974 = vpop.f32.mrf.mxu0
        %v4975 = vadd.f32 %v4862, %v4974
        %v4976 = vpop.f32.mrf.mxu0
        %v4977 = vadd.f32 %v4864, %v4976
        %v4978 = vpop.f32.mrf.mxu0
        %v4979 = vadd.f32 %v4866, %v4978
        %4980 = vmatprep.mubr.bf16.mxu0 %v2471
        %4981 = vmatmul.mubr.bf16.gmra.mxu0 %v2470
        %v4982 = vpop.f32.mrf.mxu0
        %v4983 = vadd.f32 %v4870, %v4982
        %v4984 = vpop.f32.mrf.mxu0
        %v4985 = vadd.f32 %v4872, %v4984
        %v4986 = vpop.f32.mrf.mxu0
        %v4987 = vadd.f32 %v4874, %v4986
        %v4988 = vpop.f32.mrf.mxu0
        %v4989 = vadd.f32 %v4876, %v4988
        %4990 = vmatprep.mubr.bf16.mxu0 %v2479
        %4991 = vmatmul.mubr.bf16.gmra.mxu0 %v2478
        %v4992 = vpop.f32.mrf.mxu0
        %v4993 = vadd.f32 %v4880, %v4992
        %v4994 = vpop.f32.mrf.mxu0
        %v4995 = vadd.f32 %v4882, %v4994
        %v4996 = vpop.f32.mrf.mxu0
        %v4997 = vadd.f32 %v4884, %v4996
        %v4998 = vpop.f32.mrf.mxu0
        %v4999 = vadd.f32 %v4886, %v4998
        %5000 = vmatprep.mubr.bf16.mxu0 %v2487
        %5001 = vmatmul.mubr.bf16.gmra.mxu0 %v2486
        %v5002 = vpop.f32.mrf.mxu0
        %v5003 = vadd.f32 %v4890, %v5002
        %v5004 = vpop.f32.mrf.mxu0
        %v5005 = vadd.f32 %v4892, %v5004
        %v5006 = vpop.f32.mrf.mxu0
        %v5007 = vadd.f32 %v4894, %v5006
        %v5008 = vpop.f32.mrf.mxu0
        %v5009 = vadd.f32 %v4896, %v5008
        %5010 = vmatprep.mubr.bf16.mxu0 %v2495
        %5011 = vmatmul.mubr.bf16.gmra.mxu0 %v2494
        %v5012 = vpop.f32.mrf.mxu0
        %v5013 = vadd.f32 %v4900, %v5012
        %v5014 = vpop.f32.mrf.mxu0
        %v5015 = vadd.f32 %v4902, %v5014
        %v5016 = vpop.f32.mrf.mxu0
        %v5017 = vadd.f32 %v4904, %v5016
        %v5018 = vpop.f32.mrf.mxu0
        %v5019 = vadd.f32 %v4906, %v5018
        %5020 = vmatprep.mubr.bf16.mxu0 %v2503
        %5021 = vmatmul.mubr.bf16.gmra.mxu0 %v2502
        %v5022 = vpop.f32.mrf.mxu0
        %v5023 = vadd.f32 %v4910, %v5022
        %v5024 = vpop.f32.mrf.mxu0
        %v5025 = vadd.f32 %v4912, %v5024
        %v5026 = vpop.f32.mrf.mxu0
        %v5027 = vadd.f32 %v4914, %v5026
        %v5028 = vpop.f32.mrf.mxu0
        %v5029 = vadd.f32 %v4916, %v5028
        %5030 = vdwg.mxu0
        %vm5031 = vcmp.gt.f32.partialorder %v4501, 0.0
        %vm5032 = vcmp.gt.f32.partialorder %v4503, 0.0
        %vm5033 = vcmp.gt.f32.partialorder %v4953, 0.0
        %vm5034 = vcmp.gt.f32.partialorder %v4955, 0.0
        %vm5035 = vcmp.gt.f32.partialorder %v4505, 0.0
        %vm5036 = vcmp.gt.f32.partialorder %v4507, 0.0
        %vm5037 = vcmp.gt.f32.partialorder %v4957, 0.0
        %vm5038 = vcmp.gt.f32.partialorder %v4959, 0.0
        %vm5039 = vcmp.gt.f32.partialorder %v4511, 0.0
        %vm5040 = vcmp.gt.f32.partialorder %v4513, 0.0
        %vm5041 = vcmp.gt.f32.partialorder %v4963, 0.0
        %vm5042 = vcmp.gt.f32.partialorder %v4965, 0.0
        %vm5043 = vcmp.gt.f32.partialorder %v4515, 0.0
        %vm5044 = vcmp.gt.f32.partialorder %v4517, 0.0
        %vm5045 = vcmp.gt.f32.partialorder %v4967, 0.0
        %vm5046 = vcmp.gt.f32.partialorder %v4969, 0.0
        %vm5047 = vcmp.gt.f32.partialorder %v4521, 0.0
        %vm5048 = vcmp.gt.f32.partialorder %v4523, 0.0
        %vm5049 = vcmp.gt.f32.partialorder %v4973, 0.0
        %vm5050 = vcmp.gt.f32.partialorder %v4975, 0.0
        %vm5051 = vcmp.gt.f32.partialorder %v4525, 0.0
        %vm5052 = vcmp.gt.f32.partialorder %v4527, 0.0
        %vm5053 = vcmp.gt.f32.partialorder %v4977, 0.0
        %vm5054 = vcmp.gt.f32.partialorder %v4979, 0.0
        %vm5055 = vcmp.gt.f32.partialorder %v4531, 0.0
        %vm5056 = vcmp.gt.f32.partialorder %v4533, 0.0
        %vm5057 = vcmp.gt.f32.partialorder %v4983, 0.0
        %vm5058 = vcmp.gt.f32.partialorder %v4985, 0.0
        %vm5059 = vcmp.gt.f32.partialorder %v4535, 0.0
        %vm5060 = vcmp.gt.f32.partialorder %v4537, 0.0
        %vm5061 = vcmp.gt.f32.partialorder %v4987, 0.0
        %vm5062 = vcmp.gt.f32.partialorder %v4989, 0.0
        %vm5063 = vcmp.gt.f32.partialorder %v4541, 0.0
        %vm5064 = vcmp.gt.f32.partialorder %v4543, 0.0
        %vm5065 = vcmp.gt.f32.partialorder %v4993, 0.0
        %vm5066 = vcmp.gt.f32.partialorder %v4995, 0.0
        %vm5067 = vcmp.gt.f32.partialorder %v4545, 0.0
        %vm5068 = vcmp.gt.f32.partialorder %v4547, 0.0
        %vm5069 = vcmp.gt.f32.partialorder %v4997, 0.0
        %vm5070 = vcmp.gt.f32.partialorder %v4999, 0.0
        %vm5071 = vcmp.gt.f32.partialorder %v4551, 0.0
        %vm5072 = vcmp.gt.f32.partialorder %v4553, 0.0
        %vm5073 = vcmp.gt.f32.partialorder %v5003, 0.0
        %vm5074 = vcmp.gt.f32.partialorder %v5005, 0.0
        %vm5075 = vcmp.gt.f32.partialorder %v4555, 0.0
        %vm5076 = vcmp.gt.f32.partialorder %v4557, 0.0
        %vm5077 = vcmp.gt.f32.partialorder %v5007, 0.0
        %vm5078 = vcmp.gt.f32.partialorder %v5009, 0.0
        %vm5079 = vcmp.gt.f32.partialorder %v4561, 0.0
        %vm5080 = vcmp.gt.f32.partialorder %v4563, 0.0
        %vm5081 = vcmp.gt.f32.partialorder %v5013, 0.0
        %vm5082 = vcmp.gt.f32.partialorder %v5015, 0.0
        %vm5083 = vcmp.gt.f32.partialorder %v4565, 0.0
        %vm5084 = vcmp.gt.f32.partialorder %v4567, 0.0
        %vm5085 = vcmp.gt.f32.partialorder %v5017, 0.0
        %vm5086 = vcmp.gt.f32.partialorder %v5019, 0.0
        %vm5087 = vcmp.gt.f32.partialorder %v4571, 0.0
        %vm5088 = vcmp.gt.f32.partialorder %v4573, 0.0
        %vm5089 = vcmp.gt.f32.partialorder %v5023, 0.0
        %vm5090 = vcmp.gt.f32.partialorder %v5025, 0.0
        %vm5091 = vcmp.gt.f32.partialorder %v4575, 0.0
        %vm5092 = vcmp.gt.f32.partialorder %v4577, 0.0
        %vm5093 = vcmp.gt.f32.partialorder %v5027, 0.0
        %vm5094 = vcmp.gt.f32.partialorder %v5029, 0.0
        %v5095 = vmul.f32 %v4501, 0.01
        %v5096 = vmul.f32 %v4503, 0.01
        %v5097 = vmul.f32 %v4953, 0.01
        %v5098 = vmul.f32 %v4955, 0.01
        %v5099 = vmul.f32 %v4505, 0.01
        %v5100 = vmul.f32 %v4507, 0.01
        %v5101 = vmul.f32 %v4957, 0.01
        %v5102 = vmul.f32 %v4959, 0.01
        %v5103 = vmul.f32 %v4511, 0.01
        %v5104 = vmul.f32 %v4513, 0.01
        %v5105 = vmul.f32 %v4963, 0.01
        %v5106 = vmul.f32 %v4965, 0.01
        %v5107 = vmul.f32 %v4515, 0.01
        %v5108 = vmul.f32 %v4517, 0.01
        %v5109 = vmul.f32 %v4967, 0.01
        %v5110 = vmul.f32 %v4969, 0.01
        %v5111 = vmul.f32 %v4521, 0.01
        %v5112 = vmul.f32 %v4523, 0.01
        %v5113 = vmul.f32 %v4973, 0.01
        %v5114 = vmul.f32 %v4975, 0.01
        %v5115 = vmul.f32 %v4525, 0.01
        %v5116 = vmul.f32 %v4527, 0.01
        %v5117 = vmul.f32 %v4977, 0.01
        %v5118 = vmul.f32 %v4979, 0.01
        %v5119 = vmul.f32 %v4531, 0.01
        %v5120 = vmul.f32 %v4533, 0.01
        %v5121 = vmul.f32 %v4983, 0.01
        %v5122 = vmul.f32 %v4985, 0.01
        %v5123 = vmul.f32 %v4535, 0.01
        %v5124 = vmul.f32 %v4537, 0.01
        %v5125 = vmul.f32 %v4987, 0.01
        %v5126 = vmul.f32 %v4989, 0.01
        %v5127 = vmul.f32 %v4541, 0.01
        %v5128 = vmul.f32 %v4543, 0.01
        %v5129 = vmul.f32 %v4993, 0.01
        %v5130 = vmul.f32 %v4995, 0.01
        %v5131 = vmul.f32 %v4545, 0.01
        %v5132 = vmul.f32 %v4547, 0.01
        %v5133 = vmul.f32 %v4997, 0.01
        %v5134 = vmul.f32 %v4999, 0.01
        %v5135 = vmul.f32 %v4551, 0.01
        %v5136 = vmul.f32 %v4553, 0.01
        %v5137 = vmul.f32 %v5003, 0.01
        %v5138 = vmul.f32 %v5005, 0.01
        %v5139 = vmul.f32 %v4555, 0.01
        %v5140 = vmul.f32 %v4557, 0.01
        %v5141 = vmul.f32 %v5007, 0.01
        %v5142 = vmul.f32 %v5009, 0.01
        %v5143 = vmul.f32 %v4561, 0.01
        %v5144 = vmul.f32 %v4563, 0.01
        %v5145 = vmul.f32 %v5013, 0.01
        %v5146 = vmul.f32 %v5015, 0.01
        %v5147 = vmul.f32 %v4565, 0.01
        %v5148 = vmul.f32 %v4567, 0.01
        %v5149 = vmul.f32 %v5017, 0.01
        %v5150 = vmul.f32 %v5019, 0.01
        %v5151 = vmul.f32 %v4571, 0.01
        %v5152 = vmul.f32 %v4573, 0.01
        %v5153 = vmul.f32 %v5023, 0.01
        %v5154 = vmul.f32 %v5025, 0.01
        %v5155 = vmul.f32 %v4575, 0.01
        %v5156 = vmul.f32 %v4577, 0.01
        %v5157 = vmul.f32 %v5027, 0.01
        %v5158 = vmul.f32 %v5029, 0.01
        %v5159 = vsel %vm5031, %v4501, %v5095
        %v5160 = vsel %vm5032, %v4503, %v5096
        %v5161 = vsel %vm5033, %v4953, %v5097
        %v5162 = vsel %vm5034, %v4955, %v5098
        %v5163 = vsel %vm5035, %v4505, %v5099
        %v5164 = vsel %vm5036, %v4507, %v5100
        %v5165 = vsel %vm5037, %v4957, %v5101
        %v5166 = vsel %vm5038, %v4959, %v5102
        %v5167 = vsel %vm5039, %v4511, %v5103
        %v5168 = vsel %vm5040, %v4513, %v5104
        %v5169 = vsel %vm5041, %v4963, %v5105
        %v5170 = vsel %vm5042, %v4965, %v5106
        %v5171 = vsel %vm5043, %v4515, %v5107
        %v5172 = vsel %vm5044, %v4517, %v5108
        %v5173 = vsel %vm5045, %v4967, %v5109
        %v5174 = vsel %vm5046, %v4969, %v5110
        %v5175 = vsel %vm5047, %v4521, %v5111
        %v5176 = vsel %vm5048, %v4523, %v5112
        %v5177 = vsel %vm5049, %v4973, %v5113
        %v5178 = vsel %vm5050, %v4975, %v5114
        %v5179 = vsel %vm5051, %v4525, %v5115
        %v5180 = vsel %vm5052, %v4527, %v5116
        %v5181 = vsel %vm5053, %v4977, %v5117
        %v5182 = vsel %vm5054, %v4979, %v5118
        %v5183 = vsel %vm5055, %v4531, %v5119
        %v5184 = vsel %vm5056, %v4533, %v5120
        %v5185 = vsel %vm5057, %v4983, %v5121
        %v5186 = vsel %vm5058, %v4985, %v5122
        %v5187 = vsel %vm5059, %v4535, %v5123
        %v5188 = vsel %vm5060, %v4537, %v5124
        %v5189 = vsel %vm5061, %v4987, %v5125
        %v5190 = vsel %vm5062, %v4989, %v5126
        %v5191 = vsel %vm5063, %v4541, %v5127
        %v5192 = vsel %vm5064, %v4543, %v5128
        %v5193 = vsel %vm5065, %v4993, %v5129
        %v5194 = vsel %vm5066, %v4995, %v5130
        %v5195 = vsel %vm5067, %v4545, %v5131
        %v5196 = vsel %vm5068, %v4547, %v5132
        %v5197 = vsel %vm5069, %v4997, %v5133
        %v5198 = vsel %vm5070, %v4999, %v5134
        %v5199 = vsel %vm5071, %v4551, %v5135
        %v5200 = vsel %vm5072, %v4553, %v5136
        %v5201 = vsel %vm5073, %v5003, %v5137
        %v5202 = vsel %vm5074, %v5005, %v5138
        %v5203 = vsel %vm5075, %v4555, %v5139
        %v5204 = vsel %vm5076, %v4557, %v5140
        %v5205 = vsel %vm5077, %v5007, %v5141
        %v5206 = vsel %vm5078, %v5009, %v5142
        %v5207 = vsel %vm5079, %v4561, %v5143
        %v5208 = vsel %vm5080, %v4563, %v5144
        %v5209 = vsel %vm5081, %v5013, %v5145
        %v5210 = vsel %vm5082, %v5015, %v5146
        %v5211 = vsel %vm5083, %v4565, %v5147
        %v5212 = vsel %vm5084, %v4567, %v5148
        %v5213 = vsel %vm5085, %v5017, %v5149
        %v5214 = vsel %vm5086, %v5019, %v5150
        %v5215 = vsel %vm5087, %v4571, %v5151
        %v5216 = vsel %vm5088, %v4573, %v5152
        %v5217 = vsel %vm5089, %v5023, %v5153
        %v5218 = vsel %vm5090, %v5025, %v5154
        %v5219 = vsel %vm5091, %v4575, %v5155
        %v5220 = vsel %vm5092, %v4577, %v5156
        %v5221 = vsel %vm5093, %v5027, %v5157
        %v5222 = vsel %vm5094, %v5029, %v5158
        %v5223 = vpack.c.bf16 %v5163, %v5159
        %v5224 = vpack.c.bf16 %v5164, %v5160
        %v5225 = vpack.c.bf16 %v5165, %v5161
        %v5226 = vpack.c.bf16 %v5166, %v5162
        %v5227 = vpack.c.bf16 %v5171, %v5167
        %v5228 = vpack.c.bf16 %v5172, %v5168
        %v5229 = vpack.c.bf16 %v5173, %v5169
        %v5230 = vpack.c.bf16 %v5174, %v5170
        %v5231 = vpack.c.bf16 %v5179, %v5175
        %v5232 = vpack.c.bf16 %v5180, %v5176
        %v5233 = vpack.c.bf16 %v5181, %v5177
        %v5234 = vpack.c.bf16 %v5182, %v5178
        %v5235 = vpack.c.bf16 %v5187, %v5183
        %v5236 = vpack.c.bf16 %v5188, %v5184
        %v5237 = vpack.c.bf16 %v5189, %v5185
        %v5238 = vpack.c.bf16 %v5190, %v5186
        %v5239 = vpack.c.bf16 %v5195, %v5191
        %v5240 = vpack.c.bf16 %v5196, %v5192
        %v5241 = vpack.c.bf16 %v5197, %v5193
        %v5242 = vpack.c.bf16 %v5198, %v5194
        %v5243 = vpack.c.bf16 %v5203, %v5199
        %v5244 = vpack.c.bf16 %v5204, %v5200
        %v5245 = vpack.c.bf16 %v5205, %v5201
        %v5246 = vpack.c.bf16 %v5206, %v5202
        %v5247 = vpack.c.bf16 %v5211, %v5207
        %v5248 = vpack.c.bf16 %v5212, %v5208
        %v5249 = vpack.c.bf16 %v5213, %v5209
        %v5250 = vpack.c.bf16 %v5214, %v5210
        %v5251 = vpack.c.bf16 %v5219, %v5215
        %v5252 = vpack.c.bf16 %v5220, %v5216
        %v5253 = vpack.c.bf16 %v5221, %v5217
        %v5254 = vpack.c.bf16 %v5222, %v5218
        %v5255 = vld [vmem:[#allocation4] sm:$0xff]
        %v5256 = vld [vmem:[#allocation4 + $0x8] sm:$0xff]
        %v5257 = vld [vmem:[#allocation4 + $0x10] sm:$0xff]
        %v5258 = vld [vmem:[#allocation4 + $0x18] sm:$0xff]
        %v5259 = vld [vmem:[#allocation4 + $0x20] sm:$0xff]
        %v5260 = vld [vmem:[#allocation4 + $0x28] sm:$0xff]
        %v5261 = vld [vmem:[#allocation4 + $0x30] sm:$0xff]
        %v5262 = vld [vmem:[#allocation4 + $0x38] sm:$0xff]
        %v5263 = vld [vmem:[#allocation4 + $0x40] sm:$0xff]
        %v5264 = vld [vmem:[#allocation4 + $0x48] sm:$0xff]
        %v5265 = vld [vmem:[#allocation4 + $0x50] sm:$0xff]
        %v5266 = vld [vmem:[#allocation4 + $0x58] sm:$0xff]
        %v5267 = vld [vmem:[#allocation4 + $0x60] sm:$0xff]
        %v5268 = vld [vmem:[#allocation4 + $0x68] sm:$0xff]
        %v5269 = vld [vmem:[#allocation4 + $0x70] sm:$0xff]
        %v5270 = vld [vmem:[#allocation4 + $0x78] sm:$0xff]
        %v5271 = vld [vmem:[#allocation4 + $0x80] sm:$0xff]
        %v5272 = vld [vmem:[#allocation4 + $0x88] sm:$0xff]
        %v5273 = vld [vmem:[#allocation4 + $0x90] sm:$0xff]
        %v5274 = vld [vmem:[#allocation4 + $0x98] sm:$0xff]
        %v5275 = vld [vmem:[#allocation4 + $0xa0] sm:$0xff]
        %v5276 = vld [vmem:[#allocation4 + $0xa8] sm:$0xff]
        %v5277 = vld [vmem:[#allocation4 + $0xb0] sm:$0xff]
        %v5278 = vld [vmem:[#allocation4 + $0xb8] sm:$0xff]
        %v5279 = vld [vmem:[#allocation4 + $0xc0] sm:$0xff]
        %v5280 = vld [vmem:[#allocation4 + $0xc8] sm:$0xff]
        %v5281 = vld [vmem:[#allocation4 + $0xd0] sm:$0xff]
        %v5282 = vld [vmem:[#allocation4 + $0xd8] sm:$0xff]
        %v5283 = vld [vmem:[#allocation4 + $0xe0] sm:$0xff]
        %v5284 = vld [vmem:[#allocation4 + $0xe8] sm:$0xff]
        %v5285 = vld [vmem:[#allocation4 + $0xf0] sm:$0xff]
        %v5286 = vld [vmem:[#allocation4 + $0xf8] sm:$0xff]
        %v5287 = vld [vmem:[#allocation4 + $0x100] sm:$0xff]
        %v5288 = vld [vmem:[#allocation4 + $0x108] sm:$0xff]
        %v5289 = vld [vmem:[#allocation4 + $0x110] sm:$0xff]
        %v5290 = vld [vmem:[#allocation4 + $0x118] sm:$0xff]
        %v5291 = vld [vmem:[#allocation4 + $0x120] sm:$0xff]
        %v5292 = vld [vmem:[#allocation4 + $0x128] sm:$0xff]
        %v5293 = vld [vmem:[#allocation4 + $0x130] sm:$0xff]
        %v5294 = vld [vmem:[#allocation4 + $0x138] sm:$0xff]
        %v5295 = vld [vmem:[#allocation4 + $0x140] sm:$0xff]
        %v5296 = vld [vmem:[#allocation4 + $0x148] sm:$0xff]
        %v5297 = vld [vmem:[#allocation4 + $0x150] sm:$0xff]
        %v5298 = vld [vmem:[#allocation4 + $0x158] sm:$0xff]
        %v5299 = vld [vmem:[#allocation4 + $0x160] sm:$0xff]
        %v5300 = vld [vmem:[#allocation4 + $0x168] sm:$0xff]
        %v5301 = vld [vmem:[#allocation4 + $0x170] sm:$0xff]
        %v5302 = vld [vmem:[#allocation4 + $0x178] sm:$0xff]
        %v5303 = vld [vmem:[#allocation4 + $0x180] sm:$0xff]
        %v5304 = vld [vmem:[#allocation4 + $0x188] sm:$0xff]
        %v5305 = vld [vmem:[#allocation4 + $0x190] sm:$0xff]
        %v5306 = vld [vmem:[#allocation4 + $0x198] sm:$0xff]
        %v5307 = vld [vmem:[#allocation4 + $0x1a0] sm:$0xff]
        %v5308 = vld [vmem:[#allocation4 + $0x1a8] sm:$0xff]
        %v5309 = vld [vmem:[#allocation4 + $0x1b0] sm:$0xff]
        %v5310 = vld [vmem:[#allocation4 + $0x1b8] sm:$0xff]
        %v5311 = vld [vmem:[#allocation4 + $0x1c0] sm:$0xff]
        %v5312 = vld [vmem:[#allocation4 + $0x1c8] sm:$0xff]
        %v5313 = vld [vmem:[#allocation4 + $0x1d0] sm:$0xff]
        %v5314 = vld [vmem:[#allocation4 + $0x1d8] sm:$0xff]
        %v5315 = vld [vmem:[#allocation4 + $0x1e0] sm:$0xff]
        %v5316 = vld [vmem:[#allocation4 + $0x1e8] sm:$0xff]
        %v5317 = vld [vmem:[#allocation4 + $0x1f0] sm:$0xff]
        %v5318 = vld [vmem:[#allocation4 + $0x1f8] sm:$0xff]
        %v5319 = vld [vmem:[#allocation4 + $0x200] sm:$0xff]
        %v5320 = vld [vmem:[#allocation4 + $0x208] sm:$0xff]
        %v5321 = vld [vmem:[#allocation4 + $0x210] sm:$0xff]
        %v5322 = vld [vmem:[#allocation4 + $0x218] sm:$0xff]
        %v5323 = vld [vmem:[#allocation4 + $0x220] sm:$0xff]
        %v5324 = vld [vmem:[#allocation4 + $0x228] sm:$0xff]
        %v5325 = vld [vmem:[#allocation4 + $0x230] sm:$0xff]
        %v5326 = vld [vmem:[#allocation4 + $0x238] sm:$0xff]
        %v5327 = vld [vmem:[#allocation4 + $0x240] sm:$0xff]
        %v5328 = vld [vmem:[#allocation4 + $0x248] sm:$0xff]
        %v5329 = vld [vmem:[#allocation4 + $0x250] sm:$0xff]
        %v5330 = vld [vmem:[#allocation4 + $0x258] sm:$0xff]
        %v5331 = vld [vmem:[#allocation4 + $0x260] sm:$0xff]
        %v5332 = vld [vmem:[#allocation4 + $0x268] sm:$0xff]
        %v5333 = vld [vmem:[#allocation4 + $0x270] sm:$0xff]
        %v5334 = vld [vmem:[#allocation4 + $0x278] sm:$0xff]
        %v5335 = vld [vmem:[#allocation4 + $0x280] sm:$0xff]
        %v5336 = vld [vmem:[#allocation4 + $0x288] sm:$0xff]
        %v5337 = vld [vmem:[#allocation4 + $0x290] sm:$0xff]
        %v5338 = vld [vmem:[#allocation4 + $0x298] sm:$0xff]
        %v5339 = vld [vmem:[#allocation4 + $0x2a0] sm:$0xff]
        %v5340 = vld [vmem:[#allocation4 + $0x2a8] sm:$0xff]
        %v5341 = vld [vmem:[#allocation4 + $0x2b0] sm:$0xff]
        %v5342 = vld [vmem:[#allocation4 + $0x2b8] sm:$0xff]
        %v5343 = vld [vmem:[#allocation4 + $0x2c0] sm:$0xff]
        %v5344 = vld [vmem:[#allocation4 + $0x2c8] sm:$0xff]
        %v5345 = vld [vmem:[#allocation4 + $0x2d0] sm:$0xff]
        %v5346 = vld [vmem:[#allocation4 + $0x2d8] sm:$0xff]
        %v5347 = vld [vmem:[#allocation4 + $0x2e0] sm:$0xff]
        %v5348 = vld [vmem:[#allocation4 + $0x2e8] sm:$0xff]
        %v5349 = vld [vmem:[#allocation4 + $0x2f0] sm:$0xff]
        %v5350 = vld [vmem:[#allocation4 + $0x2f8] sm:$0xff]
        %v5351 = vld [vmem:[#allocation4 + $0x300] sm:$0xff]
        %v5352 = vld [vmem:[#allocation4 + $0x308] sm:$0xff]
        %v5353 = vld [vmem:[#allocation4 + $0x310] sm:$0xff]
        %v5354 = vld [vmem:[#allocation4 + $0x318] sm:$0xff]
        %v5355 = vld [vmem:[#allocation4 + $0x320] sm:$0xff]
        %v5356 = vld [vmem:[#allocation4 + $0x328] sm:$0xff]
        %v5357 = vld [vmem:[#allocation4 + $0x330] sm:$0xff]
        %v5358 = vld [vmem:[#allocation4 + $0x338] sm:$0xff]
        %v5359 = vld [vmem:[#allocation4 + $0x340] sm:$0xff]
        %v5360 = vld [vmem:[#allocation4 + $0x348] sm:$0xff]
        %v5361 = vld [vmem:[#allocation4 + $0x350] sm:$0xff]
        %v5362 = vld [vmem:[#allocation4 + $0x358] sm:$0xff]
        %v5363 = vld [vmem:[#allocation4 + $0x360] sm:$0xff]
        %v5364 = vld [vmem:[#allocation4 + $0x368] sm:$0xff]
        %v5365 = vld [vmem:[#allocation4 + $0x370] sm:$0xff]
        %v5366 = vld [vmem:[#allocation4 + $0x378] sm:$0xff]
        %v5367 = vld [vmem:[#allocation4 + $0x380] sm:$0xff]
        %v5368 = vld [vmem:[#allocation4 + $0x388] sm:$0xff]
        %v5369 = vld [vmem:[#allocation4 + $0x390] sm:$0xff]
        %v5370 = vld [vmem:[#allocation4 + $0x398] sm:$0xff]
        %v5371 = vld [vmem:[#allocation4 + $0x3a0] sm:$0xff]
        %v5372 = vld [vmem:[#allocation4 + $0x3a8] sm:$0xff]
        %v5373 = vld [vmem:[#allocation4 + $0x3b0] sm:$0xff]
        %v5374 = vld [vmem:[#allocation4 + $0x3b8] sm:$0xff]
        %v5375 = vld [vmem:[#allocation4 + $0x3c0] sm:$0xff]
        %v5376 = vld [vmem:[#allocation4 + $0x3c8] sm:$0xff]
        %v5377 = vld [vmem:[#allocation4 + $0x3d0] sm:$0xff]
        %v5378 = vld [vmem:[#allocation4 + $0x3d8] sm:$0xff]
        %v5379 = vld [vmem:[#allocation4 + $0x3e0] sm:$0xff]
        %v5380 = vld [vmem:[#allocation4 + $0x3e8] sm:$0xff]
        %v5381 = vld [vmem:[#allocation4 + $0x3f0] sm:$0xff]
        %v5382 = vld [vmem:[#allocation4 + $0x3f8] sm:$0xff]
        %v5383 = vld [vmem:[#allocation4 + $0x400] sm:$0xff]
        %v5384 = vld [vmem:[#allocation4 + $0x408] sm:$0xff]
        %v5385 = vld [vmem:[#allocation4 + $0x410] sm:$0xff]
        %v5386 = vld [vmem:[#allocation4 + $0x418] sm:$0xff]
        %v5387 = vld [vmem:[#allocation4 + $0x420] sm:$0xff]
        %v5388 = vld [vmem:[#allocation4 + $0x428] sm:$0xff]
        %v5389 = vld [vmem:[#allocation4 + $0x430] sm:$0xff]
        %v5390 = vld [vmem:[#allocation4 + $0x438] sm:$0xff]
        %v5391 = vld [vmem:[#allocation4 + $0x440] sm:$0xff]
        %v5392 = vld [vmem:[#allocation4 + $0x448] sm:$0xff]
        %v5393 = vld [vmem:[#allocation4 + $0x450] sm:$0xff]
        %v5394 = vld [vmem:[#allocation4 + $0x458] sm:$0xff]
        %v5395 = vld [vmem:[#allocation4 + $0x460] sm:$0xff]
        %v5396 = vld [vmem:[#allocation4 + $0x468] sm:$0xff]
        %v5397 = vld [vmem:[#allocation4 + $0x470] sm:$0xff]
        %v5398 = vld [vmem:[#allocation4 + $0x478] sm:$0xff]
        %v5399 = vld [vmem:[#allocation4 + $0x480] sm:$0xff]
        %v5400 = vld [vmem:[#allocation4 + $0x488] sm:$0xff]
        %v5401 = vld [vmem:[#allocation4 + $0x490] sm:$0xff]
        %v5402 = vld [vmem:[#allocation4 + $0x498] sm:$0xff]
        %v5403 = vld [vmem:[#allocation4 + $0x4a0] sm:$0xff]
        %v5404 = vld [vmem:[#allocation4 + $0x4a8] sm:$0xff]
        %v5405 = vld [vmem:[#allocation4 + $0x4b0] sm:$0xff]
        %v5406 = vld [vmem:[#allocation4 + $0x4b8] sm:$0xff]
        %v5407 = vld [vmem:[#allocation4 + $0x4c0] sm:$0xff]
        %v5408 = vld [vmem:[#allocation4 + $0x4c8] sm:$0xff]
        %v5409 = vld [vmem:[#allocation4 + $0x4d0] sm:$0xff]
        %v5410 = vld [vmem:[#allocation4 + $0x4d8] sm:$0xff]
        %v5411 = vld [vmem:[#allocation4 + $0x4e0] sm:$0xff]
        %v5412 = vld [vmem:[#allocation4 + $0x4e8] sm:$0xff]
        %v5413 = vld [vmem:[#allocation4 + $0x4f0] sm:$0xff]
        %v5414 = vld [vmem:[#allocation4 + $0x4f8] sm:$0xff]
        %v5415 = vld [vmem:[#allocation4 + $0x500] sm:$0xff]
        %v5416 = vld [vmem:[#allocation4 + $0x508] sm:$0xff]
        %v5417 = vld [vmem:[#allocation4 + $0x510] sm:$0xff]
        %v5418 = vld [vmem:[#allocation4 + $0x518] sm:$0xff]
        %v5419 = vld [vmem:[#allocation4 + $0x520] sm:$0xff]
        %v5420 = vld [vmem:[#allocation4 + $0x528] sm:$0xff]
        %v5421 = vld [vmem:[#allocation4 + $0x530] sm:$0xff]
        %v5422 = vld [vmem:[#allocation4 + $0x538] sm:$0xff]
        %v5423 = vld [vmem:[#allocation4 + $0x540] sm:$0xff]
        %v5424 = vld [vmem:[#allocation4 + $0x548] sm:$0xff]
        %v5425 = vld [vmem:[#allocation4 + $0x550] sm:$0xff]
        %v5426 = vld [vmem:[#allocation4 + $0x558] sm:$0xff]
        %v5427 = vld [vmem:[#allocation4 + $0x560] sm:$0xff]
        %v5428 = vld [vmem:[#allocation4 + $0x568] sm:$0xff]
        %v5429 = vld [vmem:[#allocation4 + $0x570] sm:$0xff]
        %v5430 = vld [vmem:[#allocation4 + $0x578] sm:$0xff]
        %v5431 = vld [vmem:[#allocation4 + $0x580] sm:$0xff]
        %v5432 = vld [vmem:[#allocation4 + $0x588] sm:$0xff]
        %v5433 = vld [vmem:[#allocation4 + $0x590] sm:$0xff]
        %v5434 = vld [vmem:[#allocation4 + $0x598] sm:$0xff]
        %v5435 = vld [vmem:[#allocation4 + $0x5a0] sm:$0xff]
        %v5436 = vld [vmem:[#allocation4 + $0x5a8] sm:$0xff]
        %v5437 = vld [vmem:[#allocation4 + $0x5b0] sm:$0xff]
        %v5438 = vld [vmem:[#allocation4 + $0x5b8] sm:$0xff]
        %v5439 = vld [vmem:[#allocation4 + $0x5c0] sm:$0xff]
        %v5440 = vld [vmem:[#allocation4 + $0x5c8] sm:$0xff]
        %v5441 = vld [vmem:[#allocation4 + $0x5d0] sm:$0xff]
        %v5442 = vld [vmem:[#allocation4 + $0x5d8] sm:$0xff]
        %v5443 = vld [vmem:[#allocation4 + $0x5e0] sm:$0xff]
        %v5444 = vld [vmem:[#allocation4 + $0x5e8] sm:$0xff]
        %v5445 = vld [vmem:[#allocation4 + $0x5f0] sm:$0xff]
        %v5446 = vld [vmem:[#allocation4 + $0x5f8] sm:$0xff]
        %v5447 = vld [vmem:[#allocation4 + $0x600] sm:$0xff]
        %v5448 = vld [vmem:[#allocation4 + $0x608] sm:$0xff]
        %v5449 = vld [vmem:[#allocation4 + $0x610] sm:$0xff]
        %v5450 = vld [vmem:[#allocation4 + $0x618] sm:$0xff]
        %v5451 = vld [vmem:[#allocation4 + $0x620] sm:$0xff]
        %v5452 = vld [vmem:[#allocation4 + $0x628] sm:$0xff]
        %v5453 = vld [vmem:[#allocation4 + $0x630] sm:$0xff]
        %v5454 = vld [vmem:[#allocation4 + $0x638] sm:$0xff]
        %v5455 = vld [vmem:[#allocation4 + $0x640] sm:$0xff]
        %v5456 = vld [vmem:[#allocation4 + $0x648] sm:$0xff]
        %v5457 = vld [vmem:[#allocation4 + $0x650] sm:$0xff]
        %v5458 = vld [vmem:[#allocation4 + $0x658] sm:$0xff]
        %v5459 = vld [vmem:[#allocation4 + $0x660] sm:$0xff]
        %v5460 = vld [vmem:[#allocation4 + $0x668] sm:$0xff]
        %v5461 = vld [vmem:[#allocation4 + $0x670] sm:$0xff]
        %v5462 = vld [vmem:[#allocation4 + $0x678] sm:$0xff]
        %v5463 = vld [vmem:[#allocation4 + $0x680] sm:$0xff]
        %v5464 = vld [vmem:[#allocation4 + $0x688] sm:$0xff]
        %v5465 = vld [vmem:[#allocation4 + $0x690] sm:$0xff]
        %v5466 = vld [vmem:[#allocation4 + $0x698] sm:$0xff]
        %v5467 = vld [vmem:[#allocation4 + $0x6a0] sm:$0xff]
        %v5468 = vld [vmem:[#allocation4 + $0x6a8] sm:$0xff]
        %v5469 = vld [vmem:[#allocation4 + $0x6b0] sm:$0xff]
        %v5470 = vld [vmem:[#allocation4 + $0x6b8] sm:$0xff]
        %v5471 = vld [vmem:[#allocation4 + $0x6c0] sm:$0xff]
        %v5472 = vld [vmem:[#allocation4 + $0x6c8] sm:$0xff]
        %v5473 = vld [vmem:[#allocation4 + $0x6d0] sm:$0xff]
        %v5474 = vld [vmem:[#allocation4 + $0x6d8] sm:$0xff]
        %v5475 = vld [vmem:[#allocation4 + $0x6e0] sm:$0xff]
        %v5476 = vld [vmem:[#allocation4 + $0x6e8] sm:$0xff]
        %v5477 = vld [vmem:[#allocation4 + $0x6f0] sm:$0xff]
        %v5478 = vld [vmem:[#allocation4 + $0x6f8] sm:$0xff]
        %v5479 = vld [vmem:[#allocation4 + $0x700] sm:$0xff]
        %v5480 = vld [vmem:[#allocation4 + $0x708] sm:$0xff]
        %v5481 = vld [vmem:[#allocation4 + $0x710] sm:$0xff]
        %v5482 = vld [vmem:[#allocation4 + $0x718] sm:$0xff]
        %v5483 = vld [vmem:[#allocation4 + $0x720] sm:$0xff]
        %v5484 = vld [vmem:[#allocation4 + $0x728] sm:$0xff]
        %v5485 = vld [vmem:[#allocation4 + $0x730] sm:$0xff]
        %v5486 = vld [vmem:[#allocation4 + $0x738] sm:$0xff]
        %v5487 = vld [vmem:[#allocation4 + $0x740] sm:$0xff]
        %v5488 = vld [vmem:[#allocation4 + $0x748] sm:$0xff]
        %v5489 = vld [vmem:[#allocation4 + $0x750] sm:$0xff]
        %v5490 = vld [vmem:[#allocation4 + $0x758] sm:$0xff]
        %v5491 = vld [vmem:[#allocation4 + $0x760] sm:$0xff]
        %v5492 = vld [vmem:[#allocation4 + $0x768] sm:$0xff]
        %v5493 = vld [vmem:[#allocation4 + $0x770] sm:$0xff]
        %v5494 = vld [vmem:[#allocation4 + $0x778] sm:$0xff]
        %v5495 = vld [vmem:[#allocation4 + $0x780] sm:$0xff]
        %v5496 = vld [vmem:[#allocation4 + $0x788] sm:$0xff]
        %v5497 = vld [vmem:[#allocation4 + $0x790] sm:$0xff]
        %v5498 = vld [vmem:[#allocation4 + $0x798] sm:$0xff]
        %v5499 = vld [vmem:[#allocation4 + $0x7a0] sm:$0xff]
        %v5500 = vld [vmem:[#allocation4 + $0x7a8] sm:$0xff]
        %v5501 = vld [vmem:[#allocation4 + $0x7b0] sm:$0xff]
        %v5502 = vld [vmem:[#allocation4 + $0x7b8] sm:$0xff]
        %v5503 = vld [vmem:[#allocation4 + $0x7c0] sm:$0xff]
        %v5504 = vld [vmem:[#allocation4 + $0x7c8] sm:$0xff]
        %v5505 = vld [vmem:[#allocation4 + $0x7d0] sm:$0xff]
        %v5506 = vld [vmem:[#allocation4 + $0x7d8] sm:$0xff]
        %v5507 = vld [vmem:[#allocation4 + $0x7e0] sm:$0xff]
        %v5508 = vld [vmem:[#allocation4 + $0x7e8] sm:$0xff]
        %v5509 = vld [vmem:[#allocation4 + $0x7f0] sm:$0xff]
        %v5510 = vld [vmem:[#allocation4 + $0x7f8] sm:$0xff]
        %v5512 = vlaneseq
        %v5513 = vshrl.u32 %v5512, 7
        %v5514 = vsub.s32 0, %v5513
        %v5515 = vrot.slane %v2569, %v5514
        %v5516 = vlaneseq
        %v5517 = vshrl.u32 %v5516, 7
        %v5518 = vsub.s32 1, %v5517
        %v5519 = vrot.slane %v2569, %v5518
        %v5520 = vlaneseq
        %v5521 = vshrl.u32 %v5520, 7
        %v5522 = vsub.s32 2, %v5521
        %v5523 = vrot.slane %v2569, %v5522
        %v5524 = vlaneseq
        %v5525 = vshrl.u32 %v5524, 7
        %v5526 = vsub.s32 3, %v5525
        %v5527 = vrot.slane %v2569, %v5526
        %v5788 = vunpack.c.l.b16 %v5255
        %v5789 = vunpack.c.h.b16 %v5255
        %v5790 = vunpack.c.l.b16 %v5256
        %v5791 = vunpack.c.h.b16 %v5256
        %v5792 = vunpack.c.l.b16 %v5257
        %v5793 = vunpack.c.h.b16 %v5257
        %v5794 = vunpack.c.l.b16 %v5258
        %v5795 = vunpack.c.h.b16 %v5258
        %v5796 = vunpack.c.l.b16 %v5259
        %v5797 = vunpack.c.h.b16 %v5259
        %v5798 = vunpack.c.l.b16 %v5260
        %v5799 = vunpack.c.h.b16 %v5260
        %v5800 = vunpack.c.l.b16 %v5261
        %v5801 = vunpack.c.h.b16 %v5261
        %v5802 = vunpack.c.l.b16 %v5262
        %v5803 = vunpack.c.h.b16 %v5262
        %v5804 = vunpack.c.l.b16 %v5263
        %v5805 = vunpack.c.h.b16 %v5263
        %v5806 = vunpack.c.l.b16 %v5264
        %v5807 = vunpack.c.h.b16 %v5264
        %v5808 = vunpack.c.l.b16 %v5265
        %v5809 = vunpack.c.h.b16 %v5265
        %v5810 = vunpack.c.l.b16 %v5266
        %v5811 = vunpack.c.h.b16 %v5266
        %v5812 = vunpack.c.l.b16 %v5267
        %v5813 = vunpack.c.h.b16 %v5267
        %v5814 = vunpack.c.l.b16 %v5268
        %v5815 = vunpack.c.h.b16 %v5268
        %v5816 = vunpack.c.l.b16 %v5269
        %v5817 = vunpack.c.h.b16 %v5269
        %v5818 = vunpack.c.l.b16 %v5270
        %v5819 = vunpack.c.h.b16 %v5270
        %v5820 = vunpack.c.l.b16 %v5271
        %v5821 = vunpack.c.h.b16 %v5271
        %v5822 = vunpack.c.l.b16 %v5272
        %v5823 = vunpack.c.h.b16 %v5272
        %v5824 = vunpack.c.l.b16 %v5273
        %v5825 = vunpack.c.h.b16 %v5273
        %v5826 = vunpack.c.l.b16 %v5274
        %v5827 = vunpack.c.h.b16 %v5274
        %v5828 = vunpack.c.l.b16 %v5275
        %v5829 = vunpack.c.h.b16 %v5275
        %v5830 = vunpack.c.l.b16 %v5276
        %v5831 = vunpack.c.h.b16 %v5276
        %v5832 = vunpack.c.l.b16 %v5277
        %v5833 = vunpack.c.h.b16 %v5277
        %v5834 = vunpack.c.l.b16 %v5278
        %v5835 = vunpack.c.h.b16 %v5278
        %v5836 = vunpack.c.l.b16 %v5279
        %v5837 = vunpack.c.h.b16 %v5279
        %v5838 = vunpack.c.l.b16 %v5280
        %v5839 = vunpack.c.h.b16 %v5280
        %v5840 = vunpack.c.l.b16 %v5281
        %v5841 = vunpack.c.h.b16 %v5281
        %v5842 = vunpack.c.l.b16 %v5282
        %v5843 = vunpack.c.h.b16 %v5282
        %v5844 = vunpack.c.l.b16 %v5283
        %v5845 = vunpack.c.h.b16 %v5283
        %v5846 = vunpack.c.l.b16 %v5284
        %v5847 = vunpack.c.h.b16 %v5284
        %v5848 = vunpack.c.l.b16 %v5285
        %v5849 = vunpack.c.h.b16 %v5285
        %v5850 = vunpack.c.l.b16 %v5286
        %v5851 = vunpack.c.h.b16 %v5286
        %v5852 = vunpack.c.l.b16 %v5287
        %v5853 = vunpack.c.h.b16 %v5287
        %v5854 = vunpack.c.l.b16 %v5288
        %v5855 = vunpack.c.h.b16 %v5288
        %v5856 = vunpack.c.l.b16 %v5289
        %v5857 = vunpack.c.h.b16 %v5289
        %v5858 = vunpack.c.l.b16 %v5290
        %v5859 = vunpack.c.h.b16 %v5290
        %v5860 = vunpack.c.l.b16 %v5291
        %v5861 = vunpack.c.h.b16 %v5291
        %v5862 = vunpack.c.l.b16 %v5292
        %v5863 = vunpack.c.h.b16 %v5292
        %v5864 = vunpack.c.l.b16 %v5293
        %v5865 = vunpack.c.h.b16 %v5293
        %v5866 = vunpack.c.l.b16 %v5294
        %v5867 = vunpack.c.h.b16 %v5294
        %v5868 = vunpack.c.l.b16 %v5295
        %v5869 = vunpack.c.h.b16 %v5295
        %v5870 = vunpack.c.l.b16 %v5296
        %v5871 = vunpack.c.h.b16 %v5296
        %v5872 = vunpack.c.l.b16 %v5297
        %v5873 = vunpack.c.h.b16 %v5297
        %v5874 = vunpack.c.l.b16 %v5298
        %v5875 = vunpack.c.h.b16 %v5298
        %v5876 = vunpack.c.l.b16 %v5299
        %v5877 = vunpack.c.h.b16 %v5299
        %v5878 = vunpack.c.l.b16 %v5300
        %v5879 = vunpack.c.h.b16 %v5300
        %v5880 = vunpack.c.l.b16 %v5301
        %v5881 = vunpack.c.h.b16 %v5301
        %v5882 = vunpack.c.l.b16 %v5302
        %v5883 = vunpack.c.h.b16 %v5302
        %v5884 = vunpack.c.l.b16 %v5303
        %v5885 = vunpack.c.h.b16 %v5303
        %v5886 = vunpack.c.l.b16 %v5304
        %v5887 = vunpack.c.h.b16 %v5304
        %v5888 = vunpack.c.l.b16 %v5305
        %v5889 = vunpack.c.h.b16 %v5305
        %v5890 = vunpack.c.l.b16 %v5306
        %v5891 = vunpack.c.h.b16 %v5306
        %v5892 = vunpack.c.l.b16 %v5307
        %v5893 = vunpack.c.h.b16 %v5307
        %v5894 = vunpack.c.l.b16 %v5308
        %v5895 = vunpack.c.h.b16 %v5308
        %v5896 = vunpack.c.l.b16 %v5309
        %v5897 = vunpack.c.h.b16 %v5309
        %v5898 = vunpack.c.l.b16 %v5310
        %v5899 = vunpack.c.h.b16 %v5310
        %v5900 = vunpack.c.l.b16 %v5311
        %v5901 = vunpack.c.h.b16 %v5311
        %v5902 = vunpack.c.l.b16 %v5312
        %v5903 = vunpack.c.h.b16 %v5312
        %v5904 = vunpack.c.l.b16 %v5313
        %v5905 = vunpack.c.h.b16 %v5313
        %v5906 = vunpack.c.l.b16 %v5314
        %v5907 = vunpack.c.h.b16 %v5314
        %v5908 = vunpack.c.l.b16 %v5315
        %v5909 = vunpack.c.h.b16 %v5315
        %v5910 = vunpack.c.l.b16 %v5316
        %v5911 = vunpack.c.h.b16 %v5316
        %v5912 = vunpack.c.l.b16 %v5317
        %v5913 = vunpack.c.h.b16 %v5317
        %v5914 = vunpack.c.l.b16 %v5318
        %v5915 = vunpack.c.h.b16 %v5318
        %v5916 = vunpack.c.l.b16 %v5319
        %v5917 = vunpack.c.h.b16 %v5319
        %v5918 = vunpack.c.l.b16 %v5320
        %v5919 = vunpack.c.h.b16 %v5320
        %v5920 = vunpack.c.l.b16 %v5321
        %v5921 = vunpack.c.h.b16 %v5321
        %v5922 = vunpack.c.l.b16 %v5322
        %v5923 = vunpack.c.h.b16 %v5322
        %v5924 = vunpack.c.l.b16 %v5323
        %v5925 = vunpack.c.h.b16 %v5323
        %v5926 = vunpack.c.l.b16 %v5324
        %v5927 = vunpack.c.h.b16 %v5324
        %v5928 = vunpack.c.l.b16 %v5325
        %v5929 = vunpack.c.h.b16 %v5325
        %v5930 = vunpack.c.l.b16 %v5326
        %v5931 = vunpack.c.h.b16 %v5326
        %v5932 = vunpack.c.l.b16 %v5327
        %v5933 = vunpack.c.h.b16 %v5327
        %v5934 = vunpack.c.l.b16 %v5328
        %v5935 = vunpack.c.h.b16 %v5328
        %v5936 = vunpack.c.l.b16 %v5329
        %v5937 = vunpack.c.h.b16 %v5329
        %v5938 = vunpack.c.l.b16 %v5330
        %v5939 = vunpack.c.h.b16 %v5330
        %v5940 = vunpack.c.l.b16 %v5331
        %v5941 = vunpack.c.h.b16 %v5331
        %v5942 = vunpack.c.l.b16 %v5332
        %v5943 = vunpack.c.h.b16 %v5332
        %v5944 = vunpack.c.l.b16 %v5333
        %v5945 = vunpack.c.h.b16 %v5333
        %v5946 = vunpack.c.l.b16 %v5334
        %v5947 = vunpack.c.h.b16 %v5334
        %v5948 = vunpack.c.l.b16 %v5335
        %v5949 = vunpack.c.h.b16 %v5335
        %v5950 = vunpack.c.l.b16 %v5336
        %v5951 = vunpack.c.h.b16 %v5336
        %v5952 = vunpack.c.l.b16 %v5337
        %v5953 = vunpack.c.h.b16 %v5337
        %v5954 = vunpack.c.l.b16 %v5338
        %v5955 = vunpack.c.h.b16 %v5338
        %v5956 = vunpack.c.l.b16 %v5339
        %v5957 = vunpack.c.h.b16 %v5339
        %v5958 = vunpack.c.l.b16 %v5340
        %v5959 = vunpack.c.h.b16 %v5340
        %v5960 = vunpack.c.l.b16 %v5341
        %v5961 = vunpack.c.h.b16 %v5341
        %v5962 = vunpack.c.l.b16 %v5342
        %v5963 = vunpack.c.h.b16 %v5342
        %v5964 = vunpack.c.l.b16 %v5343
        %v5965 = vunpack.c.h.b16 %v5343
        %v5966 = vunpack.c.l.b16 %v5344
        %v5967 = vunpack.c.h.b16 %v5344
        %v5968 = vunpack.c.l.b16 %v5345
        %v5969 = vunpack.c.h.b16 %v5345
        %v5970 = vunpack.c.l.b16 %v5346
        %v5971 = vunpack.c.h.b16 %v5346
        %v5972 = vunpack.c.l.b16 %v5347
        %v5973 = vunpack.c.h.b16 %v5347
        %v5974 = vunpack.c.l.b16 %v5348
        %v5975 = vunpack.c.h.b16 %v5348
        %v5976 = vunpack.c.l.b16 %v5349
        %v5977 = vunpack.c.h.b16 %v5349
        %v5978 = vunpack.c.l.b16 %v5350
        %v5979 = vunpack.c.h.b16 %v5350
        %v5980 = vunpack.c.l.b16 %v5351
        %v5981 = vunpack.c.h.b16 %v5351
        %v5982 = vunpack.c.l.b16 %v5352
        %v5983 = vunpack.c.h.b16 %v5352
        %v5984 = vunpack.c.l.b16 %v5353
        %v5985 = vunpack.c.h.b16 %v5353
        %v5986 = vunpack.c.l.b16 %v5354
        %v5987 = vunpack.c.h.b16 %v5354
        %v5988 = vunpack.c.l.b16 %v5355
        %v5989 = vunpack.c.h.b16 %v5355
        %v5990 = vunpack.c.l.b16 %v5356
        %v5991 = vunpack.c.h.b16 %v5356
        %v5992 = vunpack.c.l.b16 %v5357
        %v5993 = vunpack.c.h.b16 %v5357
        %v5994 = vunpack.c.l.b16 %v5358
        %v5995 = vunpack.c.h.b16 %v5358
        %v5996 = vunpack.c.l.b16 %v5359
        %v5997 = vunpack.c.h.b16 %v5359
        %v5998 = vunpack.c.l.b16 %v5360
        %v5999 = vunpack.c.h.b16 %v5360
        %v6000 = vunpack.c.l.b16 %v5361
        %v6001 = vunpack.c.h.b16 %v5361
        %v6002 = vunpack.c.l.b16 %v5362
        %v6003 = vunpack.c.h.b16 %v5362
        %v6004 = vunpack.c.l.b16 %v5363
        %v6005 = vunpack.c.h.b16 %v5363
        %v6006 = vunpack.c.l.b16 %v5364
        %v6007 = vunpack.c.h.b16 %v5364
        %v6008 = vunpack.c.l.b16 %v5365
        %v6009 = vunpack.c.h.b16 %v5365
        %v6010 = vunpack.c.l.b16 %v5366
        %v6011 = vunpack.c.h.b16 %v5366
        %v6012 = vunpack.c.l.b16 %v5367
        %v6013 = vunpack.c.h.b16 %v5367
        %v6014 = vunpack.c.l.b16 %v5368
        %v6015 = vunpack.c.h.b16 %v5368
        %v6016 = vunpack.c.l.b16 %v5369
        %v6017 = vunpack.c.h.b16 %v5369
        %v6018 = vunpack.c.l.b16 %v5370
        %v6019 = vunpack.c.h.b16 %v5370
        %v6020 = vunpack.c.l.b16 %v5371
        %v6021 = vunpack.c.h.b16 %v5371
        %v6022 = vunpack.c.l.b16 %v5372
        %v6023 = vunpack.c.h.b16 %v5372
        %v6024 = vunpack.c.l.b16 %v5373
        %v6025 = vunpack.c.h.b16 %v5373
        %v6026 = vunpack.c.l.b16 %v5374
        %v6027 = vunpack.c.h.b16 %v5374
        %v6028 = vunpack.c.l.b16 %v5375
        %v6029 = vunpack.c.h.b16 %v5375
        %v6030 = vunpack.c.l.b16 %v5376
        %v6031 = vunpack.c.h.b16 %v5376
        %v6032 = vunpack.c.l.b16 %v5377
        %v6033 = vunpack.c.h.b16 %v5377
        %v6034 = vunpack.c.l.b16 %v5378
        %v6035 = vunpack.c.h.b16 %v5378
        %v6036 = vunpack.c.l.b16 %v5379
        %v6037 = vunpack.c.h.b16 %v5379
        %v6038 = vunpack.c.l.b16 %v5380
        %v6039 = vunpack.c.h.b16 %v5380
        %v6040 = vunpack.c.l.b16 %v5381
        %v6041 = vunpack.c.h.b16 %v5381
        %v6042 = vunpack.c.l.b16 %v5382
        %v6043 = vunpack.c.h.b16 %v5382
        %v6044 = vunpack.c.l.b16 %v5383
        %v6045 = vunpack.c.h.b16 %v5383
        %v6046 = vunpack.c.l.b16 %v5384
        %v6047 = vunpack.c.h.b16 %v5384
        %v6048 = vunpack.c.l.b16 %v5385
        %v6049 = vunpack.c.h.b16 %v5385
        %v6050 = vunpack.c.l.b16 %v5386
        %v6051 = vunpack.c.h.b16 %v5386
        %v6052 = vunpack.c.l.b16 %v5387
        %v6053 = vunpack.c.h.b16 %v5387
        %v6054 = vunpack.c.l.b16 %v5388
        %v6055 = vunpack.c.h.b16 %v5388
        %v6056 = vunpack.c.l.b16 %v5389
        %v6057 = vunpack.c.h.b16 %v5389
        %v6058 = vunpack.c.l.b16 %v5390
        %v6059 = vunpack.c.h.b16 %v5390
        %v6060 = vunpack.c.l.b16 %v5391
        %v6061 = vunpack.c.h.b16 %v5391
        %v6062 = vunpack.c.l.b16 %v5392
        %v6063 = vunpack.c.h.b16 %v5392
        %v6064 = vunpack.c.l.b16 %v5393
        %v6065 = vunpack.c.h.b16 %v5393
        %v6066 = vunpack.c.l.b16 %v5394
        %v6067 = vunpack.c.h.b16 %v5394
        %v6068 = vunpack.c.l.b16 %v5395
        %v6069 = vunpack.c.h.b16 %v5395
        %v6070 = vunpack.c.l.b16 %v5396
        %v6071 = vunpack.c.h.b16 %v5396
        %v6072 = vunpack.c.l.b16 %v5397
        %v6073 = vunpack.c.h.b16 %v5397
        %v6074 = vunpack.c.l.b16 %v5398
        %v6075 = vunpack.c.h.b16 %v5398
        %v6076 = vunpack.c.l.b16 %v5399
        %v6077 = vunpack.c.h.b16 %v5399
        %v6078 = vunpack.c.l.b16 %v5400
        %v6079 = vunpack.c.h.b16 %v5400
        %v6080 = vunpack.c.l.b16 %v5401
        %v6081 = vunpack.c.h.b16 %v5401
        %v6082 = vunpack.c.l.b16 %v5402
        %v6083 = vunpack.c.h.b16 %v5402
        %v6084 = vunpack.c.l.b16 %v5403
        %v6085 = vunpack.c.h.b16 %v5403
        %v6086 = vunpack.c.l.b16 %v5404
        %v6087 = vunpack.c.h.b16 %v5404
        %v6088 = vunpack.c.l.b16 %v5405
        %v6089 = vunpack.c.h.b16 %v5405
        %v6090 = vunpack.c.l.b16 %v5406
        %v6091 = vunpack.c.h.b16 %v5406
        %v6092 = vunpack.c.l.b16 %v5407
        %v6093 = vunpack.c.h.b16 %v5407
        %v6094 = vunpack.c.l.b16 %v5408
        %v6095 = vunpack.c.h.b16 %v5408
        %v6096 = vunpack.c.l.b16 %v5409
        %v6097 = vunpack.c.h.b16 %v5409
        %v6098 = vunpack.c.l.b16 %v5410
        %v6099 = vunpack.c.h.b16 %v5410
        %v6100 = vunpack.c.l.b16 %v5411
        %v6101 = vunpack.c.h.b16 %v5411
        %v6102 = vunpack.c.l.b16 %v5412
        %v6103 = vunpack.c.h.b16 %v5412
        %v6104 = vunpack.c.l.b16 %v5413
        %v6105 = vunpack.c.h.b16 %v5413
        %v6106 = vunpack.c.l.b16 %v5414
        %v6107 = vunpack.c.h.b16 %v5414
        %v6108 = vunpack.c.l.b16 %v5415
        %v6109 = vunpack.c.h.b16 %v5415
        %v6110 = vunpack.c.l.b16 %v5416
        %v6111 = vunpack.c.h.b16 %v5416
        %v6112 = vunpack.c.l.b16 %v5417
        %v6113 = vunpack.c.h.b16 %v5417
        %v6114 = vunpack.c.l.b16 %v5418
        %v6115 = vunpack.c.h.b16 %v5418
        %v6116 = vunpack.c.l.b16 %v5419
        %v6117 = vunpack.c.h.b16 %v5419
        %v6118 = vunpack.c.l.b16 %v5420
        %v6119 = vunpack.c.h.b16 %v5420
        %v6120 = vunpack.c.l.b16 %v5421
        %v6121 = vunpack.c.h.b16 %v5421
        %v6122 = vunpack.c.l.b16 %v5422
        %v6123 = vunpack.c.h.b16 %v5422
        %v6124 = vunpack.c.l.b16 %v5423
        %v6125 = vunpack.c.h.b16 %v5423
        %v6126 = vunpack.c.l.b16 %v5424
        %v6127 = vunpack.c.h.b16 %v5424
        %v6128 = vunpack.c.l.b16 %v5425
        %v6129 = vunpack.c.h.b16 %v5425
        %v6130 = vunpack.c.l.b16 %v5426
        %v6131 = vunpack.c.h.b16 %v5426
        %v6132 = vunpack.c.l.b16 %v5427
        %v6133 = vunpack.c.h.b16 %v5427
        %v6134 = vunpack.c.l.b16 %v5428
        %v6135 = vunpack.c.h.b16 %v5428
        %v6136 = vunpack.c.l.b16 %v5429
        %v6137 = vunpack.c.h.b16 %v5429
        %v6138 = vunpack.c.l.b16 %v5430
        %v6139 = vunpack.c.h.b16 %v5430
        %v6140 = vunpack.c.l.b16 %v5431
        %v6141 = vunpack.c.h.b16 %v5431
        %v6142 = vunpack.c.l.b16 %v5432
        %v6143 = vunpack.c.h.b16 %v5432
        %v6144 = vunpack.c.l.b16 %v5433
        %v6145 = vunpack.c.h.b16 %v5433
        %v6146 = vunpack.c.l.b16 %v5434
        %v6147 = vunpack.c.h.b16 %v5434
        %v6148 = vunpack.c.l.b16 %v5435
        %v6149 = vunpack.c.h.b16 %v5435
        %v6150 = vunpack.c.l.b16 %v5436
        %v6151 = vunpack.c.h.b16 %v5436
        %v6152 = vunpack.c.l.b16 %v5437
        %v6153 = vunpack.c.h.b16 %v5437
        %v6154 = vunpack.c.l.b16 %v5438
        %v6155 = vunpack.c.h.b16 %v5438
        %v6156 = vunpack.c.l.b16 %v5439
        %v6157 = vunpack.c.h.b16 %v5439
        %v6158 = vunpack.c.l.b16 %v5440
        %v6159 = vunpack.c.h.b16 %v5440
        %v6160 = vunpack.c.l.b16 %v5441
        %v6161 = vunpack.c.h.b16 %v5441
        %v6162 = vunpack.c.l.b16 %v5442
        %v6163 = vunpack.c.h.b16 %v5442
        %v6164 = vunpack.c.l.b16 %v5443
        %v6165 = vunpack.c.h.b16 %v5443
        %v6166 = vunpack.c.l.b16 %v5444
        %v6167 = vunpack.c.h.b16 %v5444
        %v6168 = vunpack.c.l.b16 %v5445
        %v6169 = vunpack.c.h.b16 %v5445
        %v6170 = vunpack.c.l.b16 %v5446
        %v6171 = vunpack.c.h.b16 %v5446
        %v6172 = vunpack.c.l.b16 %v5447
        %v6173 = vunpack.c.h.b16 %v5447
        %v6174 = vunpack.c.l.b16 %v5448
        %v6175 = vunpack.c.h.b16 %v5448
        %v6176 = vunpack.c.l.b16 %v5449
        %v6177 = vunpack.c.h.b16 %v5449
        %v6178 = vunpack.c.l.b16 %v5450
        %v6179 = vunpack.c.h.b16 %v5450
        %v6180 = vunpack.c.l.b16 %v5451
        %v6181 = vunpack.c.h.b16 %v5451
        %v6182 = vunpack.c.l.b16 %v5452
        %v6183 = vunpack.c.h.b16 %v5452
        %v6184 = vunpack.c.l.b16 %v5453
        %v6185 = vunpack.c.h.b16 %v5453
        %v6186 = vunpack.c.l.b16 %v5454
        %v6187 = vunpack.c.h.b16 %v5454
        %v6188 = vunpack.c.l.b16 %v5455
        %v6189 = vunpack.c.h.b16 %v5455
        %v6190 = vunpack.c.l.b16 %v5456
        %v6191 = vunpack.c.h.b16 %v5456
        %v6192 = vunpack.c.l.b16 %v5457
        %v6193 = vunpack.c.h.b16 %v5457
        %v6194 = vunpack.c.l.b16 %v5458
        %v6195 = vunpack.c.h.b16 %v5458
        %v6196 = vunpack.c.l.b16 %v5459
        %v6197 = vunpack.c.h.b16 %v5459
        %v6198 = vunpack.c.l.b16 %v5460
        %v6199 = vunpack.c.h.b16 %v5460
        %v6200 = vunpack.c.l.b16 %v5461
        %v6201 = vunpack.c.h.b16 %v5461
        %v6202 = vunpack.c.l.b16 %v5462
        %v6203 = vunpack.c.h.b16 %v5462
        %v6204 = vunpack.c.l.b16 %v5463
        %v6205 = vunpack.c.h.b16 %v5463
        %v6206 = vunpack.c.l.b16 %v5464
        %v6207 = vunpack.c.h.b16 %v5464
        %v6208 = vunpack.c.l.b16 %v5465
        %v6209 = vunpack.c.h.b16 %v5465
        %v6210 = vunpack.c.l.b16 %v5466
        %v6211 = vunpack.c.h.b16 %v5466
        %v6212 = vunpack.c.l.b16 %v5467
        %v6213 = vunpack.c.h.b16 %v5467
        %v6214 = vunpack.c.l.b16 %v5468
        %v6215 = vunpack.c.h.b16 %v5468
        %v6216 = vunpack.c.l.b16 %v5469
        %v6217 = vunpack.c.h.b16 %v5469
        %v6218 = vunpack.c.l.b16 %v5470
        %v6219 = vunpack.c.h.b16 %v5470
        %v6220 = vunpack.c.l.b16 %v5471
        %v6221 = vunpack.c.h.b16 %v5471
        %v6222 = vunpack.c.l.b16 %v5472
        %v6223 = vunpack.c.h.b16 %v5472
        %v6224 = vunpack.c.l.b16 %v5473
        %v6225 = vunpack.c.h.b16 %v5473
        %v6226 = vunpack.c.l.b16 %v5474
        %v6227 = vunpack.c.h.b16 %v5474
        %v6228 = vunpack.c.l.b16 %v5475
        %v6229 = vunpack.c.h.b16 %v5475
        %v6230 = vunpack.c.l.b16 %v5476
        %v6231 = vunpack.c.h.b16 %v5476
        %v6232 = vunpack.c.l.b16 %v5477
        %v6233 = vunpack.c.h.b16 %v5477
        %v6234 = vunpack.c.l.b16 %v5478
        %v6235 = vunpack.c.h.b16 %v5478
        %v6236 = vunpack.c.l.b16 %v5479
        %v6237 = vunpack.c.h.b16 %v5479
        %v6238 = vunpack.c.l.b16 %v5480
        %v6239 = vunpack.c.h.b16 %v5480
        %v6240 = vunpack.c.l.b16 %v5481
        %v6241 = vunpack.c.h.b16 %v5481
        %v6242 = vunpack.c.l.b16 %v5482
        %v6243 = vunpack.c.h.b16 %v5482
        %v6244 = vunpack.c.l.b16 %v5483
        %v6245 = vunpack.c.h.b16 %v5483
        %v6246 = vunpack.c.l.b16 %v5484
        %v6247 = vunpack.c.h.b16 %v5484
        %v6248 = vunpack.c.l.b16 %v5485
        %v6249 = vunpack.c.h.b16 %v5485
        %v6250 = vunpack.c.l.b16 %v5486
        %v6251 = vunpack.c.h.b16 %v5486
        %v6252 = vunpack.c.l.b16 %v5487
        %v6253 = vunpack.c.h.b16 %v5487
        %v6254 = vunpack.c.l.b16 %v5488
        %v6255 = vunpack.c.h.b16 %v5488
        %v6256 = vunpack.c.l.b16 %v5489
        %v6257 = vunpack.c.h.b16 %v5489
        %v6258 = vunpack.c.l.b16 %v5490
        %v6259 = vunpack.c.h.b16 %v5490
        %v6260 = vunpack.c.l.b16 %v5491
        %v6261 = vunpack.c.h.b16 %v5491
        %v6262 = vunpack.c.l.b16 %v5492
        %v6263 = vunpack.c.h.b16 %v5492
        %v6264 = vunpack.c.l.b16 %v5493
        %v6265 = vunpack.c.h.b16 %v5493
        %v6266 = vunpack.c.l.b16 %v5494
        %v6267 = vunpack.c.h.b16 %v5494
        %v6268 = vunpack.c.l.b16 %v5495
        %v6269 = vunpack.c.h.b16 %v5495
        %v6270 = vunpack.c.l.b16 %v5496
        %v6271 = vunpack.c.h.b16 %v5496
        %v6272 = vunpack.c.l.b16 %v5497
        %v6273 = vunpack.c.h.b16 %v5497
        %v6274 = vunpack.c.l.b16 %v5498
        %v6275 = vunpack.c.h.b16 %v5498
        %v6276 = vunpack.c.l.b16 %v5499
        %v6277 = vunpack.c.h.b16 %v5499
        %v6278 = vunpack.c.l.b16 %v5500
        %v6279 = vunpack.c.h.b16 %v5500
        %v6280 = vunpack.c.l.b16 %v5501
        %v6281 = vunpack.c.h.b16 %v5501
        %v6282 = vunpack.c.l.b16 %v5502
        %v6283 = vunpack.c.h.b16 %v5502
        %v6284 = vunpack.c.l.b16 %v5503
        %v6285 = vunpack.c.h.b16 %v5503
        %v6286 = vunpack.c.l.b16 %v5504
        %v6287 = vunpack.c.h.b16 %v5504
        %v6288 = vunpack.c.l.b16 %v5505
        %v6289 = vunpack.c.h.b16 %v5505
        %v6290 = vunpack.c.l.b16 %v5506
        %v6291 = vunpack.c.h.b16 %v5506
        %v6292 = vunpack.c.l.b16 %v5507
        %v6293 = vunpack.c.h.b16 %v5507
        %v6294 = vunpack.c.l.b16 %v5508
        %v6295 = vunpack.c.h.b16 %v5508
        %v6296 = vunpack.c.l.b16 %v5509
        %v6297 = vunpack.c.h.b16 %v5509
        %v6298 = vunpack.c.l.b16 %v5510
        %v6299 = vunpack.c.h.b16 %v5510
        %v6300 = vpack.c.b16 %v5792, %v5788
        %v6301 = vpack.c.b16 %v5793, %v5789
        %v6302 = vpack.c.b16 %v5794, %v5790
        %v6303 = vpack.c.b16 %v5795, %v5791
        %v6304 = vpack.c.b16 %v5800, %v5796
        %v6305 = vpack.c.b16 %v5801, %v5797
        %v6306 = vpack.c.b16 %v5802, %v5798
        %v6307 = vpack.c.b16 %v5803, %v5799
        %v6308 = vpack.c.b16 %v5808, %v5804
        %v6309 = vpack.c.b16 %v5809, %v5805
        %v6310 = vpack.c.b16 %v5810, %v5806
        %v6311 = vpack.c.b16 %v5811, %v5807
        %v6312 = vpack.c.b16 %v5816, %v5812
        %v6313 = vpack.c.b16 %v5817, %v5813
        %v6314 = vpack.c.b16 %v5818, %v5814
        %v6315 = vpack.c.b16 %v5819, %v5815
        %v6316 = vpack.c.b16 %v5824, %v5820
        %v6317 = vpack.c.b16 %v5825, %v5821
        %v6318 = vpack.c.b16 %v5826, %v5822
        %v6319 = vpack.c.b16 %v5827, %v5823
        %v6320 = vpack.c.b16 %v5832, %v5828
        %v6321 = vpack.c.b16 %v5833, %v5829
        %v6322 = vpack.c.b16 %v5834, %v5830
        %v6323 = vpack.c.b16 %v5835, %v5831
        %v6324 = vpack.c.b16 %v5840, %v5836
        %v6325 = vpack.c.b16 %v5841, %v5837
        %v6326 = vpack.c.b16 %v5842, %v5838
        %v6327 = vpack.c.b16 %v5843, %v5839
        %v6328 = vpack.c.b16 %v5848, %v5844
        %v6329 = vpack.c.b16 %v5849, %v5845
        %v6330 = vpack.c.b16 %v5850, %v5846
        %v6331 = vpack.c.b16 %v5851, %v5847
        %v6332 = vpack.c.b16 %v5856, %v5852
        %v6333 = vpack.c.b16 %v5857, %v5853
        %v6334 = vpack.c.b16 %v5858, %v5854
        %v6335 = vpack.c.b16 %v5859, %v5855
        %v6336 = vpack.c.b16 %v5864, %v5860
        %v6337 = vpack.c.b16 %v5865, %v5861
        %v6338 = vpack.c.b16 %v5866, %v5862
        %v6339 = vpack.c.b16 %v5867, %v5863
        %v6340 = vpack.c.b16 %v5872, %v5868
        %v6341 = vpack.c.b16 %v5873, %v5869
        %v6342 = vpack.c.b16 %v5874, %v5870
        %v6343 = vpack.c.b16 %v5875, %v5871
        %v6344 = vpack.c.b16 %v5880, %v5876
        %v6345 = vpack.c.b16 %v5881, %v5877
        %v6346 = vpack.c.b16 %v5882, %v5878
        %v6347 = vpack.c.b16 %v5883, %v5879
        %v6348 = vpack.c.b16 %v5888, %v5884
        %v6349 = vpack.c.b16 %v5889, %v5885
        %v6350 = vpack.c.b16 %v5890, %v5886
        %v6351 = vpack.c.b16 %v5891, %v5887
        %v6352 = vpack.c.b16 %v5896, %v5892
        %v6353 = vpack.c.b16 %v5897, %v5893
        %v6354 = vpack.c.b16 %v5898, %v5894
        %v6355 = vpack.c.b16 %v5899, %v5895
        %v6356 = vpack.c.b16 %v5904, %v5900
        %v6357 = vpack.c.b16 %v5905, %v5901
        %v6358 = vpack.c.b16 %v5906, %v5902
        %v6359 = vpack.c.b16 %v5907, %v5903
        %v6360 = vpack.c.b16 %v5912, %v5908
        %v6361 = vpack.c.b16 %v5913, %v5909
        %v6362 = vpack.c.b16 %v5914, %v5910
        %v6363 = vpack.c.b16 %v5915, %v5911
        %v6364 = vpack.c.b16 %v5920, %v5916
        %v6365 = vpack.c.b16 %v5921, %v5917
        %v6366 = vpack.c.b16 %v5922, %v5918
        %v6367 = vpack.c.b16 %v5923, %v5919
        %v6368 = vpack.c.b16 %v5928, %v5924
        %v6369 = vpack.c.b16 %v5929, %v5925
        %v6370 = vpack.c.b16 %v5930, %v5926
        %v6371 = vpack.c.b16 %v5931, %v5927
        %v6372 = vpack.c.b16 %v5936, %v5932
        %v6373 = vpack.c.b16 %v5937, %v5933
        %v6374 = vpack.c.b16 %v5938, %v5934
        %v6375 = vpack.c.b16 %v5939, %v5935
        %v6376 = vpack.c.b16 %v5944, %v5940
        %v6377 = vpack.c.b16 %v5945, %v5941
        %v6378 = vpack.c.b16 %v5946, %v5942
        %v6379 = vpack.c.b16 %v5947, %v5943
        %v6380 = vpack.c.b16 %v5952, %v5948
        %v6381 = vpack.c.b16 %v5953, %v5949
        %v6382 = vpack.c.b16 %v5954, %v5950
        %v6383 = vpack.c.b16 %v5955, %v5951
        %v6384 = vpack.c.b16 %v5960, %v5956
        %v6385 = vpack.c.b16 %v5961, %v5957
        %v6386 = vpack.c.b16 %v5962, %v5958
        %v6387 = vpack.c.b16 %v5963, %v5959
        %v6388 = vpack.c.b16 %v5968, %v5964
        %v6389 = vpack.c.b16 %v5969, %v5965
        %v6390 = vpack.c.b16 %v5970, %v5966
        %v6391 = vpack.c.b16 %v5971, %v5967
        %v6392 = vpack.c.b16 %v5976, %v5972
        %v6393 = vpack.c.b16 %v5977, %v5973
        %v6394 = vpack.c.b16 %v5978, %v5974
        %v6395 = vpack.c.b16 %v5979, %v5975
        %v6396 = vpack.c.b16 %v5984, %v5980
        %v6397 = vpack.c.b16 %v5985, %v5981
        %v6398 = vpack.c.b16 %v5986, %v5982
        %v6399 = vpack.c.b16 %v5987, %v5983
        %v6400 = vpack.c.b16 %v5992, %v5988
        %v6401 = vpack.c.b16 %v5993, %v5989
        %v6402 = vpack.c.b16 %v5994, %v5990
        %v6403 = vpack.c.b16 %v5995, %v5991
        %v6404 = vpack.c.b16 %v6000, %v5996
        %v6405 = vpack.c.b16 %v6001, %v5997
        %v6406 = vpack.c.b16 %v6002, %v5998
        %v6407 = vpack.c.b16 %v6003, %v5999
        %v6408 = vpack.c.b16 %v6008, %v6004
        %v6409 = vpack.c.b16 %v6009, %v6005
        %v6410 = vpack.c.b16 %v6010, %v6006
        %v6411 = vpack.c.b16 %v6011, %v6007
        %v6412 = vpack.c.b16 %v6016, %v6012
        %v6413 = vpack.c.b16 %v6017, %v6013
        %v6414 = vpack.c.b16 %v6018, %v6014
        %v6415 = vpack.c.b16 %v6019, %v6015
        %v6416 = vpack.c.b16 %v6024, %v6020
        %v6417 = vpack.c.b16 %v6025, %v6021
        %v6418 = vpack.c.b16 %v6026, %v6022
        %v6419 = vpack.c.b16 %v6027, %v6023
        %v6420 = vpack.c.b16 %v6032, %v6028
        %v6421 = vpack.c.b16 %v6033, %v6029
        %v6422 = vpack.c.b16 %v6034, %v6030
        %v6423 = vpack.c.b16 %v6035, %v6031
        %v6424 = vpack.c.b16 %v6040, %v6036
        %v6425 = vpack.c.b16 %v6041, %v6037
        %v6426 = vpack.c.b16 %v6042, %v6038
        %v6427 = vpack.c.b16 %v6043, %v6039
        %v6428 = vpack.c.b16 %v6048, %v6044
        %v6429 = vpack.c.b16 %v6049, %v6045
        %v6430 = vpack.c.b16 %v6050, %v6046
        %v6431 = vpack.c.b16 %v6051, %v6047
        %v6432 = vpack.c.b16 %v6056, %v6052
        %v6433 = vpack.c.b16 %v6057, %v6053
        %v6434 = vpack.c.b16 %v6058, %v6054
        %v6435 = vpack.c.b16 %v6059, %v6055
        %v6436 = vpack.c.b16 %v6064, %v6060
        %v6437 = vpack.c.b16 %v6065, %v6061
        %v6438 = vpack.c.b16 %v6066, %v6062
        %v6439 = vpack.c.b16 %v6067, %v6063
        %v6440 = vpack.c.b16 %v6072, %v6068
        %v6441 = vpack.c.b16 %v6073, %v6069
        %v6442 = vpack.c.b16 %v6074, %v6070
        %v6443 = vpack.c.b16 %v6075, %v6071
        %v6444 = vpack.c.b16 %v6080, %v6076
        %v6445 = vpack.c.b16 %v6081, %v6077
        %v6446 = vpack.c.b16 %v6082, %v6078
        %v6447 = vpack.c.b16 %v6083, %v6079
        %v6448 = vpack.c.b16 %v6088, %v6084
        %v6449 = vpack.c.b16 %v6089, %v6085
        %v6450 = vpack.c.b16 %v6090, %v6086
        %v6451 = vpack.c.b16 %v6091, %v6087
        %v6452 = vpack.c.b16 %v6096, %v6092
        %v6453 = vpack.c.b16 %v6097, %v6093
        %v6454 = vpack.c.b16 %v6098, %v6094
        %v6455 = vpack.c.b16 %v6099, %v6095
        %v6456 = vpack.c.b16 %v6104, %v6100
        %v6457 = vpack.c.b16 %v6105, %v6101
        %v6458 = vpack.c.b16 %v6106, %v6102
        %v6459 = vpack.c.b16 %v6107, %v6103
        %v6460 = vpack.c.b16 %v6112, %v6108
        %v6461 = vpack.c.b16 %v6113, %v6109
        %v6462 = vpack.c.b16 %v6114, %v6110
        %v6463 = vpack.c.b16 %v6115, %v6111
        %v6464 = vpack.c.b16 %v6120, %v6116
        %v6465 = vpack.c.b16 %v6121, %v6117
        %v6466 = vpack.c.b16 %v6122, %v6118
        %v6467 = vpack.c.b16 %v6123, %v6119
        %v6468 = vpack.c.b16 %v6128, %v6124
        %v6469 = vpack.c.b16 %v6129, %v6125
        %v6470 = vpack.c.b16 %v6130, %v6126
        %v6471 = vpack.c.b16 %v6131, %v6127
        %v6472 = vpack.c.b16 %v6136, %v6132
        %v6473 = vpack.c.b16 %v6137, %v6133
        %v6474 = vpack.c.b16 %v6138, %v6134
        %v6475 = vpack.c.b16 %v6139, %v6135
        %v6476 = vpack.c.b16 %v6144, %v6140
        %v6477 = vpack.c.b16 %v6145, %v6141
        %v6478 = vpack.c.b16 %v6146, %v6142
        %v6479 = vpack.c.b16 %v6147, %v6143
        %v6480 = vpack.c.b16 %v6152, %v6148
        %v6481 = vpack.c.b16 %v6153, %v6149
        %v6482 = vpack.c.b16 %v6154, %v6150
        %v6483 = vpack.c.b16 %v6155, %v6151
        %v6484 = vpack.c.b16 %v6160, %v6156
        %v6485 = vpack.c.b16 %v6161, %v6157
        %v6486 = vpack.c.b16 %v6162, %v6158
        %v6487 = vpack.c.b16 %v6163, %v6159
        %v6488 = vpack.c.b16 %v6168, %v6164
        %v6489 = vpack.c.b16 %v6169, %v6165
        %v6490 = vpack.c.b16 %v6170, %v6166
        %v6491 = vpack.c.b16 %v6171, %v6167
        %v6492 = vpack.c.b16 %v6176, %v6172
        %v6493 = vpack.c.b16 %v6177, %v6173
        %v6494 = vpack.c.b16 %v6178, %v6174
        %v6495 = vpack.c.b16 %v6179, %v6175
        %v6496 = vpack.c.b16 %v6184, %v6180
        %v6497 = vpack.c.b16 %v6185, %v6181
        %v6498 = vpack.c.b16 %v6186, %v6182
        %v6499 = vpack.c.b16 %v6187, %v6183
        %v6500 = vpack.c.b16 %v6192, %v6188
        %v6501 = vpack.c.b16 %v6193, %v6189
        %v6502 = vpack.c.b16 %v6194, %v6190
        %v6503 = vpack.c.b16 %v6195, %v6191
        %v6504 = vpack.c.b16 %v6200, %v6196
        %v6505 = vpack.c.b16 %v6201, %v6197
        %v6506 = vpack.c.b16 %v6202, %v6198
        %v6507 = vpack.c.b16 %v6203, %v6199
        %v6508 = vpack.c.b16 %v6208, %v6204
        %v6509 = vpack.c.b16 %v6209, %v6205
        %v6510 = vpack.c.b16 %v6210, %v6206
        %v6511 = vpack.c.b16 %v6211, %v6207
        %v6512 = vpack.c.b16 %v6216, %v6212
        %v6513 = vpack.c.b16 %v6217, %v6213
        %v6514 = vpack.c.b16 %v6218, %v6214
        %v6515 = vpack.c.b16 %v6219, %v6215
        %v6516 = vpack.c.b16 %v6224, %v6220
        %v6517 = vpack.c.b16 %v6225, %v6221
        %v6518 = vpack.c.b16 %v6226, %v6222
        %v6519 = vpack.c.b16 %v6227, %v6223
        %v6520 = vpack.c.b16 %v6232, %v6228
        %v6521 = vpack.c.b16 %v6233, %v6229
        %v6522 = vpack.c.b16 %v6234, %v6230
        %v6523 = vpack.c.b16 %v6235, %v6231
        %v6524 = vpack.c.b16 %v6240, %v6236
        %v6525 = vpack.c.b16 %v6241, %v6237
        %v6526 = vpack.c.b16 %v6242, %v6238
        %v6527 = vpack.c.b16 %v6243, %v6239
        %v6528 = vpack.c.b16 %v6248, %v6244
        %v6529 = vpack.c.b16 %v6249, %v6245
        %v6530 = vpack.c.b16 %v6250, %v6246
        %v6531 = vpack.c.b16 %v6251, %v6247
        %v6532 = vpack.c.b16 %v6256, %v6252
        %v6533 = vpack.c.b16 %v6257, %v6253
        %v6534 = vpack.c.b16 %v6258, %v6254
        %v6535 = vpack.c.b16 %v6259, %v6255
        %v6536 = vpack.c.b16 %v6264, %v6260
        %v6537 = vpack.c.b16 %v6265, %v6261
        %v6538 = vpack.c.b16 %v6266, %v6262
        %v6539 = vpack.c.b16 %v6267, %v6263
        %v6540 = vpack.c.b16 %v6272, %v6268
        %v6541 = vpack.c.b16 %v6273, %v6269
        %v6542 = vpack.c.b16 %v6274, %v6270
        %v6543 = vpack.c.b16 %v6275, %v6271
        %v6544 = vpack.c.b16 %v6280, %v6276
        %v6545 = vpack.c.b16 %v6281, %v6277
        %v6546 = vpack.c.b16 %v6282, %v6278
        %v6547 = vpack.c.b16 %v6283, %v6279
        %v6548 = vpack.c.b16 %v6288, %v6284
        %v6549 = vpack.c.b16 %v6289, %v6285
        %v6550 = vpack.c.b16 %v6290, %v6286
        %v6551 = vpack.c.b16 %v6291, %v6287
        %v6552 = vpack.c.b16 %v6296, %v6292
        %v6553 = vpack.c.b16 %v6297, %v6293
        %v6554 = vpack.c.b16 %v6298, %v6294
        %v6555 = vpack.c.b16 %v6299, %v6295
        %6812 = vmatprep.subr.bf16.mxu0 %v6329
        %6813 = vmatpush1.bf16.msra.mxu0 %v6328
        %6814 = vmatprep.subr.bf16.mxu0 %v6325
        %6815 = vmatpush1.bf16.msra.mxu0 %v6324
        %6816 = vmatprep.subr.bf16.mxu0 %v6321
        %6817 = vmatpush1.bf16.msra.mxu0 %v6320
        %6818 = vmatprep.subr.bf16.mxu0 %v6317
        %6819 = vmatpush1.bf16.msra.mxu0 %v6316
        %6820 = vmatprep.subr.bf16.mxu0 %v6313
        %6821 = vmatpush1.bf16.msra.mxu0 %v6312
        %6822 = vmatprep.subr.bf16.mxu0 %v6309
        %6823 = vmatpush1.bf16.msra.mxu0 %v6308
        %6824 = vmatprep.subr.bf16.mxu0 %v6305
        %6825 = vmatpush1.bf16.msra.mxu0 %v6304
        %6826 = vmatprep.subr.bf16.mxu0 %v6301
        %6827 = vmatpush1.bf16.msra.mxu0 %v6300
        %6828 = vmatprep.subr.bf16.mxu0 %v6361
        %6829 = vmatpush2.bf16.msra.mxu0 %v6360
        %6830 = vmatprep.subr.bf16.mxu0 %v6357
        %6831 = vmatpush2.bf16.msra.mxu0 %v6356
        %6832 = vmatprep.subr.bf16.mxu0 %v6353
        %6833 = vmatpush2.bf16.msra.mxu0 %v6352
        %6834 = vmatprep.subr.bf16.mxu0 %v6349
        %6835 = vmatpush2.bf16.msra.mxu0 %v6348
        %6836 = vmatprep.subr.bf16.mxu0 %v6345
        %6837 = vmatpush2.bf16.msra.mxu0 %v6344
        %6838 = vmatprep.subr.bf16.mxu0 %v6341
        %6839 = vmatpush2.bf16.msra.mxu0 %v6340
        %6840 = vmatprep.subr.bf16.mxu0 %v6337
        %6841 = vmatpush2.bf16.msra.mxu0 %v6336
        %6842 = vmatprep.subr.bf16.mxu0 %v6333
        %6843 = vmatpush2.bf16.msra.mxu0 %v6332
        %6844 = vmatprep.mubr.bf16.mxu0 %v2505
        %6845 = vmatmul.mubr.bf16.gmra.mxu0 %v2504
        %v6846 = vpop.f32.mrf.mxu0
        %v6847 = vadd.f32 %v5515, %v6846
        %v6848 = vpop.f32.mrf.mxu0
        %v6849 = vadd.f32 %v5519, %v6848
        %v6850 = vpop.f32.mrf.mxu0
        %v6851 = vadd.f32 %v5515, %v6850
        %v6852 = vpop.f32.mrf.mxu0
        %v6853 = vadd.f32 %v5519, %v6852
        %6854 = vmatprep.mubr.bf16.mxu0 %v2513
        %6855 = vmatmul.mubr.bf16.gmra.mxu0 %v2512
        %v6856 = vpop.f32.mrf.mxu0
        %v6857 = vadd.f32 %v5515, %v6856
        %v6858 = vpop.f32.mrf.mxu0
        %v6859 = vadd.f32 %v5519, %v6858
        %v6860 = vpop.f32.mrf.mxu0
        %v6861 = vadd.f32 %v5515, %v6860
        %v6862 = vpop.f32.mrf.mxu0
        %v6863 = vadd.f32 %v5519, %v6862
        %6864 = vmatprep.mubr.bf16.mxu0 %v2521
        %6865 = vmatmul.mubr.bf16.gmra.mxu0 %v2520
        %v6866 = vpop.f32.mrf.mxu0
        %v6867 = vadd.f32 %v5515, %v6866
        %v6868 = vpop.f32.mrf.mxu0
        %v6869 = vadd.f32 %v5519, %v6868
        %v6870 = vpop.f32.mrf.mxu0
        %v6871 = vadd.f32 %v5515, %v6870
        %v6872 = vpop.f32.mrf.mxu0
        %v6873 = vadd.f32 %v5519, %v6872
        %6874 = vmatprep.mubr.bf16.mxu0 %v2529
        %6875 = vmatmul.mubr.bf16.gmra.mxu0 %v2528
        %v6876 = vpop.f32.mrf.mxu0
        %v6877 = vadd.f32 %v5515, %v6876
        %v6878 = vpop.f32.mrf.mxu0
        %v6879 = vadd.f32 %v5519, %v6878
        %v6880 = vpop.f32.mrf.mxu0
        %v6881 = vadd.f32 %v5515, %v6880
        %v6882 = vpop.f32.mrf.mxu0
        %v6883 = vadd.f32 %v5519, %v6882
        %6884 = vmatprep.mubr.bf16.mxu0 %v2537
        %6885 = vmatmul.mubr.bf16.gmra.mxu0 %v2536
        %v6886 = vpop.f32.mrf.mxu0
        %v6887 = vadd.f32 %v5515, %v6886
        %v6888 = vpop.f32.mrf.mxu0
        %v6889 = vadd.f32 %v5519, %v6888
        %v6890 = vpop.f32.mrf.mxu0
        %v6891 = vadd.f32 %v5515, %v6890
        %v6892 = vpop.f32.mrf.mxu0
        %v6893 = vadd.f32 %v5519, %v6892
        %6894 = vmatprep.mubr.bf16.mxu0 %v2545
        %6895 = vmatmul.mubr.bf16.gmra.mxu0 %v2544
        %v6896 = vpop.f32.mrf.mxu0
        %v6897 = vadd.f32 %v5515, %v6896
        %v6898 = vpop.f32.mrf.mxu0
        %v6899 = vadd.f32 %v5519, %v6898
        %v6900 = vpop.f32.mrf.mxu0
        %v6901 = vadd.f32 %v5515, %v6900
        %v6902 = vpop.f32.mrf.mxu0
        %v6903 = vadd.f32 %v5519, %v6902
        %6904 = vmatprep.mubr.bf16.mxu0 %v2553
        %6905 = vmatmul.mubr.bf16.gmra.mxu0 %v2552
        %v6906 = vpop.f32.mrf.mxu0
        %v6907 = vadd.f32 %v5515, %v6906
        %v6908 = vpop.f32.mrf.mxu0
        %v6909 = vadd.f32 %v5519, %v6908
        %v6910 = vpop.f32.mrf.mxu0
        %v6911 = vadd.f32 %v5515, %v6910
        %v6912 = vpop.f32.mrf.mxu0
        %v6913 = vadd.f32 %v5519, %v6912
        %6914 = vmatprep.mubr.bf16.mxu0 %v2561
        %6915 = vmatmul.mubr.bf16.gmra.mxu0 %v2560
        %v6916 = vpop.f32.mrf.mxu0
        %v6917 = vadd.f32 %v5515, %v6916
        %v6918 = vpop.f32.mrf.mxu0
        %v6919 = vadd.f32 %v5519, %v6918
        %v6920 = vpop.f32.mrf.mxu0
        %v6921 = vadd.f32 %v5515, %v6920
        %v6922 = vpop.f32.mrf.mxu0
        %v6923 = vadd.f32 %v5519, %v6922
        %6924 = vdwg.mxu0
        %6925 = vmatprep.subr.bf16.mxu0 %v6393
        %6926 = vmatpush1.bf16.msra.mxu0 %v6392
        %6927 = vmatprep.subr.bf16.mxu0 %v6389
        %6928 = vmatpush1.bf16.msra.mxu0 %v6388
        %6929 = vmatprep.subr.bf16.mxu0 %v6385
        %6930 = vmatpush1.bf16.msra.mxu0 %v6384
        %6931 = vmatprep.subr.bf16.mxu0 %v6381
        %6932 = vmatpush1.bf16.msra.mxu0 %v6380
        %6933 = vmatprep.subr.bf16.mxu0 %v6377
        %6934 = vmatpush1.bf16.msra.mxu0 %v6376
        %6935 = vmatprep.subr.bf16.mxu0 %v6373
        %6936 = vmatpush1.bf16.msra.mxu0 %v6372
        %6937 = vmatprep.subr.bf16.mxu0 %v6369
        %6938 = vmatpush1.bf16.msra.mxu0 %v6368
        %6939 = vmatprep.subr.bf16.mxu0 %v6365
        %6940 = vmatpush1.bf16.msra.mxu0 %v6364
        %6941 = vmatprep.subr.bf16.mxu0 %v6425
        %6942 = vmatpush2.bf16.msra.mxu0 %v6424
        %6943 = vmatprep.subr.bf16.mxu0 %v6421
        %6944 = vmatpush2.bf16.msra.mxu0 %v6420
        %6945 = vmatprep.subr.bf16.mxu0 %v6417
        %6946 = vmatpush2.bf16.msra.mxu0 %v6416
        %6947 = vmatprep.subr.bf16.mxu0 %v6413
        %6948 = vmatpush2.bf16.msra.mxu0 %v6412
        %6949 = vmatprep.subr.bf16.mxu0 %v6409
        %6950 = vmatpush2.bf16.msra.mxu0 %v6408
        %6951 = vmatprep.subr.bf16.mxu0 %v6405
        %6952 = vmatpush2.bf16.msra.mxu0 %v6404
        %6953 = vmatprep.subr.bf16.mxu0 %v6401
        %6954 = vmatpush2.bf16.msra.mxu0 %v6400
        %6955 = vmatprep.subr.bf16.mxu0 %v6397
        %6956 = vmatpush2.bf16.msra.mxu0 %v6396
        %6957 = vmatprep.mubr.bf16.mxu0 %v2507
        %6958 = vmatmul.mubr.bf16.gmra.mxu0 %v2506
        %v6959 = vpop.f32.mrf.mxu0
        %v6960 = vadd.f32 %v6847, %v6959
        %v6961 = vpop.f32.mrf.mxu0
        %v6962 = vadd.f32 %v6849, %v6961
        %v6963 = vpop.f32.mrf.mxu0
        %v6964 = vadd.f32 %v6851, %v6963
        %v6965 = vpop.f32.mrf.mxu0
        %v6966 = vadd.f32 %v6853, %v6965
        %6967 = vmatprep.mubr.bf16.mxu0 %v2515
        %6968 = vmatmul.mubr.bf16.gmra.mxu0 %v2514
        %v6969 = vpop.f32.mrf.mxu0
        %v6970 = vadd.f32 %v6857, %v6969
        %v6971 = vpop.f32.mrf.mxu0
        %v6972 = vadd.f32 %v6859, %v6971
        %v6973 = vpop.f32.mrf.mxu0
        %v6974 = vadd.f32 %v6861, %v6973
        %v6975 = vpop.f32.mrf.mxu0
        %v6976 = vadd.f32 %v6863, %v6975
        %6977 = vmatprep.mubr.bf16.mxu0 %v2523
        %6978 = vmatmul.mubr.bf16.gmra.mxu0 %v2522
        %v6979 = vpop.f32.mrf.mxu0
        %v6980 = vadd.f32 %v6867, %v6979
        %v6981 = vpop.f32.mrf.mxu0
        %v6982 = vadd.f32 %v6869, %v6981
        %v6983 = vpop.f32.mrf.mxu0
        %v6984 = vadd.f32 %v6871, %v6983
        %v6985 = vpop.f32.mrf.mxu0
        %v6986 = vadd.f32 %v6873, %v6985
        %6987 = vmatprep.mubr.bf16.mxu0 %v2531
        %6988 = vmatmul.mubr.bf16.gmra.mxu0 %v2530
        %v6989 = vpop.f32.mrf.mxu0
        %v6990 = vadd.f32 %v6877, %v6989
        %v6991 = vpop.f32.mrf.mxu0
        %v6992 = vadd.f32 %v6879, %v6991
        %v6993 = vpop.f32.mrf.mxu0
        %v6994 = vadd.f32 %v6881, %v6993
        %v6995 = vpop.f32.mrf.mxu0
        %v6996 = vadd.f32 %v6883, %v6995
        %6997 = vmatprep.mubr.bf16.mxu0 %v2539
        %6998 = vmatmul.mubr.bf16.gmra.mxu0 %v2538
        %v6999 = vpop.f32.mrf.mxu0
        %v7000 = vadd.f32 %v6887, %v6999
        %v7001 = vpop.f32.mrf.mxu0
        %v7002 = vadd.f32 %v6889, %v7001
        %v7003 = vpop.f32.mrf.mxu0
        %v7004 = vadd.f32 %v6891, %v7003
        %v7005 = vpop.f32.mrf.mxu0
        %v7006 = vadd.f32 %v6893, %v7005
        %7007 = vmatprep.mubr.bf16.mxu0 %v2547
        %7008 = vmatmul.mubr.bf16.gmra.mxu0 %v2546
        %v7009 = vpop.f32.mrf.mxu0
        %v7010 = vadd.f32 %v6897, %v7009
        %v7011 = vpop.f32.mrf.mxu0
        %v7012 = vadd.f32 %v6899, %v7011
        %v7013 = vpop.f32.mrf.mxu0
        %v7014 = vadd.f32 %v6901, %v7013
        %v7015 = vpop.f32.mrf.mxu0
        %v7016 = vadd.f32 %v6903, %v7015
        %7017 = vmatprep.mubr.bf16.mxu0 %v2555
        %7018 = vmatmul.mubr.bf16.gmra.mxu0 %v2554
        %v7019 = vpop.f32.mrf.mxu0
        %v7020 = vadd.f32 %v6907, %v7019
        %v7021 = vpop.f32.mrf.mxu0
        %v7022 = vadd.f32 %v6909, %v7021
        %v7023 = vpop.f32.mrf.mxu0
        %v7024 = vadd.f32 %v6911, %v7023
        %v7025 = vpop.f32.mrf.mxu0
        %v7026 = vadd.f32 %v6913, %v7025
        %7027 = vmatprep.mubr.bf16.mxu0 %v2563
        %7028 = vmatmul.mubr.bf16.gmra.mxu0 %v2562
        %v7029 = vpop.f32.mrf.mxu0
        %v7030 = vadd.f32 %v6917, %v7029
        %v7031 = vpop.f32.mrf.mxu0
        %v7032 = vadd.f32 %v6919, %v7031
        %v7033 = vpop.f32.mrf.mxu0
        %v7034 = vadd.f32 %v6921, %v7033
        %v7035 = vpop.f32.mrf.mxu0
        %v7036 = vadd.f32 %v6923, %v7035
        %7037 = vdwg.mxu0
        %7038 = vmatprep.subr.bf16.mxu0 %v6457
        %7039 = vmatpush1.bf16.msra.mxu0 %v6456
        %7040 = vmatprep.subr.bf16.mxu0 %v6453
        %7041 = vmatpush1.bf16.msra.mxu0 %v6452
        %7042 = vmatprep.subr.bf16.mxu0 %v6449
        %7043 = vmatpush1.bf16.msra.mxu0 %v6448
        %7044 = vmatprep.subr.bf16.mxu0 %v6445
        %7045 = vmatpush1.bf16.msra.mxu0 %v6444
        %7046 = vmatprep.subr.bf16.mxu0 %v6441
        %7047 = vmatpush1.bf16.msra.mxu0 %v6440
        %7048 = vmatprep.subr.bf16.mxu0 %v6437
        %7049 = vmatpush1.bf16.msra.mxu0 %v6436
        %7050 = vmatprep.subr.bf16.mxu0 %v6433
        %7051 = vmatpush1.bf16.msra.mxu0 %v6432
        %7052 = vmatprep.subr.bf16.mxu0 %v6429
        %7053 = vmatpush1.bf16.msra.mxu0 %v6428
        %7054 = vmatprep.subr.bf16.mxu0 %v6489
        %7055 = vmatpush2.bf16.msra.mxu0 %v6488
        %7056 = vmatprep.subr.bf16.mxu0 %v6485
        %7057 = vmatpush2.bf16.msra.mxu0 %v6484
        %7058 = vmatprep.subr.bf16.mxu0 %v6481
        %7059 = vmatpush2.bf16.msra.mxu0 %v6480
        %7060 = vmatprep.subr.bf16.mxu0 %v6477
        %7061 = vmatpush2.bf16.msra.mxu0 %v6476
        %7062 = vmatprep.subr.bf16.mxu0 %v6473
        %7063 = vmatpush2.bf16.msra.mxu0 %v6472
        %7064 = vmatprep.subr.bf16.mxu0 %v6469
        %7065 = vmatpush2.bf16.msra.mxu0 %v6468
        %7066 = vmatprep.subr.bf16.mxu0 %v6465
        %7067 = vmatpush2.bf16.msra.mxu0 %v6464
        %7068 = vmatprep.subr.bf16.mxu0 %v6461
        %7069 = vmatpush2.bf16.msra.mxu0 %v6460
        %7070 = vmatprep.mubr.bf16.mxu0 %v2509
        %7071 = vmatmul.mubr.bf16.gmra.mxu0 %v2508
        %v7072 = vpop.f32.mrf.mxu0
        %v7073 = vadd.f32 %v6960, %v7072
        %v7074 = vpop.f32.mrf.mxu0
        %v7075 = vadd.f32 %v6962, %v7074
        %v7076 = vpop.f32.mrf.mxu0
        %v7077 = vadd.f32 %v6964, %v7076
        %v7078 = vpop.f32.mrf.mxu0
        %v7079 = vadd.f32 %v6966, %v7078
        %7080 = vmatprep.mubr.bf16.mxu0 %v2517
        %7081 = vmatmul.mubr.bf16.gmra.mxu0 %v2516
        %v7082 = vpop.f32.mrf.mxu0
        %v7083 = vadd.f32 %v6970, %v7082
        %v7084 = vpop.f32.mrf.mxu0
        %v7085 = vadd.f32 %v6972, %v7084
        %v7086 = vpop.f32.mrf.mxu0
        %v7087 = vadd.f32 %v6974, %v7086
        %v7088 = vpop.f32.mrf.mxu0
        %v7089 = vadd.f32 %v6976, %v7088
        %7090 = vmatprep.mubr.bf16.mxu0 %v2525
        %7091 = vmatmul.mubr.bf16.gmra.mxu0 %v2524
        %v7092 = vpop.f32.mrf.mxu0
        %v7093 = vadd.f32 %v6980, %v7092
        %v7094 = vpop.f32.mrf.mxu0
        %v7095 = vadd.f32 %v6982, %v7094
        %v7096 = vpop.f32.mrf.mxu0
        %v7097 = vadd.f32 %v6984, %v7096
        %v7098 = vpop.f32.mrf.mxu0
        %v7099 = vadd.f32 %v6986, %v7098
        %7100 = vmatprep.mubr.bf16.mxu0 %v2533
        %7101 = vmatmul.mubr.bf16.gmra.mxu0 %v2532
        %v7102 = vpop.f32.mrf.mxu0
        %v7103 = vadd.f32 %v6990, %v7102
        %v7104 = vpop.f32.mrf.mxu0
        %v7105 = vadd.f32 %v6992, %v7104
        %v7106 = vpop.f32.mrf.mxu0
        %v7107 = vadd.f32 %v6994, %v7106
        %v7108 = vpop.f32.mrf.mxu0
        %v7109 = vadd.f32 %v6996, %v7108
        %7110 = vmatprep.mubr.bf16.mxu0 %v2541
        %7111 = vmatmul.mubr.bf16.gmra.mxu0 %v2540
        %v7112 = vpop.f32.mrf.mxu0
        %v7113 = vadd.f32 %v7000, %v7112
        %v7114 = vpop.f32.mrf.mxu0
        %v7115 = vadd.f32 %v7002, %v7114
        %v7116 = vpop.f32.mrf.mxu0
        %v7117 = vadd.f32 %v7004, %v7116
        %v7118 = vpop.f32.mrf.mxu0
        %v7119 = vadd.f32 %v7006, %v7118
        %7120 = vmatprep.mubr.bf16.mxu0 %v2549
        %7121 = vmatmul.mubr.bf16.gmra.mxu0 %v2548
        %v7122 = vpop.f32.mrf.mxu0
        %v7123 = vadd.f32 %v7010, %v7122
        %v7124 = vpop.f32.mrf.mxu0
        %v7125 = vadd.f32 %v7012, %v7124
        %v7126 = vpop.f32.mrf.mxu0
        %v7127 = vadd.f32 %v7014, %v7126
        %v7128 = vpop.f32.mrf.mxu0
        %v7129 = vadd.f32 %v7016, %v7128
        %7130 = vmatprep.mubr.bf16.mxu0 %v2557
        %7131 = vmatmul.mubr.bf16.gmra.mxu0 %v2556
        %v7132 = vpop.f32.mrf.mxu0
        %v7133 = vadd.f32 %v7020, %v7132
        %v7134 = vpop.f32.mrf.mxu0
        %v7135 = vadd.f32 %v7022, %v7134
        %v7136 = vpop.f32.mrf.mxu0
        %v7137 = vadd.f32 %v7024, %v7136
        %v7138 = vpop.f32.mrf.mxu0
        %v7139 = vadd.f32 %v7026, %v7138
        %7140 = vmatprep.mubr.bf16.mxu0 %v2565
        %7141 = vmatmul.mubr.bf16.gmra.mxu0 %v2564
        %v7142 = vpop.f32.mrf.mxu0
        %v7143 = vadd.f32 %v7030, %v7142
        %v7144 = vpop.f32.mrf.mxu0
        %v7145 = vadd.f32 %v7032, %v7144
        %v7146 = vpop.f32.mrf.mxu0
        %v7147 = vadd.f32 %v7034, %v7146
        %v7148 = vpop.f32.mrf.mxu0
        %v7149 = vadd.f32 %v7036, %v7148
        %7150 = vdwg.mxu0
        %7151 = vmatprep.subr.bf16.mxu0 %v6521
        %7152 = vmatpush1.bf16.msra.mxu0 %v6520
        %7153 = vmatprep.subr.bf16.mxu0 %v6517
        %7154 = vmatpush1.bf16.msra.mxu0 %v6516
        %7155 = vmatprep.subr.bf16.mxu0 %v6513
        %7156 = vmatpush1.bf16.msra.mxu0 %v6512
        %7157 = vmatprep.subr.bf16.mxu0 %v6509
        %7158 = vmatpush1.bf16.msra.mxu0 %v6508
        %7159 = vmatprep.subr.bf16.mxu0 %v6505
        %7160 = vmatpush1.bf16.msra.mxu0 %v6504
        %7161 = vmatprep.subr.bf16.mxu0 %v6501
        %7162 = vmatpush1.bf16.msra.mxu0 %v6500
        %7163 = vmatprep.subr.bf16.mxu0 %v6497
        %7164 = vmatpush1.bf16.msra.mxu0 %v6496
        %7165 = vmatprep.subr.bf16.mxu0 %v6493
        %7166 = vmatpush1.bf16.msra.mxu0 %v6492
        %7167 = vmatprep.subr.bf16.mxu0 %v6553
        %7168 = vmatpush2.bf16.msra.mxu0 %v6552
        %7169 = vmatprep.subr.bf16.mxu0 %v6549
        %7170 = vmatpush2.bf16.msra.mxu0 %v6548
        %7171 = vmatprep.subr.bf16.mxu0 %v6545
        %7172 = vmatpush2.bf16.msra.mxu0 %v6544
        %7173 = vmatprep.subr.bf16.mxu0 %v6541
        %7174 = vmatpush2.bf16.msra.mxu0 %v6540
        %7175 = vmatprep.subr.bf16.mxu0 %v6537
        %7176 = vmatpush2.bf16.msra.mxu0 %v6536
        %7177 = vmatprep.subr.bf16.mxu0 %v6533
        %7178 = vmatpush2.bf16.msra.mxu0 %v6532
        %7179 = vmatprep.subr.bf16.mxu0 %v6529
        %7180 = vmatpush2.bf16.msra.mxu0 %v6528
        %7181 = vmatprep.subr.bf16.mxu0 %v6525
        %7182 = vmatpush2.bf16.msra.mxu0 %v6524
        %7183 = vmatprep.mubr.bf16.mxu0 %v2511
        %7184 = vmatmul.mubr.bf16.gmra.mxu0 %v2510
        %v7185 = vpop.f32.mrf.mxu0
        %v7186 = vadd.f32 %v7073, %v7185
        %v7187 = vpop.f32.mrf.mxu0
        %v7188 = vadd.f32 %v7075, %v7187
        %v7189 = vpop.f32.mrf.mxu0
        %v7190 = vadd.f32 %v7077, %v7189
        %v7191 = vpop.f32.mrf.mxu0
        %v7192 = vadd.f32 %v7079, %v7191
        %7193 = vmatprep.mubr.bf16.mxu0 %v2519
        %7194 = vmatmul.mubr.bf16.gmra.mxu0 %v2518
        %v7195 = vpop.f32.mrf.mxu0
        %v7196 = vadd.f32 %v7083, %v7195
        %v7197 = vpop.f32.mrf.mxu0
        %v7198 = vadd.f32 %v7085, %v7197
        %v7199 = vpop.f32.mrf.mxu0
        %v7200 = vadd.f32 %v7087, %v7199
        %v7201 = vpop.f32.mrf.mxu0
        %v7202 = vadd.f32 %v7089, %v7201
        %7203 = vmatprep.mubr.bf16.mxu0 %v2527
        %7204 = vmatmul.mubr.bf16.gmra.mxu0 %v2526
        %v7205 = vpop.f32.mrf.mxu0
        %v7206 = vadd.f32 %v7093, %v7205
        %v7207 = vpop.f32.mrf.mxu0
        %v7208 = vadd.f32 %v7095, %v7207
        %v7209 = vpop.f32.mrf.mxu0
        %v7210 = vadd.f32 %v7097, %v7209
        %v7211 = vpop.f32.mrf.mxu0
        %v7212 = vadd.f32 %v7099, %v7211
        %7213 = vmatprep.mubr.bf16.mxu0 %v2535
        %7214 = vmatmul.mubr.bf16.gmra.mxu0 %v2534
        %v7215 = vpop.f32.mrf.mxu0
        %v7216 = vadd.f32 %v7103, %v7215
        %v7217 = vpop.f32.mrf.mxu0
        %v7218 = vadd.f32 %v7105, %v7217
        %v7219 = vpop.f32.mrf.mxu0
        %v7220 = vadd.f32 %v7107, %v7219
        %v7221 = vpop.f32.mrf.mxu0
        %v7222 = vadd.f32 %v7109, %v7221
        %7223 = vmatprep.mubr.bf16.mxu0 %v2543
        %7224 = vmatmul.mubr.bf16.gmra.mxu0 %v2542
        %v7225 = vpop.f32.mrf.mxu0
        %v7226 = vadd.f32 %v7113, %v7225
        %v7227 = vpop.f32.mrf.mxu0
        %v7228 = vadd.f32 %v7115, %v7227
        %v7229 = vpop.f32.mrf.mxu0
        %v7230 = vadd.f32 %v7117, %v7229
        %v7231 = vpop.f32.mrf.mxu0
        %v7232 = vadd.f32 %v7119, %v7231
        %7233 = vmatprep.mubr.bf16.mxu0 %v2551
        %7234 = vmatmul.mubr.bf16.gmra.mxu0 %v2550
        %v7235 = vpop.f32.mrf.mxu0
        %v7236 = vadd.f32 %v7123, %v7235
        %v7237 = vpop.f32.mrf.mxu0
        %v7238 = vadd.f32 %v7125, %v7237
        %v7239 = vpop.f32.mrf.mxu0
        %v7240 = vadd.f32 %v7127, %v7239
        %v7241 = vpop.f32.mrf.mxu0
        %v7242 = vadd.f32 %v7129, %v7241
        %7243 = vmatprep.mubr.bf16.mxu0 %v2559
        %7244 = vmatmul.mubr.bf16.gmra.mxu0 %v2558
        %v7245 = vpop.f32.mrf.mxu0
        %v7246 = vadd.f32 %v7133, %v7245
        %v7247 = vpop.f32.mrf.mxu0
        %v7248 = vadd.f32 %v7135, %v7247
        %v7249 = vpop.f32.mrf.mxu0
        %v7250 = vadd.f32 %v7137, %v7249
        %v7251 = vpop.f32.mrf.mxu0
        %v7252 = vadd.f32 %v7139, %v7251
        %7253 = vmatprep.mubr.bf16.mxu0 %v2567
        %7254 = vmatmul.mubr.bf16.gmra.mxu0 %v2566
        %v7255 = vpop.f32.mrf.mxu0
        %v7256 = vadd.f32 %v7143, %v7255
        %v7257 = vpop.f32.mrf.mxu0
        %v7258 = vadd.f32 %v7145, %v7257
        %v7259 = vpop.f32.mrf.mxu0
        %v7260 = vadd.f32 %v7147, %v7259
        %v7261 = vpop.f32.mrf.mxu0
        %v7262 = vadd.f32 %v7149, %v7261
        %7263 = vdwg.mxu0
        %7264 = vmatprep.subr.bf16.mxu0 %v6331
        %7265 = vmatpush1.bf16.msra.mxu0 %v6330
        %7266 = vmatprep.subr.bf16.mxu0 %v6327
        %7267 = vmatpush1.bf16.msra.mxu0 %v6326
        %7268 = vmatprep.subr.bf16.mxu0 %v6323
        %7269 = vmatpush1.bf16.msra.mxu0 %v6322
        %7270 = vmatprep.subr.bf16.mxu0 %v6319
        %7271 = vmatpush1.bf16.msra.mxu0 %v6318
        %7272 = vmatprep.subr.bf16.mxu0 %v6315
        %7273 = vmatpush1.bf16.msra.mxu0 %v6314
        %7274 = vmatprep.subr.bf16.mxu0 %v6311
        %7275 = vmatpush1.bf16.msra.mxu0 %v6310
        %7276 = vmatprep.subr.bf16.mxu0 %v6307
        %7277 = vmatpush1.bf16.msra.mxu0 %v6306
        %7278 = vmatprep.subr.bf16.mxu0 %v6303
        %7279 = vmatpush1.bf16.msra.mxu0 %v6302
        %7280 = vmatprep.subr.bf16.mxu0 %v6363
        %7281 = vmatpush2.bf16.msra.mxu0 %v6362
        %7282 = vmatprep.subr.bf16.mxu0 %v6359
        %7283 = vmatpush2.bf16.msra.mxu0 %v6358
        %7284 = vmatprep.subr.bf16.mxu0 %v6355
        %7285 = vmatpush2.bf16.msra.mxu0 %v6354
        %7286 = vmatprep.subr.bf16.mxu0 %v6351
        %7287 = vmatpush2.bf16.msra.mxu0 %v6350
        %7288 = vmatprep.subr.bf16.mxu0 %v6347
        %7289 = vmatpush2.bf16.msra.mxu0 %v6346
        %7290 = vmatprep.subr.bf16.mxu0 %v6343
        %7291 = vmatpush2.bf16.msra.mxu0 %v6342
        %7292 = vmatprep.subr.bf16.mxu0 %v6339
        %7293 = vmatpush2.bf16.msra.mxu0 %v6338
        %7294 = vmatprep.subr.bf16.mxu0 %v6335
        %7295 = vmatpush2.bf16.msra.mxu0 %v6334
        %7296 = vmatprep.mubr.bf16.mxu0 %v2505
        %7297 = vmatmul.mubr.bf16.gmra.mxu0 %v2504
        %v7298 = vpop.f32.mrf.mxu0
        %v7299 = vadd.f32 %v5523, %v7298
        %v7300 = vpop.f32.mrf.mxu0
        %v7301 = vadd.f32 %v5527, %v7300
        %v7302 = vpop.f32.mrf.mxu0
        %v7303 = vadd.f32 %v5523, %v7302
        %v7304 = vpop.f32.mrf.mxu0
        %v7305 = vadd.f32 %v5527, %v7304
        %7306 = vmatprep.mubr.bf16.mxu0 %v2513
        %7307 = vmatmul.mubr.bf16.gmra.mxu0 %v2512
        %v7308 = vpop.f32.mrf.mxu0
        %v7309 = vadd.f32 %v5523, %v7308
        %v7310 = vpop.f32.mrf.mxu0
        %v7311 = vadd.f32 %v5527, %v7310
        %v7312 = vpop.f32.mrf.mxu0
        %v7313 = vadd.f32 %v5523, %v7312
        %v7314 = vpop.f32.mrf.mxu0
        %v7315 = vadd.f32 %v5527, %v7314
        %7316 = vmatprep.mubr.bf16.mxu0 %v2521
        %7317 = vmatmul.mubr.bf16.gmra.mxu0 %v2520
        %v7318 = vpop.f32.mrf.mxu0
        %v7319 = vadd.f32 %v5523, %v7318
        %v7320 = vpop.f32.mrf.mxu0
        %v7321 = vadd.f32 %v5527, %v7320
        %v7322 = vpop.f32.mrf.mxu0
        %v7323 = vadd.f32 %v5523, %v7322
        %v7324 = vpop.f32.mrf.mxu0
        %v7325 = vadd.f32 %v5527, %v7324
        %7326 = vmatprep.mubr.bf16.mxu0 %v2529
        %7327 = vmatmul.mubr.bf16.gmra.mxu0 %v2528
        %v7328 = vpop.f32.mrf.mxu0
        %v7329 = vadd.f32 %v5523, %v7328
        %v7330 = vpop.f32.mrf.mxu0
        %v7331 = vadd.f32 %v5527, %v7330
        %v7332 = vpop.f32.mrf.mxu0
        %v7333 = vadd.f32 %v5523, %v7332
        %v7334 = vpop.f32.mrf.mxu0
        %v7335 = vadd.f32 %v5527, %v7334
        %7336 = vmatprep.mubr.bf16.mxu0 %v2537
        %7337 = vmatmul.mubr.bf16.gmra.mxu0 %v2536
        %v7338 = vpop.f32.mrf.mxu0
        %v7339 = vadd.f32 %v5523, %v7338
        %v7340 = vpop.f32.mrf.mxu0
        %v7341 = vadd.f32 %v5527, %v7340
        %v7342 = vpop.f32.mrf.mxu0
        %v7343 = vadd.f32 %v5523, %v7342
        %v7344 = vpop.f32.mrf.mxu0
        %v7345 = vadd.f32 %v5527, %v7344
        %7346 = vmatprep.mubr.bf16.mxu0 %v2545
        %7347 = vmatmul.mubr.bf16.gmra.mxu0 %v2544
        %v7348 = vpop.f32.mrf.mxu0
        %v7349 = vadd.f32 %v5523, %v7348
        %v7350 = vpop.f32.mrf.mxu0
        %v7351 = vadd.f32 %v5527, %v7350
        %v7352 = vpop.f32.mrf.mxu0
        %v7353 = vadd.f32 %v5523, %v7352
        %v7354 = vpop.f32.mrf.mxu0
        %v7355 = vadd.f32 %v5527, %v7354
        %7356 = vmatprep.mubr.bf16.mxu0 %v2553
        %7357 = vmatmul.mubr.bf16.gmra.mxu0 %v2552
        %v7358 = vpop.f32.mrf.mxu0
        %v7359 = vadd.f32 %v5523, %v7358
        %v7360 = vpop.f32.mrf.mxu0
        %v7361 = vadd.f32 %v5527, %v7360
        %v7362 = vpop.f32.mrf.mxu0
        %v7363 = vadd.f32 %v5523, %v7362
        %v7364 = vpop.f32.mrf.mxu0
        %v7365 = vadd.f32 %v5527, %v7364
        %7366 = vmatprep.mubr.bf16.mxu0 %v2561
        %7367 = vmatmul.mubr.bf16.gmra.mxu0 %v2560
        %v7368 = vpop.f32.mrf.mxu0
        %v7369 = vadd.f32 %v5523, %v7368
        %v7370 = vpop.f32.mrf.mxu0
        %v7371 = vadd.f32 %v5527, %v7370
        %v7372 = vpop.f32.mrf.mxu0
        %v7373 = vadd.f32 %v5523, %v7372
        %v7374 = vpop.f32.mrf.mxu0
        %v7375 = vadd.f32 %v5527, %v7374
        %7376 = vdwg.mxu0
        %7377 = vmatprep.subr.bf16.mxu0 %v6395
        %7378 = vmatpush1.bf16.msra.mxu0 %v6394
        %7379 = vmatprep.subr.bf16.mxu0 %v6391
        %7380 = vmatpush1.bf16.msra.mxu0 %v6390
        %7381 = vmatprep.subr.bf16.mxu0 %v6387
        %7382 = vmatpush1.bf16.msra.mxu0 %v6386
        %7383 = vmatprep.subr.bf16.mxu0 %v6383
        %7384 = vmatpush1.bf16.msra.mxu0 %v6382
        %7385 = vmatprep.subr.bf16.mxu0 %v6379
        %7386 = vmatpush1.bf16.msra.mxu0 %v6378
        %7387 = vmatprep.subr.bf16.mxu0 %v6375
        %7388 = vmatpush1.bf16.msra.mxu0 %v6374
        %7389 = vmatprep.subr.bf16.mxu0 %v6371
        %7390 = vmatpush1.bf16.msra.mxu0 %v6370
        %7391 = vmatprep.subr.bf16.mxu0 %v6367
        %7392 = vmatpush1.bf16.msra.mxu0 %v6366
        %7393 = vmatprep.subr.bf16.mxu0 %v6427
        %7394 = vmatpush2.bf16.msra.mxu0 %v6426
        %7395 = vmatprep.subr.bf16.mxu0 %v6423
        %7396 = vmatpush2.bf16.msra.mxu0 %v6422
        %7397 = vmatprep.subr.bf16.mxu0 %v6419
        %7398 = vmatpush2.bf16.msra.mxu0 %v6418
        %7399 = vmatprep.subr.bf16.mxu0 %v6415
        %7400 = vmatpush2.bf16.msra.mxu0 %v6414
        %7401 = vmatprep.subr.bf16.mxu0 %v6411
        %7402 = vmatpush2.bf16.msra.mxu0 %v6410
        %7403 = vmatprep.subr.bf16.mxu0 %v6407
        %7404 = vmatpush2.bf16.msra.mxu0 %v6406
        %7405 = vmatprep.subr.bf16.mxu0 %v6403
        %7406 = vmatpush2.bf16.msra.mxu0 %v6402
        %7407 = vmatprep.subr.bf16.mxu0 %v6399
        %7408 = vmatpush2.bf16.msra.mxu0 %v6398
        %7409 = vmatprep.mubr.bf16.mxu0 %v2507
        %7410 = vmatmul.mubr.bf16.gmra.mxu0 %v2506
        %v7411 = vpop.f32.mrf.mxu0
        %v7412 = vadd.f32 %v7299, %v7411
        %v7413 = vpop.f32.mrf.mxu0
        %v7414 = vadd.f32 %v7301, %v7413
        %v7415 = vpop.f32.mrf.mxu0
        %v7416 = vadd.f32 %v7303, %v7415
        %v7417 = vpop.f32.mrf.mxu0
        %v7418 = vadd.f32 %v7305, %v7417
        %7419 = vmatprep.mubr.bf16.mxu0 %v2515
        %7420 = vmatmul.mubr.bf16.gmra.mxu0 %v2514
        %v7421 = vpop.f32.mrf.mxu0
        %v7422 = vadd.f32 %v7309, %v7421
        %v7423 = vpop.f32.mrf.mxu0
        %v7424 = vadd.f32 %v7311, %v7423
        %v7425 = vpop.f32.mrf.mxu0
        %v7426 = vadd.f32 %v7313, %v7425
        %v7427 = vpop.f32.mrf.mxu0
        %v7428 = vadd.f32 %v7315, %v7427
        %7429 = vmatprep.mubr.bf16.mxu0 %v2523
        %7430 = vmatmul.mubr.bf16.gmra.mxu0 %v2522
        %v7431 = vpop.f32.mrf.mxu0
        %v7432 = vadd.f32 %v7319, %v7431
        %v7433 = vpop.f32.mrf.mxu0
        %v7434 = vadd.f32 %v7321, %v7433
        %v7435 = vpop.f32.mrf.mxu0
        %v7436 = vadd.f32 %v7323, %v7435
        %v7437 = vpop.f32.mrf.mxu0
        %v7438 = vadd.f32 %v7325, %v7437
        %7439 = vmatprep.mubr.bf16.mxu0 %v2531
        %7440 = vmatmul.mubr.bf16.gmra.mxu0 %v2530
        %v7441 = vpop.f32.mrf.mxu0
        %v7442 = vadd.f32 %v7329, %v7441
        %v7443 = vpop.f32.mrf.mxu0
        %v7444 = vadd.f32 %v7331, %v7443
        %v7445 = vpop.f32.mrf.mxu0
        %v7446 = vadd.f32 %v7333, %v7445
        %v7447 = vpop.f32.mrf.mxu0
        %v7448 = vadd.f32 %v7335, %v7447
        %7449 = vmatprep.mubr.bf16.mxu0 %v2539
        %7450 = vmatmul.mubr.bf16.gmra.mxu0 %v2538
        %v7451 = vpop.f32.mrf.mxu0
        %v7452 = vadd.f32 %v7339, %v7451
        %v7453 = vpop.f32.mrf.mxu0
        %v7454 = vadd.f32 %v7341, %v7453
        %v7455 = vpop.f32.mrf.mxu0
        %v7456 = vadd.f32 %v7343, %v7455
        %v7457 = vpop.f32.mrf.mxu0
        %v7458 = vadd.f32 %v7345, %v7457
        %7459 = vmatprep.mubr.bf16.mxu0 %v2547
        %7460 = vmatmul.mubr.bf16.gmra.mxu0 %v2546
        %v7461 = vpop.f32.mrf.mxu0
        %v7462 = vadd.f32 %v7349, %v7461
        %v7463 = vpop.f32.mrf.mxu0
        %v7464 = vadd.f32 %v7351, %v7463
        %v7465 = vpop.f32.mrf.mxu0
        %v7466 = vadd.f32 %v7353, %v7465
        %v7467 = vpop.f32.mrf.mxu0
        %v7468 = vadd.f32 %v7355, %v7467
        %7469 = vmatprep.mubr.bf16.mxu0 %v2555
        %7470 = vmatmul.mubr.bf16.gmra.mxu0 %v2554
        %v7471 = vpop.f32.mrf.mxu0
        %v7472 = vadd.f32 %v7359, %v7471
        %v7473 = vpop.f32.mrf.mxu0
        %v7474 = vadd.f32 %v7361, %v7473
        %v7475 = vpop.f32.mrf.mxu0
        %v7476 = vadd.f32 %v7363, %v7475
        %v7477 = vpop.f32.mrf.mxu0
        %v7478 = vadd.f32 %v7365, %v7477
        %7479 = vmatprep.mubr.bf16.mxu0 %v2563
        %7480 = vmatmul.mubr.bf16.gmra.mxu0 %v2562
        %v7481 = vpop.f32.mrf.mxu0
        %v7482 = vadd.f32 %v7369, %v7481
        %v7483 = vpop.f32.mrf.mxu0
        %v7484 = vadd.f32 %v7371, %v7483
        %v7485 = vpop.f32.mrf.mxu0
        %v7486 = vadd.f32 %v7373, %v7485
        %v7487 = vpop.f32.mrf.mxu0
        %v7488 = vadd.f32 %v7375, %v7487
        %7489 = vdwg.mxu0
        %7490 = vmatprep.subr.bf16.mxu0 %v6459
        %7491 = vmatpush1.bf16.msra.mxu0 %v6458
        %7492 = vmatprep.subr.bf16.mxu0 %v6455
        %7493 = vmatpush1.bf16.msra.mxu0 %v6454
        %7494 = vmatprep.subr.bf16.mxu0 %v6451
        %7495 = vmatpush1.bf16.msra.mxu0 %v6450
        %7496 = vmatprep.subr.bf16.mxu0 %v6447
        %7497 = vmatpush1.bf16.msra.mxu0 %v6446
        %7498 = vmatprep.subr.bf16.mxu0 %v6443
        %7499 = vmatpush1.bf16.msra.mxu0 %v6442
        %7500 = vmatprep.subr.bf16.mxu0 %v6439
        %7501 = vmatpush1.bf16.msra.mxu0 %v6438
        %7502 = vmatprep.subr.bf16.mxu0 %v6435
        %7503 = vmatpush1.bf16.msra.mxu0 %v6434
        %7504 = vmatprep.subr.bf16.mxu0 %v6431
        %7505 = vmatpush1.bf16.msra.mxu0 %v6430
        %7506 = vmatprep.subr.bf16.mxu0 %v6491
        %7507 = vmatpush2.bf16.msra.mxu0 %v6490
        %7508 = vmatprep.subr.bf16.mxu0 %v6487
        %7509 = vmatpush2.bf16.msra.mxu0 %v6486
        %7510 = vmatprep.subr.bf16.mxu0 %v6483
        %7511 = vmatpush2.bf16.msra.mxu0 %v6482
        %7512 = vmatprep.subr.bf16.mxu0 %v6479
        %7513 = vmatpush2.bf16.msra.mxu0 %v6478
        %7514 = vmatprep.subr.bf16.mxu0 %v6475
        %7515 = vmatpush2.bf16.msra.mxu0 %v6474
        %7516 = vmatprep.subr.bf16.mxu0 %v6471
        %7517 = vmatpush2.bf16.msra.mxu0 %v6470
        %7518 = vmatprep.subr.bf16.mxu0 %v6467
        %7519 = vmatpush2.bf16.msra.mxu0 %v6466
        %7520 = vmatprep.subr.bf16.mxu0 %v6463
        %7521 = vmatpush2.bf16.msra.mxu0 %v6462
        %7522 = vmatprep.mubr.bf16.mxu0 %v2509
        %7523 = vmatmul.mubr.bf16.gmra.mxu0 %v2508
        %v7524 = vpop.f32.mrf.mxu0
        %v7525 = vadd.f32 %v7412, %v7524
        %v7526 = vpop.f32.mrf.mxu0
        %v7527 = vadd.f32 %v7414, %v7526
        %v7528 = vpop.f32.mrf.mxu0
        %v7529 = vadd.f32 %v7416, %v7528
        %v7530 = vpop.f32.mrf.mxu0
        %v7531 = vadd.f32 %v7418, %v7530
        %7532 = vmatprep.mubr.bf16.mxu0 %v2517
        %7533 = vmatmul.mubr.bf16.gmra.mxu0 %v2516
        %v7534 = vpop.f32.mrf.mxu0
        %v7535 = vadd.f32 %v7422, %v7534
        %v7536 = vpop.f32.mrf.mxu0
        %v7537 = vadd.f32 %v7424, %v7536
        %v7538 = vpop.f32.mrf.mxu0
        %v7539 = vadd.f32 %v7426, %v7538
        %v7540 = vpop.f32.mrf.mxu0
        %v7541 = vadd.f32 %v7428, %v7540
        %7542 = vmatprep.mubr.bf16.mxu0 %v2525
        %7543 = vmatmul.mubr.bf16.gmra.mxu0 %v2524
        %v7544 = vpop.f32.mrf.mxu0
        %v7545 = vadd.f32 %v7432, %v7544
        %v7546 = vpop.f32.mrf.mxu0
        %v7547 = vadd.f32 %v7434, %v7546
        %v7548 = vpop.f32.mrf.mxu0
        %v7549 = vadd.f32 %v7436, %v7548
        %v7550 = vpop.f32.mrf.mxu0
        %v7551 = vadd.f32 %v7438, %v7550
        %7552 = vmatprep.mubr.bf16.mxu0 %v2533
        %7553 = vmatmul.mubr.bf16.gmra.mxu0 %v2532
        %v7554 = vpop.f32.mrf.mxu0
        %v7555 = vadd.f32 %v7442, %v7554
        %v7556 = vpop.f32.mrf.mxu0
        %v7557 = vadd.f32 %v7444, %v7556
        %v7558 = vpop.f32.mrf.mxu0
        %v7559 = vadd.f32 %v7446, %v7558
        %v7560 = vpop.f32.mrf.mxu0
        %v7561 = vadd.f32 %v7448, %v7560
        %7562 = vmatprep.mubr.bf16.mxu0 %v2541
        %7563 = vmatmul.mubr.bf16.gmra.mxu0 %v2540
        %v7564 = vpop.f32.mrf.mxu0
        %v7565 = vadd.f32 %v7452, %v7564
        %v7566 = vpop.f32.mrf.mxu0
        %v7567 = vadd.f32 %v7454, %v7566
        %v7568 = vpop.f32.mrf.mxu0
        %v7569 = vadd.f32 %v7456, %v7568
        %v7570 = vpop.f32.mrf.mxu0
        %v7571 = vadd.f32 %v7458, %v7570
        %7572 = vmatprep.mubr.bf16.mxu0 %v2549
        %7573 = vmatmul.mubr.bf16.gmra.mxu0 %v2548
        %v7574 = vpop.f32.mrf.mxu0
        %v7575 = vadd.f32 %v7462, %v7574
        %v7576 = vpop.f32.mrf.mxu0
        %v7577 = vadd.f32 %v7464, %v7576
        %v7578 = vpop.f32.mrf.mxu0
        %v7579 = vadd.f32 %v7466, %v7578
        %v7580 = vpop.f32.mrf.mxu0
        %v7581 = vadd.f32 %v7468, %v7580
        %7582 = vmatprep.mubr.bf16.mxu0 %v2557
        %7583 = vmatmul.mubr.bf16.gmra.mxu0 %v2556
        %v7584 = vpop.f32.mrf.mxu0
        %v7585 = vadd.f32 %v7472, %v7584
        %v7586 = vpop.f32.mrf.mxu0
        %v7587 = vadd.f32 %v7474, %v7586
        %v7588 = vpop.f32.mrf.mxu0
        %v7589 = vadd.f32 %v7476, %v7588
        %v7590 = vpop.f32.mrf.mxu0
        %v7591 = vadd.f32 %v7478, %v7590
        %7592 = vmatprep.mubr.bf16.mxu0 %v2565
        %7593 = vmatmul.mubr.bf16.gmra.mxu0 %v2564
        %v7594 = vpop.f32.mrf.mxu0
        %v7595 = vadd.f32 %v7482, %v7594
        %v7596 = vpop.f32.mrf.mxu0
        %v7597 = vadd.f32 %v7484, %v7596
        %v7598 = vpop.f32.mrf.mxu0
        %v7599 = vadd.f32 %v7486, %v7598
        %v7600 = vpop.f32.mrf.mxu0
        %v7601 = vadd.f32 %v7488, %v7600
        %7602 = vdwg.mxu0
        %7603 = vmatprep.subr.bf16.mxu0 %v6523
        %7604 = vmatpush1.bf16.msra.mxu0 %v6522
        %7605 = vmatprep.subr.bf16.mxu0 %v6519
        %7606 = vmatpush1.bf16.msra.mxu0 %v6518
        %7607 = vmatprep.subr.bf16.mxu0 %v6515
        %7608 = vmatpush1.bf16.msra.mxu0 %v6514
        %7609 = vmatprep.subr.bf16.mxu0 %v6511
        %7610 = vmatpush1.bf16.msra.mxu0 %v6510
        %7611 = vmatprep.subr.bf16.mxu0 %v6507
        %7612 = vmatpush1.bf16.msra.mxu0 %v6506
        %7613 = vmatprep.subr.bf16.mxu0 %v6503
        %7614 = vmatpush1.bf16.msra.mxu0 %v6502
        %7615 = vmatprep.subr.bf16.mxu0 %v6499
        %7616 = vmatpush1.bf16.msra.mxu0 %v6498
        %7617 = vmatprep.subr.bf16.mxu0 %v6495
        %7618 = vmatpush1.bf16.msra.mxu0 %v6494
        %7619 = vmatprep.subr.bf16.mxu0 %v6555
        %7620 = vmatpush2.bf16.msra.mxu0 %v6554
        %7621 = vmatprep.subr.bf16.mxu0 %v6551
        %7622 = vmatpush2.bf16.msra.mxu0 %v6550
        %7623 = vmatprep.subr.bf16.mxu0 %v6547
        %7624 = vmatpush2.bf16.msra.mxu0 %v6546
        %7625 = vmatprep.subr.bf16.mxu0 %v6543
        %7626 = vmatpush2.bf16.msra.mxu0 %v6542
        %7627 = vmatprep.subr.bf16.mxu0 %v6539
        %7628 = vmatpush2.bf16.msra.mxu0 %v6538
        %7629 = vmatprep.subr.bf16.mxu0 %v6535
        %7630 = vmatpush2.bf16.msra.mxu0 %v6534
        %7631 = vmatprep.subr.bf16.mxu0 %v6531
        %7632 = vmatpush2.bf16.msra.mxu0 %v6530
        %7633 = vmatprep.subr.bf16.mxu0 %v6527
        %7634 = vmatpush2.bf16.msra.mxu0 %v6526
        %7635 = vmatprep.mubr.bf16.mxu0 %v2511
        %7636 = vmatmul.mubr.bf16.gmra.mxu0 %v2510
        %v7637 = vpop.f32.mrf.mxu0
        %v7638 = vadd.f32 %v7525, %v7637
        %v7639 = vpop.f32.mrf.mxu0
        %v7640 = vadd.f32 %v7527, %v7639
        %v7641 = vpop.f32.mrf.mxu0
        %v7642 = vadd.f32 %v7529, %v7641
        %v7643 = vpop.f32.mrf.mxu0
        %v7644 = vadd.f32 %v7531, %v7643
        %7645 = vmatprep.mubr.bf16.mxu0 %v2519
        %7646 = vmatmul.mubr.bf16.gmra.mxu0 %v2518
        %v7647 = vpop.f32.mrf.mxu0
        %v7648 = vadd.f32 %v7535, %v7647
        %v7649 = vpop.f32.mrf.mxu0
        %v7650 = vadd.f32 %v7537, %v7649
        %v7651 = vpop.f32.mrf.mxu0
        %v7652 = vadd.f32 %v7539, %v7651
        %v7653 = vpop.f32.mrf.mxu0
        %v7654 = vadd.f32 %v7541, %v7653
        %7655 = vmatprep.mubr.bf16.mxu0 %v2527
        %7656 = vmatmul.mubr.bf16.gmra.mxu0 %v2526
        %v7657 = vpop.f32.mrf.mxu0
        %v7658 = vadd.f32 %v7545, %v7657
        %v7659 = vpop.f32.mrf.mxu0
        %v7660 = vadd.f32 %v7547, %v7659
        %v7661 = vpop.f32.mrf.mxu0
        %v7662 = vadd.f32 %v7549, %v7661
        %v7663 = vpop.f32.mrf.mxu0
        %v7664 = vadd.f32 %v7551, %v7663
        %7665 = vmatprep.mubr.bf16.mxu0 %v2535
        %7666 = vmatmul.mubr.bf16.gmra.mxu0 %v2534
        %v7667 = vpop.f32.mrf.mxu0
        %v7668 = vadd.f32 %v7555, %v7667
        %v7669 = vpop.f32.mrf.mxu0
        %v7670 = vadd.f32 %v7557, %v7669
        %v7671 = vpop.f32.mrf.mxu0
        %v7672 = vadd.f32 %v7559, %v7671
        %v7673 = vpop.f32.mrf.mxu0
        %v7674 = vadd.f32 %v7561, %v7673
        %7675 = vmatprep.mubr.bf16.mxu0 %v2543
        %7676 = vmatmul.mubr.bf16.gmra.mxu0 %v2542
        %v7677 = vpop.f32.mrf.mxu0
        %v7678 = vadd.f32 %v7565, %v7677
        %v7679 = vpop.f32.mrf.mxu0
        %v7680 = vadd.f32 %v7567, %v7679
        %v7681 = vpop.f32.mrf.mxu0
        %v7682 = vadd.f32 %v7569, %v7681
        %v7683 = vpop.f32.mrf.mxu0
        %v7684 = vadd.f32 %v7571, %v7683
        %7685 = vmatprep.mubr.bf16.mxu0 %v2551
        %7686 = vmatmul.mubr.bf16.gmra.mxu0 %v2550
        %v7687 = vpop.f32.mrf.mxu0
        %v7688 = vadd.f32 %v7575, %v7687
        %v7689 = vpop.f32.mrf.mxu0
        %v7690 = vadd.f32 %v7577, %v7689
        %v7691 = vpop.f32.mrf.mxu0
        %v7692 = vadd.f32 %v7579, %v7691
        %v7693 = vpop.f32.mrf.mxu0
        %v7694 = vadd.f32 %v7581, %v7693
        %7695 = vmatprep.mubr.bf16.mxu0 %v2559
        %7696 = vmatmul.mubr.bf16.gmra.mxu0 %v2558
        %v7697 = vpop.f32.mrf.mxu0
        %v7698 = vadd.f32 %v7585, %v7697
        %v7699 = vpop.f32.mrf.mxu0
        %v7700 = vadd.f32 %v7587, %v7699
        %v7701 = vpop.f32.mrf.mxu0
        %v7702 = vadd.f32 %v7589, %v7701
        %v7703 = vpop.f32.mrf.mxu0
        %v7704 = vadd.f32 %v7591, %v7703
        %7705 = vmatprep.mubr.bf16.mxu0 %v2567
        %7706 = vmatmul.mubr.bf16.gmra.mxu0 %v2566
        %v7707 = vpop.f32.mrf.mxu0
        %v7708 = vadd.f32 %v7595, %v7707
        %v7709 = vpop.f32.mrf.mxu0
        %v7710 = vadd.f32 %v7597, %v7709
        %v7711 = vpop.f32.mrf.mxu0
        %v7712 = vadd.f32 %v7599, %v7711
        %v7713 = vpop.f32.mrf.mxu0
        %v7714 = vadd.f32 %v7601, %v7713
        %7715 = vdwg.mxu0
        %vm7716 = vcmp.gt.f32.partialorder %v7186, 0.0
        %vm7717 = vcmp.gt.f32.partialorder %v7188, 0.0
        %vm7718 = vcmp.gt.f32.partialorder %v7638, 0.0
        %vm7719 = vcmp.gt.f32.partialorder %v7640, 0.0
        %vm7720 = vcmp.gt.f32.partialorder %v7190, 0.0
        %vm7721 = vcmp.gt.f32.partialorder %v7192, 0.0
        %vm7722 = vcmp.gt.f32.partialorder %v7642, 0.0
        %vm7723 = vcmp.gt.f32.partialorder %v7644, 0.0
        %vm7724 = vcmp.gt.f32.partialorder %v7196, 0.0
        %vm7725 = vcmp.gt.f32.partialorder %v7198, 0.0
        %vm7726 = vcmp.gt.f32.partialorder %v7648, 0.0
        %vm7727 = vcmp.gt.f32.partialorder %v7650, 0.0
        %vm7728 = vcmp.gt.f32.partialorder %v7200, 0.0
        %vm7729 = vcmp.gt.f32.partialorder %v7202, 0.0
        %vm7730 = vcmp.gt.f32.partialorder %v7652, 0.0
        %vm7731 = vcmp.gt.f32.partialorder %v7654, 0.0
        %vm7732 = vcmp.gt.f32.partialorder %v7206, 0.0
        %vm7733 = vcmp.gt.f32.partialorder %v7208, 0.0
        %vm7734 = vcmp.gt.f32.partialorder %v7658, 0.0
        %vm7735 = vcmp.gt.f32.partialorder %v7660, 0.0
        %vm7736 = vcmp.gt.f32.partialorder %v7210, 0.0
        %vm7737 = vcmp.gt.f32.partialorder %v7212, 0.0
        %vm7738 = vcmp.gt.f32.partialorder %v7662, 0.0
        %vm7739 = vcmp.gt.f32.partialorder %v7664, 0.0
        %vm7740 = vcmp.gt.f32.partialorder %v7216, 0.0
        %vm7741 = vcmp.gt.f32.partialorder %v7218, 0.0
        %vm7742 = vcmp.gt.f32.partialorder %v7668, 0.0
        %vm7743 = vcmp.gt.f32.partialorder %v7670, 0.0
        %vm7744 = vcmp.gt.f32.partialorder %v7220, 0.0
        %vm7745 = vcmp.gt.f32.partialorder %v7222, 0.0
        %vm7746 = vcmp.gt.f32.partialorder %v7672, 0.0
        %vm7747 = vcmp.gt.f32.partialorder %v7674, 0.0
        %vm7748 = vcmp.gt.f32.partialorder %v7226, 0.0
        %vm7749 = vcmp.gt.f32.partialorder %v7228, 0.0
        %vm7750 = vcmp.gt.f32.partialorder %v7678, 0.0
        %vm7751 = vcmp.gt.f32.partialorder %v7680, 0.0
        %vm7752 = vcmp.gt.f32.partialorder %v7230, 0.0
        %vm7753 = vcmp.gt.f32.partialorder %v7232, 0.0
        %vm7754 = vcmp.gt.f32.partialorder %v7682, 0.0
        %vm7755 = vcmp.gt.f32.partialorder %v7684, 0.0
        %vm7756 = vcmp.gt.f32.partialorder %v7236, 0.0
        %vm7757 = vcmp.gt.f32.partialorder %v7238, 0.0
        %vm7758 = vcmp.gt.f32.partialorder %v7688, 0.0
        %vm7759 = vcmp.gt.f32.partialorder %v7690, 0.0
        %vm7760 = vcmp.gt.f32.partialorder %v7240, 0.0
        %vm7761 = vcmp.gt.f32.partialorder %v7242, 0.0
        %vm7762 = vcmp.gt.f32.partialorder %v7692, 0.0
        %vm7763 = vcmp.gt.f32.partialorder %v7694, 0.0
        %vm7764 = vcmp.gt.f32.partialorder %v7246, 0.0
        %vm7765 = vcmp.gt.f32.partialorder %v7248, 0.0
        %vm7766 = vcmp.gt.f32.partialorder %v7698, 0.0
        %vm7767 = vcmp.gt.f32.partialorder %v7700, 0.0
        %vm7768 = vcmp.gt.f32.partialorder %v7250, 0.0
        %vm7769 = vcmp.gt.f32.partialorder %v7252, 0.0
        %vm7770 = vcmp.gt.f32.partialorder %v7702, 0.0
        %vm7771 = vcmp.gt.f32.partialorder %v7704, 0.0
        %vm7772 = vcmp.gt.f32.partialorder %v7256, 0.0
        %vm7773 = vcmp.gt.f32.partialorder %v7258, 0.0
        %vm7774 = vcmp.gt.f32.partialorder %v7708, 0.0
        %vm7775 = vcmp.gt.f32.partialorder %v7710, 0.0
        %vm7776 = vcmp.gt.f32.partialorder %v7260, 0.0
        %vm7777 = vcmp.gt.f32.partialorder %v7262, 0.0
        %vm7778 = vcmp.gt.f32.partialorder %v7712, 0.0
        %vm7779 = vcmp.gt.f32.partialorder %v7714, 0.0
        %v7780 = vmul.f32 %v7186, 0.01
        %v7781 = vmul.f32 %v7188, 0.01
        %v7782 = vmul.f32 %v7638, 0.01
        %v7783 = vmul.f32 %v7640, 0.01
        %v7784 = vmul.f32 %v7190, 0.01
        %v7785 = vmul.f32 %v7192, 0.01
        %v7786 = vmul.f32 %v7642, 0.01
        %v7787 = vmul.f32 %v7644, 0.01
        %v7788 = vmul.f32 %v7196, 0.01
        %v7789 = vmul.f32 %v7198, 0.01
        %v7790 = vmul.f32 %v7648, 0.01
        %v7791 = vmul.f32 %v7650, 0.01
        %v7792 = vmul.f32 %v7200, 0.01
        %v7793 = vmul.f32 %v7202, 0.01
        %v7794 = vmul.f32 %v7652, 0.01
        %v7795 = vmul.f32 %v7654, 0.01
        %v7796 = vmul.f32 %v7206, 0.01
        %v7797 = vmul.f32 %v7208, 0.01
        %v7798 = vmul.f32 %v7658, 0.01
        %v7799 = vmul.f32 %v7660, 0.01
        %v7800 = vmul.f32 %v7210, 0.01
        %v7801 = vmul.f32 %v7212, 0.01
        %v7802 = vmul.f32 %v7662, 0.01
        %v7803 = vmul.f32 %v7664, 0.01
        %v7804 = vmul.f32 %v7216, 0.01
        %v7805 = vmul.f32 %v7218, 0.01
        %v7806 = vmul.f32 %v7668, 0.01
        %v7807 = vmul.f32 %v7670, 0.01
        %v7808 = vmul.f32 %v7220, 0.01
        %v7809 = vmul.f32 %v7222, 0.01
        %v7810 = vmul.f32 %v7672, 0.01
        %v7811 = vmul.f32 %v7674, 0.01
        %v7812 = vmul.f32 %v7226, 0.01
        %v7813 = vmul.f32 %v7228, 0.01
        %v7814 = vmul.f32 %v7678, 0.01
        %v7815 = vmul.f32 %v7680, 0.01
        %v7816 = vmul.f32 %v7230, 0.01
        %v7817 = vmul.f32 %v7232, 0.01
        %v7818 = vmul.f32 %v7682, 0.01
        %v7819 = vmul.f32 %v7684, 0.01
        %v7820 = vmul.f32 %v7236, 0.01
        %v7821 = vmul.f32 %v7238, 0.01
        %v7822 = vmul.f32 %v7688, 0.01
        %v7823 = vmul.f32 %v7690, 0.01
        %v7824 = vmul.f32 %v7240, 0.01
        %v7825 = vmul.f32 %v7242, 0.01
        %v7826 = vmul.f32 %v7692, 0.01
        %v7827 = vmul.f32 %v7694, 0.01
        %v7828 = vmul.f32 %v7246, 0.01
        %v7829 = vmul.f32 %v7248, 0.01
        %v7830 = vmul.f32 %v7698, 0.01
        %v7831 = vmul.f32 %v7700, 0.01
        %v7832 = vmul.f32 %v7250, 0.01
        %v7833 = vmul.f32 %v7252, 0.01
        %v7834 = vmul.f32 %v7702, 0.01
        %v7835 = vmul.f32 %v7704, 0.01
        %v7836 = vmul.f32 %v7256, 0.01
        %v7837 = vmul.f32 %v7258, 0.01
        %v7838 = vmul.f32 %v7708, 0.01
        %v7839 = vmul.f32 %v7710, 0.01
        %v7840 = vmul.f32 %v7260, 0.01
        %v7841 = vmul.f32 %v7262, 0.01
        %v7842 = vmul.f32 %v7712, 0.01
        %v7843 = vmul.f32 %v7714, 0.01
        %v7844 = vsel %vm7716, %v7186, %v7780
        %v7845 = vsel %vm7717, %v7188, %v7781
        %v7846 = vsel %vm7718, %v7638, %v7782
        %v7847 = vsel %vm7719, %v7640, %v7783
        %v7848 = vsel %vm7720, %v7190, %v7784
        %v7849 = vsel %vm7721, %v7192, %v7785
        %v7850 = vsel %vm7722, %v7642, %v7786
        %v7851 = vsel %vm7723, %v7644, %v7787
        %v7852 = vsel %vm7724, %v7196, %v7788
        %v7853 = vsel %vm7725, %v7198, %v7789
        %v7854 = vsel %vm7726, %v7648, %v7790
        %v7855 = vsel %vm7727, %v7650, %v7791
        %v7856 = vsel %vm7728, %v7200, %v7792
        %v7857 = vsel %vm7729, %v7202, %v7793
        %v7858 = vsel %vm7730, %v7652, %v7794
        %v7859 = vsel %vm7731, %v7654, %v7795
        %v7860 = vsel %vm7732, %v7206, %v7796
        %v7861 = vsel %vm7733, %v7208, %v7797
        %v7862 = vsel %vm7734, %v7658, %v7798
        %v7863 = vsel %vm7735, %v7660, %v7799
        %v7864 = vsel %vm7736, %v7210, %v7800
        %v7865 = vsel %vm7737, %v7212, %v7801
        %v7866 = vsel %vm7738, %v7662, %v7802
        %v7867 = vsel %vm7739, %v7664, %v7803
        %v7868 = vsel %vm7740, %v7216, %v7804
        %v7869 = vsel %vm7741, %v7218, %v7805
        %v7870 = vsel %vm7742, %v7668, %v7806
        %v7871 = vsel %vm7743, %v7670, %v7807
        %v7872 = vsel %vm7744, %v7220, %v7808
        %v7873 = vsel %vm7745, %v7222, %v7809
        %v7874 = vsel %vm7746, %v7672, %v7810
        %v7875 = vsel %vm7747, %v7674, %v7811
        %v7876 = vsel %vm7748, %v7226, %v7812
        %v7877 = vsel %vm7749, %v7228, %v7813
        %v7878 = vsel %vm7750, %v7678, %v7814
        %v7879 = vsel %vm7751, %v7680, %v7815
        %v7880 = vsel %vm7752, %v7230, %v7816
        %v7881 = vsel %vm7753, %v7232, %v7817
        %v7882 = vsel %vm7754, %v7682, %v7818
        %v7883 = vsel %vm7755, %v7684, %v7819
        %v7884 = vsel %vm7756, %v7236, %v7820
        %v7885 = vsel %vm7757, %v7238, %v7821
        %v7886 = vsel %vm7758, %v7688, %v7822
        %v7887 = vsel %vm7759, %v7690, %v7823
        %v7888 = vsel %vm7760, %v7240, %v7824
        %v7889 = vsel %vm7761, %v7242, %v7825
        %v7890 = vsel %vm7762, %v7692, %v7826
        %v7891 = vsel %vm7763, %v7694, %v7827
        %v7892 = vsel %vm7764, %v7246, %v7828
        %v7893 = vsel %vm7765, %v7248, %v7829
        %v7894 = vsel %vm7766, %v7698, %v7830
        %v7895 = vsel %vm7767, %v7700, %v7831
        %v7896 = vsel %vm7768, %v7250, %v7832
        %v7897 = vsel %vm7769, %v7252, %v7833
        %v7898 = vsel %vm7770, %v7702, %v7834
        %v7899 = vsel %vm7771, %v7704, %v7835
        %v7900 = vsel %vm7772, %v7256, %v7836
        %v7901 = vsel %vm7773, %v7258, %v7837
        %v7902 = vsel %vm7774, %v7708, %v7838
        %v7903 = vsel %vm7775, %v7710, %v7839
        %v7904 = vsel %vm7776, %v7260, %v7840
        %v7905 = vsel %vm7777, %v7262, %v7841
        %v7906 = vsel %vm7778, %v7712, %v7842
        %v7907 = vsel %vm7779, %v7714, %v7843
        %v7908 = vpack.c.bf16 %v7848, %v7844
        %v7909 = vpack.c.bf16 %v7849, %v7845
        %v7910 = vpack.c.bf16 %v7850, %v7846
        %v7911 = vpack.c.bf16 %v7851, %v7847
        %v7912 = vpack.c.bf16 %v7856, %v7852
        %v7913 = vpack.c.bf16 %v7857, %v7853
        %v7914 = vpack.c.bf16 %v7858, %v7854
        %v7915 = vpack.c.bf16 %v7859, %v7855
        %v7916 = vpack.c.bf16 %v7864, %v7860
        %v7917 = vpack.c.bf16 %v7865, %v7861
        %v7918 = vpack.c.bf16 %v7866, %v7862
        %v7919 = vpack.c.bf16 %v7867, %v7863
        %v7920 = vpack.c.bf16 %v7872, %v7868
        %v7921 = vpack.c.bf16 %v7873, %v7869
        %v7922 = vpack.c.bf16 %v7874, %v7870
        %v7923 = vpack.c.bf16 %v7875, %v7871
        %v7924 = vpack.c.bf16 %v7880, %v7876
        %v7925 = vpack.c.bf16 %v7881, %v7877
        %v7926 = vpack.c.bf16 %v7882, %v7878
        %v7927 = vpack.c.bf16 %v7883, %v7879
        %v7928 = vpack.c.bf16 %v7888, %v7884
        %v7929 = vpack.c.bf16 %v7889, %v7885
        %v7930 = vpack.c.bf16 %v7890, %v7886
        %v7931 = vpack.c.bf16 %v7891, %v7887
        %v7932 = vpack.c.bf16 %v7896, %v7892
        %v7933 = vpack.c.bf16 %v7897, %v7893
        %v7934 = vpack.c.bf16 %v7898, %v7894
        %v7935 = vpack.c.bf16 %v7899, %v7895
        %v7936 = vpack.c.bf16 %v7904, %v7900
        %v7937 = vpack.c.bf16 %v7905, %v7901
        %v7938 = vpack.c.bf16 %v7906, %v7902
        %v7939 = vpack.c.bf16 %v7907, %v7903
        %v7940 = vld [vmem:[%s7 + $0x18] sm:$0x1]
        %v7941 = vld [vmem:[%s7 + $0x19] sm:$0x1]
        %v7942 = vld [vmem:[%s5] sm:$0xf]
        %v7943 = vld [vmem:[%s5 + $0x4] sm:$0xf]
        %v7944 = vld [vmem:[%s5 + $0x8] sm:$0xf]
        %v7945 = vld [vmem:[%s5 + $0xc] sm:$0xf]
        %v7946 = vld [vmem:[%s5 + $0x10] sm:$0xf]
        %v7947 = vld [vmem:[%s5 + $0x14] sm:$0xf]
        %v7948 = vld [vmem:[%s5 + $0x18] sm:$0xf]
        %v7949 = vld [vmem:[%s5 + $0x1c] sm:$0xf]
        %v7950 = vld [vmem:[%s5 + $0x20] sm:$0xf]
        %v7951 = vld [vmem:[%s5 + $0x24] sm:$0xf]
        %v7952 = vld [vmem:[%s5 + $0x28] sm:$0xf]
        %v7953 = vld [vmem:[%s5 + $0x2c] sm:$0xf]
        %v7954 = vld [vmem:[%s5 + $0x30] sm:$0xf]
        %v7955 = vld [vmem:[%s5 + $0x34] sm:$0xf]
        %v7956 = vld [vmem:[%s5 + $0x38] sm:$0xf]
        %v7957 = vld [vmem:[%s5 + $0x3c] sm:$0xf]
        %v7958 = vld [vmem:[%s5 + $0x40] sm:$0xf]
        %v7959 = vld [vmem:[%s5 + $0x44] sm:$0xf]
        %v7960 = vld [vmem:[%s5 + $0x48] sm:$0xf]
        %v7961 = vld [vmem:[%s5 + $0x4c] sm:$0xf]
        %v7962 = vld [vmem:[%s5 + $0x50] sm:$0xf]
        %v7963 = vld [vmem:[%s5 + $0x54] sm:$0xf]
        %v7964 = vld [vmem:[%s5 + $0x58] sm:$0xf]
        %v7965 = vld [vmem:[%s5 + $0x5c] sm:$0xf]
        %v7966 = vld [vmem:[%s5 + $0x60] sm:$0xf]
        %v7967 = vld [vmem:[%s5 + $0x64] sm:$0xf]
        %v7968 = vld [vmem:[%s5 + $0x68] sm:$0xf]
        %v7969 = vld [vmem:[%s5 + $0x6c] sm:$0xf]
        %v7970 = vld [vmem:[%s5 + $0x70] sm:$0xf]
        %v7971 = vld [vmem:[%s5 + $0x74] sm:$0xf]
        %v7972 = vld [vmem:[%s5 + $0x78] sm:$0xf]
        %v7973 = vld [vmem:[%s5 + $0x7c] sm:$0xf]
        %v7974 = vld [vmem:[%s5 + $0x80] sm:$0xf]
        %v7975 = vld [vmem:[%s5 + $0x84] sm:$0xf]
        %v7976 = vld [vmem:[%s5 + $0x88] sm:$0xf]
        %v7977 = vld [vmem:[%s5 + $0x8c] sm:$0xf]
        %v7978 = vld [vmem:[%s5 + $0x90] sm:$0xf]
        %v7979 = vld [vmem:[%s5 + $0x94] sm:$0xf]
        %v7980 = vld [vmem:[%s5 + $0x98] sm:$0xf]
        %v7981 = vld [vmem:[%s5 + $0x9c] sm:$0xf]
        %v7982 = vld [vmem:[%s5 + $0xa0] sm:$0xf]
        %v7983 = vld [vmem:[%s5 + $0xa4] sm:$0xf]
        %v7984 = vld [vmem:[%s5 + $0xa8] sm:$0xf]
        %v7985 = vld [vmem:[%s5 + $0xac] sm:$0xf]
        %v7986 = vld [vmem:[%s5 + $0xb0] sm:$0xf]
        %v7987 = vld [vmem:[%s5 + $0xb4] sm:$0xf]
        %v7988 = vld [vmem:[%s5 + $0xb8] sm:$0xf]
        %v7989 = vld [vmem:[%s5 + $0xbc] sm:$0xf]
        %v7990 = vld [vmem:[%s5 + $0xc0] sm:$0xf]
        %v7991 = vld [vmem:[%s5 + $0xc4] sm:$0xf]
        %v7992 = vld [vmem:[%s5 + $0xc8] sm:$0xf]
        %v7993 = vld [vmem:[%s5 + $0xcc] sm:$0xf]
        %v7994 = vld [vmem:[%s5 + $0xd0] sm:$0xf]
        %v7995 = vld [vmem:[%s5 + $0xd4] sm:$0xf]
        %v7996 = vld [vmem:[%s5 + $0xd8] sm:$0xf]
        %v7997 = vld [vmem:[%s5 + $0xdc] sm:$0xf]
        %v7998 = vld [vmem:[%s5 + $0xe0] sm:$0xf]
        %v7999 = vld [vmem:[%s5 + $0xe4] sm:$0xf]
        %v8000 = vld [vmem:[%s5 + $0xe8] sm:$0xf]
        %v8001 = vld [vmem:[%s5 + $0xec] sm:$0xf]
        %v8002 = vld [vmem:[%s5 + $0xf0] sm:$0xf]
        %v8003 = vld [vmem:[%s5 + $0xf4] sm:$0xf]
        %v8004 = vld [vmem:[%s5 + $0xf8] sm:$0xf]
        %v8005 = vld [vmem:[%s5 + $0xfc] sm:$0xf]
        %v8007 = vlaneseq
        %v8008 = vshrl.u32 %v8007, 7
        %v8009 = vsub.s32 0, %v8008
        %v8010 = vrot.slane %v7940, %v8009
        %v8076 = vunpack.c.l.b16 %v7942
        %v8077 = vunpack.c.l.b16 %v7943
        %v8078 = vunpack.c.l.b16 %v7944
        %v8079 = vunpack.c.l.b16 %v7945
        %v8080 = vunpack.c.l.b16 %v7946
        %v8081 = vunpack.c.l.b16 %v7947
        %v8082 = vunpack.c.l.b16 %v7948
        %v8083 = vunpack.c.l.b16 %v7949
        %v8084 = vunpack.c.l.b16 %v7950
        %v8085 = vunpack.c.l.b16 %v7951
        %v8086 = vunpack.c.l.b16 %v7952
        %v8087 = vunpack.c.l.b16 %v7953
        %v8088 = vunpack.c.l.b16 %v7954
        %v8089 = vunpack.c.l.b16 %v7955
        %v8090 = vunpack.c.l.b16 %v7956
        %v8091 = vunpack.c.l.b16 %v7957
        %v8092 = vunpack.c.l.b16 %v7958
        %v8093 = vunpack.c.l.b16 %v7959
        %v8094 = vunpack.c.l.b16 %v7960
        %v8095 = vunpack.c.l.b16 %v7961
        %v8096 = vunpack.c.l.b16 %v7962
        %v8097 = vunpack.c.l.b16 %v7963
        %v8098 = vunpack.c.l.b16 %v7964
        %v8099 = vunpack.c.l.b16 %v7965
        %v8100 = vunpack.c.l.b16 %v7966
        %v8101 = vunpack.c.l.b16 %v7967
        %v8102 = vunpack.c.l.b16 %v7968
        %v8103 = vunpack.c.l.b16 %v7969
        %v8104 = vunpack.c.l.b16 %v7970
        %v8105 = vunpack.c.l.b16 %v7971
        %v8106 = vunpack.c.l.b16 %v7972
        %v8107 = vunpack.c.l.b16 %v7973
        %v8108 = vunpack.c.l.b16 %v7974
        %v8109 = vunpack.c.l.b16 %v7975
        %v8110 = vunpack.c.l.b16 %v7976
        %v8111 = vunpack.c.l.b16 %v7977
        %v8112 = vunpack.c.l.b16 %v7978
        %v8113 = vunpack.c.l.b16 %v7979
        %v8114 = vunpack.c.l.b16 %v7980
        %v8115 = vunpack.c.l.b16 %v7981
        %v8116 = vunpack.c.l.b16 %v7982
        %v8117 = vunpack.c.l.b16 %v7983
        %v8118 = vunpack.c.l.b16 %v7984
        %v8119 = vunpack.c.l.b16 %v7985
        %v8120 = vunpack.c.l.b16 %v7986
        %v8121 = vunpack.c.l.b16 %v7987
        %v8122 = vunpack.c.l.b16 %v7988
        %v8123 = vunpack.c.l.b16 %v7989
        %v8124 = vunpack.c.l.b16 %v7990
        %v8125 = vunpack.c.l.b16 %v7991
        %v8126 = vunpack.c.l.b16 %v7992
        %v8127 = vunpack.c.l.b16 %v7993
        %v8128 = vunpack.c.l.b16 %v7994
        %v8129 = vunpack.c.l.b16 %v7995
        %v8130 = vunpack.c.l.b16 %v7996
        %v8131 = vunpack.c.l.b16 %v7997
        %v8132 = vunpack.c.l.b16 %v7998
        %v8133 = vunpack.c.l.b16 %v7999
        %v8134 = vunpack.c.l.b16 %v8000
        %v8135 = vunpack.c.l.b16 %v8001
        %v8136 = vunpack.c.l.b16 %v8002
        %v8137 = vunpack.c.l.b16 %v8003
        %v8138 = vunpack.c.l.b16 %v8004
        %v8139 = vunpack.c.l.b16 %v8005
        %v8140 = vpack.c.b16 %v8077, %v8076
        %v8141 = vpack.c.b16 %v8079, %v8078
        %v8142 = vpack.c.b16 %v8081, %v8080
        %v8143 = vpack.c.b16 %v8083, %v8082
        %v8144 = vpack.c.b16 %v8085, %v8084
        %v8145 = vpack.c.b16 %v8087, %v8086
        %v8146 = vpack.c.b16 %v8089, %v8088
        %v8147 = vpack.c.b16 %v8091, %v8090
        %v8148 = vpack.c.b16 %v8093, %v8092
        %v8149 = vpack.c.b16 %v8095, %v8094
        %v8150 = vpack.c.b16 %v8097, %v8096
        %v8151 = vpack.c.b16 %v8099, %v8098
        %v8152 = vpack.c.b16 %v8101, %v8100
        %v8153 = vpack.c.b16 %v8103, %v8102
        %v8154 = vpack.c.b16 %v8105, %v8104
        %v8155 = vpack.c.b16 %v8107, %v8106
        %v8156 = vpack.c.b16 %v8109, %v8108
        %v8157 = vpack.c.b16 %v8111, %v8110
        %v8158 = vpack.c.b16 %v8113, %v8112
        %v8159 = vpack.c.b16 %v8115, %v8114
        %v8160 = vpack.c.b16 %v8117, %v8116
        %v8161 = vpack.c.b16 %v8119, %v8118
        %v8162 = vpack.c.b16 %v8121, %v8120
        %v8163 = vpack.c.b16 %v8123, %v8122
        %v8164 = vpack.c.b16 %v8125, %v8124
        %v8165 = vpack.c.b16 %v8127, %v8126
        %v8166 = vpack.c.b16 %v8129, %v8128
        %v8167 = vpack.c.b16 %v8131, %v8130
        %v8168 = vpack.c.b16 %v8133, %v8132
        %v8169 = vpack.c.b16 %v8135, %v8134
        %v8170 = vpack.c.b16 %v8137, %v8136
        %v8171 = vpack.c.b16 %v8139, %v8138
        %8204 = vmatprep.subr.bf16.mxu0 0
        %8205 = vmatpush1.bf16.msra.mxu0 %v8147
        %8206 = vmatprep.subr.bf16.mxu0 0
        %8207 = vmatpush1.bf16.msra.mxu0 %v8146
        %8208 = vmatprep.subr.bf16.mxu0 0
        %8209 = vmatpush1.bf16.msra.mxu0 %v8145
        %8210 = vmatprep.subr.bf16.mxu0 0
        %8211 = vmatpush1.bf16.msra.mxu0 %v8144
        %8212 = vmatprep.subr.bf16.mxu0 0
        %8213 = vmatpush1.bf16.msra.mxu0 %v8143
        %8214 = vmatprep.subr.bf16.mxu0 0
        %8215 = vmatpush1.bf16.msra.mxu0 %v8142
        %8216 = vmatprep.subr.bf16.mxu0 0
        %8217 = vmatpush1.bf16.msra.mxu0 %v8141
        %8218 = vmatprep.subr.bf16.mxu0 0
        %8219 = vmatpush1.bf16.msra.mxu0 %v8140
        %8220 = vmatprep.subr.bf16.mxu0 0
        %8221 = vmatpush2.bf16.msra.mxu0 %v8155
        %8222 = vmatprep.subr.bf16.mxu0 0
        %8223 = vmatpush2.bf16.msra.mxu0 %v8154
        %8224 = vmatprep.subr.bf16.mxu0 0
        %8225 = vmatpush2.bf16.msra.mxu0 %v8153
        %8226 = vmatprep.subr.bf16.mxu0 0
        %8227 = vmatpush2.bf16.msra.mxu0 %v8152
        %8228 = vmatprep.subr.bf16.mxu0 0
        %8229 = vmatpush2.bf16.msra.mxu0 %v8151
        %8230 = vmatprep.subr.bf16.mxu0 0
        %8231 = vmatpush2.bf16.msra.mxu0 %v8150
        %8232 = vmatprep.subr.bf16.mxu0 0
        %8233 = vmatpush2.bf16.msra.mxu0 %v8149
        %8234 = vmatprep.subr.bf16.mxu0 0
        %8235 = vmatpush2.bf16.msra.mxu0 %v8148
        %8236 = vmatprep.mubr.bf16.mxu0 %v5224
        %8237 = vmatmul.mubr.bf16.gmra.mxu0 %v5223
        %v8238 = vpop.f32.mrf.mxu0
        %v8239 = vadd.f32 %v8010, %v8238
        %v8240 = vpop.f32.mrf.mxu0
        %v8241 = vpop.f32.mrf.mxu0
        %v8242 = vadd.f32 %v8010, %v8241
        %v8243 = vpop.f32.mrf.mxu0
        %8244 = vmatprep.mubr.bf16.mxu0 %v5228
        %8245 = vmatmul.mubr.bf16.gmra.mxu0 %v5227
        %v8246 = vpop.f32.mrf.mxu0
        %v8247 = vadd.f32 %v8010, %v8246
        %v8248 = vpop.f32.mrf.mxu0
        %v8249 = vpop.f32.mrf.mxu0
        %v8250 = vadd.f32 %v8010, %v8249
        %v8251 = vpop.f32.mrf.mxu0
        %8252 = vmatprep.mubr.bf16.mxu0 %v5232
        %8253 = vmatmul.mubr.bf16.gmra.mxu0 %v5231
        %v8254 = vpop.f32.mrf.mxu0
        %v8255 = vadd.f32 %v8010, %v8254
        %v8256 = vpop.f32.mrf.mxu0
        %v8257 = vpop.f32.mrf.mxu0
        %v8258 = vadd.f32 %v8010, %v8257
        %v8259 = vpop.f32.mrf.mxu0
        %8260 = vmatprep.mubr.bf16.mxu0 %v5236
        %8261 = vmatmul.mubr.bf16.gmra.mxu0 %v5235
        %v8262 = vpop.f32.mrf.mxu0
        %v8263 = vadd.f32 %v8010, %v8262
        %v8264 = vpop.f32.mrf.mxu0
        %v8265 = vpop.f32.mrf.mxu0
        %v8266 = vadd.f32 %v8010, %v8265
        %v8267 = vpop.f32.mrf.mxu0
        %8268 = vmatprep.mubr.bf16.mxu0 %v5240
        %8269 = vmatmul.mubr.bf16.gmra.mxu0 %v5239
        %v8270 = vpop.f32.mrf.mxu0
        %v8271 = vadd.f32 %v8010, %v8270
        %v8272 = vpop.f32.mrf.mxu0
        %v8273 = vpop.f32.mrf.mxu0
        %v8274 = vadd.f32 %v8010, %v8273
        %v8275 = vpop.f32.mrf.mxu0
        %8276 = vmatprep.mubr.bf16.mxu0 %v5244
        %8277 = vmatmul.mubr.bf16.gmra.mxu0 %v5243
        %v8278 = vpop.f32.mrf.mxu0
        %v8279 = vadd.f32 %v8010, %v8278
        %v8280 = vpop.f32.mrf.mxu0
        %v8281 = vpop.f32.mrf.mxu0
        %v8282 = vadd.f32 %v8010, %v8281
        %v8283 = vpop.f32.mrf.mxu0
        %8284 = vmatprep.mubr.bf16.mxu0 %v5248
        %8285 = vmatmul.mubr.bf16.gmra.mxu0 %v5247
        %v8286 = vpop.f32.mrf.mxu0
        %v8287 = vadd.f32 %v8010, %v8286
        %v8288 = vpop.f32.mrf.mxu0
        %v8289 = vpop.f32.mrf.mxu0
        %v8290 = vadd.f32 %v8010, %v8289
        %v8291 = vpop.f32.mrf.mxu0
        %8292 = vmatprep.mubr.bf16.mxu0 %v5252
        %8293 = vmatmul.mubr.bf16.gmra.mxu0 %v5251
        %v8294 = vpop.f32.mrf.mxu0
        %v8295 = vadd.f32 %v8010, %v8294
        %v8296 = vpop.f32.mrf.mxu0
        %v8297 = vpop.f32.mrf.mxu0
        %v8298 = vadd.f32 %v8010, %v8297
        %v8299 = vpop.f32.mrf.mxu0
        %8300 = vdwg.mxu0
        %8301 = vmatprep.subr.bf16.mxu0 0
        %8302 = vmatpush1.bf16.msra.mxu0 %v8163
        %8303 = vmatprep.subr.bf16.mxu0 0
        %8304 = vmatpush1.bf16.msra.mxu0 %v8162
        %8305 = vmatprep.subr.bf16.mxu0 0
        %8306 = vmatpush1.bf16.msra.mxu0 %v8161
        %8307 = vmatprep.subr.bf16.mxu0 0
        %8308 = vmatpush1.bf16.msra.mxu0 %v8160
        %8309 = vmatprep.subr.bf16.mxu0 0
        %8310 = vmatpush1.bf16.msra.mxu0 %v8159
        %8311 = vmatprep.subr.bf16.mxu0 0
        %8312 = vmatpush1.bf16.msra.mxu0 %v8158
        %8313 = vmatprep.subr.bf16.mxu0 0
        %8314 = vmatpush1.bf16.msra.mxu0 %v8157
        %8315 = vmatprep.subr.bf16.mxu0 0
        %8316 = vmatpush1.bf16.msra.mxu0 %v8156
        %8317 = vmatprep.subr.bf16.mxu0 0
        %8318 = vmatpush2.bf16.msra.mxu0 %v8171
        %8319 = vmatprep.subr.bf16.mxu0 0
        %8320 = vmatpush2.bf16.msra.mxu0 %v8170
        %8321 = vmatprep.subr.bf16.mxu0 0
        %8322 = vmatpush2.bf16.msra.mxu0 %v8169
        %8323 = vmatprep.subr.bf16.mxu0 0
        %8324 = vmatpush2.bf16.msra.mxu0 %v8168
        %8325 = vmatprep.subr.bf16.mxu0 0
        %8326 = vmatpush2.bf16.msra.mxu0 %v8167
        %8327 = vmatprep.subr.bf16.mxu0 0
        %8328 = vmatpush2.bf16.msra.mxu0 %v8166
        %8329 = vmatprep.subr.bf16.mxu0 0
        %8330 = vmatpush2.bf16.msra.mxu0 %v8165
        %8331 = vmatprep.subr.bf16.mxu0 0
        %8332 = vmatpush2.bf16.msra.mxu0 %v8164
        %8333 = vmatprep.mubr.bf16.mxu0 %v5226
        %8334 = vmatmul.mubr.bf16.gmra.mxu0 %v5225
        %v8335 = vpop.f32.mrf.mxu0
        %v8336 = vadd.f32 %v8239, %v8335
        %v8337 = vpop.f32.mrf.mxu0
        %v8338 = vpop.f32.mrf.mxu0
        %v8339 = vadd.f32 %v8242, %v8338
        %v8340 = vpop.f32.mrf.mxu0
        %8341 = vmatprep.mubr.bf16.mxu0 %v5230
        %8342 = vmatmul.mubr.bf16.gmra.mxu0 %v5229
        %v8343 = vpop.f32.mrf.mxu0
        %v8344 = vadd.f32 %v8247, %v8343
        %v8345 = vpop.f32.mrf.mxu0
        %v8346 = vpop.f32.mrf.mxu0
        %v8347 = vadd.f32 %v8250, %v8346
        %v8348 = vpop.f32.mrf.mxu0
        %8349 = vmatprep.mubr.bf16.mxu0 %v5234
        %8350 = vmatmul.mubr.bf16.gmra.mxu0 %v5233
        %v8351 = vpop.f32.mrf.mxu0
        %v8352 = vadd.f32 %v8255, %v8351
        %v8353 = vpop.f32.mrf.mxu0
        %v8354 = vpop.f32.mrf.mxu0
        %v8355 = vadd.f32 %v8258, %v8354
        %v8356 = vpop.f32.mrf.mxu0
        %8357 = vmatprep.mubr.bf16.mxu0 %v5238
        %8358 = vmatmul.mubr.bf16.gmra.mxu0 %v5237
        %v8359 = vpop.f32.mrf.mxu0
        %v8360 = vadd.f32 %v8263, %v8359
        %v8361 = vpop.f32.mrf.mxu0
        %v8362 = vpop.f32.mrf.mxu0
        %v8363 = vadd.f32 %v8266, %v8362
        %v8364 = vpop.f32.mrf.mxu0
        %8365 = vmatprep.mubr.bf16.mxu0 %v5242
        %8366 = vmatmul.mubr.bf16.gmra.mxu0 %v5241
        %v8367 = vpop.f32.mrf.mxu0
        %v8368 = vadd.f32 %v8271, %v8367
        %v8369 = vpop.f32.mrf.mxu0
        %v8370 = vpop.f32.mrf.mxu0
        %v8371 = vadd.f32 %v8274, %v8370
        %v8372 = vpop.f32.mrf.mxu0
        %8373 = vmatprep.mubr.bf16.mxu0 %v5246
        %8374 = vmatmul.mubr.bf16.gmra.mxu0 %v5245
        %v8375 = vpop.f32.mrf.mxu0
        %v8376 = vadd.f32 %v8279, %v8375
        %v8377 = vpop.f32.mrf.mxu0
        %v8378 = vpop.f32.mrf.mxu0
        %v8379 = vadd.f32 %v8282, %v8378
        %v8380 = vpop.f32.mrf.mxu0
        %8381 = vmatprep.mubr.bf16.mxu0 %v5250
        %8382 = vmatmul.mubr.bf16.gmra.mxu0 %v5249
        %v8383 = vpop.f32.mrf.mxu0
        %v8384 = vadd.f32 %v8287, %v8383
        %v8385 = vpop.f32.mrf.mxu0
        %v8386 = vpop.f32.mrf.mxu0
        %v8387 = vadd.f32 %v8290, %v8386
        %v8388 = vpop.f32.mrf.mxu0
        %8389 = vmatprep.mubr.bf16.mxu0 %v5254
        %8390 = vmatmul.mubr.bf16.gmra.mxu0 %v5253
        %v8391 = vpop.f32.mrf.mxu0
        %v8392 = vadd.f32 %v8295, %v8391
        %v8393 = vpop.f32.mrf.mxu0
        %v8394 = vpop.f32.mrf.mxu0
        %v8395 = vadd.f32 %v8298, %v8394
        %v8396 = vpop.f32.mrf.mxu0
        %8397 = vdwg.mxu0
        %v8398 = vld [vmem:[%s422] sm:$0xff]
        %v8399 = vld [vmem:[%s422 + $0x8] sm:$0xff]
        %v8400 = vld [vmem:[%s422 + $0x10] sm:$0xff]
        %v8401 = vld [vmem:[%s422 + $0x18] sm:$0xff]
        %v8402 = vld [vmem:[%s422 + $0x20] sm:$0xff]
        %v8403 = vld [vmem:[%s422 + $0x28] sm:$0xff]
        %v8404 = vld [vmem:[%s422 + $0x30] sm:$0xff]
        %v8405 = vld [vmem:[%s422 + $0x38] sm:$0xff]
        %v8406 = vld [vmem:[%s422 + $0x40] sm:$0xff]
        %v8407 = vld [vmem:[%s422 + $0x48] sm:$0xff]
        %v8408 = vld [vmem:[%s422 + $0x50] sm:$0xff]
        %v8409 = vld [vmem:[%s422 + $0x58] sm:$0xff]
        %v8410 = vld [vmem:[%s422 + $0x60] sm:$0xff]
        %v8411 = vld [vmem:[%s422 + $0x68] sm:$0xff]
        %v8412 = vld [vmem:[%s422 + $0x70] sm:$0xff]
        %v8413 = vld [vmem:[%s422 + $0x78] sm:$0xff]
        %v8414 = vmul.f32 %v8336, %v8398
        %v8415 = vmul.f32 %v8339, %v8399
        %v8416 = vmul.f32 %v8344, %v8400
        %v8417 = vmul.f32 %v8347, %v8401
        %v8418 = vmul.f32 %v8352, %v8402
        %v8419 = vmul.f32 %v8355, %v8403
        %v8420 = vmul.f32 %v8360, %v8404
        %v8421 = vmul.f32 %v8363, %v8405
        %v8422 = vmul.f32 %v8368, %v8406
        %v8423 = vmul.f32 %v8371, %v8407
        %v8424 = vmul.f32 %v8376, %v8408
        %v8425 = vmul.f32 %v8379, %v8409
        %v8426 = vmul.f32 %v8384, %v8410
        %v8427 = vmul.f32 %v8387, %v8411
        %v8428 = vmul.f32 %v8392, %v8412
        %v8429 = vmul.f32 %v8395, %v8413
        %v8430 = vld [vmem:[%s6] sm:$0xf]
        %v8431 = vld [vmem:[%s6 + $0x4] sm:$0xf]
        %v8432 = vld [vmem:[%s6 + $0x8] sm:$0xf]
        %v8433 = vld [vmem:[%s6 + $0xc] sm:$0xf]
        %v8434 = vld [vmem:[%s6 + $0x10] sm:$0xf]
        %v8435 = vld [vmem:[%s6 + $0x14] sm:$0xf]
        %v8436 = vld [vmem:[%s6 + $0x18] sm:$0xf]
        %v8437 = vld [vmem:[%s6 + $0x1c] sm:$0xf]
        %v8438 = vld [vmem:[%s6 + $0x20] sm:$0xf]
        %v8439 = vld [vmem:[%s6 + $0x24] sm:$0xf]
        %v8440 = vld [vmem:[%s6 + $0x28] sm:$0xf]
        %v8441 = vld [vmem:[%s6 + $0x2c] sm:$0xf]
        %v8442 = vld [vmem:[%s6 + $0x30] sm:$0xf]
        %v8443 = vld [vmem:[%s6 + $0x34] sm:$0xf]
        %v8444 = vld [vmem:[%s6 + $0x38] sm:$0xf]
        %v8445 = vld [vmem:[%s6 + $0x3c] sm:$0xf]
        %v8446 = vld [vmem:[%s6 + $0x40] sm:$0xf]
        %v8447 = vld [vmem:[%s6 + $0x44] sm:$0xf]
        %v8448 = vld [vmem:[%s6 + $0x48] sm:$0xf]
        %v8449 = vld [vmem:[%s6 + $0x4c] sm:$0xf]
        %v8450 = vld [vmem:[%s6 + $0x50] sm:$0xf]
        %v8451 = vld [vmem:[%s6 + $0x54] sm:$0xf]
        %v8452 = vld [vmem:[%s6 + $0x58] sm:$0xf]
        %v8453 = vld [vmem:[%s6 + $0x5c] sm:$0xf]
        %v8454 = vld [vmem:[%s6 + $0x60] sm:$0xf]
        %v8455 = vld [vmem:[%s6 + $0x64] sm:$0xf]
        %v8456 = vld [vmem:[%s6 + $0x68] sm:$0xf]
        %v8457 = vld [vmem:[%s6 + $0x6c] sm:$0xf]
        %v8458 = vld [vmem:[%s6 + $0x70] sm:$0xf]
        %v8459 = vld [vmem:[%s6 + $0x74] sm:$0xf]
        %v8460 = vld [vmem:[%s6 + $0x78] sm:$0xf]
        %v8461 = vld [vmem:[%s6 + $0x7c] sm:$0xf]
        %v8462 = vld [vmem:[%s6 + $0x80] sm:$0xf]
        %v8463 = vld [vmem:[%s6 + $0x84] sm:$0xf]
        %v8464 = vld [vmem:[%s6 + $0x88] sm:$0xf]
        %v8465 = vld [vmem:[%s6 + $0x8c] sm:$0xf]
        %v8466 = vld [vmem:[%s6 + $0x90] sm:$0xf]
        %v8467 = vld [vmem:[%s6 + $0x94] sm:$0xf]
        %v8468 = vld [vmem:[%s6 + $0x98] sm:$0xf]
        %v8469 = vld [vmem:[%s6 + $0x9c] sm:$0xf]
        %v8470 = vld [vmem:[%s6 + $0xa0] sm:$0xf]
        %v8471 = vld [vmem:[%s6 + $0xa4] sm:$0xf]
        %v8472 = vld [vmem:[%s6 + $0xa8] sm:$0xf]
        %v8473 = vld [vmem:[%s6 + $0xac] sm:$0xf]
        %v8474 = vld [vmem:[%s6 + $0xb0] sm:$0xf]
        %v8475 = vld [vmem:[%s6 + $0xb4] sm:$0xf]
        %v8476 = vld [vmem:[%s6 + $0xb8] sm:$0xf]
        %v8477 = vld [vmem:[%s6 + $0xbc] sm:$0xf]
        %v8478 = vld [vmem:[%s6 + $0xc0] sm:$0xf]
        %v8479 = vld [vmem:[%s6 + $0xc4] sm:$0xf]
        %v8480 = vld [vmem:[%s6 + $0xc8] sm:$0xf]
        %v8481 = vld [vmem:[%s6 + $0xcc] sm:$0xf]
        %v8482 = vld [vmem:[%s6 + $0xd0] sm:$0xf]
        %v8483 = vld [vmem:[%s6 + $0xd4] sm:$0xf]
        %v8484 = vld [vmem:[%s6 + $0xd8] sm:$0xf]
        %v8485 = vld [vmem:[%s6 + $0xdc] sm:$0xf]
        %v8486 = vld [vmem:[%s6 + $0xe0] sm:$0xf]
        %v8487 = vld [vmem:[%s6 + $0xe4] sm:$0xf]
        %v8488 = vld [vmem:[%s6 + $0xe8] sm:$0xf]
        %v8489 = vld [vmem:[%s6 + $0xec] sm:$0xf]
        %v8490 = vld [vmem:[%s6 + $0xf0] sm:$0xf]
        %v8491 = vld [vmem:[%s6 + $0xf4] sm:$0xf]
        %v8492 = vld [vmem:[%s6 + $0xf8] sm:$0xf]
        %v8493 = vld [vmem:[%s6 + $0xfc] sm:$0xf]
        %v8495 = vlaneseq
        %v8496 = vshrl.u32 %v8495, 7
        %v8497 = vsub.s32 0, %v8496
        %v8498 = vrot.slane %v7941, %v8497
        %v8564 = vunpack.c.l.b16 %v8430
        %v8565 = vunpack.c.l.b16 %v8431
        %v8566 = vunpack.c.l.b16 %v8432
        %v8567 = vunpack.c.l.b16 %v8433
        %v8568 = vunpack.c.l.b16 %v8434
        %v8569 = vunpack.c.l.b16 %v8435
        %v8570 = vunpack.c.l.b16 %v8436
        %v8571 = vunpack.c.l.b16 %v8437
        %v8572 = vunpack.c.l.b16 %v8438
        %v8573 = vunpack.c.l.b16 %v8439
        %v8574 = vunpack.c.l.b16 %v8440
        %v8575 = vunpack.c.l.b16 %v8441
        %v8576 = vunpack.c.l.b16 %v8442
        %v8577 = vunpack.c.l.b16 %v8443
        %v8578 = vunpack.c.l.b16 %v8444
        %v8579 = vunpack.c.l.b16 %v8445
        %v8580 = vunpack.c.l.b16 %v8446
        %v8581 = vunpack.c.l.b16 %v8447
        %v8582 = vunpack.c.l.b16 %v8448
        %v8583 = vunpack.c.l.b16 %v8449
        %v8584 = vunpack.c.l.b16 %v8450
        %v8585 = vunpack.c.l.b16 %v8451
        %v8586 = vunpack.c.l.b16 %v8452
        %v8587 = vunpack.c.l.b16 %v8453
        %v8588 = vunpack.c.l.b16 %v8454
        %v8589 = vunpack.c.l.b16 %v8455
        %v8590 = vunpack.c.l.b16 %v8456
        %v8591 = vunpack.c.l.b16 %v8457
        %v8592 = vunpack.c.l.b16 %v8458
        %v8593 = vunpack.c.l.b16 %v8459
        %v8594 = vunpack.c.l.b16 %v8460
        %v8595 = vunpack.c.l.b16 %v8461
        %v8596 = vunpack.c.l.b16 %v8462
        %v8597 = vunpack.c.l.b16 %v8463
        %v8598 = vunpack.c.l.b16 %v8464
        %v8599 = vunpack.c.l.b16 %v8465
        %v8600 = vunpack.c.l.b16 %v8466
        %v8601 = vunpack.c.l.b16 %v8467
        %v8602 = vunpack.c.l.b16 %v8468
        %v8603 = vunpack.c.l.b16 %v8469
        %v8604 = vunpack.c.l.b16 %v8470
        %v8605 = vunpack.c.l.b16 %v8471
        %v8606 = vunpack.c.l.b16 %v8472
        %v8607 = vunpack.c.l.b16 %v8473
        %v8608 = vunpack.c.l.b16 %v8474
        %v8609 = vunpack.c.l.b16 %v8475
        %v8610 = vunpack.c.l.b16 %v8476
        %v8611 = vunpack.c.l.b16 %v8477
        %v8612 = vunpack.c.l.b16 %v8478
        %v8613 = vunpack.c.l.b16 %v8479
        %v8614 = vunpack.c.l.b16 %v8480
        %v8615 = vunpack.c.l.b16 %v8481
        %v8616 = vunpack.c.l.b16 %v8482
        %v8617 = vunpack.c.l.b16 %v8483
        %v8618 = vunpack.c.l.b16 %v8484
        %v8619 = vunpack.c.l.b16 %v8485
        %v8620 = vunpack.c.l.b16 %v8486
        %v8621 = vunpack.c.l.b16 %v8487
        %v8622 = vunpack.c.l.b16 %v8488
        %v8623 = vunpack.c.l.b16 %v8489
        %v8624 = vunpack.c.l.b16 %v8490
        %v8625 = vunpack.c.l.b16 %v8491
        %v8626 = vunpack.c.l.b16 %v8492
        %v8627 = vunpack.c.l.b16 %v8493
        %v8628 = vpack.c.b16 %v8565, %v8564
        %v8629 = vpack.c.b16 %v8567, %v8566
        %v8630 = vpack.c.b16 %v8569, %v8568
        %v8631 = vpack.c.b16 %v8571, %v8570
        %v8632 = vpack.c.b16 %v8573, %v8572
        %v8633 = vpack.c.b16 %v8575, %v8574
        %v8634 = vpack.c.b16 %v8577, %v8576
        %v8635 = vpack.c.b16 %v8579, %v8578
        %v8636 = vpack.c.b16 %v8581, %v8580
        %v8637 = vpack.c.b16 %v8583, %v8582
        %v8638 = vpack.c.b16 %v8585, %v8584
        %v8639 = vpack.c.b16 %v8587, %v8586
        %v8640 = vpack.c.b16 %v8589, %v8588
        %v8641 = vpack.c.b16 %v8591, %v8590
        %v8642 = vpack.c.b16 %v8593, %v8592
        %v8643 = vpack.c.b16 %v8595, %v8594
        %v8644 = vpack.c.b16 %v8597, %v8596
        %v8645 = vpack.c.b16 %v8599, %v8598
        %v8646 = vpack.c.b16 %v8601, %v8600
        %v8647 = vpack.c.b16 %v8603, %v8602
        %v8648 = vpack.c.b16 %v8605, %v8604
        %v8649 = vpack.c.b16 %v8607, %v8606
        %v8650 = vpack.c.b16 %v8609, %v8608
        %v8651 = vpack.c.b16 %v8611, %v8610
        %v8652 = vpack.c.b16 %v8613, %v8612
        %v8653 = vpack.c.b16 %v8615, %v8614
        %v8654 = vpack.c.b16 %v8617, %v8616
        %v8655 = vpack.c.b16 %v8619, %v8618
        %v8656 = vpack.c.b16 %v8621, %v8620
        %v8657 = vpack.c.b16 %v8623, %v8622
        %v8658 = vpack.c.b16 %v8625, %v8624
        %v8659 = vpack.c.b16 %v8627, %v8626
        %8692 = vmatprep.subr.bf16.mxu0 0
        %8693 = vmatpush1.bf16.msra.mxu0 %v8635
        %8694 = vmatprep.subr.bf16.mxu0 0
        %8695 = vmatpush1.bf16.msra.mxu0 %v8634
        %8696 = vmatprep.subr.bf16.mxu0 0
        %8697 = vmatpush1.bf16.msra.mxu0 %v8633
        %8698 = vmatprep.subr.bf16.mxu0 0
        %8699 = vmatpush1.bf16.msra.mxu0 %v8632
        %8700 = vmatprep.subr.bf16.mxu0 0
        %8701 = vmatpush1.bf16.msra.mxu0 %v8631
        %8702 = vmatprep.subr.bf16.mxu0 0
        %8703 = vmatpush1.bf16.msra.mxu0 %v8630
        %8704 = vmatprep.subr.bf16.mxu0 0
        %8705 = vmatpush1.bf16.msra.mxu0 %v8629
        %8706 = vmatprep.subr.bf16.mxu0 0
        %8707 = vmatpush1.bf16.msra.mxu0 %v8628
        %8708 = vmatprep.subr.bf16.mxu0 0
        %8709 = vmatpush2.bf16.msra.mxu0 %v8643
        %8710 = vmatprep.subr.bf16.mxu0 0
        %8711 = vmatpush2.bf16.msra.mxu0 %v8642
        %8712 = vmatprep.subr.bf16.mxu0 0
        %8713 = vmatpush2.bf16.msra.mxu0 %v8641
        %8714 = vmatprep.subr.bf16.mxu0 0
        %8715 = vmatpush2.bf16.msra.mxu0 %v8640
        %8716 = vmatprep.subr.bf16.mxu0 0
        %8717 = vmatpush2.bf16.msra.mxu0 %v8639
        %8718 = vmatprep.subr.bf16.mxu0 0
        %8719 = vmatpush2.bf16.msra.mxu0 %v8638
        %8720 = vmatprep.subr.bf16.mxu0 0
        %8721 = vmatpush2.bf16.msra.mxu0 %v8637
        %8722 = vmatprep.subr.bf16.mxu0 0
        %8723 = vmatpush2.bf16.msra.mxu0 %v8636
        %8724 = vmatprep.mubr.bf16.mxu0 %v7909
        %8725 = vmatmul.mubr.bf16.gmra.mxu0 %v7908
        %v8726 = vpop.f32.mrf.mxu0
        %v8727 = vadd.f32 %v8498, %v8726
        %v8728 = vpop.f32.mrf.mxu0
        %v8729 = vpop.f32.mrf.mxu0
        %v8730 = vadd.f32 %v8498, %v8729
        %v8731 = vpop.f32.mrf.mxu0
        %8732 = vmatprep.mubr.bf16.mxu0 %v7913
        %8733 = vmatmul.mubr.bf16.gmra.mxu0 %v7912
        %v8734 = vpop.f32.mrf.mxu0
        %v8735 = vadd.f32 %v8498, %v8734
        %v8736 = vpop.f32.mrf.mxu0
        %v8737 = vpop.f32.mrf.mxu0
        %v8738 = vadd.f32 %v8498, %v8737
        %v8739 = vpop.f32.mrf.mxu0
        %8740 = vmatprep.mubr.bf16.mxu0 %v7917
        %8741 = vmatmul.mubr.bf16.gmra.mxu0 %v7916
        %v8742 = vpop.f32.mrf.mxu0
        %v8743 = vadd.f32 %v8498, %v8742
        %v8744 = vpop.f32.mrf.mxu0
        %v8745 = vpop.f32.mrf.mxu0
        %v8746 = vadd.f32 %v8498, %v8745
        %v8747 = vpop.f32.mrf.mxu0
        %8748 = vmatprep.mubr.bf16.mxu0 %v7921
        %8749 = vmatmul.mubr.bf16.gmra.mxu0 %v7920
        %v8750 = vpop.f32.mrf.mxu0
        %v8751 = vadd.f32 %v8498, %v8750
        %v8752 = vpop.f32.mrf.mxu0
        %v8753 = vpop.f32.mrf.mxu0
        %v8754 = vadd.f32 %v8498, %v8753
        %v8755 = vpop.f32.mrf.mxu0
        %8756 = vmatprep.mubr.bf16.mxu0 %v7925
        %8757 = vmatmul.mubr.bf16.gmra.mxu0 %v7924
        %v8758 = vpop.f32.mrf.mxu0
        %v8759 = vadd.f32 %v8498, %v8758
        %v8760 = vpop.f32.mrf.mxu0
        %v8761 = vpop.f32.mrf.mxu0
        %v8762 = vadd.f32 %v8498, %v8761
        %v8763 = vpop.f32.mrf.mxu0
        %8764 = vmatprep.mubr.bf16.mxu0 %v7929
        %8765 = vmatmul.mubr.bf16.gmra.mxu0 %v7928
        %v8766 = vpop.f32.mrf.mxu0
        %v8767 = vadd.f32 %v8498, %v8766
        %v8768 = vpop.f32.mrf.mxu0
        %v8769 = vpop.f32.mrf.mxu0
        %v8770 = vadd.f32 %v8498, %v8769
        %v8771 = vpop.f32.mrf.mxu0
        %8772 = vmatprep.mubr.bf16.mxu0 %v7933
        %8773 = vmatmul.mubr.bf16.gmra.mxu0 %v7932
        %v8774 = vpop.f32.mrf.mxu0
        %v8775 = vadd.f32 %v8498, %v8774
        %v8776 = vpop.f32.mrf.mxu0
        %v8777 = vpop.f32.mrf.mxu0
        %v8778 = vadd.f32 %v8498, %v8777
        %v8779 = vpop.f32.mrf.mxu0
        %8780 = vmatprep.mubr.bf16.mxu0 %v7937
        %8781 = vmatmul.mubr.bf16.gmra.mxu0 %v7936
        %v8782 = vpop.f32.mrf.mxu0
        %v8783 = vadd.f32 %v8498, %v8782
        %v8784 = vpop.f32.mrf.mxu0
        %v8785 = vpop.f32.mrf.mxu0
        %v8786 = vadd.f32 %v8498, %v8785
        %v8787 = vpop.f32.mrf.mxu0
        %8788 = vdwg.mxu0
        %8789 = vmatprep.subr.bf16.mxu0 0
        %8790 = vmatpush1.bf16.msra.mxu0 %v8651
        %8791 = vmatprep.subr.bf16.mxu0 0
        %8792 = vmatpush1.bf16.msra.mxu0 %v8650
        %8793 = vmatprep.subr.bf16.mxu0 0
        %8794 = vmatpush1.bf16.msra.mxu0 %v8649
        %8795 = vmatprep.subr.bf16.mxu0 0
        %8796 = vmatpush1.bf16.msra.mxu0 %v8648
        %8797 = vmatprep.subr.bf16.mxu0 0
        %8798 = vmatpush1.bf16.msra.mxu0 %v8647
        %8799 = vmatprep.subr.bf16.mxu0 0
        %8800 = vmatpush1.bf16.msra.mxu0 %v8646
        %8801 = vmatprep.subr.bf16.mxu0 0
        %8802 = vmatpush1.bf16.msra.mxu0 %v8645
        %8803 = vmatprep.subr.bf16.mxu0 0
        %8804 = vmatpush1.bf16.msra.mxu0 %v8644
        %8805 = vmatprep.subr.bf16.mxu0 0
        %8806 = vmatpush2.bf16.msra.mxu0 %v8659
        %8807 = vmatprep.subr.bf16.mxu0 0
        %8808 = vmatpush2.bf16.msra.mxu0 %v8658
        %8809 = vmatprep.subr.bf16.mxu0 0
        %8810 = vmatpush2.bf16.msra.mxu0 %v8657
        %8811 = vmatprep.subr.bf16.mxu0 0
        %8812 = vmatpush2.bf16.msra.mxu0 %v8656
        %8813 = vmatprep.subr.bf16.mxu0 0
        %8814 = vmatpush2.bf16.msra.mxu0 %v8655
        %8815 = vmatprep.subr.bf16.mxu0 0
        %8816 = vmatpush2.bf16.msra.mxu0 %v8654
        %8817 = vmatprep.subr.bf16.mxu0 0
        %8818 = vmatpush2.bf16.msra.mxu0 %v8653
        %8819 = vmatprep.subr.bf16.mxu0 0
        %8820 = vmatpush2.bf16.msra.mxu0 %v8652
        %8821 = vmatprep.mubr.bf16.mxu0 %v7911
        %8822 = vmatmul.mubr.bf16.gmra.mxu0 %v7910
        %v8823 = vpop.f32.mrf.mxu0
        %v8824 = vadd.f32 %v8727, %v8823
        %v8825 = vpop.f32.mrf.mxu0
        %v8826 = vpop.f32.mrf.mxu0
        %v8827 = vadd.f32 %v8730, %v8826
        %v8828 = vpop.f32.mrf.mxu0
        %8829 = vmatprep.mubr.bf16.mxu0 %v7915
        %8830 = vmatmul.mubr.bf16.gmra.mxu0 %v7914
        %v8831 = vpop.f32.mrf.mxu0
        %v8832 = vadd.f32 %v8735, %v8831
        %v8833 = vpop.f32.mrf.mxu0
        %v8834 = vpop.f32.mrf.mxu0
        %v8835 = vadd.f32 %v8738, %v8834
        %v8836 = vpop.f32.mrf.mxu0
        %8837 = vmatprep.mubr.bf16.mxu0 %v7919
        %8838 = vmatmul.mubr.bf16.gmra.mxu0 %v7918
        %v8839 = vpop.f32.mrf.mxu0
        %v8840 = vadd.f32 %v8743, %v8839
        %v8841 = vpop.f32.mrf.mxu0
        %v8842 = vpop.f32.mrf.mxu0
        %v8843 = vadd.f32 %v8746, %v8842
        %v8844 = vpop.f32.mrf.mxu0
        %8845 = vmatprep.mubr.bf16.mxu0 %v7923
        %8846 = vmatmul.mubr.bf16.gmra.mxu0 %v7922
        %v8847 = vpop.f32.mrf.mxu0
        %v8848 = vadd.f32 %v8751, %v8847
        %v8849 = vpop.f32.mrf.mxu0
        %v8850 = vpop.f32.mrf.mxu0
        %v8851 = vadd.f32 %v8754, %v8850
        %v8852 = vpop.f32.mrf.mxu0
        %8853 = vmatprep.mubr.bf16.mxu0 %v7927
        %8854 = vmatmul.mubr.bf16.gmra.mxu0 %v7926
        %v8855 = vpop.f32.mrf.mxu0
        %v8856 = vadd.f32 %v8759, %v8855
        %v8857 = vpop.f32.mrf.mxu0
        %v8858 = vpop.f32.mrf.mxu0
        %v8859 = vadd.f32 %v8762, %v8858
        %v8860 = vpop.f32.mrf.mxu0
        %8861 = vmatprep.mubr.bf16.mxu0 %v7931
        %8862 = vmatmul.mubr.bf16.gmra.mxu0 %v7930
        %v8863 = vpop.f32.mrf.mxu0
        %v8864 = vadd.f32 %v8767, %v8863
        %v8865 = vpop.f32.mrf.mxu0
        %v8866 = vpop.f32.mrf.mxu0
        %v8867 = vadd.f32 %v8770, %v8866
        %v8868 = vpop.f32.mrf.mxu0
        %8869 = vmatprep.mubr.bf16.mxu0 %v7935
        %8870 = vmatmul.mubr.bf16.gmra.mxu0 %v7934
        %v8871 = vpop.f32.mrf.mxu0
        %v8872 = vadd.f32 %v8775, %v8871
        %v8873 = vpop.f32.mrf.mxu0
        %v8874 = vpop.f32.mrf.mxu0
        %v8875 = vadd.f32 %v8778, %v8874
        %v8876 = vpop.f32.mrf.mxu0
        %8877 = vmatprep.mubr.bf16.mxu0 %v7939
        %8878 = vmatmul.mubr.bf16.gmra.mxu0 %v7938
        %v8879 = vpop.f32.mrf.mxu0
        %v8880 = vadd.f32 %v8783, %v8879
        %v8881 = vpop.f32.mrf.mxu0
        %v8882 = vpop.f32.mrf.mxu0
        %v8883 = vadd.f32 %v8786, %v8882
        %v8884 = vpop.f32.mrf.mxu0
        %8885 = vdwg.mxu0
        %vm8886 = vcmask 130048
        %v8887 = vsel %vm8886, %v8414, -inf
        %8888 = vmax.xlane.f32.xlu0 %v8887
        %v8889 = vpop.xlane.xlu0 %8888
        %v8890 = vsel %vm8886, %v8415, -inf
        %8891 = vmax.xlane.f32.xlu0 %v8890
        %v8892 = vpop.xlane.xlu0 %8891
        %v8893 = vsel %vm8886, %v8416, -inf
        %8894 = vmax.xlane.f32.xlu0 %v8893
        %v8895 = vpop.xlane.xlu0 %8894
        %v8896 = vsel %vm8886, %v8417, -inf
        %8897 = vmax.xlane.f32.xlu0 %v8896
        %v8898 = vpop.xlane.xlu0 %8897
        %v8899 = vsel %vm8886, %v8418, -inf
        %8900 = vmax.xlane.f32.xlu0 %v8899
        %v8901 = vpop.xlane.xlu0 %8900
        %v8902 = vsel %vm8886, %v8419, -inf
        %8903 = vmax.xlane.f32.xlu0 %v8902
        %v8904 = vpop.xlane.xlu0 %8903
        %v8905 = vsel %vm8886, %v8420, -inf
        %8906 = vmax.xlane.f32.xlu0 %v8905
        %v8907 = vpop.xlane.xlu0 %8906
        %v8908 = vsel %vm8886, %v8421, -inf
        %8909 = vmax.xlane.f32.xlu0 %v8908
        %v8910 = vpop.xlane.xlu0 %8909
        %v8911 = vsel %vm8886, %v8422, -inf
        %8912 = vmax.xlane.f32.xlu0 %v8911
        %v8913 = vpop.xlane.xlu0 %8912
        %v8914 = vsel %vm8886, %v8423, -inf
        %8915 = vmax.xlane.f32.xlu0 %v8914
        %v8916 = vpop.xlane.xlu0 %8915
        %v8917 = vsel %vm8886, %v8424, -inf
        %8918 = vmax.xlane.f32.xlu0 %v8917
        %v8919 = vpop.xlane.xlu0 %8918
        %v8920 = vsel %vm8886, %v8425, -inf
        %8921 = vmax.xlane.f32.xlu0 %v8920
        %v8922 = vpop.xlane.xlu0 %8921
        %v8923 = vsel %vm8886, %v8426, -inf
        %8924 = vmax.xlane.f32.xlu0 %v8923
        %v8925 = vpop.xlane.xlu0 %8924
        %v8926 = vsel %vm8886, %v8427, -inf
        %8927 = vmax.xlane.f32.xlu0 %v8926
        %v8928 = vpop.xlane.xlu0 %8927
        %v8929 = vsel %vm8886, %v8428, -inf
        %8930 = vmax.xlane.f32.xlu0 %v8929
        %v8931 = vpop.xlane.xlu0 %8930
        %v8932 = vsel %vm8886, %v8429, -inf
        %8933 = vmax.xlane.f32.xlu0 %v8932
        %v8934 = vpop.xlane.xlu0 %8933
        %v8935 = vsub.f32 %v8414, %v8889
        %v8936 = vsub.f32 %v8415, %v8892
        %v8937 = vsub.f32 %v8416, %v8895
        %v8938 = vsub.f32 %v8417, %v8898
        %v8939 = vsub.f32 %v8418, %v8901
        %v8940 = vsub.f32 %v8419, %v8904
        %v8941 = vsub.f32 %v8420, %v8907
        %v8942 = vsub.f32 %v8421, %v8910
        %v8943 = vsub.f32 %v8422, %v8913
        %v8944 = vsub.f32 %v8423, %v8916
        %v8945 = vsub.f32 %v8424, %v8919
        %v8946 = vsub.f32 %v8425, %v8922
        %v8947 = vsub.f32 %v8426, %v8925
        %v8948 = vsub.f32 %v8427, %v8928
        %v8949 = vsub.f32 %v8428, %v8931
        %v8950 = vsub.f32 %v8429, %v8934
        %v8951 = vmul.f32 %v8935, 1.442695
        %v8952 = vpow.pop %v8951
        %v8953 = vmul.f32 %v8936, 1.442695
        %v8954 = vpow.pop %v8953
        %v8955 = vmul.f32 %v8937, 1.442695
        %v8956 = vpow.pop %v8955
        %v8957 = vmul.f32 %v8938, 1.442695
        %v8958 = vpow.pop %v8957
        %v8959 = vmul.f32 %v8939, 1.442695
        %v8960 = vpow.pop %v8959
        %v8961 = vmul.f32 %v8940, 1.442695
        %v8962 = vpow.pop %v8961
        %v8963 = vmul.f32 %v8941, 1.442695
        %v8964 = vpow.pop %v8963
        %v8965 = vmul.f32 %v8942, 1.442695
        %v8966 = vpow.pop %v8965
        %v8967 = vmul.f32 %v8943, 1.442695
        %v8968 = vpow.pop %v8967
        %v8969 = vmul.f32 %v8944, 1.442695
        %v8970 = vpow.pop %v8969
        %v8971 = vmul.f32 %v8945, 1.442695
        %v8972 = vpow.pop %v8971
        %v8973 = vmul.f32 %v8946, 1.442695
        %v8974 = vpow.pop %v8973
        %v8975 = vmul.f32 %v8947, 1.442695
        %v8976 = vpow.pop %v8975
        %v8977 = vmul.f32 %v8948, 1.442695
        %v8978 = vpow.pop %v8977
        %v8979 = vmul.f32 %v8949, 1.442695
        %v8980 = vpow.pop %v8979
        %v8981 = vmul.f32 %v8950, 1.442695
        %v8982 = vpow.pop %v8981
        %v8983 = vsel %vm8886, %v8952, 0.0
        %8984 = vadd.xlane.f32.xlu0 %v8983
        %v8985 = vpop.xlane.xlu0 %8984
        %v8986 = vsel %vm8886, %v8954, 0.0
        %8987 = vadd.xlane.f32.xlu0 %v8986
        %v8988 = vpop.xlane.xlu0 %8987
        %v8989 = vsel %vm8886, %v8956, 0.0
        %8990 = vadd.xlane.f32.xlu0 %v8989
        %v8991 = vpop.xlane.xlu0 %8990
        %v8992 = vsel %vm8886, %v8958, 0.0
        %8993 = vadd.xlane.f32.xlu0 %v8992
        %v8994 = vpop.xlane.xlu0 %8993
        %v8995 = vsel %vm8886, %v8960, 0.0
        %8996 = vadd.xlane.f32.xlu0 %v8995
        %v8997 = vpop.xlane.xlu0 %8996
        %v8998 = vsel %vm8886, %v8962, 0.0
        %8999 = vadd.xlane.f32.xlu0 %v8998
        %v9000 = vpop.xlane.xlu0 %8999
        %v9001 = vsel %vm8886, %v8964, 0.0
        %9002 = vadd.xlane.f32.xlu0 %v9001
        %v9003 = vpop.xlane.xlu0 %9002
        %v9004 = vsel %vm8886, %v8966, 0.0
        %9005 = vadd.xlane.f32.xlu0 %v9004
        %v9006 = vpop.xlane.xlu0 %9005
        %v9007 = vsel %vm8886, %v8968, 0.0
        %9008 = vadd.xlane.f32.xlu0 %v9007
        %v9009 = vpop.xlane.xlu0 %9008
        %v9010 = vsel %vm8886, %v8970, 0.0
        %9011 = vadd.xlane.f32.xlu0 %v9010
        %v9012 = vpop.xlane.xlu0 %9011
        %v9013 = vsel %vm8886, %v8972, 0.0
        %9014 = vadd.xlane.f32.xlu0 %v9013
        %v9015 = vpop.xlane.xlu0 %9014
        %v9016 = vsel %vm8886, %v8974, 0.0
        %9017 = vadd.xlane.f32.xlu0 %v9016
        %v9018 = vpop.xlane.xlu0 %9017
        %v9019 = vsel %vm8886, %v8976, 0.0
        %9020 = vadd.xlane.f32.xlu0 %v9019
        %v9021 = vpop.xlane.xlu0 %9020
        %v9022 = vsel %vm8886, %v8978, 0.0
        %9023 = vadd.xlane.f32.xlu0 %v9022
        %v9024 = vpop.xlane.xlu0 %9023
        %v9025 = vsel %vm8886, %v8980, 0.0
        %9026 = vadd.xlane.f32.xlu0 %v9025
        %v9027 = vpop.xlane.xlu0 %9026
        %v9028 = vsel %vm8886, %v8982, 0.0
        %9029 = vadd.xlane.f32.xlu0 %v9028
        %v9030 = vpop.xlane.xlu0 %9029
        %v9031 = vlog2.pop %v8985
        %v9032 = vmul.f32 %v9031, 0.6931472
        %v9033 = vlog2.pop %v8988
        %v9034 = vmul.f32 %v9033, 0.6931472
        %v9035 = vlog2.pop %v8991
        %v9036 = vmul.f32 %v9035, 0.6931472
        %v9037 = vlog2.pop %v8994
        %v9038 = vmul.f32 %v9037, 0.6931472
        %v9039 = vlog2.pop %v8997
        %v9040 = vmul.f32 %v9039, 0.6931472
        %v9041 = vlog2.pop %v9000
        %v9042 = vmul.f32 %v9041, 0.6931472
        %v9043 = vlog2.pop %v9003
        %v9044 = vmul.f32 %v9043, 0.6931472
        %v9045 = vlog2.pop %v9006
        %v9046 = vmul.f32 %v9045, 0.6931472
        %v9047 = vlog2.pop %v9009
        %v9048 = vmul.f32 %v9047, 0.6931472
        %v9049 = vlog2.pop %v9012
        %v9050 = vmul.f32 %v9049, 0.6931472
        %v9051 = vlog2.pop %v9015
        %v9052 = vmul.f32 %v9051, 0.6931472
        %v9053 = vlog2.pop %v9018
        %v9054 = vmul.f32 %v9053, 0.6931472
        %v9055 = vlog2.pop %v9021
        %v9056 = vmul.f32 %v9055, 0.6931472
        %v9057 = vlog2.pop %v9024
        %v9058 = vmul.f32 %v9057, 0.6931472
        %v9059 = vlog2.pop %v9027
        %v9060 = vmul.f32 %v9059, 0.6931472
        %v9061 = vlog2.pop %v9030
        %v9062 = vmul.f32 %v9061, 0.6931472
        %v9063 = vadd.f32 %v8889, %v9032
        %v9064 = vadd.f32 %v8892, %v9034
        %v9065 = vadd.f32 %v8895, %v9036
        %v9066 = vadd.f32 %v8898, %v9038
        %v9067 = vadd.f32 %v8901, %v9040
        %v9068 = vadd.f32 %v8904, %v9042
        %v9069 = vadd.f32 %v8907, %v9044
        %v9070 = vadd.f32 %v8910, %v9046
        %v9071 = vadd.f32 %v8913, %v9048
        %v9072 = vadd.f32 %v8916, %v9050
        %v9073 = vadd.f32 %v8919, %v9052
        %v9074 = vadd.f32 %v8922, %v9054
        %v9075 = vadd.f32 %v8925, %v9056
        %v9076 = vadd.f32 %v8928, %v9058
        %v9077 = vadd.f32 %v8931, %v9060
        %v9078 = vadd.f32 %v8934, %v9062
        %9079 = vst.msk [vmem:[%s428] sm:$0xff] %vm8886, %v8414
        %9080 = vst.msk [vmem:[%s428 + $0x8] sm:$0xff] %vm8886, %v8415
        %9081 = vst.msk [vmem:[%s428 + $0x10] sm:$0xff] %vm8886, %v8416
        %9082 = vst.msk [vmem:[%s428 + $0x18] sm:$0xff] %vm8886, %v8417
        %9083 = vst.msk [vmem:[%s428 + $0x20] sm:$0xff] %vm8886, %v8418
        %9084 = vst.msk [vmem:[%s428 + $0x28] sm:$0xff] %vm8886, %v8419
        %9085 = vst.msk [vmem:[%s428 + $0x30] sm:$0xff] %vm8886, %v8420
        %9086 = vst.msk [vmem:[%s428 + $0x38] sm:$0xff] %vm8886, %v8421
        %9087 = vst.msk [vmem:[%s428 + $0x40] sm:$0xff] %vm8886, %v8422
        %9088 = vst.msk [vmem:[%s428 + $0x48] sm:$0xff] %vm8886, %v8423
        %9089 = vst.msk [vmem:[%s428 + $0x50] sm:$0xff] %vm8886, %v8424
        %9090 = vst.msk [vmem:[%s428 + $0x58] sm:$0xff] %vm8886, %v8425
        %9091 = vst.msk [vmem:[%s428 + $0x60] sm:$0xff] %vm8886, %v8426
        %9092 = vst.msk [vmem:[%s428 + $0x68] sm:$0xff] %vm8886, %v8427
        %9093 = vst.msk [vmem:[%s428 + $0x70] sm:$0xff] %vm8886, %v8428
        %9094 = vst.msk [vmem:[%s428 + $0x78] sm:$0xff] %vm8886, %v8429
        %v9095 = vsub.f32 %v8414, %v9063
        %v9096 = vsub.f32 %v8415, %v9064
        %v9097 = vsub.f32 %v8416, %v9065
        %v9098 = vsub.f32 %v8417, %v9066
        %v9099 = vsub.f32 %v8418, %v9067
        %v9100 = vsub.f32 %v8419, %v9068
        %v9101 = vsub.f32 %v8420, %v9069
        %v9102 = vsub.f32 %v8421, %v9070
        %v9103 = vsub.f32 %v8422, %v9071
        %v9104 = vsub.f32 %v8423, %v9072
        %v9105 = vsub.f32 %v8424, %v9073
        %v9106 = vsub.f32 %v8425, %v9074
        %v9107 = vsub.f32 %v8426, %v9075
        %v9108 = vsub.f32 %v8427, %v9076
        %v9109 = vsub.f32 %v8428, %v9077
        %v9110 = vsub.f32 %v8429, %v9078
        %9111 = vst.msk [vmem:[%s434] sm:$0xff] %vm8886, %v9095
        %9112 = vst.msk [vmem:[%s434 + $0x8] sm:$0xff] %vm8886, %v9096
        %9113 = vst.msk [vmem:[%s434 + $0x10] sm:$0xff] %vm8886, %v9097
        %9114 = vst.msk [vmem:[%s434 + $0x18] sm:$0xff] %vm8886, %v9098
        %9115 = vst.msk [vmem:[%s434 + $0x20] sm:$0xff] %vm8886, %v9099
        %9116 = vst.msk [vmem:[%s434 + $0x28] sm:$0xff] %vm8886, %v9100
        %9117 = vst.msk [vmem:[%s434 + $0x30] sm:$0xff] %vm8886, %v9101
        %9118 = vst.msk [vmem:[%s434 + $0x38] sm:$0xff] %vm8886, %v9102
        %9119 = vst.msk [vmem:[%s434 + $0x40] sm:$0xff] %vm8886, %v9103
        %9120 = vst.msk [vmem:[%s434 + $0x48] sm:$0xff] %vm8886, %v9104
        %9121 = vst.msk [vmem:[%s434 + $0x50] sm:$0xff] %vm8886, %v9105
        %9122 = vst.msk [vmem:[%s434 + $0x58] sm:$0xff] %vm8886, %v9106
        %9123 = vst.msk [vmem:[%s434 + $0x60] sm:$0xff] %vm8886, %v9107
        %9124 = vst.msk [vmem:[%s434 + $0x68] sm:$0xff] %vm8886, %v9108
        %9125 = vst.msk [vmem:[%s434 + $0x70] sm:$0xff] %vm8886, %v9109
        %9126 = vst.msk [vmem:[%s434 + $0x78] sm:$0xff] %vm8886, %v9110
        %9127 = vst.msk [vmem:[%s440] sm:$0xff] %vm8886, %v8824
        %9128 = vst.msk [vmem:[%s440 + $0x8] sm:$0xff] %vm8886, %v8827
        %9129 = vst.msk [vmem:[%s440 + $0x10] sm:$0xff] %vm8886, %v8832
        %9130 = vst.msk [vmem:[%s440 + $0x18] sm:$0xff] %vm8886, %v8835
        %9131 = vst.msk [vmem:[%s440 + $0x20] sm:$0xff] %vm8886, %v8840
        %9132 = vst.msk [vmem:[%s440 + $0x28] sm:$0xff] %vm8886, %v8843
        %9133 = vst.msk [vmem:[%s440 + $0x30] sm:$0xff] %vm8886, %v8848
        %9134 = vst.msk [vmem:[%s440 + $0x38] sm:$0xff] %vm8886, %v8851
        %9135 = vst.msk [vmem:[%s440 + $0x40] sm:$0xff] %vm8886, %v8856
        %9136 = vst.msk [vmem:[%s440 + $0x48] sm:$0xff] %vm8886, %v8859
        %9137 = vst.msk [vmem:[%s440 + $0x50] sm:$0xff] %vm8886, %v8864
        %9138 = vst.msk [vmem:[%s440 + $0x58] sm:$0xff] %vm8886, %v8867
        %9139 = vst.msk [vmem:[%s440 + $0x60] sm:$0xff] %vm8886, %v8872
        %9140 = vst.msk [vmem:[%s440 + $0x68] sm:$0xff] %vm8886, %v8875
        %9141 = vst.msk [vmem:[%s440 + $0x70] sm:$0xff] %vm8886, %v8880
        %9142 = vst.msk [vmem:[%s440 + $0x78] sm:$0xff] %vm8886, %v8883
        %s9143 = smul.u32 16, %s24
        %p9144 = scmp.lt.s32.totalorder %s9143, 31
        %s9145 = scalar_select %p9144, %s9143, 31
        %s9146 = smul.addr %s9145, 8
        %s9147 = scalar_lea.vmem %s8, %s9146
        %s9148 = smul.u32 16, %s24
        %p9149 = scmp.lt.s32.totalorder %s9148, 31
        %s9150 = scalar_select %p9149, %s9148, 31
        %s9151 = smul.addr %s9150, 8
        %s9152 = scalar_lea.vmem %s9, %s9151
        %s9153 = smul.u32 16, %s24
        %p9154 = scmp.lt.s32.totalorder %s9153, 31
        %s9155 = scalar_select %p9154, %s9153, 31
        %s9156 = smul.addr %s9155, 8
        %s9157 = scalar_lea.vmem %s10, %s9156
        // Predicated region
        $region61: #{tpu_custom_call.1} parent=51 // pred_check
          %p9158 = pneg %p220
        $region62: #{tpu_custom_call.1} parent=51 // pred_check_branch
          %9160 = sbr.rel (%p9158) target = $region64
        $region63: #{tpu_custom_call.1} parent=51 // pred_region
          %s9161 = smul.u32 16, %s24
        $region64: #{tpu_custom_call.1} parent=51 // pred_fallthru
          _
        // Predicated region
        $region65: #{tpu_custom_call.1} parent=51 // pred_check
          %p9162 = pneg %p246
        $region66: #{tpu_custom_call.1} parent=51 // pred_check_branch
          %9164 = sbr.rel (%p9162) target = $region68
        $region67: #{tpu_custom_call.1} parent=51 // pred_region
          %s9165 = smul.u32 16, %s24
        $region68: #{tpu_custom_call.1} parent=51 // pred_fallthru
          _
        // Predicated region
        $region69: #{tpu_custom_call.1} parent=51 // pred_check
          %p9166 = pneg %p272
        $region70: #{tpu_custom_call.1} parent=51 // pred_check_branch
          %9168 = sbr.rel (%p9166) target = $region72
        $region71: #{tpu_custom_call.1} parent=51 // pred_region
          %s9169 = smul.u32 16, %s24
        $region72: #{tpu_custom_call.1} parent=51 // pred_fallthru
          _
      $region52: #{tpu_custom_call.1} parent=5 // pred_fallthru
        _
      %p9170 = scmp.le.s32.totalorder 2, %s19
      // Predicated region
      $region73: #{tpu_custom_call.1} parent=5 // pred_check
        %p9171 = pneg %p9170
      $region74: #{tpu_custom_call.1} parent=5 // pred_check_branch
        %9173 = sbr.rel (%p9171) target = $region76
      $region75: #{tpu_custom_call.1} parent=5 // pred_region
        %s9174 = ssub.s32 %s19, 2
        // Predicated region
        $region77: #{tpu_custom_call.1} parent=75 // pred_check
          %p9175 = pneg %p226
        $region78: #{tpu_custom_call.1} parent=75 // pred_check_branch
          %9177 = sbr.rel (%p9175) target = $region80
        $region79: #{tpu_custom_call.1} parent=75 // pred_region
          %s9178 = smul.u32 16, %s25
          %p9179 = scmp.lt.s32.totalorder %s9178, 31
          %s9180 = scalar_select %p9179, %s9178, 31
          %s9181 = smul.addr %s9180, 8
          %s9182 = scalar_lea.vmem %s8, %s9181
        $region80: #{tpu_custom_call.1} parent=75 // pred_fallthru
          _
        // Predicated region
        $region81: #{tpu_custom_call.1} parent=75 // pred_check
          %p9183 = pneg %p252
        $region82: #{tpu_custom_call.1} parent=75 // pred_check_branch
          %9185 = sbr.rel (%p9183) target = $region84
        $region83: #{tpu_custom_call.1} parent=75 // pred_region
          %s9186 = smul.u32 16, %s25
          %p9187 = scmp.lt.s32.totalorder %s9186, 31
          %s9188 = scalar_select %p9187, %s9186, 31
          %s9189 = smul.addr %s9188, 8
          %s9190 = scalar_lea.vmem %s9, %s9189
        $region84: #{tpu_custom_call.1} parent=75 // pred_fallthru
          _
        // Predicated region
        $region85: #{tpu_custom_call.1} parent=75 // pred_check
          %p9191 = pneg %p278
        $region86: #{tpu_custom_call.1} parent=75 // pred_check_branch
          %9193 = sbr.rel (%p9191) target = $region88
        $region87: #{tpu_custom_call.1} parent=75 // pred_region
          %s9194 = smul.u32 16, %s25
          %p9195 = scmp.lt.s32.totalorder %s9194, 31
          %s9196 = scalar_select %p9195, %s9194, 31
          %s9197 = smul.addr %s9196, 8
          %s9198 = scalar_lea.vmem %s10, %s9197
        $region88: #{tpu_custom_call.1} parent=75 // pred_fallthru
          _
      $region76: #{tpu_custom_call.1} parent=5 // pred_fallthru
        _
    $region6: #{tpu_custom_call.1} parent=1 // loop_footer
      %s23 = sadd.s32 1, %s19
    $region7: #{tpu_custom_call.1} parent=1 // loop_footer_branch
      %18 = sbr.rel target = $region3
    $region8: #{tpu_custom_call.1} parent=1 // loop_exit
      _
    %9199 = vsyncpa [#allocation3], 1
    %s9200 = scalar_lea.sflag [#allocation3], 1
    %9201 = vsyncpa %s9200, 1
    %9202 = vsyncpa [#allocation5], 1

</llo_original>
